<compile_context>
chip_gen: v7x
topology: tpu7x:2x2x1
jax: 0.10.0
libtpu: 0.0.40
codegen_flags: <defaults>
</compile_context>

<pallas_src>
import jax
import jax.numpy as jnp
import numpy as np
from jax.experimental import pallas as pl
from jax.experimental.pallas import tpu as pltpu

EPS = 1e-5  # nn.BatchNorm2d default


def double_conv_kernel(x_ref, w1_ref, g1_ref, be1_ref, w2_ref, g2_ref, be2_ref,
                       out_ref, xpad_ref, ypad_ref):
    # x_ref   : (N, H, W, Cin)        bf16  unpadded input (padding is done in-kernel)
    # w1_ref  : (9*Cin,  Cout)        bf16  im2col weights, row = (ky*3+kx)*Cin + cin
    # w2_ref  : (9*Cout, Cout)        bf16
    # g*/be*  : (1, Cout)             f32   BatchNorm affine parameters
    # out_ref : (N, H, W, Cout)       f32
    # xpad_ref: (N, H+2, W+2, Cin)    f32   VMEM scratch (padded input)
    # ypad_ref: (N, H+2, W+2, Cout)   f32   VMEM scratch (padded intermediate)
    N, H, W, Cin = x_ref.shape
    Hp, Wp = H + 2, W + 2
    Cout = out_ref.shape[3]
    M = N * H * W
    inv_count = 1.0 / float(M)

    def pad_into(dst_ref, interior, c):
        # Zero only the 1-wide halo; the interior is written exactly once.
        # TODO(synk): fuse the two column-halo stores into the interior write (pad along W
        # in registers) to remove the masked 1-wide column stores at real sizes.
        zrow = jnp.zeros((N, 1, Wp, c), jnp.float32)
        dst_ref[:, 0:1, :, :] = zrow
        dst_ref[:, H + 1:H + 2, :, :] = zrow
        zcol = jnp.zeros((N, Hp, 1, c), jnp.float32)
        dst_ref[:, :, 0:1, :] = zcol
        dst_ref[:, :, W + 1:W + 2, :] = zcol
        dst_ref[:, 1:1 + H, 1:1 + W, :] = interior

    def conv_im2col(pad_ref, c, w_ref):
        # Build the (M, 9*c) im2col slab once (tap-major, k = ky*3 + kx, channel inner),
        # cast it to bf16 in ONE op, and do a single wide-K MXU matmul with f32 accumulation.
        taps = [pad_ref[:, ky:ky + H, kx:kx + W, :].reshape(M, c)
                for ky in range(3) for kx in range(3)]
        slab = jnp.concatenate(taps, axis=-1).astype(jnp.bfloat16)   # (M, 9*c)
        return jnp.dot(slab, w_ref[...], preferred_element_type=jnp.float32)  # (M, Cout) f32

    def bn_relu(y, g_ref, be_ref):
        # Training-mode BatchNorm2d: biased batch stats over N,H,W in one fused pass.
        s = jnp.sum(y, axis=0, keepdims=True)                 # (1, Cout)
        ss = jnp.sum(y * y, axis=0, keepdims=True)            # (1, Cout)
        mean = s * inv_count
        var = jnp.maximum(ss * inv_count - mean * mean, 0.0)  # clamp: E[x^2]-mean^2 can go <0
        scale = g_ref[...] * jax.lax.rsqrt(var + EPS)
        shift = be_ref[...] - mean * scale
        return jnp.maximum(y * scale + shift, 0.0)

    # ---- pad input (in-kernel), conv1 (bias cancelled by BN) + BN1 + ReLU ----
    pad_into(xpad_ref, x_ref[...].astype(jnp.float32), Cin)
    y1 = bn_relu(conv_im2col(xpad_ref, Cin, w1_ref), g1_ref, be1_ref)      # (M, Cout) f32

    # ---- pad intermediate, conv2 (bias cancelled) + BN2 + ReLU ----
    pad_into(ypad_ref, y1.reshape(N, H, W, Cout), Cout)
    y2 = bn_relu(conv_im2col(ypad_ref, Cout, w2_ref), g2_ref, be2_ref)     # (M, Cout) f32

    out_ref[...] = y2.reshape(N, H, W, Cout)


def double_conv(x_nchw, params):
    """x_nchw: (N, Cin, H, W) float32. Returns (N, Cout, H, W) float32."""
    w1, b1, g1, be1, w2, b2, g2, be2 = params   # conv biases unused: cancelled by train-mode BN
    N, Cin, H, W = x_nchw.shape
    Cout = w1.shape[0]
    Hp, Wp = H + 2, W + 2

    # NHWC, bf16 once (halves the input DMA); padding happens inside the kernel.
    x = jnp.transpose(x_nchw, (0, 2, 3, 1)).astype(jnp.bfloat16)

    # (O, I, 3, 3) -> (ky, kx, I, O) -> (9*I, O); row index = (ky*3 + kx)*I + i; bf16 for MXU.
    w1k = jnp.transpose(w1, (2, 3, 1, 0)).reshape(9 * Cin, Cout).astype(jnp.bfloat16)
    w2k = jnp.transpose(w2, (2, 3, 1, 0)).reshape(9 * Cout, Cout).astype(jnp.bfloat16)
    row = lambda v: v.reshape(1, -1).astype(jnp.float32)

    # VMEM budget derived from the actual footprint (operands + output + scratch + slab
    # temporaries), with generous headroom; floor keeps compiler scratch comfortable.
    bf16_b, f32_b = 2, 4
    vmem_need = (N * H * W * Cin * bf16_b                      # x
                 + 9 * Cin * Cout * bf16_b                     # w1
                 + 9 * Cout * Cout * bf16_b                    # w2
                 + 4 * Cout * f32_b                            # BN params
                 + N * H * W * Cout * f32_b                    # output
                 + N * Hp * Wp * (Cin + Cout) * f32_b          # padded scratches
                 + N * H * W * 9 * (Cin + Cout) * f32_b)       # im2col slabs (upper bound)
    vmem_limit = max(8 * 1024 * 1024, 2 * vmem_need)

    vmem = pl.BlockSpec(memory_space=pltpu.MemorySpace.VMEM)
    out = pl.pallas_call(
        double_conv_kernel,
        out_shape=jax.ShapeDtypeStruct((N, H, W, Cout), jnp.float32),
        in_specs=[vmem] * 7,
        out_specs=vmem,
        scratch_shapes=[pltpu.VMEM((N, Hp, Wp, Cin), jnp.float32),
                        pltpu.VMEM((N, Hp, Wp, Cout), jnp.float32)],
        compiler_params=pltpu.CompilerParams(vmem_limit_bytes=int(vmem_limit)),
    )(x, w1k, row(g1), row(be1), w2k, row(g2), row(be2))

    return jnp.transpose(out, (0, 3, 1, 2))                    # back to NCHW


def reference(x_nchw, params):
    """Pure-JAX f32 reference with exact PyTorch module semantics (incl. conv bias)."""
    w1, b1, g1, be1, w2, b2, g2, be2 = params

    def conv(x, w, b):
        y = jax.lax.conv_general_dilated(
            x, w, window_strides=(1, 1), padding="SAME",
            dimension_numbers=("NCHW", "OIHW", "NCHW"))
        return y + b[None, :, None, None]

    def bn_relu(x, g, be):
        mean = x.mean(axis=(0, 2, 3), keepdims=True)
        var = ((x - mean) ** 2).mean(axis=(0, 2, 3), keepdims=True)
        y = (x - mean) * jax.lax.rsqrt(var + EPS)
        y = y * g[None, :, None, None] + be[None, :, None, None]
        return jnp.maximum(y, 0.0)

    y = bn_relu(conv(x_nchw, w1, b1), g1, be1)
    y = bn_relu(conv(y, w2, b2), g2, be2)
    return y


if __name__ == "__main__":
    N, Cin, Cout, H, W = 2, 4, 8, 16, 16

    key = jax.random.PRNGKey(0)
    ks = jax.random.split(key, 9)
    x = jax.random.normal(ks[0], (N, Cin, H, W), jnp.float32)

    # Deterministic synthetic parameters (shapes match nn.Conv2d / nn.BatchNorm2d)
    w1 = 0.1 * jax.random.normal(ks[1], (Cout, Cin, 3, 3), jnp.float32)
    b1 = 0.1 * jax.random.normal(ks[2], (Cout,), jnp.float32)
    g1 = 1.0 + 0.1 * jax.random.normal(ks[3], (Cout,), jnp.float32)
    be1 = 0.1 * jax.random.normal(ks[4], (Cout,), jnp.float32)
    w2 = 0.1 * jax.random.normal(ks[5], (Cout, Cout, 3, 3), jnp.float32)
    b2 = 0.1 * jax.random.normal(ks[6], (Cout,), jnp.float32)
    g2 = 1.0 + 0.1 * jax.random.normal(ks[7], (Cout,), jnp.float32)
    be2 = 0.1 * jax.random.normal(ks[8], (Cout,), jnp.float32)
    params = (w1, b1, g1, be1, w2, b2, g2, be2)

    out = jax.block_until_ready(double_conv(x, params))
    ref = jax.block_until_ready(reference(x, params))

    assert out.shape == (N, Cout, H, W), out.shape
    # bf16 MXU inputs with f32 accumulation / f32 BN: compare at bf16-appropriate tolerance.
    # The f32 reference keeps the conv bias the kernel drops, also verifying the bias/BN
    # cancellation.
    assert np.allclose(np.asarray(out), np.asarray(ref), atol=2e-2, rtol=2e-2), (
        "mismatch vs reference")

    print("KERNEL_OK")
</pallas_src>

<mosaic_0001>
module attributes {stable_mosaic.version = 11 : i64} {
  func.func @double_conv_kernel(%arg0: memref<2x16x16x4xbf16, #tpu.memory_space<vmem>>, %arg1: memref<36x8xbf16, #tpu.memory_space<vmem>>, %arg2: memref<1x8xf32, #tpu.memory_space<vmem>>, %arg3: memref<1x8xf32, #tpu.memory_space<vmem>>, %arg4: memref<72x8xbf16, #tpu.memory_space<vmem>>, %arg5: memref<1x8xf32, #tpu.memory_space<vmem>>, %arg6: memref<1x8xf32, #tpu.memory_space<vmem>>, %arg7: memref<2x16x16x8xf32, #tpu.memory_space<vmem>>, %arg8: memref<2x18x18x4xf32, #tpu.memory_space<vmem>>, %arg9: memref<2x18x18x8xf32, #tpu.memory_space<vmem>>) attributes {dimension_semantics = [], scalar_prefetch = 0 : i64, scratch_operands = 2 : i64, tpu.core_type = #tpu.core_type<tc>} {
    %c0 = arith.constant 0 : index
    %c0_0 = arith.constant 0 : index
    %c0_1 = arith.constant 0 : index
    %c0_2 = arith.constant 0 : index
    %0 = vector.load %arg0[%c0, %c0_0, %c0_1, %c0_2] : memref<2x16x16x4xbf16, #tpu.memory_space<vmem>>, vector<2x16x16x4xbf16>
    %1 = arith.extf %0 : vector<2x16x16x4xbf16> to vector<2x16x16x4xf32>
    %cst = arith.constant 0.000000e+00 : f32
    %2 = vector.broadcast %cst : f32 to vector<2x1x18x4xf32>
    %c0_3 = arith.constant 0 : index
    %c0_4 = arith.constant 0 : index
    %c0_5 = arith.constant 0 : index
    %c0_6 = arith.constant 0 : index
    %3 = vector.load %arg8[%c0_3, %c0_4, %c0_5, %c0_6] : memref<2x18x18x4xf32, #tpu.memory_space<vmem>>, vector<2x1x18x4xf32>
    tpu.vector_store %arg8[%c0_3, %c0_4, %c0_5, %c0_6], %2 {strides = array<i32>} : memref<2x18x18x4xf32, #tpu.memory_space<vmem>>, vector<2x1x18x4xf32>,
    %c0_7 = arith.constant 0 : index
    %c17 = arith.constant 17 : index
    %c0_8 = arith.constant 0 : index
    %c0_9 = arith.constant 0 : index
    %4 = vector.load %arg8[%c0_7, %c17, %c0_8, %c0_9] : memref<2x18x18x4xf32, #tpu.memory_space<vmem>>, vector<2x1x18x4xf32>
    tpu.vector_store %arg8[%c0_7, %c17, %c0_8, %c0_9], %2 {strides = array<i32>} : memref<2x18x18x4xf32, #tpu.memory_space<vmem>>, vector<2x1x18x4xf32>,
    %cst_10 = arith.constant 0.000000e+00 : f32
    %5 = vector.broadcast %cst_10 : f32 to vector<2x18x1x4xf32>
    %c0_11 = arith.constant 0 : index
    %c0_12 = arith.constant 0 : index
    %c0_13 = arith.constant 0 : index
    %c0_14 = arith.constant 0 : index
    %6 = vector.load %arg8[%c0_11, %c0_12, %c0_13, %c0_14] : memref<2x18x18x4xf32, #tpu.memory_space<vmem>>, vector<2x18x1x4xf32>
    tpu.vector_store %arg8[%c0_11, %c0_12, %c0_13, %c0_14], %5 {strides = array<i32>} : memref<2x18x18x4xf32, #tpu.memory_space<vmem>>, vector<2x18x1x4xf32>,
    %c0_15 = arith.constant 0 : index
    %c0_16 = arith.constant 0 : index
    %c17_17 = arith.constant 17 : index
    %c0_18 = arith.constant 0 : index
    %7 = vector.load %arg8[%c0_15, %c0_16, %c17_17, %c0_18] : memref<2x18x18x4xf32, #tpu.memory_space<vmem>>, vector<2x18x1x4xf32>
    tpu.vector_store %arg8[%c0_15, %c0_16, %c17_17, %c0_18], %5 {strides = array<i32>} : memref<2x18x18x4xf32, #tpu.memory_space<vmem>>, vector<2x18x1x4xf32>,
    %c0_19 = arith.constant 0 : index
    %c1 = arith.constant 1 : index
    %c1_20 = arith.constant 1 : index
    %c0_21 = arith.constant 0 : index
    %8 = vector.load %arg8[%c0_19, %c1, %c1_20, %c0_21] : memref<2x18x18x4xf32, #tpu.memory_space<vmem>>, vector<2x16x16x4xf32>
    tpu.vector_store %arg8[%c0_19, %c1, %c1_20, %c0_21], %1 {strides = array<i32>} : memref<2x18x18x4xf32, #tpu.memory_space<vmem>>, vector<2x16x16x4xf32>,
    %c0_22 = arith.constant 0 : index
    %c0_23 = arith.constant 0 : index
    %c0_24 = arith.constant 0 : index
    %c0_25 = arith.constant 0 : index
    %9 = vector.load %arg8[%c0_22, %c0_23, %c0_24, %c0_25] : memref<2x18x18x4xf32, #tpu.memory_space<vmem>>, vector<2x16x16x4xf32>
    %10 = vector.shape_cast %9 : vector<2x16x16x4xf32> to vector<512x4xf32>
    %c0_26 = arith.constant 0 : index
    %c0_27 = arith.constant 0 : index
    %c1_28 = arith.constant 1 : index
    %c0_29 = arith.constant 0 : index
    %11 = vector.load %arg8[%c0_26, %c0_27, %c1_28, %c0_29] : memref<2x18x18x4xf32, #tpu.memory_space<vmem>>, vector<2x16x16x4xf32>
    %12 = vector.shape_cast %11 : vector<2x16x16x4xf32> to vector<512x4xf32>
    %c0_30 = arith.constant 0 : index
    %c0_31 = arith.constant 0 : index
    %c2 = arith.constant 2 : index
    %c0_32 = arith.constant 0 : index
    %13 = vector.load %arg8[%c0_30, %c0_31, %c2, %c0_32] : memref<2x18x18x4xf32, #tpu.memory_space<vmem>>, vector<2x16x16x4xf32>
    %14 = vector.shape_cast %13 : vector<2x16x16x4xf32> to vector<512x4xf32>
    %c0_33 = arith.constant 0 : index
    %c1_34 = arith.constant 1 : index
    %c0_35 = arith.constant 0 : index
    %c0_36 = arith.constant 0 : index
    %15 = vector.load %arg8[%c0_33, %c1_34, %c0_35, %c0_36] : memref<2x18x18x4xf32, #tpu.memory_space<vmem>>, vector<2x16x16x4xf32>
    %16 = vector.shape_cast %15 : vector<2x16x16x4xf32> to vector<512x4xf32>
    %c0_37 = arith.constant 0 : index
    %c1_38 = arith.constant 1 : index
    %c1_39 = arith.constant 1 : index
    %c0_40 = arith.constant 0 : index
    %17 = vector.load %arg8[%c0_37, %c1_38, %c1_39, %c0_40] : memref<2x18x18x4xf32, #tpu.memory_space<vmem>>, vector<2x16x16x4xf32>
    %18 = vector.shape_cast %17 : vector<2x16x16x4xf32> to vector<512x4xf32>
    %c0_41 = arith.constant 0 : index
    %c1_42 = arith.constant 1 : index
    %c2_43 = arith.constant 2 : index
    %c0_44 = arith.constant 0 : index
    %19 = vector.load %arg8[%c0_41, %c1_42, %c2_43, %c0_44] : memref<2x18x18x4xf32, #tpu.memory_space<vmem>>, vector<2x16x16x4xf32>
    %20 = vector.shape_cast %19 : vector<2x16x16x4xf32> to vector<512x4xf32>
    %c0_45 = arith.constant 0 : index
    %c2_46 = arith.constant 2 : index
    %c0_47 = arith.constant 0 : index
    %c0_48 = arith.constant 0 : index
    %21 = vector.load %arg8[%c0_45, %c2_46, %c0_47, %c0_48] : memref<2x18x18x4xf32, #tpu.memory_space<vmem>>, vector<2x16x16x4xf32>
    %22 = vector.shape_cast %21 : vector<2x16x16x4xf32> to vector<512x4xf32>
    %c0_49 = arith.constant 0 : index
    %c2_50 = arith.constant 2 : index
    %c1_51 = arith.constant 1 : index
    %c0_52 = arith.constant 0 : index
    %23 = vector.load %arg8[%c0_49, %c2_50, %c1_51, %c0_52] : memref<2x18x18x4xf32, #tpu.memory_space<vmem>>, vector<2x16x16x4xf32>
    %24 = vector.shape_cast %23 : vector<2x16x16x4xf32> to vector<512x4xf32>
    %c0_53 = arith.constant 0 : index
    %c2_54 = arith.constant 2 : index
    %c2_55 = arith.constant 2 : index
    %c0_56 = arith.constant 0 : index
    %25 = vector.load %arg8[%c0_53, %c2_54, %c2_55, %c0_56] : memref<2x18x18x4xf32, #tpu.memory_space<vmem>>, vector<2x16x16x4xf32>
    %26 = vector.shape_cast %25 : vector<2x16x16x4xf32> to vector<512x4xf32>
    %27 = tpu.concatenate %10, %12, %14, %16, %18, %20, %22, %24, %26 in 1 : vector<512x4xf32>, vector<512x4xf32>, vector<512x4xf32>, vector<512x4xf32>, vector<512x4xf32>, vector<512x4xf32>, vector<512x4xf32>, vector<512x4xf32>, vector<512x4xf32> -> vector<512x36xf32>
    %28 = arith.truncf %27 : vector<512x36xf32> to vector<512x36xbf16>
    %c0_57 = arith.constant 0 : index
    %c0_58 = arith.constant 0 : index
    %29 = vector.load %arg1[%c0_57, %c0_58] : memref<36x8xbf16, #tpu.memory_space<vmem>>, vector<36x8xbf16>
    %cst_59 = arith.constant dense<0.000000e+00> : vector<512x8xf32>
    %30 = tpu.matmul %28, %29, %cst_59 {dimension_numbers = #tpu.dot_dimension_numbers<[1], [0], [0], [1], [0, 0, 1, 1], [], []>} : vector<512x36xbf16>, vector<36x8xbf16>, vector<512x8xf32> -> vector<512x8xf32>
    %cst_60 = arith.constant dense<0.000000e+00> : vector<8xf32>
    %31 = vector.multi_reduction <add>, %30, %cst_60 [0] : vector<512x8xf32> to vector<8xf32>
    %32 = vector.shape_cast %31 : vector<8xf32> to vector<1x8xf32>
    %33 = arith.mulf %30, %30 : vector<512x8xf32>
    %cst_61 = arith.constant dense<0.000000e+00> : vector<8xf32>
    %34 = vector.multi_reduction <add>, %33, %cst_61 [0] : vector<512x8xf32> to vector<8xf32>
    %35 = vector.shape_cast %34 : vector<8xf32> to vector<1x8xf32>
    %cst_62 = arith.constant 0.001953125 : f32
    %36 = vector.broadcast %cst_62 : f32 to vector<1x8xf32>
    %37 = arith.mulf %32, %36 : vector<1x8xf32>
    %cst_63 = arith.constant 0.001953125 : f32
    %38 = vector.broadcast %cst_63 : f32 to vector<1x8xf32>
    %39 = arith.mulf %35, %38 : vector<1x8xf32>
    %40 = arith.mulf %37, %37 : vector<1x8xf32>
    %41 = arith.subf %39, %40 : vector<1x8xf32>
    %cst_64 = arith.constant 0.000000e+00 : f32
    %42 = vector.broadcast %cst_64 : f32 to vector<1x8xf32>
    %43 = arith.maximumf %41, %42 : vector<1x8xf32>
    %c0_65 = arith.constant 0 : index
    %c0_66 = arith.constant 0 : index
    %44 = vector.load %arg2[%c0_65, %c0_66] : memref<1x8xf32, #tpu.memory_space<vmem>>, vector<1x8xf32>
    %cst_67 = arith.constant 9.99999974E-6 : f32
    %45 = vector.broadcast %cst_67 : f32 to vector<1x8xf32>
    %46 = arith.addf %43, %45 : vector<1x8xf32>
    %47 = math.rsqrt %46 : vector<1x8xf32>
    %48 = arith.mulf %44, %47 : vector<1x8xf32>
    %c0_68 = arith.constant 0 : index
    %c0_69 = arith.constant 0 : index
    %49 = vector.load %arg3[%c0_68, %c0_69] : memref<1x8xf32, #tpu.memory_space<vmem>>, vector<1x8xf32>
    %50 = arith.mulf %37, %48 : vector<1x8xf32>
    %51 = arith.subf %49, %50 : vector<1x8xf32>
    %52 = vector.broadcast %48 : vector<1x8xf32> to vector<512x8xf32>
    %53 = arith.mulf %30, %52 : vector<512x8xf32>
    %54 = vector.broadcast %51 : vector<1x8xf32> to vector<512x8xf32>
    %55 = arith.addf %53, %54 : vector<512x8xf32>
    %cst_70 = arith.constant 0.000000e+00 : f32
    %56 = vector.broadcast %cst_70 : f32 to vector<512x8xf32>
    %57 = arith.maximumf %55, %56 : vector<512x8xf32>
    %58 = vector.shape_cast %57 : vector<512x8xf32> to vector<2x16x16x8xf32>
    %cst_71 = arith.constant 0.000000e+00 : f32
    %59 = vector.broadcast %cst_71 : f32 to vector<2x1x18x8xf32>
    %c0_72 = arith.constant 0 : index
    %c0_73 = arith.constant 0 : index
    %c0_74 = arith.constant 0 : index
    %c0_75 = arith.constant 0 : index
    %60 = vector.load %arg9[%c0_72, %c0_73, %c0_74, %c0_75] : memref<2x18x18x8xf32, #tpu.memory_space<vmem>>, vector<2x1x18x8xf32>
    tpu.vector_store %arg9[%c0_72, %c0_73, %c0_74, %c0_75], %59 {strides = array<i32>} : memref<2x18x18x8xf32, #tpu.memory_space<vmem>>, vector<2x1x18x8xf32>,
    %c0_76 = arith.constant 0 : index
    %c17_77 = arith.constant 17 : index
    %c0_78 = arith.constant 0 : index
    %c0_79 = arith.constant 0 : index
    %61 = vector.load %arg9[%c0_76, %c17_77, %c0_78, %c0_79] : memref<2x18x18x8xf32, #tpu.memory_space<vmem>>, vector<2x1x18x8xf32>
    tpu.vector_store %arg9[%c0_76, %c17_77, %c0_78, %c0_79], %59 {strides = array<i32>} : memref<2x18x18x8xf32, #tpu.memory_space<vmem>>, vector<2x1x18x8xf32>,
    %cst_80 = arith.constant 0.000000e+00 : f32
    %62 = vector.broadcast %cst_80 : f32 to vector<2x18x1x8xf32>
    %c0_81 = arith.constant 0 : index
    %c0_82 = arith.constant 0 : index
    %c0_83 = arith.constant 0 : index
    %c0_84 = arith.constant 0 : index
    %63 = vector.load %arg9[%c0_81, %c0_82, %c0_83, %c0_84] : memref<2x18x18x8xf32, #tpu.memory_space<vmem>>, vector<2x18x1x8xf32>
    tpu.vector_store %arg9[%c0_81, %c0_82, %c0_83, %c0_84], %62 {strides = array<i32>} : memref<2x18x18x8xf32, #tpu.memory_space<vmem>>, vector<2x18x1x8xf32>,
    %c0_85 = arith.constant 0 : index
    %c0_86 = arith.constant 0 : index
    %c17_87 = arith.constant 17 : index
    %c0_88 = arith.constant 0 : index
    %64 = vector.load %arg9[%c0_85, %c0_86, %c17_87, %c0_88] : memref<2x18x18x8xf32, #tpu.memory_space<vmem>>, vector<2x18x1x8xf32>
    tpu.vector_store %arg9[%c0_85, %c0_86, %c17_87, %c0_88], %62 {strides = array<i32>} : memref<2x18x18x8xf32, #tpu.memory_space<vmem>>, vector<2x18x1x8xf32>,
    %c0_89 = arith.constant 0 : index
    %c1_90 = arith.constant 1 : index
    %c1_91 = arith.constant 1 : index
    %c0_92 = arith.constant 0 : index
    %65 = vector.load %arg9[%c0_89, %c1_90, %c1_91, %c0_92] : memref<2x18x18x8xf32, #tpu.memory_space<vmem>>, vector<2x16x16x8xf32>
    tpu.vector_store %arg9[%c0_89, %c1_90, %c1_91, %c0_92], %58 {strides = array<i32>} : memref<2x18x18x8xf32, #tpu.memory_space<vmem>>, vector<2x16x16x8xf32>,
    %c0_93 = arith.constant 0 : index
    %c0_94 = arith.constant 0 : index
    %c0_95 = arith.constant 0 : index
    %c0_96 = arith.constant 0 : index
    %66 = vector.load %arg9[%c0_93, %c0_94, %c0_95, %c0_96] : memref<2x18x18x8xf32, #tpu.memory_space<vmem>>, vector<2x16x16x8xf32>
    %67 = vector.shape_cast %66 : vector<2x16x16x8xf32> to vector<512x8xf32>
    %c0_97 = arith.constant 0 : index
    %c0_98 = arith.constant 0 : index
    %c1_99 = arith.constant 1 : index
    %c0_100 = arith.constant 0 : index
    %68 = vector.load %arg9[%c0_97, %c0_98, %c1_99, %c0_100] : memref<2x18x18x8xf32, #tpu.memory_space<vmem>>, vector<2x16x16x8xf32>
    %69 = vector.shape_cast %68 : vector<2x16x16x8xf32> to vector<512x8xf32>
    %c0_101 = arith.constant 0 : index
    %c0_102 = arith.constant 0 : index
    %c2_103 = arith.constant 2 : index
    %c0_104 = arith.constant 0 : index
    %70 = vector.load %arg9[%c0_101, %c0_102, %c2_103, %c0_104] : memref<2x18x18x8xf32, #tpu.memory_space<vmem>>, vector<2x16x16x8xf32>
    %71 = vector.shape_cast %70 : vector<2x16x16x8xf32> to vector<512x8xf32>
    %c0_105 = arith.constant 0 : index
    %c1_106 = arith.constant 1 : index
    %c0_107 = arith.constant 0 : index
    %c0_108 = arith.constant 0 : index
    %72 = vector.load %arg9[%c0_105, %c1_106, %c0_107, %c0_108] : memref<2x18x18x8xf32, #tpu.memory_space<vmem>>, vector<2x16x16x8xf32>
    %73 = vector.shape_cast %72 : vector<2x16x16x8xf32> to vector<512x8xf32>
    %c0_109 = arith.constant 0 : index
    %c1_110 = arith.constant 1 : index
    %c1_111 = arith.constant 1 : index
    %c0_112 = arith.constant 0 : index
    %74 = vector.load %arg9[%c0_109, %c1_110, %c1_111, %c0_112] : memref<2x18x18x8xf32, #tpu.memory_space<vmem>>, vector<2x16x16x8xf32>
    %75 = vector.shape_cast %74 : vector<2x16x16x8xf32> to vector<512x8xf32>
    %c0_113 = arith.constant 0 : index
    %c1_114 = arith.constant 1 : index
    %c2_115 = arith.constant 2 : index
    %c0_116 = arith.constant 0 : index
    %76 = vector.load %arg9[%c0_113, %c1_114, %c2_115, %c0_116] : memref<2x18x18x8xf32, #tpu.memory_space<vmem>>, vector<2x16x16x8xf32>
    %77 = vector.shape_cast %76 : vector<2x16x16x8xf32> to vector<512x8xf32>
    %c0_117 = arith.constant 0 : index
    %c2_118 = arith.constant 2 : index
    %c0_119 = arith.constant 0 : index
    %c0_120 = arith.constant 0 : index
    %78 = vector.load %arg9[%c0_117, %c2_118, %c0_119, %c0_120] : memref<2x18x18x8xf32, #tpu.memory_space<vmem>>, vector<2x16x16x8xf32>
    %79 = vector.shape_cast %78 : vector<2x16x16x8xf32> to vector<512x8xf32>
    %c0_121 = arith.constant 0 : index
    %c2_122 = arith.constant 2 : index
    %c1_123 = arith.constant 1 : index
    %c0_124 = arith.constant 0 : index
    %80 = vector.load %arg9[%c0_121, %c2_122, %c1_123, %c0_124] : memref<2x18x18x8xf32, #tpu.memory_space<vmem>>, vector<2x16x16x8xf32>
    %81 = vector.shape_cast %80 : vector<2x16x16x8xf32> to vector<512x8xf32>
    %c0_125 = arith.constant 0 : index
    %c2_126 = arith.constant 2 : index
    %c2_127 = arith.constant 2 : index
    %c0_128 = arith.constant 0 : index
    %82 = vector.load %arg9[%c0_125, %c2_126, %c2_127, %c0_128] : memref<2x18x18x8xf32, #tpu.memory_space<vmem>>, vector<2x16x16x8xf32>
    %83 = vector.shape_cast %82 : vector<2x16x16x8xf32> to vector<512x8xf32>
    %84 = tpu.concatenate %67, %69, %71, %73, %75, %77, %79, %81, %83 in 1 : vector<512x8xf32>, vector<512x8xf32>, vector<512x8xf32>, vector<512x8xf32>, vector<512x8xf32>, vector<512x8xf32>, vector<512x8xf32>, vector<512x8xf32>, vector<512x8xf32> -> vector<512x72xf32>
    %85 = arith.truncf %84 : vector<512x72xf32> to vector<512x72xbf16>
    %c0_129 = arith.constant 0 : index
    %c0_130 = arith.constant 0 : index
    %86 = vector.load %arg4[%c0_129, %c0_130] : memref<72x8xbf16, #tpu.memory_space<vmem>>, vector<72x8xbf16>
    %cst_131 = arith.constant dense<0.000000e+00> : vector<512x8xf32>
    %87 = tpu.matmul %85, %86, %cst_131 {dimension_numbers = #tpu.dot_dimension_numbers<[1], [0], [0], [1], [0, 0, 1, 1], [], []>} : vector<512x72xbf16>, vector<72x8xbf16>, vector<512x8xf32> -> vector<512x8xf32>
    %cst_132 = arith.constant dense<0.000000e+00> : vector<8xf32>
    %88 = vector.multi_reduction <add>, %87, %cst_132 [0] : vector<512x8xf32> to vector<8xf32>
    %89 = vector.shape_cast %88 : vector<8xf32> to vector<1x8xf32>
    %90 = arith.mulf %87, %87 : vector<512x8xf32>
    %cst_133 = arith.constant dense<0.000000e+00> : vector<8xf32>
    %91 = vector.multi_reduction <add>, %90, %cst_133 [0] : vector<512x8xf32> to vector<8xf32>
    %92 = vector.shape_cast %91 : vector<8xf32> to vector<1x8xf32>
    %cst_134 = arith.constant 0.001953125 : f32
    %93 = vector.broadcast %cst_134 : f32 to vector<1x8xf32>
    %94 = arith.mulf %89, %93 : vector<1x8xf32>
    %cst_135 = arith.constant 0.001953125 : f32
    %95 = vector.broadcast %cst_135 : f32 to vector<1x8xf32>
    %96 = arith.mulf %92, %95 : vector<1x8xf32>
    %97 = arith.mulf %94, %94 : vector<1x8xf32>
    %98 = arith.subf %96, %97 : vector<1x8xf32>
    %cst_136 = arith.constant 0.000000e+00 : f32
    %99 = vector.broadcast %cst_136 : f32 to vector<1x8xf32>
    %100 = arith.maximumf %98, %99 : vector<1x8xf32>
    %c0_137 = arith.constant 0 : index
    %c0_138 = arith.constant 0 : index
    %101 = vector.load %arg5[%c0_137, %c0_138] : memref<1x8xf32, #tpu.memory_space<vmem>>, vector<1x8xf32>
    %cst_139 = arith.constant 9.99999974E-6 : f32
    %102 = vector.broadcast %cst_139 : f32 to vector<1x8xf32>
    %103 = arith.addf %100, %102 : vector<1x8xf32>
    %104 = math.rsqrt %103 : vector<1x8xf32>
    %105 = arith.mulf %101, %104 : vector<1x8xf32>
    %c0_140 = arith.constant 0 : index
    %c0_141 = arith.constant 0 : index
    %106 = vector.load %arg6[%c0_140, %c0_141] : memref<1x8xf32, #tpu.memory_space<vmem>>, vector<1x8xf32>
    %107 = arith.mulf %94, %105 : vector<1x8xf32>
    %108 = arith.subf %106, %107 : vector<1x8xf32>
    %109 = vector.broadcast %105 : vector<1x8xf32> to vector<512x8xf32>
    %110 = arith.mulf %87, %109 : vector<512x8xf32>
    %111 = vector.broadcast %108 : vector<1x8xf32> to vector<512x8xf32>
    %112 = arith.addf %110, %111 : vector<512x8xf32>
    %cst_142 = arith.constant 0.000000e+00 : f32
    %113 = vector.broadcast %cst_142 : f32 to vector<512x8xf32>
    %114 = arith.maximumf %112, %113 : vector<512x8xf32>
    %115 = vector.shape_cast %114 : vector<512x8xf32> to vector<2x16x16x8xf32>
    %c0_143 = arith.constant 0 : index
    %c0_144 = arith.constant 0 : index
    %c0_145 = arith.constant 0 : index
    %c0_146 = arith.constant 0 : index
    %116 = vector.load %arg7[%c0_143, %c0_144, %c0_145, %c0_146] : memref<2x16x16x8xf32, #tpu.memory_space<vmem>>, vector<2x16x16x8xf32>
    tpu.vector_store %arg7[%c0_143, %c0_144, %c0_145, %c0_146], %115 {strides = array<i32>} : memref<2x16x16x8xf32, #tpu.memory_space<vmem>>, vector<2x16x16x8xf32>,
    return
  }
}

</mosaic_0001>

<llo_original>
// kernel: tpu_custom_call.1
$region0: #{tpu_custom_call.1}
  #allocation0 [shape = 'u32[]', space=smem, size = 0x4, offset = 0x4, fixed_abs, tag = 'smem constant byte address 0x4 - core index']
  #allocation1 [shape = 'u32[144,128]{1,0:T(1,128)}', space=vmem, size = 0x12000, scoped, tag = 'internal scratch']
  #allocation2 [shape = 'f32[2,18,18,4]{3,2,1,0:T(8,128)}', space=vmem, size = 0x6c000, scoped, tag = 'scratch operand']
  #allocation3 [shape = 'f32[2,18,18,8]{3,2,1,0:T(8,128)}', space=vmem, size = 0x6c000, scoped, tag = 'scratch operand']
  %s0 = inlined_call_operand.vmem [shape: bf16[2,16,16,4], index: 0, kind: input, shape index: {}]
  %s1 = inlined_call_operand.vmem [shape: bf16[36,8], index: 1, kind: input, shape index: {}]
  %s2 = inlined_call_operand.vmem [shape: f32[1,8], index: 2, kind: input, shape index: {}]
  %s3 = inlined_call_operand.vmem [shape: f32[1,8], index: 3, kind: input, shape index: {}]
  %s4 = inlined_call_operand.vmem [shape: bf16[72,8], index: 4, kind: input, shape index: {}]
  %s5 = inlined_call_operand.vmem [shape: f32[1,8], index: 5, kind: input, shape index: {}]
  %s6 = inlined_call_operand.vmem [shape: f32[1,8], index: 6, kind: input, shape index: {}]
  %s7 = inlined_call_operand.vmem [shape: f32[2,16,16,8], index: 7, kind: output, shape index: {}]
  %s8 = sld [smem:[#allocation0]]
  $region38: #{tpu_custom_call.1} parent=0
    _
  %s10 = ssub.s32 1, %s8
  %s11 = scalar_select 0, %s10, %s8
  // Predicated region
  $region2: #{tpu_custom_call.1} parent=0 // pred_check
    _
  $region3: #{tpu_custom_call.1} parent=0 // pred_check_branch
    %13 = sbr.rel (0) target = $region5
  $region4: #{tpu_custom_call.1} parent=0 // pred_region
    _
  $region5: #{tpu_custom_call.1} parent=0 // pred_fallthru
    _
  // Predicated region
  $region6: #{tpu_custom_call.1} parent=0 // pred_check
    _
  $region7: #{tpu_custom_call.1} parent=0 // pred_check_branch
    %15 = sbr.rel (0) target = $region9
  $region8: #{tpu_custom_call.1} parent=0 // pred_region
    _
  $region9: #{tpu_custom_call.1} parent=0 // pred_fallthru
    _
  // Predicated region
  $region10: #{tpu_custom_call.1} parent=0 // pred_check
    _
  $region11: #{tpu_custom_call.1} parent=0 // pred_check_branch
    %17 = sbr.rel (0) target = $region13
  $region12: #{tpu_custom_call.1} parent=0 // pred_region
    _
  $region13: #{tpu_custom_call.1} parent=0 // pred_fallthru
    _
  // Predicated region
  $region14: #{tpu_custom_call.1} parent=0 // pred_check
    _
  $region15: #{tpu_custom_call.1} parent=0 // pred_check_branch
    %19 = sbr.rel (0) target = $region17
  $region16: #{tpu_custom_call.1} parent=0 // pred_region
    _
  $region17: #{tpu_custom_call.1} parent=0 // pred_fallthru
    _
  // Predicated region
  $region18: #{tpu_custom_call.1} parent=0 // pred_check
    _
  $region19: #{tpu_custom_call.1} parent=0 // pred_check_branch
    %21 = sbr.rel (0) target = $region21
  $region20: #{tpu_custom_call.1} parent=0 // pred_region
    _
  $region21: #{tpu_custom_call.1} parent=0 // pred_fallthru
    _
  // Predicated region
  $region22: #{tpu_custom_call.1} parent=0 // pred_check
    _
  $region23: #{tpu_custom_call.1} parent=0 // pred_check_branch
    %23 = sbr.rel (0) target = $region25
  $region24: #{tpu_custom_call.1} parent=0 // pred_region
    _
  $region25: #{tpu_custom_call.1} parent=0 // pred_fallthru
    _
  // Predicated region
  $region26: #{tpu_custom_call.1} parent=0 // pred_check
    _
  $region27: #{tpu_custom_call.1} parent=0 // pred_check_branch
    %25 = sbr.rel (0) target = $region29
  $region28: #{tpu_custom_call.1} parent=0 // pred_region
    _
  $region29: #{tpu_custom_call.1} parent=0 // pred_fallthru
    _
  %v27 = vld [vmem:[%s0] sm:$0xf]
  %v28 = vld [vmem:[%s0 + $0x4] sm:$0xf]
  %v29 = vld [vmem:[%s0 + $0x8] sm:$0xf]
  %v30 = vld [vmem:[%s0 + $0xc] sm:$0xf]
  %v31 = vld [vmem:[%s0 + $0x10] sm:$0xf]
  %v32 = vld [vmem:[%s0 + $0x14] sm:$0xf]
  %v33 = vld [vmem:[%s0 + $0x18] sm:$0xf]
  %v34 = vld [vmem:[%s0 + $0x1c] sm:$0xf]
  %v35 = vld [vmem:[%s0 + $0x20] sm:$0xf]
  %v36 = vld [vmem:[%s0 + $0x24] sm:$0xf]
  %v37 = vld [vmem:[%s0 + $0x28] sm:$0xf]
  %v38 = vld [vmem:[%s0 + $0x2c] sm:$0xf]
  %v39 = vld [vmem:[%s0 + $0x30] sm:$0xf]
  %v40 = vld [vmem:[%s0 + $0x34] sm:$0xf]
  %v41 = vld [vmem:[%s0 + $0x38] sm:$0xf]
  %v42 = vld [vmem:[%s0 + $0x3c] sm:$0xf]
  %v43 = vld [vmem:[%s0 + $0x40] sm:$0xf]
  %v44 = vld [vmem:[%s0 + $0x44] sm:$0xf]
  %v45 = vld [vmem:[%s0 + $0x48] sm:$0xf]
  %v46 = vld [vmem:[%s0 + $0x4c] sm:$0xf]
  %v47 = vld [vmem:[%s0 + $0x50] sm:$0xf]
  %v48 = vld [vmem:[%s0 + $0x54] sm:$0xf]
  %v49 = vld [vmem:[%s0 + $0x58] sm:$0xf]
  %v50 = vld [vmem:[%s0 + $0x5c] sm:$0xf]
  %v51 = vld [vmem:[%s0 + $0x60] sm:$0xf]
  %v52 = vld [vmem:[%s0 + $0x64] sm:$0xf]
  %v53 = vld [vmem:[%s0 + $0x68] sm:$0xf]
  %v54 = vld [vmem:[%s0 + $0x6c] sm:$0xf]
  %v55 = vld [vmem:[%s0 + $0x70] sm:$0xf]
  %v56 = vld [vmem:[%s0 + $0x74] sm:$0xf]
  %v57 = vld [vmem:[%s0 + $0x78] sm:$0xf]
  %v58 = vld [vmem:[%s0 + $0x7c] sm:$0xf]
  %v59 = vld [vmem:[%s0 + $0x80] sm:$0xf]
  %v60 = vld [vmem:[%s0 + $0x84] sm:$0xf]
  %v61 = vld [vmem:[%s0 + $0x88] sm:$0xf]
  %v62 = vld [vmem:[%s0 + $0x8c] sm:$0xf]
  %v63 = vld [vmem:[%s0 + $0x90] sm:$0xf]
  %v64 = vld [vmem:[%s0 + $0x94] sm:$0xf]
  %v65 = vld [vmem:[%s0 + $0x98] sm:$0xf]
  %v66 = vld [vmem:[%s0 + $0x9c] sm:$0xf]
  %v67 = vld [vmem:[%s0 + $0xa0] sm:$0xf]
  %v68 = vld [vmem:[%s0 + $0xa4] sm:$0xf]
  %v69 = vld [vmem:[%s0 + $0xa8] sm:$0xf]
  %v70 = vld [vmem:[%s0 + $0xac] sm:$0xf]
  %v71 = vld [vmem:[%s0 + $0xb0] sm:$0xf]
  %v72 = vld [vmem:[%s0 + $0xb4] sm:$0xf]
  %v73 = vld [vmem:[%s0 + $0xb8] sm:$0xf]
  %v74 = vld [vmem:[%s0 + $0xbc] sm:$0xf]
  %v75 = vld [vmem:[%s0 + $0xc0] sm:$0xf]
  %v76 = vld [vmem:[%s0 + $0xc4] sm:$0xf]
  %v77 = vld [vmem:[%s0 + $0xc8] sm:$0xf]
  %v78 = vld [vmem:[%s0 + $0xcc] sm:$0xf]
  %v79 = vld [vmem:[%s0 + $0xd0] sm:$0xf]
  %v80 = vld [vmem:[%s0 + $0xd4] sm:$0xf]
  %v81 = vld [vmem:[%s0 + $0xd8] sm:$0xf]
  %v82 = vld [vmem:[%s0 + $0xdc] sm:$0xf]
  %v83 = vld [vmem:[%s0 + $0xe0] sm:$0xf]
  %v84 = vld [vmem:[%s0 + $0xe4] sm:$0xf]
  %v85 = vld [vmem:[%s0 + $0xe8] sm:$0xf]
  %v86 = vld [vmem:[%s0 + $0xec] sm:$0xf]
  %v87 = vld [vmem:[%s0 + $0xf0] sm:$0xf]
  %v88 = vld [vmem:[%s0 + $0xf4] sm:$0xf]
  %v89 = vld [vmem:[%s0 + $0xf8] sm:$0xf]
  %v90 = vld [vmem:[%s0 + $0xfc] sm:$0xf]
  %v91 = vunpack.c.l.bf16 %v27
  %v92 = vunpack.c.l.bf16 %v28
  %v93 = vunpack.c.l.bf16 %v29
  %v94 = vunpack.c.l.bf16 %v30
  %v95 = vunpack.c.l.bf16 %v31
  %v96 = vunpack.c.l.bf16 %v32
  %v97 = vunpack.c.l.bf16 %v33
  %v98 = vunpack.c.l.bf16 %v34
  %v99 = vunpack.c.l.bf16 %v35
  %v100 = vunpack.c.l.bf16 %v36
  %v101 = vunpack.c.l.bf16 %v37
  %v102 = vunpack.c.l.bf16 %v38
  %v103 = vunpack.c.l.bf16 %v39
  %v104 = vunpack.c.l.bf16 %v40
  %v105 = vunpack.c.l.bf16 %v41
  %v106 = vunpack.c.l.bf16 %v42
  %v107 = vunpack.c.l.bf16 %v43
  %v108 = vunpack.c.l.bf16 %v44
  %v109 = vunpack.c.l.bf16 %v45
  %v110 = vunpack.c.l.bf16 %v46
  %v111 = vunpack.c.l.bf16 %v47
  %v112 = vunpack.c.l.bf16 %v48
  %v113 = vunpack.c.l.bf16 %v49
  %v114 = vunpack.c.l.bf16 %v50
  %v115 = vunpack.c.l.bf16 %v51
  %v116 = vunpack.c.l.bf16 %v52
  %v117 = vunpack.c.l.bf16 %v53
  %v118 = vunpack.c.l.bf16 %v54
  %v119 = vunpack.c.l.bf16 %v55
  %v120 = vunpack.c.l.bf16 %v56
  %v121 = vunpack.c.l.bf16 %v57
  %v122 = vunpack.c.l.bf16 %v58
  %v123 = vunpack.c.l.bf16 %v59
  %v124 = vunpack.c.l.bf16 %v60
  %v125 = vunpack.c.l.bf16 %v61
  %v126 = vunpack.c.l.bf16 %v62
  %v127 = vunpack.c.l.bf16 %v63
  %v128 = vunpack.c.l.bf16 %v64
  %v129 = vunpack.c.l.bf16 %v65
  %v130 = vunpack.c.l.bf16 %v66
  %v131 = vunpack.c.l.bf16 %v67
  %v132 = vunpack.c.l.bf16 %v68
  %v133 = vunpack.c.l.bf16 %v69
  %v134 = vunpack.c.l.bf16 %v70
  %v135 = vunpack.c.l.bf16 %v71
  %v136 = vunpack.c.l.bf16 %v72
  %v137 = vunpack.c.l.bf16 %v73
  %v138 = vunpack.c.l.bf16 %v74
  %v139 = vunpack.c.l.bf16 %v75
  %v140 = vunpack.c.l.bf16 %v76
  %v141 = vunpack.c.l.bf16 %v77
  %v142 = vunpack.c.l.bf16 %v78
  %v143 = vunpack.c.l.bf16 %v79
  %v144 = vunpack.c.l.bf16 %v80
  %v145 = vunpack.c.l.bf16 %v81
  %v146 = vunpack.c.l.bf16 %v82
  %v147 = vunpack.c.l.bf16 %v83
  %v148 = vunpack.c.l.bf16 %v84
  %v149 = vunpack.c.l.bf16 %v85
  %v150 = vunpack.c.l.bf16 %v86
  %v151 = vunpack.c.l.bf16 %v87
  %v152 = vunpack.c.l.bf16 %v88
  %v153 = vunpack.c.l.bf16 %v89
  %v154 = vunpack.c.l.bf16 %v90
  %vm155 = vcmask 31744
  %156 = vst.msk [vmem:[#allocation2] sm:$0xff] %vm155, 0.0
  %157 = vst.msk [vmem:[#allocation2 + $0x8] sm:$0xff] %vm155, 0.0
  %vm158 = vcmask 25600
  %159 = vst.msk [vmem:[#allocation2 + $0x10] sm:$0x3] %vm158, 0.0
  %160 = vst.msk [vmem:[#allocation2 + $0x1b0] sm:$0xff] %vm155, 0.0
  %161 = vst.msk [vmem:[#allocation2 + $0x1b8] sm:$0xff] %vm155, 0.0
  %162 = vst.msk [vmem:[#allocation2 + $0x1c0] sm:$0x3] %vm158, 0.0
  %s163 = scalar_lea.vmem [#allocation2], 408
  %164 = vst.msk [vmem:[%s163] sm:$0xff] %vm155, 0.0
  %165 = vst.msk [vmem:[%s163 + $0x8] sm:$0xff] %vm155, 0.0
  %166 = vst.msk [vmem:[%s163 + $0x10] sm:$0x3] %vm158, 0.0
  %167 = vst.msk [vmem:[%s163 + $0x1b0] sm:$0xff] %vm155, 0.0
  %168 = vst.msk [vmem:[%s163 + $0x1b8] sm:$0xff] %vm155, 0.0
  %169 = vst.msk [vmem:[%s163 + $0x1c0] sm:$0x3] %vm158, 0.0
  %vm170 = vcmask 24576
  %171 = vst.msk [vmem:[#allocation2] sm:$0x1] %vm170, 0.0
  %172 = vst.msk [vmem:[#allocation2 + $0x18] sm:$0x1] %vm170, 0.0
  %173 = vst.msk [vmem:[#allocation2 + $0x30] sm:$0x1] %vm170, 0.0
  %174 = vst.msk [vmem:[#allocation2 + $0x48] sm:$0x1] %vm170, 0.0
  %175 = vst.msk [vmem:[#allocation2 + $0x60] sm:$0x1] %vm170, 0.0
  %176 = vst.msk [vmem:[#allocation2 + $0x78] sm:$0x1] %vm170, 0.0
  %177 = vst.msk [vmem:[#allocation2 + $0x90] sm:$0x1] %vm170, 0.0
  %178 = vst.msk [vmem:[#allocation2 + $0xa8] sm:$0x1] %vm170, 0.0
  %179 = vst.msk [vmem:[#allocation2 + $0xc0] sm:$0x1] %vm170, 0.0
  %180 = vst.msk [vmem:[#allocation2 + $0xd8] sm:$0x1] %vm170, 0.0
  %181 = vst.msk [vmem:[#allocation2 + $0xf0] sm:$0x1] %vm170, 0.0
  %182 = vst.msk [vmem:[#allocation2 + $0x108] sm:$0x1] %vm170, 0.0
  %183 = vst.msk [vmem:[#allocation2 + $0x120] sm:$0x1] %vm170, 0.0
  %184 = vst.msk [vmem:[#allocation2 + $0x138] sm:$0x1] %vm170, 0.0
  %185 = vst.msk [vmem:[#allocation2 + $0x150] sm:$0x1] %vm170, 0.0
  %186 = vst.msk [vmem:[#allocation2 + $0x168] sm:$0x1] %vm170, 0.0
  %187 = vst.msk [vmem:[#allocation2 + $0x180] sm:$0x1] %vm170, 0.0
  %188 = vst.msk [vmem:[#allocation2 + $0x198] sm:$0x1] %vm170, 0.0
  %189 = vst.msk [vmem:[#allocation2 + $0x1b0] sm:$0x1] %vm170, 0.0
  %190 = vst.msk [vmem:[#allocation2 + $0x1c8] sm:$0x1] %vm170, 0.0
  %191 = vst.msk [vmem:[#allocation2 + $0x1e0] sm:$0x1] %vm170, 0.0
  %192 = vst.msk [vmem:[#allocation2 + $0x1f8] sm:$0x1] %vm170, 0.0
  %193 = vst.msk [vmem:[#allocation2 + $0x210] sm:$0x1] %vm170, 0.0
  %194 = vst.msk [vmem:[#allocation2 + $0x228] sm:$0x1] %vm170, 0.0
  %195 = vst.msk [vmem:[#allocation2 + $0x240] sm:$0x1] %vm170, 0.0
  %196 = vst.msk [vmem:[#allocation2 + $0x258] sm:$0x1] %vm170, 0.0
  %197 = vst.msk [vmem:[#allocation2 + $0x270] sm:$0x1] %vm170, 0.0
  %198 = vst.msk [vmem:[#allocation2 + $0x288] sm:$0x1] %vm170, 0.0
  %199 = vst.msk [vmem:[#allocation2 + $0x2a0] sm:$0x1] %vm170, 0.0
  %200 = vst.msk [vmem:[#allocation2 + $0x2b8] sm:$0x1] %vm170, 0.0
  %201 = vst.msk [vmem:[#allocation2 + $0x2d0] sm:$0x1] %vm170, 0.0
  %202 = vst.msk [vmem:[#allocation2 + $0x2e8] sm:$0x1] %vm170, 0.0
  %203 = vst.msk [vmem:[#allocation2 + $0x300] sm:$0x1] %vm170, 0.0
  %204 = vst.msk [vmem:[#allocation2 + $0x318] sm:$0x1] %vm170, 0.0
  %205 = vst.msk [vmem:[#allocation2 + $0x330] sm:$0x1] %vm170, 0.0
  %206 = vst.msk [vmem:[#allocation2 + $0x348] sm:$0x1] %vm170, 0.0
  %207 = vst.msk [vmem:[#allocation2 + $0x11] sm:$0x1] %vm170, 0.0
  %208 = vst.msk [vmem:[#allocation2 + $0x29] sm:$0x1] %vm170, 0.0
  %209 = vst.msk [vmem:[#allocation2 + $0x41] sm:$0x1] %vm170, 0.0
  %210 = vst.msk [vmem:[#allocation2 + $0x59] sm:$0x1] %vm170, 0.0
  %211 = vst.msk [vmem:[#allocation2 + $0x71] sm:$0x1] %vm170, 0.0
  %212 = vst.msk [vmem:[#allocation2 + $0x89] sm:$0x1] %vm170, 0.0
  %213 = vst.msk [vmem:[#allocation2 + $0xa1] sm:$0x1] %vm170, 0.0
  %214 = vst.msk [vmem:[#allocation2 + $0xb9] sm:$0x1] %vm170, 0.0
  %215 = vst.msk [vmem:[#allocation2 + $0xd1] sm:$0x1] %vm170, 0.0
  %216 = vst.msk [vmem:[#allocation2 + $0xe9] sm:$0x1] %vm170, 0.0
  %217 = vst.msk [vmem:[#allocation2 + $0x101] sm:$0x1] %vm170, 0.0
  %218 = vst.msk [vmem:[#allocation2 + $0x119] sm:$0x1] %vm170, 0.0
  %219 = vst.msk [vmem:[#allocation2 + $0x131] sm:$0x1] %vm170, 0.0
  %220 = vst.msk [vmem:[#allocation2 + $0x149] sm:$0x1] %vm170, 0.0
  %221 = vst.msk [vmem:[#allocation2 + $0x161] sm:$0x1] %vm170, 0.0
  %222 = vst.msk [vmem:[#allocation2 + $0x179] sm:$0x1] %vm170, 0.0
  %223 = vst.msk [vmem:[#allocation2 + $0x191] sm:$0x1] %vm170, 0.0
  %224 = vst.msk [vmem:[#allocation2 + $0x1a9] sm:$0x1] %vm170, 0.0
  %225 = vst.msk [vmem:[#allocation2 + $0x1c1] sm:$0x1] %vm170, 0.0
  %226 = vst.msk [vmem:[#allocation2 + $0x1d9] sm:$0x1] %vm170, 0.0
  %227 = vst.msk [vmem:[#allocation2 + $0x1f1] sm:$0x1] %vm170, 0.0
  %228 = vst.msk [vmem:[#allocation2 + $0x209] sm:$0x1] %vm170, 0.0
  %229 = vst.msk [vmem:[#allocation2 + $0x221] sm:$0x1] %vm170, 0.0
  %230 = vst.msk [vmem:[#allocation2 + $0x239] sm:$0x1] %vm170, 0.0
  %231 = vst.msk [vmem:[#allocation2 + $0x251] sm:$0x1] %vm170, 0.0
  %232 = vst.msk [vmem:[#allocation2 + $0x269] sm:$0x1] %vm170, 0.0
  %233 = vst.msk [vmem:[#allocation2 + $0x281] sm:$0x1] %vm170, 0.0
  %234 = vst.msk [vmem:[#allocation2 + $0x299] sm:$0x1] %vm170, 0.0
  %235 = vst.msk [vmem:[#allocation2 + $0x2b1] sm:$0x1] %vm170, 0.0
  %236 = vst.msk [vmem:[#allocation2 + $0x2c9] sm:$0x1] %vm170, 0.0
  %237 = vst.msk [vmem:[#allocation2 + $0x2e1] sm:$0x1] %vm170, 0.0
  %238 = vst.msk [vmem:[#allocation2 + $0x2f9] sm:$0x1] %vm170, 0.0
  %239 = vst.msk [vmem:[#allocation2 + $0x311] sm:$0x1] %vm170, 0.0
  %240 = vst.msk [vmem:[#allocation2 + $0x329] sm:$0x1] %vm170, 0.0
  %241 = vst.msk [vmem:[#allocation2 + $0x341] sm:$0x1] %vm170, 0.0
  %242 = vst.msk [vmem:[#allocation2 + $0x359] sm:$0x1] %vm170, 0.0
  %s243 = scalar_lea.vmem [#allocation2], 24
  %244 = vst.msk [vmem:[%s243 + $0x1] sm:$0xff] %vm155, %v91
  %245 = vst.msk [vmem:[%s243 + $0x9] sm:$0xff] %vm155, %v92
  %246 = vst.msk [vmem:[%s243 + $0x19] sm:$0xff] %vm155, %v93
  %247 = vst.msk [vmem:[%s243 + $0x21] sm:$0xff] %vm155, %v94
  %248 = vst.msk [vmem:[%s243 + $0x31] sm:$0xff] %vm155, %v95
  %249 = vst.msk [vmem:[%s243 + $0x39] sm:$0xff] %vm155, %v96
  %250 = vst.msk [vmem:[%s243 + $0x49] sm:$0xff] %vm155, %v97
  %251 = vst.msk [vmem:[%s243 + $0x51] sm:$0xff] %vm155, %v98
  %252 = vst.msk [vmem:[%s243 + $0x61] sm:$0xff] %vm155, %v99
  %253 = vst.msk [vmem:[%s243 + $0x69] sm:$0xff] %vm155, %v100
  %254 = vst.msk [vmem:[%s243 + $0x79] sm:$0xff] %vm155, %v101
  %255 = vst.msk [vmem:[%s243 + $0x81] sm:$0xff] %vm155, %v102
  %256 = vst.msk [vmem:[%s243 + $0x91] sm:$0xff] %vm155, %v103
  %257 = vst.msk [vmem:[%s243 + $0x99] sm:$0xff] %vm155, %v104
  %258 = vst.msk [vmem:[%s243 + $0xa9] sm:$0xff] %vm155, %v105
  %259 = vst.msk [vmem:[%s243 + $0xb1] sm:$0xff] %vm155, %v106
  %260 = vst.msk [vmem:[%s243 + $0xc1] sm:$0xff] %vm155, %v107
  %261 = vst.msk [vmem:[%s243 + $0xc9] sm:$0xff] %vm155, %v108
  %262 = vst.msk [vmem:[%s243 + $0xd9] sm:$0xff] %vm155, %v109
  %263 = vst.msk [vmem:[%s243 + $0xe1] sm:$0xff] %vm155, %v110
  %264 = vst.msk [vmem:[%s243 + $0xf1] sm:$0xff] %vm155, %v111
  %265 = vst.msk [vmem:[%s243 + $0xf9] sm:$0xff] %vm155, %v112
  %266 = vst.msk [vmem:[%s243 + $0x109] sm:$0xff] %vm155, %v113
  %267 = vst.msk [vmem:[%s243 + $0x111] sm:$0xff] %vm155, %v114
  %268 = vst.msk [vmem:[%s243 + $0x121] sm:$0xff] %vm155, %v115
  %269 = vst.msk [vmem:[%s243 + $0x129] sm:$0xff] %vm155, %v116
  %270 = vst.msk [vmem:[%s243 + $0x139] sm:$0xff] %vm155, %v117
  %271 = vst.msk [vmem:[%s243 + $0x141] sm:$0xff] %vm155, %v118
  %272 = vst.msk [vmem:[%s243 + $0x151] sm:$0xff] %vm155, %v119
  %273 = vst.msk [vmem:[%s243 + $0x159] sm:$0xff] %vm155, %v120
  %274 = vst.msk [vmem:[%s243 + $0x169] sm:$0xff] %vm155, %v121
  %275 = vst.msk [vmem:[%s243 + $0x171] sm:$0xff] %vm155, %v122
  %276 = vst.msk [vmem:[%s243 + $0x1b1] sm:$0xff] %vm155, %v123
  %277 = vst.msk [vmem:[%s243 + $0x1b9] sm:$0xff] %vm155, %v124
  %278 = vst.msk [vmem:[%s243 + $0x1c9] sm:$0xff] %vm155, %v125
  %279 = vst.msk [vmem:[%s243 + $0x1d1] sm:$0xff] %vm155, %v126
  %280 = vst.msk [vmem:[%s243 + $0x1e1] sm:$0xff] %vm155, %v127
  %281 = vst.msk [vmem:[%s243 + $0x1e9] sm:$0xff] %vm155, %v128
  %282 = vst.msk [vmem:[%s243 + $0x1f9] sm:$0xff] %vm155, %v129
  %283 = vst.msk [vmem:[%s243 + $0x201] sm:$0xff] %vm155, %v130
  %284 = vst.msk [vmem:[%s243 + $0x211] sm:$0xff] %vm155, %v131
  %285 = vst.msk [vmem:[%s243 + $0x219] sm:$0xff] %vm155, %v132
  %286 = vst.msk [vmem:[%s243 + $0x229] sm:$0xff] %vm155, %v133
  %287 = vst.msk [vmem:[%s243 + $0x231] sm:$0xff] %vm155, %v134
  %288 = vst.msk [vmem:[%s243 + $0x241] sm:$0xff] %vm155, %v135
  %289 = vst.msk [vmem:[%s243 + $0x249] sm:$0xff] %vm155, %v136
  %290 = vst.msk [vmem:[%s243 + $0x259] sm:$0xff] %vm155, %v137
  %291 = vst.msk [vmem:[%s243 + $0x261] sm:$0xff] %vm155, %v138
  %292 = vst.msk [vmem:[%s243 + $0x271] sm:$0xff] %vm155, %v139
  %293 = vst.msk [vmem:[%s243 + $0x279] sm:$0xff] %vm155, %v140
  %294 = vst.msk [vmem:[%s243 + $0x289] sm:$0xff] %vm155, %v141
  %295 = vst.msk [vmem:[%s243 + $0x291] sm:$0xff] %vm155, %v142
  %296 = vst.msk [vmem:[%s243 + $0x2a1] sm:$0xff] %vm155, %v143
  %297 = vst.msk [vmem:[%s243 + $0x2a9] sm:$0xff] %vm155, %v144
  %298 = vst.msk [vmem:[%s243 + $0x2b9] sm:$0xff] %vm155, %v145
  %299 = vst.msk [vmem:[%s243 + $0x2c1] sm:$0xff] %vm155, %v146
  %300 = vst.msk [vmem:[%s243 + $0x2d1] sm:$0xff] %vm155, %v147
  %301 = vst.msk [vmem:[%s243 + $0x2d9] sm:$0xff] %vm155, %v148
  %302 = vst.msk [vmem:[%s243 + $0x2e9] sm:$0xff] %vm155, %v149
  %303 = vst.msk [vmem:[%s243 + $0x2f1] sm:$0xff] %vm155, %v150
  %304 = vst.msk [vmem:[%s243 + $0x301] sm:$0xff] %vm155, %v151
  %305 = vst.msk [vmem:[%s243 + $0x309] sm:$0xff] %vm155, %v152
  %306 = vst.msk [vmem:[%s243 + $0x319] sm:$0xff] %vm155, %v153
  %307 = vst.msk [vmem:[%s243 + $0x321] sm:$0xff] %vm155, %v154
  %v308 = vld [vmem:[#allocation2] sm:$0xff]
  %v309 = vld [vmem:[#allocation2 + $0x8] sm:$0xff]
  %v310 = vld [vmem:[#allocation2 + $0x18] sm:$0xff]
  %v311 = vld [vmem:[#allocation2 + $0x20] sm:$0xff]
  %v312 = vld [vmem:[#allocation2 + $0x30] sm:$0xff]
  %v313 = vld [vmem:[#allocation2 + $0x38] sm:$0xff]
  %v314 = vld [vmem:[#allocation2 + $0x48] sm:$0xff]
  %v315 = vld [vmem:[#allocation2 + $0x50] sm:$0xff]
  %v316 = vld [vmem:[#allocation2 + $0x60] sm:$0xff]
  %v317 = vld [vmem:[#allocation2 + $0x68] sm:$0xff]
  %v318 = vld [vmem:[#allocation2 + $0x78] sm:$0xff]
  %v319 = vld [vmem:[#allocation2 + $0x80] sm:$0xff]
  %v320 = vld [vmem:[#allocation2 + $0x90] sm:$0xff]
  %v321 = vld [vmem:[#allocation2 + $0x98] sm:$0xff]
  %v322 = vld [vmem:[#allocation2 + $0xa8] sm:$0xff]
  %v323 = vld [vmem:[#allocation2 + $0xb0] sm:$0xff]
  %v324 = vld [vmem:[#allocation2 + $0xc0] sm:$0xff]
  %v325 = vld [vmem:[#allocation2 + $0xc8] sm:$0xff]
  %v326 = vld [vmem:[#allocation2 + $0xd8] sm:$0xff]
  %v327 = vld [vmem:[#allocation2 + $0xe0] sm:$0xff]
  %v328 = vld [vmem:[#allocation2 + $0xf0] sm:$0xff]
  %v329 = vld [vmem:[#allocation2 + $0xf8] sm:$0xff]
  %v330 = vld [vmem:[#allocation2 + $0x108] sm:$0xff]
  %v331 = vld [vmem:[#allocation2 + $0x110] sm:$0xff]
  %v332 = vld [vmem:[#allocation2 + $0x120] sm:$0xff]
  %v333 = vld [vmem:[#allocation2 + $0x128] sm:$0xff]
  %v334 = vld [vmem:[#allocation2 + $0x138] sm:$0xff]
  %v335 = vld [vmem:[#allocation2 + $0x140] sm:$0xff]
  %v336 = vld [vmem:[#allocation2 + $0x150] sm:$0xff]
  %v337 = vld [vmem:[#allocation2 + $0x158] sm:$0xff]
  %v338 = vld [vmem:[#allocation2 + $0x168] sm:$0xff]
  %v339 = vld [vmem:[#allocation2 + $0x170] sm:$0xff]
  %v340 = vld [vmem:[#allocation2 + $0x1b0] sm:$0xff]
  %v341 = vld [vmem:[#allocation2 + $0x1b8] sm:$0xff]
  %v342 = vld [vmem:[#allocation2 + $0x1c8] sm:$0xff]
  %v343 = vld [vmem:[#allocation2 + $0x1d0] sm:$0xff]
  %v344 = vld [vmem:[#allocation2 + $0x1e0] sm:$0xff]
  %v345 = vld [vmem:[#allocation2 + $0x1e8] sm:$0xff]
  %v346 = vld [vmem:[#allocation2 + $0x1f8] sm:$0xff]
  %v347 = vld [vmem:[#allocation2 + $0x200] sm:$0xff]
  %v348 = vld [vmem:[#allocation2 + $0x210] sm:$0xff]
  %v349 = vld [vmem:[#allocation2 + $0x218] sm:$0xff]
  %v350 = vld [vmem:[#allocation2 + $0x228] sm:$0xff]
  %v351 = vld [vmem:[#allocation2 + $0x230] sm:$0xff]
  %v352 = vld [vmem:[#allocation2 + $0x240] sm:$0xff]
  %v353 = vld [vmem:[#allocation2 + $0x248] sm:$0xff]
  %v354 = vld [vmem:[#allocation2 + $0x258] sm:$0xff]
  %v355 = vld [vmem:[#allocation2 + $0x260] sm:$0xff]
  %v356 = vld [vmem:[#allocation2 + $0x270] sm:$0xff]
  %v357 = vld [vmem:[#allocation2 + $0x278] sm:$0xff]
  %v358 = vld [vmem:[#allocation2 + $0x288] sm:$0xff]
  %v359 = vld [vmem:[#allocation2 + $0x290] sm:$0xff]
  %v360 = vld [vmem:[#allocation2 + $0x2a0] sm:$0xff]
  %v361 = vld [vmem:[#allocation2 + $0x2a8] sm:$0xff]
  %v362 = vld [vmem:[#allocation2 + $0x2b8] sm:$0xff]
  %v363 = vld [vmem:[#allocation2 + $0x2c0] sm:$0xff]
  %v364 = vld [vmem:[#allocation2 + $0x2d0] sm:$0xff]
  %v365 = vld [vmem:[#allocation2 + $0x2d8] sm:$0xff]
  %v366 = vld [vmem:[#allocation2 + $0x2e8] sm:$0xff]
  %v367 = vld [vmem:[#allocation2 + $0x2f0] sm:$0xff]
  %v368 = vld [vmem:[#allocation2 + $0x300] sm:$0xff]
  %v369 = vld [vmem:[#allocation2 + $0x308] sm:$0xff]
  %v370 = vld [vmem:[#allocation2 + $0x318] sm:$0xff]
  %v371 = vld [vmem:[#allocation2 + $0x320] sm:$0xff]
  %v372 = vld [vmem:[#allocation2 + $0x1] sm:$0xff]
  %v373 = vld [vmem:[#allocation2 + $0x9] sm:$0xff]
  %v374 = vld [vmem:[#allocation2 + $0x19] sm:$0xff]
  %v375 = vld [vmem:[#allocation2 + $0x21] sm:$0xff]
  %v376 = vld [vmem:[#allocation2 + $0x31] sm:$0xff]
  %v377 = vld [vmem:[#allocation2 + $0x39] sm:$0xff]
  %v378 = vld [vmem:[#allocation2 + $0x49] sm:$0xff]
  %v379 = vld [vmem:[#allocation2 + $0x51] sm:$0xff]
  %v380 = vld [vmem:[#allocation2 + $0x61] sm:$0xff]
  %v381 = vld [vmem:[#allocation2 + $0x69] sm:$0xff]
  %v382 = vld [vmem:[#allocation2 + $0x79] sm:$0xff]
  %v383 = vld [vmem:[#allocation2 + $0x81] sm:$0xff]
  %v384 = vld [vmem:[#allocation2 + $0x91] sm:$0xff]
  %v385 = vld [vmem:[#allocation2 + $0x99] sm:$0xff]
  %v386 = vld [vmem:[#allocation2 + $0xa9] sm:$0xff]
  %v387 = vld [vmem:[#allocation2 + $0xb1] sm:$0xff]
  %v388 = vld [vmem:[#allocation2 + $0xc1] sm:$0xff]
  %v389 = vld [vmem:[#allocation2 + $0xc9] sm:$0xff]
  %v390 = vld [vmem:[#allocation2 + $0xd9] sm:$0xff]
  %v391 = vld [vmem:[#allocation2 + $0xe1] sm:$0xff]
  %v392 = vld [vmem:[#allocation2 + $0xf1] sm:$0xff]
  %v393 = vld [vmem:[#allocation2 + $0xf9] sm:$0xff]
  %v394 = vld [vmem:[#allocation2 + $0x109] sm:$0xff]
  %v395 = vld [vmem:[#allocation2 + $0x111] sm:$0xff]
  %v396 = vld [vmem:[#allocation2 + $0x121] sm:$0xff]
  %v397 = vld [vmem:[#allocation2 + $0x129] sm:$0xff]
  %v398 = vld [vmem:[#allocation2 + $0x139] sm:$0xff]
  %v399 = vld [vmem:[#allocation2 + $0x141] sm:$0xff]
  %v400 = vld [vmem:[#allocation2 + $0x151] sm:$0xff]
  %v401 = vld [vmem:[#allocation2 + $0x159] sm:$0xff]
  %v402 = vld [vmem:[#allocation2 + $0x169] sm:$0xff]
  %v403 = vld [vmem:[#allocation2 + $0x171] sm:$0xff]
  %v404 = vld [vmem:[#allocation2 + $0x1b1] sm:$0xff]
  %v405 = vld [vmem:[#allocation2 + $0x1b9] sm:$0xff]
  %v406 = vld [vmem:[#allocation2 + $0x1c9] sm:$0xff]
  %v407 = vld [vmem:[#allocation2 + $0x1d1] sm:$0xff]
  %v408 = vld [vmem:[#allocation2 + $0x1e1] sm:$0xff]
  %v409 = vld [vmem:[#allocation2 + $0x1e9] sm:$0xff]
  %v410 = vld [vmem:[#allocation2 + $0x1f9] sm:$0xff]
  %v411 = vld [vmem:[#allocation2 + $0x201] sm:$0xff]
  %v412 = vld [vmem:[#allocation2 + $0x211] sm:$0xff]
  %v413 = vld [vmem:[#allocation2 + $0x219] sm:$0xff]
  %v414 = vld [vmem:[#allocation2 + $0x229] sm:$0xff]
  %v415 = vld [vmem:[#allocation2 + $0x231] sm:$0xff]
  %v416 = vld [vmem:[#allocation2 + $0x241] sm:$0xff]
  %v417 = vld [vmem:[#allocation2 + $0x249] sm:$0xff]
  %v418 = vld [vmem:[#allocation2 + $0x259] sm:$0xff]
  %v419 = vld [vmem:[#allocation2 + $0x261] sm:$0xff]
  %v420 = vld [vmem:[#allocation2 + $0x271] sm:$0xff]
  %v421 = vld [vmem:[#allocation2 + $0x279] sm:$0xff]
  %v422 = vld [vmem:[#allocation2 + $0x289] sm:$0xff]
  %v423 = vld [vmem:[#allocation2 + $0x291] sm:$0xff]
  %v424 = vld [vmem:[#allocation2 + $0x2a1] sm:$0xff]
  %v425 = vld [vmem:[#allocation2 + $0x2a9] sm:$0xff]
  %v426 = vld [vmem:[#allocation2 + $0x2b9] sm:$0xff]
  %v427 = vld [vmem:[#allocation2 + $0x2c1] sm:$0xff]
  %v428 = vld [vmem:[#allocation2 + $0x2d1] sm:$0xff]
  %v429 = vld [vmem:[#allocation2 + $0x2d9] sm:$0xff]
  %v430 = vld [vmem:[#allocation2 + $0x2e9] sm:$0xff]
  %v431 = vld [vmem:[#allocation2 + $0x2f1] sm:$0xff]
  %v432 = vld [vmem:[#allocation2 + $0x301] sm:$0xff]
  %v433 = vld [vmem:[#allocation2 + $0x309] sm:$0xff]
  %v434 = vld [vmem:[#allocation2 + $0x319] sm:$0xff]
  %v435 = vld [vmem:[#allocation2 + $0x321] sm:$0xff]
  %v436 = vld [vmem:[#allocation2 + $0x2] sm:$0xff]
  %v437 = vld [vmem:[#allocation2 + $0xa] sm:$0xff]
  %v438 = vld [vmem:[#allocation2 + $0x1a] sm:$0xff]
  %v439 = vld [vmem:[#allocation2 + $0x22] sm:$0xff]
  %v440 = vld [vmem:[#allocation2 + $0x32] sm:$0xff]
  %v441 = vld [vmem:[#allocation2 + $0x3a] sm:$0xff]
  %v442 = vld [vmem:[#allocation2 + $0x4a] sm:$0xff]
  %v443 = vld [vmem:[#allocation2 + $0x52] sm:$0xff]
  %v444 = vld [vmem:[#allocation2 + $0x62] sm:$0xff]
  %v445 = vld [vmem:[#allocation2 + $0x6a] sm:$0xff]
  %v446 = vld [vmem:[#allocation2 + $0x7a] sm:$0xff]
  %v447 = vld [vmem:[#allocation2 + $0x82] sm:$0xff]
  %v448 = vld [vmem:[#allocation2 + $0x92] sm:$0xff]
  %v449 = vld [vmem:[#allocation2 + $0x9a] sm:$0xff]
  %v450 = vld [vmem:[#allocation2 + $0xaa] sm:$0xff]
  %v451 = vld [vmem:[#allocation2 + $0xb2] sm:$0xff]
  %v452 = vld [vmem:[#allocation2 + $0xc2] sm:$0xff]
  %v453 = vld [vmem:[#allocation2 + $0xca] sm:$0xff]
  %v454 = vld [vmem:[#allocation2 + $0xda] sm:$0xff]
  %v455 = vld [vmem:[#allocation2 + $0xe2] sm:$0xff]
  %v456 = vld [vmem:[#allocation2 + $0xf2] sm:$0xff]
  %v457 = vld [vmem:[#allocation2 + $0xfa] sm:$0xff]
  %v458 = vld [vmem:[#allocation2 + $0x10a] sm:$0xff]
  %v459 = vld [vmem:[#allocation2 + $0x112] sm:$0xff]
  %v460 = vld [vmem:[#allocation2 + $0x122] sm:$0xff]
  %v461 = vld [vmem:[#allocation2 + $0x12a] sm:$0xff]
  %v462 = vld [vmem:[#allocation2 + $0x13a] sm:$0xff]
  %v463 = vld [vmem:[#allocation2 + $0x142] sm:$0xff]
  %v464 = vld [vmem:[#allocation2 + $0x152] sm:$0xff]
  %v465 = vld [vmem:[#allocation2 + $0x15a] sm:$0xff]
  %v466 = vld [vmem:[#allocation2 + $0x16a] sm:$0xff]
  %v467 = vld [vmem:[#allocation2 + $0x172] sm:$0xff]
  %v468 = vld [vmem:[#allocation2 + $0x1b2] sm:$0xff]
  %v469 = vld [vmem:[#allocation2 + $0x1ba] sm:$0xff]
  %v470 = vld [vmem:[#allocation2 + $0x1ca] sm:$0xff]
  %v471 = vld [vmem:[#allocation2 + $0x1d2] sm:$0xff]
  %v472 = vld [vmem:[#allocation2 + $0x1e2] sm:$0xff]
  %v473 = vld [vmem:[#allocation2 + $0x1ea] sm:$0xff]
  %v474 = vld [vmem:[#allocation2 + $0x1fa] sm:$0xff]
  %v475 = vld [vmem:[#allocation2 + $0x202] sm:$0xff]
  %v476 = vld [vmem:[#allocation2 + $0x212] sm:$0xff]
  %v477 = vld [vmem:[#allocation2 + $0x21a] sm:$0xff]
  %v478 = vld [vmem:[#allocation2 + $0x22a] sm:$0xff]
  %v479 = vld [vmem:[#allocation2 + $0x232] sm:$0xff]
  %v480 = vld [vmem:[#allocation2 + $0x242] sm:$0xff]
  %v481 = vld [vmem:[#allocation2 + $0x24a] sm:$0xff]
  %v482 = vld [vmem:[#allocation2 + $0x25a] sm:$0xff]
  %v483 = vld [vmem:[#allocation2 + $0x262] sm:$0xff]
  %v484 = vld [vmem:[#allocation2 + $0x272] sm:$0xff]
  %v485 = vld [vmem:[#allocation2 + $0x27a] sm:$0xff]
  %v486 = vld [vmem:[#allocation2 + $0x28a] sm:$0xff]
  %v487 = vld [vmem:[#allocation2 + $0x292] sm:$0xff]
  %v488 = vld [vmem:[#allocation2 + $0x2a2] sm:$0xff]
  %v489 = vld [vmem:[#allocation2 + $0x2aa] sm:$0xff]
  %v490 = vld [vmem:[#allocation2 + $0x2ba] sm:$0xff]
  %v491 = vld [vmem:[#allocation2 + $0x2c2] sm:$0xff]
  %v492 = vld [vmem:[#allocation2 + $0x2d2] sm:$0xff]
  %v493 = vld [vmem:[#allocation2 + $0x2da] sm:$0xff]
  %v494 = vld [vmem:[#allocation2 + $0x2ea] sm:$0xff]
  %v495 = vld [vmem:[#allocation2 + $0x2f2] sm:$0xff]
  %v496 = vld [vmem:[#allocation2 + $0x302] sm:$0xff]
  %v497 = vld [vmem:[#allocation2 + $0x30a] sm:$0xff]
  %v498 = vld [vmem:[#allocation2 + $0x31a] sm:$0xff]
  %v499 = vld [vmem:[#allocation2 + $0x322] sm:$0xff]
  %v500 = vld [vmem:[%s243] sm:$0xff]
  %v501 = vld [vmem:[%s243 + $0x8] sm:$0xff]
  %v502 = vld [vmem:[%s243 + $0x18] sm:$0xff]
  %v503 = vld [vmem:[%s243 + $0x20] sm:$0xff]
  %v504 = vld [vmem:[%s243 + $0x30] sm:$0xff]
  %v505 = vld [vmem:[%s243 + $0x38] sm:$0xff]
  %v506 = vld [vmem:[%s243 + $0x48] sm:$0xff]
  %v507 = vld [vmem:[%s243 + $0x50] sm:$0xff]
  %v508 = vld [vmem:[%s243 + $0x60] sm:$0xff]
  %v509 = vld [vmem:[%s243 + $0x68] sm:$0xff]
  %v510 = vld [vmem:[%s243 + $0x78] sm:$0xff]
  %v511 = vld [vmem:[%s243 + $0x80] sm:$0xff]
  %v512 = vld [vmem:[%s243 + $0x90] sm:$0xff]
  %v513 = vld [vmem:[%s243 + $0x98] sm:$0xff]
  %v514 = vld [vmem:[%s243 + $0xa8] sm:$0xff]
  %v515 = vld [vmem:[%s243 + $0xb0] sm:$0xff]
  %v516 = vld [vmem:[%s243 + $0xc0] sm:$0xff]
  %v517 = vld [vmem:[%s243 + $0xc8] sm:$0xff]
  %v518 = vld [vmem:[%s243 + $0xd8] sm:$0xff]
  %v519 = vld [vmem:[%s243 + $0xe0] sm:$0xff]
  %v520 = vld [vmem:[%s243 + $0xf0] sm:$0xff]
  %v521 = vld [vmem:[%s243 + $0xf8] sm:$0xff]
  %v522 = vld [vmem:[%s243 + $0x108] sm:$0xff]
  %v523 = vld [vmem:[%s243 + $0x110] sm:$0xff]
  %v524 = vld [vmem:[%s243 + $0x120] sm:$0xff]
  %v525 = vld [vmem:[%s243 + $0x128] sm:$0xff]
  %v526 = vld [vmem:[%s243 + $0x138] sm:$0xff]
  %v527 = vld [vmem:[%s243 + $0x140] sm:$0xff]
  %v528 = vld [vmem:[%s243 + $0x150] sm:$0xff]
  %v529 = vld [vmem:[%s243 + $0x158] sm:$0xff]
  %v530 = vld [vmem:[%s243 + $0x168] sm:$0xff]
  %v531 = vld [vmem:[%s243 + $0x170] sm:$0xff]
  %v532 = vld [vmem:[%s243 + $0x1b0] sm:$0xff]
  %v533 = vld [vmem:[%s243 + $0x1b8] sm:$0xff]
  %v534 = vld [vmem:[%s243 + $0x1c8] sm:$0xff]
  %v535 = vld [vmem:[%s243 + $0x1d0] sm:$0xff]
  %v536 = vld [vmem:[%s243 + $0x1e0] sm:$0xff]
  %v537 = vld [vmem:[%s243 + $0x1e8] sm:$0xff]
  %v538 = vld [vmem:[%s243 + $0x1f8] sm:$0xff]
  %v539 = vld [vmem:[%s243 + $0x200] sm:$0xff]
  %v540 = vld [vmem:[%s243 + $0x210] sm:$0xff]
  %v541 = vld [vmem:[%s243 + $0x218] sm:$0xff]
  %v542 = vld [vmem:[%s243 + $0x228] sm:$0xff]
  %v543 = vld [vmem:[%s243 + $0x230] sm:$0xff]
  %v544 = vld [vmem:[%s243 + $0x240] sm:$0xff]
  %v545 = vld [vmem:[%s243 + $0x248] sm:$0xff]
  %v546 = vld [vmem:[%s243 + $0x258] sm:$0xff]
  %v547 = vld [vmem:[%s243 + $0x260] sm:$0xff]
  %v548 = vld [vmem:[%s243 + $0x270] sm:$0xff]
  %v549 = vld [vmem:[%s243 + $0x278] sm:$0xff]
  %v550 = vld [vmem:[%s243 + $0x288] sm:$0xff]
  %v551 = vld [vmem:[%s243 + $0x290] sm:$0xff]
  %v552 = vld [vmem:[%s243 + $0x2a0] sm:$0xff]
  %v553 = vld [vmem:[%s243 + $0x2a8] sm:$0xff]
  %v554 = vld [vmem:[%s243 + $0x2b8] sm:$0xff]
  %v555 = vld [vmem:[%s243 + $0x2c0] sm:$0xff]
  %v556 = vld [vmem:[%s243 + $0x2d0] sm:$0xff]
  %v557 = vld [vmem:[%s243 + $0x2d8] sm:$0xff]
  %v558 = vld [vmem:[%s243 + $0x2e8] sm:$0xff]
  %v559 = vld [vmem:[%s243 + $0x2f0] sm:$0xff]
  %v560 = vld [vmem:[%s243 + $0x300] sm:$0xff]
  %v561 = vld [vmem:[%s243 + $0x308] sm:$0xff]
  %v562 = vld [vmem:[%s243 + $0x318] sm:$0xff]
  %v563 = vld [vmem:[%s243 + $0x320] sm:$0xff]
  %v564 = vld [vmem:[%s243 + $0x1] sm:$0xff]
  %v565 = vld [vmem:[%s243 + $0x9] sm:$0xff]
  %v566 = vld [vmem:[%s243 + $0x19] sm:$0xff]
  %v567 = vld [vmem:[%s243 + $0x21] sm:$0xff]
  %v568 = vld [vmem:[%s243 + $0x31] sm:$0xff]
  %v569 = vld [vmem:[%s243 + $0x39] sm:$0xff]
  %v570 = vld [vmem:[%s243 + $0x49] sm:$0xff]
  %v571 = vld [vmem:[%s243 + $0x51] sm:$0xff]
  %v572 = vld [vmem:[%s243 + $0x61] sm:$0xff]
  %v573 = vld [vmem:[%s243 + $0x69] sm:$0xff]
  %v574 = vld [vmem:[%s243 + $0x79] sm:$0xff]
  %v575 = vld [vmem:[%s243 + $0x81] sm:$0xff]
  %v576 = vld [vmem:[%s243 + $0x91] sm:$0xff]
  %v577 = vld [vmem:[%s243 + $0x99] sm:$0xff]
  %v578 = vld [vmem:[%s243 + $0xa9] sm:$0xff]
  %v579 = vld [vmem:[%s243 + $0xb1] sm:$0xff]
  %v580 = vld [vmem:[%s243 + $0xc1] sm:$0xff]
  %v581 = vld [vmem:[%s243 + $0xc9] sm:$0xff]
  %v582 = vld [vmem:[%s243 + $0xd9] sm:$0xff]
  %v583 = vld [vmem:[%s243 + $0xe1] sm:$0xff]
  %v584 = vld [vmem:[%s243 + $0xf1] sm:$0xff]
  %v585 = vld [vmem:[%s243 + $0xf9] sm:$0xff]
  %v586 = vld [vmem:[%s243 + $0x109] sm:$0xff]
  %v587 = vld [vmem:[%s243 + $0x111] sm:$0xff]
  %v588 = vld [vmem:[%s243 + $0x121] sm:$0xff]
  %v589 = vld [vmem:[%s243 + $0x129] sm:$0xff]
  %v590 = vld [vmem:[%s243 + $0x139] sm:$0xff]
  %v591 = vld [vmem:[%s243 + $0x141] sm:$0xff]
  %v592 = vld [vmem:[%s243 + $0x151] sm:$0xff]
  %v593 = vld [vmem:[%s243 + $0x159] sm:$0xff]
  %v594 = vld [vmem:[%s243 + $0x169] sm:$0xff]
  %v595 = vld [vmem:[%s243 + $0x171] sm:$0xff]
  %v596 = vld [vmem:[%s243 + $0x1b1] sm:$0xff]
  %v597 = vld [vmem:[%s243 + $0x1b9] sm:$0xff]
  %v598 = vld [vmem:[%s243 + $0x1c9] sm:$0xff]
  %v599 = vld [vmem:[%s243 + $0x1d1] sm:$0xff]
  %v600 = vld [vmem:[%s243 + $0x1e1] sm:$0xff]
  %v601 = vld [vmem:[%s243 + $0x1e9] sm:$0xff]
  %v602 = vld [vmem:[%s243 + $0x1f9] sm:$0xff]
  %v603 = vld [vmem:[%s243 + $0x201] sm:$0xff]
  %v604 = vld [vmem:[%s243 + $0x211] sm:$0xff]
  %v605 = vld [vmem:[%s243 + $0x219] sm:$0xff]
  %v606 = vld [vmem:[%s243 + $0x229] sm:$0xff]
  %v607 = vld [vmem:[%s243 + $0x231] sm:$0xff]
  %v608 = vld [vmem:[%s243 + $0x241] sm:$0xff]
  %v609 = vld [vmem:[%s243 + $0x249] sm:$0xff]
  %v610 = vld [vmem:[%s243 + $0x259] sm:$0xff]
  %v611 = vld [vmem:[%s243 + $0x261] sm:$0xff]
  %v612 = vld [vmem:[%s243 + $0x271] sm:$0xff]
  %v613 = vld [vmem:[%s243 + $0x279] sm:$0xff]
  %v614 = vld [vmem:[%s243 + $0x289] sm:$0xff]
  %v615 = vld [vmem:[%s243 + $0x291] sm:$0xff]
  %v616 = vld [vmem:[%s243 + $0x2a1] sm:$0xff]
  %v617 = vld [vmem:[%s243 + $0x2a9] sm:$0xff]
  %v618 = vld [vmem:[%s243 + $0x2b9] sm:$0xff]
  %v619 = vld [vmem:[%s243 + $0x2c1] sm:$0xff]
  %v620 = vld [vmem:[%s243 + $0x2d1] sm:$0xff]
  %v621 = vld [vmem:[%s243 + $0x2d9] sm:$0xff]
  %v622 = vld [vmem:[%s243 + $0x2e9] sm:$0xff]
  %v623 = vld [vmem:[%s243 + $0x2f1] sm:$0xff]
  %v624 = vld [vmem:[%s243 + $0x301] sm:$0xff]
  %v625 = vld [vmem:[%s243 + $0x309] sm:$0xff]
  %v626 = vld [vmem:[%s243 + $0x319] sm:$0xff]
  %v627 = vld [vmem:[%s243 + $0x321] sm:$0xff]
  %v628 = vld [vmem:[%s243 + $0x2] sm:$0xff]
  %v629 = vld [vmem:[%s243 + $0xa] sm:$0xff]
  %v630 = vld [vmem:[%s243 + $0x1a] sm:$0xff]
  %v631 = vld [vmem:[%s243 + $0x22] sm:$0xff]
  %v632 = vld [vmem:[%s243 + $0x32] sm:$0xff]
  %v633 = vld [vmem:[%s243 + $0x3a] sm:$0xff]
  %v634 = vld [vmem:[%s243 + $0x4a] sm:$0xff]
  %v635 = vld [vmem:[%s243 + $0x52] sm:$0xff]
  %v636 = vld [vmem:[%s243 + $0x62] sm:$0xff]
  %v637 = vld [vmem:[%s243 + $0x6a] sm:$0xff]
  %v638 = vld [vmem:[%s243 + $0x7a] sm:$0xff]
  %v639 = vld [vmem:[%s243 + $0x82] sm:$0xff]
  %v640 = vld [vmem:[%s243 + $0x92] sm:$0xff]
  %v641 = vld [vmem:[%s243 + $0x9a] sm:$0xff]
  %v642 = vld [vmem:[%s243 + $0xaa] sm:$0xff]
  %v643 = vld [vmem:[%s243 + $0xb2] sm:$0xff]
  %v644 = vld [vmem:[%s243 + $0xc2] sm:$0xff]
  %v645 = vld [vmem:[%s243 + $0xca] sm:$0xff]
  %v646 = vld [vmem:[%s243 + $0xda] sm:$0xff]
  %v647 = vld [vmem:[%s243 + $0xe2] sm:$0xff]
  %v648 = vld [vmem:[%s243 + $0xf2] sm:$0xff]
  %v649 = vld [vmem:[%s243 + $0xfa] sm:$0xff]
  %v650 = vld [vmem:[%s243 + $0x10a] sm:$0xff]
  %v651 = vld [vmem:[%s243 + $0x112] sm:$0xff]
  %v652 = vld [vmem:[%s243 + $0x122] sm:$0xff]
  %v653 = vld [vmem:[%s243 + $0x12a] sm:$0xff]
  %v654 = vld [vmem:[%s243 + $0x13a] sm:$0xff]
  %v655 = vld [vmem:[%s243 + $0x142] sm:$0xff]
  %v656 = vld [vmem:[%s243 + $0x152] sm:$0xff]
  %v657 = vld [vmem:[%s243 + $0x15a] sm:$0xff]
  %v658 = vld [vmem:[%s243 + $0x16a] sm:$0xff]
  %v659 = vld [vmem:[%s243 + $0x172] sm:$0xff]
  %v660 = vld [vmem:[%s243 + $0x1b2] sm:$0xff]
  %v661 = vld [vmem:[%s243 + $0x1ba] sm:$0xff]
  %v662 = vld [vmem:[%s243 + $0x1ca] sm:$0xff]
  %v663 = vld [vmem:[%s243 + $0x1d2] sm:$0xff]
  %v664 = vld [vmem:[%s243 + $0x1e2] sm:$0xff]
  %v665 = vld [vmem:[%s243 + $0x1ea] sm:$0xff]
  %v666 = vld [vmem:[%s243 + $0x1fa] sm:$0xff]
  %v667 = vld [vmem:[%s243 + $0x202] sm:$0xff]
  %v668 = vld [vmem:[%s243 + $0x212] sm:$0xff]
  %v669 = vld [vmem:[%s243 + $0x21a] sm:$0xff]
  %v670 = vld [vmem:[%s243 + $0x22a] sm:$0xff]
  %v671 = vld [vmem:[%s243 + $0x232] sm:$0xff]
  %v672 = vld [vmem:[%s243 + $0x242] sm:$0xff]
  %v673 = vld [vmem:[%s243 + $0x24a] sm:$0xff]
  %v674 = vld [vmem:[%s243 + $0x25a] sm:$0xff]
  %v675 = vld [vmem:[%s243 + $0x262] sm:$0xff]
  %v676 = vld [vmem:[%s243 + $0x272] sm:$0xff]
  %v677 = vld [vmem:[%s243 + $0x27a] sm:$0xff]
  %v678 = vld [vmem:[%s243 + $0x28a] sm:$0xff]
  %v679 = vld [vmem:[%s243 + $0x292] sm:$0xff]
  %v680 = vld [vmem:[%s243 + $0x2a2] sm:$0xff]
  %v681 = vld [vmem:[%s243 + $0x2aa] sm:$0xff]
  %v682 = vld [vmem:[%s243 + $0x2ba] sm:$0xff]
  %v683 = vld [vmem:[%s243 + $0x2c2] sm:$0xff]
  %v684 = vld [vmem:[%s243 + $0x2d2] sm:$0xff]
  %v685 = vld [vmem:[%s243 + $0x2da] sm:$0xff]
  %v686 = vld [vmem:[%s243 + $0x2ea] sm:$0xff]
  %v687 = vld [vmem:[%s243 + $0x2f2] sm:$0xff]
  %v688 = vld [vmem:[%s243 + $0x302] sm:$0xff]
  %v689 = vld [vmem:[%s243 + $0x30a] sm:$0xff]
  %v690 = vld [vmem:[%s243 + $0x31a] sm:$0xff]
  %v691 = vld [vmem:[%s243 + $0x322] sm:$0xff]
  %s692 = scalar_lea.vmem [#allocation2], 48
  %v693 = vld [vmem:[%s692] sm:$0xff]
  %v694 = vld [vmem:[%s692 + $0x8] sm:$0xff]
  %v695 = vld [vmem:[%s692 + $0x18] sm:$0xff]
  %v696 = vld [vmem:[%s692 + $0x20] sm:$0xff]
  %v697 = vld [vmem:[%s692 + $0x30] sm:$0xff]
  %v698 = vld [vmem:[%s692 + $0x38] sm:$0xff]
  %v699 = vld [vmem:[%s692 + $0x48] sm:$0xff]
  %v700 = vld [vmem:[%s692 + $0x50] sm:$0xff]
  %v701 = vld [vmem:[%s692 + $0x60] sm:$0xff]
  %v702 = vld [vmem:[%s692 + $0x68] sm:$0xff]
  %v703 = vld [vmem:[%s692 + $0x78] sm:$0xff]
  %v704 = vld [vmem:[%s692 + $0x80] sm:$0xff]
  %v705 = vld [vmem:[%s692 + $0x90] sm:$0xff]
  %v706 = vld [vmem:[%s692 + $0x98] sm:$0xff]
  %v707 = vld [vmem:[%s692 + $0xa8] sm:$0xff]
  %v708 = vld [vmem:[%s692 + $0xb0] sm:$0xff]
  %v709 = vld [vmem:[%s692 + $0xc0] sm:$0xff]
  %v710 = vld [vmem:[%s692 + $0xc8] sm:$0xff]
  %v711 = vld [vmem:[%s692 + $0xd8] sm:$0xff]
  %v712 = vld [vmem:[%s692 + $0xe0] sm:$0xff]
  %v713 = vld [vmem:[%s692 + $0xf0] sm:$0xff]
  %v714 = vld [vmem:[%s692 + $0xf8] sm:$0xff]
  %v715 = vld [vmem:[%s692 + $0x108] sm:$0xff]
  %v716 = vld [vmem:[%s692 + $0x110] sm:$0xff]
  %v717 = vld [vmem:[%s692 + $0x120] sm:$0xff]
  %v718 = vld [vmem:[%s692 + $0x128] sm:$0xff]
  %v719 = vld [vmem:[%s692 + $0x138] sm:$0xff]
  %v720 = vld [vmem:[%s692 + $0x140] sm:$0xff]
  %v721 = vld [vmem:[%s692 + $0x150] sm:$0xff]
  %v722 = vld [vmem:[%s692 + $0x158] sm:$0xff]
  %v723 = vld [vmem:[%s692 + $0x168] sm:$0xff]
  %v724 = vld [vmem:[%s692 + $0x170] sm:$0xff]
  %v725 = vld [vmem:[%s692 + $0x1b0] sm:$0xff]
  %v726 = vld [vmem:[%s692 + $0x1b8] sm:$0xff]
  %v727 = vld [vmem:[%s692 + $0x1c8] sm:$0xff]
  %v728 = vld [vmem:[%s692 + $0x1d0] sm:$0xff]
  %v729 = vld [vmem:[%s692 + $0x1e0] sm:$0xff]
  %v730 = vld [vmem:[%s692 + $0x1e8] sm:$0xff]
  %v731 = vld [vmem:[%s692 + $0x1f8] sm:$0xff]
  %v732 = vld [vmem:[%s692 + $0x200] sm:$0xff]
  %v733 = vld [vmem:[%s692 + $0x210] sm:$0xff]
  %v734 = vld [vmem:[%s692 + $0x218] sm:$0xff]
  %v735 = vld [vmem:[%s692 + $0x228] sm:$0xff]
  %v736 = vld [vmem:[%s692 + $0x230] sm:$0xff]
  %v737 = vld [vmem:[%s692 + $0x240] sm:$0xff]
  %v738 = vld [vmem:[%s692 + $0x248] sm:$0xff]
  %v739 = vld [vmem:[%s692 + $0x258] sm:$0xff]
  %v740 = vld [vmem:[%s692 + $0x260] sm:$0xff]
  %v741 = vld [vmem:[%s692 + $0x270] sm:$0xff]
  %v742 = vld [vmem:[%s692 + $0x278] sm:$0xff]
  %v743 = vld [vmem:[%s692 + $0x288] sm:$0xff]
  %v744 = vld [vmem:[%s692 + $0x290] sm:$0xff]
  %v745 = vld [vmem:[%s692 + $0x2a0] sm:$0xff]
  %v746 = vld [vmem:[%s692 + $0x2a8] sm:$0xff]
  %v747 = vld [vmem:[%s692 + $0x2b8] sm:$0xff]
  %v748 = vld [vmem:[%s692 + $0x2c0] sm:$0xff]
  %v749 = vld [vmem:[%s692 + $0x2d0] sm:$0xff]
  %v750 = vld [vmem:[%s692 + $0x2d8] sm:$0xff]
  %v751 = vld [vmem:[%s692 + $0x2e8] sm:$0xff]
  %v752 = vld [vmem:[%s692 + $0x2f0] sm:$0xff]
  %v753 = vld [vmem:[%s692 + $0x300] sm:$0xff]
  %v754 = vld [vmem:[%s692 + $0x308] sm:$0xff]
  %v755 = vld [vmem:[%s692 + $0x318] sm:$0xff]
  %v756 = vld [vmem:[%s692 + $0x320] sm:$0xff]
  %v757 = vld [vmem:[%s692 + $0x1] sm:$0xff]
  %v758 = vld [vmem:[%s692 + $0x9] sm:$0xff]
  %v759 = vld [vmem:[%s692 + $0x19] sm:$0xff]
  %v760 = vld [vmem:[%s692 + $0x21] sm:$0xff]
  %v761 = vld [vmem:[%s692 + $0x31] sm:$0xff]
  %v762 = vld [vmem:[%s692 + $0x39] sm:$0xff]
  %v763 = vld [vmem:[%s692 + $0x49] sm:$0xff]
  %v764 = vld [vmem:[%s692 + $0x51] sm:$0xff]
  %v765 = vld [vmem:[%s692 + $0x61] sm:$0xff]
  %v766 = vld [vmem:[%s692 + $0x69] sm:$0xff]
  %v767 = vld [vmem:[%s692 + $0x79] sm:$0xff]
  %v768 = vld [vmem:[%s692 + $0x81] sm:$0xff]
  %v769 = vld [vmem:[%s692 + $0x91] sm:$0xff]
  %v770 = vld [vmem:[%s692 + $0x99] sm:$0xff]
  %v771 = vld [vmem:[%s692 + $0xa9] sm:$0xff]
  %v772 = vld [vmem:[%s692 + $0xb1] sm:$0xff]
  %v773 = vld [vmem:[%s692 + $0xc1] sm:$0xff]
  %v774 = vld [vmem:[%s692 + $0xc9] sm:$0xff]
  %v775 = vld [vmem:[%s692 + $0xd9] sm:$0xff]
  %v776 = vld [vmem:[%s692 + $0xe1] sm:$0xff]
  %v777 = vld [vmem:[%s692 + $0xf1] sm:$0xff]
  %v778 = vld [vmem:[%s692 + $0xf9] sm:$0xff]
  %v779 = vld [vmem:[%s692 + $0x109] sm:$0xff]
  %v780 = vld [vmem:[%s692 + $0x111] sm:$0xff]
  %v781 = vld [vmem:[%s692 + $0x121] sm:$0xff]
  %v782 = vld [vmem:[%s692 + $0x129] sm:$0xff]
  %v783 = vld [vmem:[%s692 + $0x139] sm:$0xff]
  %v784 = vld [vmem:[%s692 + $0x141] sm:$0xff]
  %v785 = vld [vmem:[%s692 + $0x151] sm:$0xff]
  %v786 = vld [vmem:[%s692 + $0x159] sm:$0xff]
  %v787 = vld [vmem:[%s692 + $0x169] sm:$0xff]
  %v788 = vld [vmem:[%s692 + $0x171] sm:$0xff]
  %v789 = vld [vmem:[%s692 + $0x1b1] sm:$0xff]
  %v790 = vld [vmem:[%s692 + $0x1b9] sm:$0xff]
  %v791 = vld [vmem:[%s692 + $0x1c9] sm:$0xff]
  %v792 = vld [vmem:[%s692 + $0x1d1] sm:$0xff]
  %v793 = vld [vmem:[%s692 + $0x1e1] sm:$0xff]
  %v794 = vld [vmem:[%s692 + $0x1e9] sm:$0xff]
  %v795 = vld [vmem:[%s692 + $0x1f9] sm:$0xff]
  %v796 = vld [vmem:[%s692 + $0x201] sm:$0xff]
  %v797 = vld [vmem:[%s692 + $0x211] sm:$0xff]
  %v798 = vld [vmem:[%s692 + $0x219] sm:$0xff]
  %v799 = vld [vmem:[%s692 + $0x229] sm:$0xff]
  %v800 = vld [vmem:[%s692 + $0x231] sm:$0xff]
  %v801 = vld [vmem:[%s692 + $0x241] sm:$0xff]
  %v802 = vld [vmem:[%s692 + $0x249] sm:$0xff]
  %v803 = vld [vmem:[%s692 + $0x259] sm:$0xff]
  %v804 = vld [vmem:[%s692 + $0x261] sm:$0xff]
  %v805 = vld [vmem:[%s692 + $0x271] sm:$0xff]
  %v806 = vld [vmem:[%s692 + $0x279] sm:$0xff]
  %v807 = vld [vmem:[%s692 + $0x289] sm:$0xff]
  %v808 = vld [vmem:[%s692 + $0x291] sm:$0xff]
  %v809 = vld [vmem:[%s692 + $0x2a1] sm:$0xff]
  %v810 = vld [vmem:[%s692 + $0x2a9] sm:$0xff]
  %v811 = vld [vmem:[%s692 + $0x2b9] sm:$0xff]
  %v812 = vld [vmem:[%s692 + $0x2c1] sm:$0xff]
  %v813 = vld [vmem:[%s692 + $0x2d1] sm:$0xff]
  %v814 = vld [vmem:[%s692 + $0x2d9] sm:$0xff]
  %v815 = vld [vmem:[%s692 + $0x2e9] sm:$0xff]
  %v816 = vld [vmem:[%s692 + $0x2f1] sm:$0xff]
  %v817 = vld [vmem:[%s692 + $0x301] sm:$0xff]
  %v818 = vld [vmem:[%s692 + $0x309] sm:$0xff]
  %v819 = vld [vmem:[%s692 + $0x319] sm:$0xff]
  %v820 = vld [vmem:[%s692 + $0x321] sm:$0xff]
  %v821 = vld [vmem:[%s692 + $0x2] sm:$0xff]
  %v822 = vld [vmem:[%s692 + $0xa] sm:$0xff]
  %v823 = vld [vmem:[%s692 + $0x1a] sm:$0xff]
  %v824 = vld [vmem:[%s692 + $0x22] sm:$0xff]
  %v825 = vld [vmem:[%s692 + $0x32] sm:$0xff]
  %v826 = vld [vmem:[%s692 + $0x3a] sm:$0xff]
  %v827 = vld [vmem:[%s692 + $0x4a] sm:$0xff]
  %v828 = vld [vmem:[%s692 + $0x52] sm:$0xff]
  %v829 = vld [vmem:[%s692 + $0x62] sm:$0xff]
  %v830 = vld [vmem:[%s692 + $0x6a] sm:$0xff]
  %v831 = vld [vmem:[%s692 + $0x7a] sm:$0xff]
  %v832 = vld [vmem:[%s692 + $0x82] sm:$0xff]
  %v833 = vld [vmem:[%s692 + $0x92] sm:$0xff]
  %v834 = vld [vmem:[%s692 + $0x9a] sm:$0xff]
  %v835 = vld [vmem:[%s692 + $0xaa] sm:$0xff]
  %v836 = vld [vmem:[%s692 + $0xb2] sm:$0xff]
  %v837 = vld [vmem:[%s692 + $0xc2] sm:$0xff]
  %v838 = vld [vmem:[%s692 + $0xca] sm:$0xff]
  %v839 = vld [vmem:[%s692 + $0xda] sm:$0xff]
  %v840 = vld [vmem:[%s692 + $0xe2] sm:$0xff]
  %v841 = vld [vmem:[%s692 + $0xf2] sm:$0xff]
  %v842 = vld [vmem:[%s692 + $0xfa] sm:$0xff]
  %v843 = vld [vmem:[%s692 + $0x10a] sm:$0xff]
  %v844 = vld [vmem:[%s692 + $0x112] sm:$0xff]
  %v845 = vld [vmem:[%s692 + $0x122] sm:$0xff]
  %v846 = vld [vmem:[%s692 + $0x12a] sm:$0xff]
  %v847 = vld [vmem:[%s692 + $0x13a] sm:$0xff]
  %v848 = vld [vmem:[%s692 + $0x142] sm:$0xff]
  %v849 = vld [vmem:[%s692 + $0x152] sm:$0xff]
  %v850 = vld [vmem:[%s692 + $0x15a] sm:$0xff]
  %v851 = vld [vmem:[%s692 + $0x16a] sm:$0xff]
  %v852 = vld [vmem:[%s692 + $0x172] sm:$0xff]
  %v853 = vld [vmem:[%s692 + $0x1b2] sm:$0xff]
  %v854 = vld [vmem:[%s692 + $0x1ba] sm:$0xff]
  %v855 = vld [vmem:[%s692 + $0x1ca] sm:$0xff]
  %v856 = vld [vmem:[%s692 + $0x1d2] sm:$0xff]
  %v857 = vld [vmem:[%s692 + $0x1e2] sm:$0xff]
  %v858 = vld [vmem:[%s692 + $0x1ea] sm:$0xff]
  %v859 = vld [vmem:[%s692 + $0x1fa] sm:$0xff]
  %v860 = vld [vmem:[%s692 + $0x202] sm:$0xff]
  %v861 = vld [vmem:[%s692 + $0x212] sm:$0xff]
  %v862 = vld [vmem:[%s692 + $0x21a] sm:$0xff]
  %v863 = vld [vmem:[%s692 + $0x22a] sm:$0xff]
  %v864 = vld [vmem:[%s692 + $0x232] sm:$0xff]
  %v865 = vld [vmem:[%s692 + $0x242] sm:$0xff]
  %v866 = vld [vmem:[%s692 + $0x24a] sm:$0xff]
  %v867 = vld [vmem:[%s692 + $0x25a] sm:$0xff]
  %v868 = vld [vmem:[%s692 + $0x262] sm:$0xff]
  %v869 = vld [vmem:[%s692 + $0x272] sm:$0xff]
  %v870 = vld [vmem:[%s692 + $0x27a] sm:$0xff]
  %v871 = vld [vmem:[%s692 + $0x28a] sm:$0xff]
  %v872 = vld [vmem:[%s692 + $0x292] sm:$0xff]
  %v873 = vld [vmem:[%s692 + $0x2a2] sm:$0xff]
  %v874 = vld [vmem:[%s692 + $0x2aa] sm:$0xff]
  %v875 = vld [vmem:[%s692 + $0x2ba] sm:$0xff]
  %v876 = vld [vmem:[%s692 + $0x2c2] sm:$0xff]
  %v877 = vld [vmem:[%s692 + $0x2d2] sm:$0xff]
  %v878 = vld [vmem:[%s692 + $0x2da] sm:$0xff]
  %v879 = vld [vmem:[%s692 + $0x2ea] sm:$0xff]
  %v880 = vld [vmem:[%s692 + $0x2f2] sm:$0xff]
  %v881 = vld [vmem:[%s692 + $0x302] sm:$0xff]
  %v882 = vld [vmem:[%s692 + $0x30a] sm:$0xff]
  %v883 = vld [vmem:[%s692 + $0x31a] sm:$0xff]
  %v884 = vld [vmem:[%s692 + $0x322] sm:$0xff]
  %949 = vrot.lane.b32.xlu0 %v372, 4
  %v950 = vpop.permute.xlu0 %949
  %951 = vrot.lane.b32.xlu0 %v373, 4
  %v952 = vpop.permute.xlu0 %951
  %953 = vrot.lane.b32.xlu0 %v374, 4
  %v954 = vpop.permute.xlu0 %953
  %955 = vrot.lane.b32.xlu0 %v375, 4
  %v956 = vpop.permute.xlu0 %955
  %957 = vrot.lane.b32.xlu0 %v376, 4
  %v958 = vpop.permute.xlu0 %957
  %959 = vrot.lane.b32.xlu0 %v377, 4
  %v960 = vpop.permute.xlu0 %959
  %961 = vrot.lane.b32.xlu0 %v378, 4
  %v962 = vpop.permute.xlu0 %961
  %963 = vrot.lane.b32.xlu0 %v379, 4
  %v964 = vpop.permute.xlu0 %963
  %965 = vrot.lane.b32.xlu0 %v380, 4
  %v966 = vpop.permute.xlu0 %965
  %967 = vrot.lane.b32.xlu0 %v381, 4
  %v968 = vpop.permute.xlu0 %967
  %969 = vrot.lane.b32.xlu0 %v382, 4
  %v970 = vpop.permute.xlu0 %969
  %971 = vrot.lane.b32.xlu0 %v383, 4
  %v972 = vpop.permute.xlu0 %971
  %973 = vrot.lane.b32.xlu0 %v384, 4
  %v974 = vpop.permute.xlu0 %973
  %975 = vrot.lane.b32.xlu0 %v385, 4
  %v976 = vpop.permute.xlu0 %975
  %977 = vrot.lane.b32.xlu0 %v386, 4
  %v978 = vpop.permute.xlu0 %977
  %979 = vrot.lane.b32.xlu0 %v387, 4
  %v980 = vpop.permute.xlu0 %979
  %981 = vrot.lane.b32.xlu0 %v388, 4
  %v982 = vpop.permute.xlu0 %981
  %983 = vrot.lane.b32.xlu0 %v389, 4
  %v984 = vpop.permute.xlu0 %983
  %985 = vrot.lane.b32.xlu0 %v390, 4
  %v986 = vpop.permute.xlu0 %985
  %987 = vrot.lane.b32.xlu0 %v391, 4
  %v988 = vpop.permute.xlu0 %987
  %989 = vrot.lane.b32.xlu0 %v392, 4
  %v990 = vpop.permute.xlu0 %989
  %991 = vrot.lane.b32.xlu0 %v393, 4
  %v992 = vpop.permute.xlu0 %991
  %993 = vrot.lane.b32.xlu0 %v394, 4
  %v994 = vpop.permute.xlu0 %993
  %995 = vrot.lane.b32.xlu0 %v395, 4
  %v996 = vpop.permute.xlu0 %995
  %997 = vrot.lane.b32.xlu0 %v396, 4
  %v998 = vpop.permute.xlu0 %997
  %999 = vrot.lane.b32.xlu0 %v397, 4
  %v1000 = vpop.permute.xlu0 %999
  %1001 = vrot.lane.b32.xlu0 %v398, 4
  %v1002 = vpop.permute.xlu0 %1001
  %1003 = vrot.lane.b32.xlu0 %v399, 4
  %v1004 = vpop.permute.xlu0 %1003
  %1005 = vrot.lane.b32.xlu0 %v400, 4
  %v1006 = vpop.permute.xlu0 %1005
  %1007 = vrot.lane.b32.xlu0 %v401, 4
  %v1008 = vpop.permute.xlu0 %1007
  %1009 = vrot.lane.b32.xlu0 %v402, 4
  %v1010 = vpop.permute.xlu0 %1009
  %1011 = vrot.lane.b32.xlu0 %v403, 4
  %v1012 = vpop.permute.xlu0 %1011
  %1013 = vrot.lane.b32.xlu0 %v404, 4
  %v1014 = vpop.permute.xlu0 %1013
  %1015 = vrot.lane.b32.xlu0 %v405, 4
  %v1016 = vpop.permute.xlu0 %1015
  %1017 = vrot.lane.b32.xlu0 %v406, 4
  %v1018 = vpop.permute.xlu0 %1017
  %1019 = vrot.lane.b32.xlu0 %v407, 4
  %v1020 = vpop.permute.xlu0 %1019
  %1021 = vrot.lane.b32.xlu0 %v408, 4
  %v1022 = vpop.permute.xlu0 %1021
  %1023 = vrot.lane.b32.xlu0 %v409, 4
  %v1024 = vpop.permute.xlu0 %1023
  %1025 = vrot.lane.b32.xlu0 %v410, 4
  %v1026 = vpop.permute.xlu0 %1025
  %1027 = vrot.lane.b32.xlu0 %v411, 4
  %v1028 = vpop.permute.xlu0 %1027
  %1029 = vrot.lane.b32.xlu0 %v412, 4
  %v1030 = vpop.permute.xlu0 %1029
  %1031 = vrot.lane.b32.xlu0 %v413, 4
  %v1032 = vpop.permute.xlu0 %1031
  %1033 = vrot.lane.b32.xlu0 %v414, 4
  %v1034 = vpop.permute.xlu0 %1033
  %1035 = vrot.lane.b32.xlu0 %v415, 4
  %v1036 = vpop.permute.xlu0 %1035
  %1037 = vrot.lane.b32.xlu0 %v416, 4
  %v1038 = vpop.permute.xlu0 %1037
  %1039 = vrot.lane.b32.xlu0 %v417, 4
  %v1040 = vpop.permute.xlu0 %1039
  %1041 = vrot.lane.b32.xlu0 %v418, 4
  %v1042 = vpop.permute.xlu0 %1041
  %1043 = vrot.lane.b32.xlu0 %v419, 4
  %v1044 = vpop.permute.xlu0 %1043
  %1045 = vrot.lane.b32.xlu0 %v420, 4
  %v1046 = vpop.permute.xlu0 %1045
  %1047 = vrot.lane.b32.xlu0 %v421, 4
  %v1048 = vpop.permute.xlu0 %1047
  %1049 = vrot.lane.b32.xlu0 %v422, 4
  %v1050 = vpop.permute.xlu0 %1049
  %1051 = vrot.lane.b32.xlu0 %v423, 4
  %v1052 = vpop.permute.xlu0 %1051
  %1053 = vrot.lane.b32.xlu0 %v424, 4
  %v1054 = vpop.permute.xlu0 %1053
  %1055 = vrot.lane.b32.xlu0 %v425, 4
  %v1056 = vpop.permute.xlu0 %1055
  %1057 = vrot.lane.b32.xlu0 %v426, 4
  %v1058 = vpop.permute.xlu0 %1057
  %1059 = vrot.lane.b32.xlu0 %v427, 4
  %v1060 = vpop.permute.xlu0 %1059
  %1061 = vrot.lane.b32.xlu0 %v428, 4
  %v1062 = vpop.permute.xlu0 %1061
  %1063 = vrot.lane.b32.xlu0 %v429, 4
  %v1064 = vpop.permute.xlu0 %1063
  %1065 = vrot.lane.b32.xlu0 %v430, 4
  %v1066 = vpop.permute.xlu0 %1065
  %1067 = vrot.lane.b32.xlu0 %v431, 4
  %v1068 = vpop.permute.xlu0 %1067
  %1069 = vrot.lane.b32.xlu0 %v432, 4
  %v1070 = vpop.permute.xlu0 %1069
  %1071 = vrot.lane.b32.xlu0 %v433, 4
  %v1072 = vpop.permute.xlu0 %1071
  %1073 = vrot.lane.b32.xlu0 %v434, 4
  %v1074 = vpop.permute.xlu0 %1073
  %1075 = vrot.lane.b32.xlu0 %v435, 4
  %v1076 = vpop.permute.xlu0 %1075
  %1205 = vrot.lane.b32.xlu0 %v436, 8
  %v1206 = vpop.permute.xlu0 %1205
  %1207 = vrot.lane.b32.xlu0 %v437, 8
  %v1208 = vpop.permute.xlu0 %1207
  %1209 = vrot.lane.b32.xlu0 %v438, 8
  %v1210 = vpop.permute.xlu0 %1209
  %1211 = vrot.lane.b32.xlu0 %v439, 8
  %v1212 = vpop.permute.xlu0 %1211
  %1213 = vrot.lane.b32.xlu0 %v440, 8
  %v1214 = vpop.permute.xlu0 %1213
  %1215 = vrot.lane.b32.xlu0 %v441, 8
  %v1216 = vpop.permute.xlu0 %1215
  %1217 = vrot.lane.b32.xlu0 %v442, 8
  %v1218 = vpop.permute.xlu0 %1217
  %1219 = vrot.lane.b32.xlu0 %v443, 8
  %v1220 = vpop.permute.xlu0 %1219
  %1221 = vrot.lane.b32.xlu0 %v444, 8
  %v1222 = vpop.permute.xlu0 %1221
  %1223 = vrot.lane.b32.xlu0 %v445, 8
  %v1224 = vpop.permute.xlu0 %1223
  %1225 = vrot.lane.b32.xlu0 %v446, 8
  %v1226 = vpop.permute.xlu0 %1225
  %1227 = vrot.lane.b32.xlu0 %v447, 8
  %v1228 = vpop.permute.xlu0 %1227
  %1229 = vrot.lane.b32.xlu0 %v448, 8
  %v1230 = vpop.permute.xlu0 %1229
  %1231 = vrot.lane.b32.xlu0 %v449, 8
  %v1232 = vpop.permute.xlu0 %1231
  %1233 = vrot.lane.b32.xlu0 %v450, 8
  %v1234 = vpop.permute.xlu0 %1233
  %1235 = vrot.lane.b32.xlu0 %v451, 8
  %v1236 = vpop.permute.xlu0 %1235
  %1237 = vrot.lane.b32.xlu0 %v452, 8
  %v1238 = vpop.permute.xlu0 %1237
  %1239 = vrot.lane.b32.xlu0 %v453, 8
  %v1240 = vpop.permute.xlu0 %1239
  %1241 = vrot.lane.b32.xlu0 %v454, 8
  %v1242 = vpop.permute.xlu0 %1241
  %1243 = vrot.lane.b32.xlu0 %v455, 8
  %v1244 = vpop.permute.xlu0 %1243
  %1245 = vrot.lane.b32.xlu0 %v456, 8
  %v1246 = vpop.permute.xlu0 %1245
  %1247 = vrot.lane.b32.xlu0 %v457, 8
  %v1248 = vpop.permute.xlu0 %1247
  %1249 = vrot.lane.b32.xlu0 %v458, 8
  %v1250 = vpop.permute.xlu0 %1249
  %1251 = vrot.lane.b32.xlu0 %v459, 8
  %v1252 = vpop.permute.xlu0 %1251
  %1253 = vrot.lane.b32.xlu0 %v460, 8
  %v1254 = vpop.permute.xlu0 %1253
  %1255 = vrot.lane.b32.xlu0 %v461, 8
  %v1256 = vpop.permute.xlu0 %1255
  %1257 = vrot.lane.b32.xlu0 %v462, 8
  %v1258 = vpop.permute.xlu0 %1257
  %1259 = vrot.lane.b32.xlu0 %v463, 8
  %v1260 = vpop.permute.xlu0 %1259
  %1261 = vrot.lane.b32.xlu0 %v464, 8
  %v1262 = vpop.permute.xlu0 %1261
  %1263 = vrot.lane.b32.xlu0 %v465, 8
  %v1264 = vpop.permute.xlu0 %1263
  %1265 = vrot.lane.b32.xlu0 %v466, 8
  %v1266 = vpop.permute.xlu0 %1265
  %1267 = vrot.lane.b32.xlu0 %v467, 8
  %v1268 = vpop.permute.xlu0 %1267
  %1269 = vrot.lane.b32.xlu0 %v468, 8
  %v1270 = vpop.permute.xlu0 %1269
  %1271 = vrot.lane.b32.xlu0 %v469, 8
  %v1272 = vpop.permute.xlu0 %1271
  %1273 = vrot.lane.b32.xlu0 %v470, 8
  %v1274 = vpop.permute.xlu0 %1273
  %1275 = vrot.lane.b32.xlu0 %v471, 8
  %v1276 = vpop.permute.xlu0 %1275
  %1277 = vrot.lane.b32.xlu0 %v472, 8
  %v1278 = vpop.permute.xlu0 %1277
  %1279 = vrot.lane.b32.xlu0 %v473, 8
  %v1280 = vpop.permute.xlu0 %1279
  %1281 = vrot.lane.b32.xlu0 %v474, 8
  %v1282 = vpop.permute.xlu0 %1281
  %1283 = vrot.lane.b32.xlu0 %v475, 8
  %v1284 = vpop.permute.xlu0 %1283
  %1285 = vrot.lane.b32.xlu0 %v476, 8
  %v1286 = vpop.permute.xlu0 %1285
  %1287 = vrot.lane.b32.xlu0 %v477, 8
  %v1288 = vpop.permute.xlu0 %1287
  %1289 = vrot.lane.b32.xlu0 %v478, 8
  %v1290 = vpop.permute.xlu0 %1289
  %1291 = vrot.lane.b32.xlu0 %v479, 8
  %v1292 = vpop.permute.xlu0 %1291
  %1293 = vrot.lane.b32.xlu0 %v480, 8
  %v1294 = vpop.permute.xlu0 %1293
  %1295 = vrot.lane.b32.xlu0 %v481, 8
  %v1296 = vpop.permute.xlu0 %1295
  %1297 = vrot.lane.b32.xlu0 %v482, 8
  %v1298 = vpop.permute.xlu0 %1297
  %1299 = vrot.lane.b32.xlu0 %v483, 8
  %v1300 = vpop.permute.xlu0 %1299
  %1301 = vrot.lane.b32.xlu0 %v484, 8
  %v1302 = vpop.permute.xlu0 %1301
  %1303 = vrot.lane.b32.xlu0 %v485, 8
  %v1304 = vpop.permute.xlu0 %1303
  %1305 = vrot.lane.b32.xlu0 %v486, 8
  %v1306 = vpop.permute.xlu0 %1305
  %1307 = vrot.lane.b32.xlu0 %v487, 8
  %v1308 = vpop.permute.xlu0 %1307
  %1309 = vrot.lane.b32.xlu0 %v488, 8
  %v1310 = vpop.permute.xlu0 %1309
  %1311 = vrot.lane.b32.xlu0 %v489, 8
  %v1312 = vpop.permute.xlu0 %1311
  %1313 = vrot.lane.b32.xlu0 %v490, 8
  %v1314 = vpop.permute.xlu0 %1313
  %1315 = vrot.lane.b32.xlu0 %v491, 8
  %v1316 = vpop.permute.xlu0 %1315
  %1317 = vrot.lane.b32.xlu0 %v492, 8
  %v1318 = vpop.permute.xlu0 %1317
  %1319 = vrot.lane.b32.xlu0 %v493, 8
  %v1320 = vpop.permute.xlu0 %1319
  %1321 = vrot.lane.b32.xlu0 %v494, 8
  %v1322 = vpop.permute.xlu0 %1321
  %1323 = vrot.lane.b32.xlu0 %v495, 8
  %v1324 = vpop.permute.xlu0 %1323
  %1325 = vrot.lane.b32.xlu0 %v496, 8
  %v1326 = vpop.permute.xlu0 %1325
  %1327 = vrot.lane.b32.xlu0 %v497, 8
  %v1328 = vpop.permute.xlu0 %1327
  %1329 = vrot.lane.b32.xlu0 %v498, 8
  %v1330 = vpop.permute.xlu0 %1329
  %1331 = vrot.lane.b32.xlu0 %v499, 8
  %v1332 = vpop.permute.xlu0 %1331
  %1461 = vrot.lane.b32.xlu0 %v500, 12
  %v1462 = vpop.permute.xlu0 %1461
  %1463 = vrot.lane.b32.xlu0 %v501, 12
  %v1464 = vpop.permute.xlu0 %1463
  %1465 = vrot.lane.b32.xlu0 %v502, 12
  %v1466 = vpop.permute.xlu0 %1465
  %1467 = vrot.lane.b32.xlu0 %v503, 12
  %v1468 = vpop.permute.xlu0 %1467
  %1469 = vrot.lane.b32.xlu0 %v504, 12
  %v1470 = vpop.permute.xlu0 %1469
  %1471 = vrot.lane.b32.xlu0 %v505, 12
  %v1472 = vpop.permute.xlu0 %1471
  %1473 = vrot.lane.b32.xlu0 %v506, 12
  %v1474 = vpop.permute.xlu0 %1473
  %1475 = vrot.lane.b32.xlu0 %v507, 12
  %v1476 = vpop.permute.xlu0 %1475
  %1477 = vrot.lane.b32.xlu0 %v508, 12
  %v1478 = vpop.permute.xlu0 %1477
  %1479 = vrot.lane.b32.xlu0 %v509, 12
  %v1480 = vpop.permute.xlu0 %1479
  %1481 = vrot.lane.b32.xlu0 %v510, 12
  %v1482 = vpop.permute.xlu0 %1481
  %1483 = vrot.lane.b32.xlu0 %v511, 12
  %v1484 = vpop.permute.xlu0 %1483
  %1485 = vrot.lane.b32.xlu0 %v512, 12
  %v1486 = vpop.permute.xlu0 %1485
  %1487 = vrot.lane.b32.xlu0 %v513, 12
  %v1488 = vpop.permute.xlu0 %1487
  %1489 = vrot.lane.b32.xlu0 %v514, 12
  %v1490 = vpop.permute.xlu0 %1489
  %1491 = vrot.lane.b32.xlu0 %v515, 12
  %v1492 = vpop.permute.xlu0 %1491
  %1493 = vrot.lane.b32.xlu0 %v516, 12
  %v1494 = vpop.permute.xlu0 %1493
  %1495 = vrot.lane.b32.xlu0 %v517, 12
  %v1496 = vpop.permute.xlu0 %1495
  %1497 = vrot.lane.b32.xlu0 %v518, 12
  %v1498 = vpop.permute.xlu0 %1497
  %1499 = vrot.lane.b32.xlu0 %v519, 12
  %v1500 = vpop.permute.xlu0 %1499
  %1501 = vrot.lane.b32.xlu0 %v520, 12
  %v1502 = vpop.permute.xlu0 %1501
  %1503 = vrot.lane.b32.xlu0 %v521, 12
  %v1504 = vpop.permute.xlu0 %1503
  %1505 = vrot.lane.b32.xlu0 %v522, 12
  %v1506 = vpop.permute.xlu0 %1505
  %1507 = vrot.lane.b32.xlu0 %v523, 12
  %v1508 = vpop.permute.xlu0 %1507
  %1509 = vrot.lane.b32.xlu0 %v524, 12
  %v1510 = vpop.permute.xlu0 %1509
  %1511 = vrot.lane.b32.xlu0 %v525, 12
  %v1512 = vpop.permute.xlu0 %1511
  %1513 = vrot.lane.b32.xlu0 %v526, 12
  %v1514 = vpop.permute.xlu0 %1513
  %1515 = vrot.lane.b32.xlu0 %v527, 12
  %v1516 = vpop.permute.xlu0 %1515
  %1517 = vrot.lane.b32.xlu0 %v528, 12
  %v1518 = vpop.permute.xlu0 %1517
  %1519 = vrot.lane.b32.xlu0 %v529, 12
  %v1520 = vpop.permute.xlu0 %1519
  %1521 = vrot.lane.b32.xlu0 %v530, 12
  %v1522 = vpop.permute.xlu0 %1521
  %1523 = vrot.lane.b32.xlu0 %v531, 12
  %v1524 = vpop.permute.xlu0 %1523
  %1525 = vrot.lane.b32.xlu0 %v532, 12
  %v1526 = vpop.permute.xlu0 %1525
  %1527 = vrot.lane.b32.xlu0 %v533, 12
  %v1528 = vpop.permute.xlu0 %1527
  %1529 = vrot.lane.b32.xlu0 %v534, 12
  %v1530 = vpop.permute.xlu0 %1529
  %1531 = vrot.lane.b32.xlu0 %v535, 12
  %v1532 = vpop.permute.xlu0 %1531
  %1533 = vrot.lane.b32.xlu0 %v536, 12
  %v1534 = vpop.permute.xlu0 %1533
  %1535 = vrot.lane.b32.xlu0 %v537, 12
  %v1536 = vpop.permute.xlu0 %1535
  %1537 = vrot.lane.b32.xlu0 %v538, 12
  %v1538 = vpop.permute.xlu0 %1537
  %1539 = vrot.lane.b32.xlu0 %v539, 12
  %v1540 = vpop.permute.xlu0 %1539
  %1541 = vrot.lane.b32.xlu0 %v540, 12
  %v1542 = vpop.permute.xlu0 %1541
  %1543 = vrot.lane.b32.xlu0 %v541, 12
  %v1544 = vpop.permute.xlu0 %1543
  %1545 = vrot.lane.b32.xlu0 %v542, 12
  %v1546 = vpop.permute.xlu0 %1545
  %1547 = vrot.lane.b32.xlu0 %v543, 12
  %v1548 = vpop.permute.xlu0 %1547
  %1549 = vrot.lane.b32.xlu0 %v544, 12
  %v1550 = vpop.permute.xlu0 %1549
  %1551 = vrot.lane.b32.xlu0 %v545, 12
  %v1552 = vpop.permute.xlu0 %1551
  %1553 = vrot.lane.b32.xlu0 %v546, 12
  %v1554 = vpop.permute.xlu0 %1553
  %1555 = vrot.lane.b32.xlu0 %v547, 12
  %v1556 = vpop.permute.xlu0 %1555
  %1557 = vrot.lane.b32.xlu0 %v548, 12
  %v1558 = vpop.permute.xlu0 %1557
  %1559 = vrot.lane.b32.xlu0 %v549, 12
  %v1560 = vpop.permute.xlu0 %1559
  %1561 = vrot.lane.b32.xlu0 %v550, 12
  %v1562 = vpop.permute.xlu0 %1561
  %1563 = vrot.lane.b32.xlu0 %v551, 12
  %v1564 = vpop.permute.xlu0 %1563
  %1565 = vrot.lane.b32.xlu0 %v552, 12
  %v1566 = vpop.permute.xlu0 %1565
  %1567 = vrot.lane.b32.xlu0 %v553, 12
  %v1568 = vpop.permute.xlu0 %1567
  %1569 = vrot.lane.b32.xlu0 %v554, 12
  %v1570 = vpop.permute.xlu0 %1569
  %1571 = vrot.lane.b32.xlu0 %v555, 12
  %v1572 = vpop.permute.xlu0 %1571
  %1573 = vrot.lane.b32.xlu0 %v556, 12
  %v1574 = vpop.permute.xlu0 %1573
  %1575 = vrot.lane.b32.xlu0 %v557, 12
  %v1576 = vpop.permute.xlu0 %1575
  %1577 = vrot.lane.b32.xlu0 %v558, 12
  %v1578 = vpop.permute.xlu0 %1577
  %1579 = vrot.lane.b32.xlu0 %v559, 12
  %v1580 = vpop.permute.xlu0 %1579
  %1581 = vrot.lane.b32.xlu0 %v560, 12
  %v1582 = vpop.permute.xlu0 %1581
  %1583 = vrot.lane.b32.xlu0 %v561, 12
  %v1584 = vpop.permute.xlu0 %1583
  %1585 = vrot.lane.b32.xlu0 %v562, 12
  %v1586 = vpop.permute.xlu0 %1585
  %1587 = vrot.lane.b32.xlu0 %v563, 12
  %v1588 = vpop.permute.xlu0 %1587
  %1717 = vrot.lane.b32.xlu0 %v564, 16
  %v1718 = vpop.permute.xlu0 %1717
  %1719 = vrot.lane.b32.xlu0 %v565, 16
  %v1720 = vpop.permute.xlu0 %1719
  %1721 = vrot.lane.b32.xlu0 %v566, 16
  %v1722 = vpop.permute.xlu0 %1721
  %1723 = vrot.lane.b32.xlu0 %v567, 16
  %v1724 = vpop.permute.xlu0 %1723
  %1725 = vrot.lane.b32.xlu0 %v568, 16
  %v1726 = vpop.permute.xlu0 %1725
  %1727 = vrot.lane.b32.xlu0 %v569, 16
  %v1728 = vpop.permute.xlu0 %1727
  %1729 = vrot.lane.b32.xlu0 %v570, 16
  %v1730 = vpop.permute.xlu0 %1729
  %1731 = vrot.lane.b32.xlu0 %v571, 16
  %v1732 = vpop.permute.xlu0 %1731
  %1733 = vrot.lane.b32.xlu0 %v572, 16
  %v1734 = vpop.permute.xlu0 %1733
  %1735 = vrot.lane.b32.xlu0 %v573, 16
  %v1736 = vpop.permute.xlu0 %1735
  %1737 = vrot.lane.b32.xlu0 %v574, 16
  %v1738 = vpop.permute.xlu0 %1737
  %1739 = vrot.lane.b32.xlu0 %v575, 16
  %v1740 = vpop.permute.xlu0 %1739
  %1741 = vrot.lane.b32.xlu0 %v576, 16
  %v1742 = vpop.permute.xlu0 %1741
  %1743 = vrot.lane.b32.xlu0 %v577, 16
  %v1744 = vpop.permute.xlu0 %1743
  %1745 = vrot.lane.b32.xlu0 %v578, 16
  %v1746 = vpop.permute.xlu0 %1745
  %1747 = vrot.lane.b32.xlu0 %v579, 16
  %v1748 = vpop.permute.xlu0 %1747
  %1749 = vrot.lane.b32.xlu0 %v580, 16
  %v1750 = vpop.permute.xlu0 %1749
  %1751 = vrot.lane.b32.xlu0 %v581, 16
  %v1752 = vpop.permute.xlu0 %1751
  %1753 = vrot.lane.b32.xlu0 %v582, 16
  %v1754 = vpop.permute.xlu0 %1753
  %1755 = vrot.lane.b32.xlu0 %v583, 16
  %v1756 = vpop.permute.xlu0 %1755
  %1757 = vrot.lane.b32.xlu0 %v584, 16
  %v1758 = vpop.permute.xlu0 %1757
  %1759 = vrot.lane.b32.xlu0 %v585, 16
  %v1760 = vpop.permute.xlu0 %1759
  %1761 = vrot.lane.b32.xlu0 %v586, 16
  %v1762 = vpop.permute.xlu0 %1761
  %1763 = vrot.lane.b32.xlu0 %v587, 16
  %v1764 = vpop.permute.xlu0 %1763
  %1765 = vrot.lane.b32.xlu0 %v588, 16
  %v1766 = vpop.permute.xlu0 %1765
  %1767 = vrot.lane.b32.xlu0 %v589, 16
  %v1768 = vpop.permute.xlu0 %1767
  %1769 = vrot.lane.b32.xlu0 %v590, 16
  %v1770 = vpop.permute.xlu0 %1769
  %1771 = vrot.lane.b32.xlu0 %v591, 16
  %v1772 = vpop.permute.xlu0 %1771
  %1773 = vrot.lane.b32.xlu0 %v592, 16
  %v1774 = vpop.permute.xlu0 %1773
  %1775 = vrot.lane.b32.xlu0 %v593, 16
  %v1776 = vpop.permute.xlu0 %1775
  %1777 = vrot.lane.b32.xlu0 %v594, 16
  %v1778 = vpop.permute.xlu0 %1777
  %1779 = vrot.lane.b32.xlu0 %v595, 16
  %v1780 = vpop.permute.xlu0 %1779
  %1781 = vrot.lane.b32.xlu0 %v596, 16
  %v1782 = vpop.permute.xlu0 %1781
  %1783 = vrot.lane.b32.xlu0 %v597, 16
  %v1784 = vpop.permute.xlu0 %1783
  %1785 = vrot.lane.b32.xlu0 %v598, 16
  %v1786 = vpop.permute.xlu0 %1785
  %1787 = vrot.lane.b32.xlu0 %v599, 16
  %v1788 = vpop.permute.xlu0 %1787
  %1789 = vrot.lane.b32.xlu0 %v600, 16
  %v1790 = vpop.permute.xlu0 %1789
  %1791 = vrot.lane.b32.xlu0 %v601, 16
  %v1792 = vpop.permute.xlu0 %1791
  %1793 = vrot.lane.b32.xlu0 %v602, 16
  %v1794 = vpop.permute.xlu0 %1793
  %1795 = vrot.lane.b32.xlu0 %v603, 16
  %v1796 = vpop.permute.xlu0 %1795
  %1797 = vrot.lane.b32.xlu0 %v604, 16
  %v1798 = vpop.permute.xlu0 %1797
  %1799 = vrot.lane.b32.xlu0 %v605, 16
  %v1800 = vpop.permute.xlu0 %1799
  %1801 = vrot.lane.b32.xlu0 %v606, 16
  %v1802 = vpop.permute.xlu0 %1801
  %1803 = vrot.lane.b32.xlu0 %v607, 16
  %v1804 = vpop.permute.xlu0 %1803
  %1805 = vrot.lane.b32.xlu0 %v608, 16
  %v1806 = vpop.permute.xlu0 %1805
  %1807 = vrot.lane.b32.xlu0 %v609, 16
  %v1808 = vpop.permute.xlu0 %1807
  %1809 = vrot.lane.b32.xlu0 %v610, 16
  %v1810 = vpop.permute.xlu0 %1809
  %1811 = vrot.lane.b32.xlu0 %v611, 16
  %v1812 = vpop.permute.xlu0 %1811
  %1813 = vrot.lane.b32.xlu0 %v612, 16
  %v1814 = vpop.permute.xlu0 %1813
  %1815 = vrot.lane.b32.xlu0 %v613, 16
  %v1816 = vpop.permute.xlu0 %1815
  %1817 = vrot.lane.b32.xlu0 %v614, 16
  %v1818 = vpop.permute.xlu0 %1817
  %1819 = vrot.lane.b32.xlu0 %v615, 16
  %v1820 = vpop.permute.xlu0 %1819
  %1821 = vrot.lane.b32.xlu0 %v616, 16
  %v1822 = vpop.permute.xlu0 %1821
  %1823 = vrot.lane.b32.xlu0 %v617, 16
  %v1824 = vpop.permute.xlu0 %1823
  %1825 = vrot.lane.b32.xlu0 %v618, 16
  %v1826 = vpop.permute.xlu0 %1825
  %1827 = vrot.lane.b32.xlu0 %v619, 16
  %v1828 = vpop.permute.xlu0 %1827
  %1829 = vrot.lane.b32.xlu0 %v620, 16
  %v1830 = vpop.permute.xlu0 %1829
  %1831 = vrot.lane.b32.xlu0 %v621, 16
  %v1832 = vpop.permute.xlu0 %1831
  %1833 = vrot.lane.b32.xlu0 %v622, 16
  %v1834 = vpop.permute.xlu0 %1833
  %1835 = vrot.lane.b32.xlu0 %v623, 16
  %v1836 = vpop.permute.xlu0 %1835
  %1837 = vrot.lane.b32.xlu0 %v624, 16
  %v1838 = vpop.permute.xlu0 %1837
  %1839 = vrot.lane.b32.xlu0 %v625, 16
  %v1840 = vpop.permute.xlu0 %1839
  %1841 = vrot.lane.b32.xlu0 %v626, 16
  %v1842 = vpop.permute.xlu0 %1841
  %1843 = vrot.lane.b32.xlu0 %v627, 16
  %v1844 = vpop.permute.xlu0 %1843
  %1973 = vrot.lane.b32.xlu0 %v628, 20
  %v1974 = vpop.permute.xlu0 %1973
  %1975 = vrot.lane.b32.xlu0 %v629, 20
  %v1976 = vpop.permute.xlu0 %1975
  %1977 = vrot.lane.b32.xlu0 %v630, 20
  %v1978 = vpop.permute.xlu0 %1977
  %1979 = vrot.lane.b32.xlu0 %v631, 20
  %v1980 = vpop.permute.xlu0 %1979
  %1981 = vrot.lane.b32.xlu0 %v632, 20
  %v1982 = vpop.permute.xlu0 %1981
  %1983 = vrot.lane.b32.xlu0 %v633, 20
  %v1984 = vpop.permute.xlu0 %1983
  %1985 = vrot.lane.b32.xlu0 %v634, 20
  %v1986 = vpop.permute.xlu0 %1985
  %1987 = vrot.lane.b32.xlu0 %v635, 20
  %v1988 = vpop.permute.xlu0 %1987
  %1989 = vrot.lane.b32.xlu0 %v636, 20
  %v1990 = vpop.permute.xlu0 %1989
  %1991 = vrot.lane.b32.xlu0 %v637, 20
  %v1992 = vpop.permute.xlu0 %1991
  %1993 = vrot.lane.b32.xlu0 %v638, 20
  %v1994 = vpop.permute.xlu0 %1993
  %1995 = vrot.lane.b32.xlu0 %v639, 20
  %v1996 = vpop.permute.xlu0 %1995
  %1997 = vrot.lane.b32.xlu0 %v640, 20
  %v1998 = vpop.permute.xlu0 %1997
  %1999 = vrot.lane.b32.xlu0 %v641, 20
  %v2000 = vpop.permute.xlu0 %1999
  %2001 = vrot.lane.b32.xlu0 %v642, 20
  %v2002 = vpop.permute.xlu0 %2001
  %2003 = vrot.lane.b32.xlu0 %v643, 20
  %v2004 = vpop.permute.xlu0 %2003
  %2005 = vrot.lane.b32.xlu0 %v644, 20
  %v2006 = vpop.permute.xlu0 %2005
  %2007 = vrot.lane.b32.xlu0 %v645, 20
  %v2008 = vpop.permute.xlu0 %2007
  %2009 = vrot.lane.b32.xlu0 %v646, 20
  %v2010 = vpop.permute.xlu0 %2009
  %2011 = vrot.lane.b32.xlu0 %v647, 20
  %v2012 = vpop.permute.xlu0 %2011
  %2013 = vrot.lane.b32.xlu0 %v648, 20
  %v2014 = vpop.permute.xlu0 %2013
  %2015 = vrot.lane.b32.xlu0 %v649, 20
  %v2016 = vpop.permute.xlu0 %2015
  %2017 = vrot.lane.b32.xlu0 %v650, 20
  %v2018 = vpop.permute.xlu0 %2017
  %2019 = vrot.lane.b32.xlu0 %v651, 20
  %v2020 = vpop.permute.xlu0 %2019
  %2021 = vrot.lane.b32.xlu0 %v652, 20
  %v2022 = vpop.permute.xlu0 %2021
  %2023 = vrot.lane.b32.xlu0 %v653, 20
  %v2024 = vpop.permute.xlu0 %2023
  %2025 = vrot.lane.b32.xlu0 %v654, 20
  %v2026 = vpop.permute.xlu0 %2025
  %2027 = vrot.lane.b32.xlu0 %v655, 20
  %v2028 = vpop.permute.xlu0 %2027
  %2029 = vrot.lane.b32.xlu0 %v656, 20
  %v2030 = vpop.permute.xlu0 %2029
  %2031 = vrot.lane.b32.xlu0 %v657, 20
  %v2032 = vpop.permute.xlu0 %2031
  %2033 = vrot.lane.b32.xlu0 %v658, 20
  %v2034 = vpop.permute.xlu0 %2033
  %2035 = vrot.lane.b32.xlu0 %v659, 20
  %v2036 = vpop.permute.xlu0 %2035
  %2037 = vrot.lane.b32.xlu0 %v660, 20
  %v2038 = vpop.permute.xlu0 %2037
  %2039 = vrot.lane.b32.xlu0 %v661, 20
  %v2040 = vpop.permute.xlu0 %2039
  %2041 = vrot.lane.b32.xlu0 %v662, 20
  %v2042 = vpop.permute.xlu0 %2041
  %2043 = vrot.lane.b32.xlu0 %v663, 20
  %v2044 = vpop.permute.xlu0 %2043
  %2045 = vrot.lane.b32.xlu0 %v664, 20
  %v2046 = vpop.permute.xlu0 %2045
  %2047 = vrot.lane.b32.xlu0 %v665, 20
  %v2048 = vpop.permute.xlu0 %2047
  %2049 = vrot.lane.b32.xlu0 %v666, 20
  %v2050 = vpop.permute.xlu0 %2049
  %2051 = vrot.lane.b32.xlu0 %v667, 20
  %v2052 = vpop.permute.xlu0 %2051
  %2053 = vrot.lane.b32.xlu0 %v668, 20
  %v2054 = vpop.permute.xlu0 %2053
  %2055 = vrot.lane.b32.xlu0 %v669, 20
  %v2056 = vpop.permute.xlu0 %2055
  %2057 = vrot.lane.b32.xlu0 %v670, 20
  %v2058 = vpop.permute.xlu0 %2057
  %2059 = vrot.lane.b32.xlu0 %v671, 20
  %v2060 = vpop.permute.xlu0 %2059
  %2061 = vrot.lane.b32.xlu0 %v672, 20
  %v2062 = vpop.permute.xlu0 %2061
  %2063 = vrot.lane.b32.xlu0 %v673, 20
  %v2064 = vpop.permute.xlu0 %2063
  %2065 = vrot.lane.b32.xlu0 %v674, 20
  %v2066 = vpop.permute.xlu0 %2065
  %2067 = vrot.lane.b32.xlu0 %v675, 20
  %v2068 = vpop.permute.xlu0 %2067
  %2069 = vrot.lane.b32.xlu0 %v676, 20
  %v2070 = vpop.permute.xlu0 %2069
  %2071 = vrot.lane.b32.xlu0 %v677, 20
  %v2072 = vpop.permute.xlu0 %2071
  %2073 = vrot.lane.b32.xlu0 %v678, 20
  %v2074 = vpop.permute.xlu0 %2073
  %2075 = vrot.lane.b32.xlu0 %v679, 20
  %v2076 = vpop.permute.xlu0 %2075
  %2077 = vrot.lane.b32.xlu0 %v680, 20
  %v2078 = vpop.permute.xlu0 %2077
  %2079 = vrot.lane.b32.xlu0 %v681, 20
  %v2080 = vpop.permute.xlu0 %2079
  %2081 = vrot.lane.b32.xlu0 %v682, 20
  %v2082 = vpop.permute.xlu0 %2081
  %2083 = vrot.lane.b32.xlu0 %v683, 20
  %v2084 = vpop.permute.xlu0 %2083
  %2085 = vrot.lane.b32.xlu0 %v684, 20
  %v2086 = vpop.permute.xlu0 %2085
  %2087 = vrot.lane.b32.xlu0 %v685, 20
  %v2088 = vpop.permute.xlu0 %2087
  %2089 = vrot.lane.b32.xlu0 %v686, 20
  %v2090 = vpop.permute.xlu0 %2089
  %2091 = vrot.lane.b32.xlu0 %v687, 20
  %v2092 = vpop.permute.xlu0 %2091
  %2093 = vrot.lane.b32.xlu0 %v688, 20
  %v2094 = vpop.permute.xlu0 %2093
  %2095 = vrot.lane.b32.xlu0 %v689, 20
  %v2096 = vpop.permute.xlu0 %2095
  %2097 = vrot.lane.b32.xlu0 %v690, 20
  %v2098 = vpop.permute.xlu0 %2097
  %2099 = vrot.lane.b32.xlu0 %v691, 20
  %v2100 = vpop.permute.xlu0 %2099
  %2229 = vrot.lane.b32.xlu0 %v693, 24
  %v2230 = vpop.permute.xlu0 %2229
  %2231 = vrot.lane.b32.xlu0 %v694, 24
  %v2232 = vpop.permute.xlu0 %2231
  %2233 = vrot.lane.b32.xlu0 %v695, 24
  %v2234 = vpop.permute.xlu0 %2233
  %2235 = vrot.lane.b32.xlu0 %v696, 24
  %v2236 = vpop.permute.xlu0 %2235
  %2237 = vrot.lane.b32.xlu0 %v697, 24
  %v2238 = vpop.permute.xlu0 %2237
  %2239 = vrot.lane.b32.xlu0 %v698, 24
  %v2240 = vpop.permute.xlu0 %2239
  %2241 = vrot.lane.b32.xlu0 %v699, 24
  %v2242 = vpop.permute.xlu0 %2241
  %2243 = vrot.lane.b32.xlu0 %v700, 24
  %v2244 = vpop.permute.xlu0 %2243
  %2245 = vrot.lane.b32.xlu0 %v701, 24
  %v2246 = vpop.permute.xlu0 %2245
  %2247 = vrot.lane.b32.xlu0 %v702, 24
  %v2248 = vpop.permute.xlu0 %2247
  %2249 = vrot.lane.b32.xlu0 %v703, 24
  %v2250 = vpop.permute.xlu0 %2249
  %2251 = vrot.lane.b32.xlu0 %v704, 24
  %v2252 = vpop.permute.xlu0 %2251
  %2253 = vrot.lane.b32.xlu0 %v705, 24
  %v2254 = vpop.permute.xlu0 %2253
  %2255 = vrot.lane.b32.xlu0 %v706, 24
  %v2256 = vpop.permute.xlu0 %2255
  %2257 = vrot.lane.b32.xlu0 %v707, 24
  %v2258 = vpop.permute.xlu0 %2257
  %2259 = vrot.lane.b32.xlu0 %v708, 24
  %v2260 = vpop.permute.xlu0 %2259
  %2261 = vrot.lane.b32.xlu0 %v709, 24
  %v2262 = vpop.permute.xlu0 %2261
  %2263 = vrot.lane.b32.xlu0 %v710, 24
  %v2264 = vpop.permute.xlu0 %2263
  %2265 = vrot.lane.b32.xlu0 %v711, 24
  %v2266 = vpop.permute.xlu0 %2265
  %2267 = vrot.lane.b32.xlu0 %v712, 24
  %v2268 = vpop.permute.xlu0 %2267
  %2269 = vrot.lane.b32.xlu0 %v713, 24
  %v2270 = vpop.permute.xlu0 %2269
  %2271 = vrot.lane.b32.xlu0 %v714, 24
  %v2272 = vpop.permute.xlu0 %2271
  %2273 = vrot.lane.b32.xlu0 %v715, 24
  %v2274 = vpop.permute.xlu0 %2273
  %2275 = vrot.lane.b32.xlu0 %v716, 24
  %v2276 = vpop.permute.xlu0 %2275
  %2277 = vrot.lane.b32.xlu0 %v717, 24
  %v2278 = vpop.permute.xlu0 %2277
  %2279 = vrot.lane.b32.xlu0 %v718, 24
  %v2280 = vpop.permute.xlu0 %2279
  %2281 = vrot.lane.b32.xlu0 %v719, 24
  %v2282 = vpop.permute.xlu0 %2281
  %2283 = vrot.lane.b32.xlu0 %v720, 24
  %v2284 = vpop.permute.xlu0 %2283
  %2285 = vrot.lane.b32.xlu0 %v721, 24
  %v2286 = vpop.permute.xlu0 %2285
  %2287 = vrot.lane.b32.xlu0 %v722, 24
  %v2288 = vpop.permute.xlu0 %2287
  %2289 = vrot.lane.b32.xlu0 %v723, 24
  %v2290 = vpop.permute.xlu0 %2289
  %2291 = vrot.lane.b32.xlu0 %v724, 24
  %v2292 = vpop.permute.xlu0 %2291
  %2293 = vrot.lane.b32.xlu0 %v725, 24
  %v2294 = vpop.permute.xlu0 %2293
  %2295 = vrot.lane.b32.xlu0 %v726, 24
  %v2296 = vpop.permute.xlu0 %2295
  %2297 = vrot.lane.b32.xlu0 %v727, 24
  %v2298 = vpop.permute.xlu0 %2297
  %2299 = vrot.lane.b32.xlu0 %v728, 24
  %v2300 = vpop.permute.xlu0 %2299
  %2301 = vrot.lane.b32.xlu0 %v729, 24
  %v2302 = vpop.permute.xlu0 %2301
  %2303 = vrot.lane.b32.xlu0 %v730, 24
  %v2304 = vpop.permute.xlu0 %2303
  %2305 = vrot.lane.b32.xlu0 %v731, 24
  %v2306 = vpop.permute.xlu0 %2305
  %2307 = vrot.lane.b32.xlu0 %v732, 24
  %v2308 = vpop.permute.xlu0 %2307
  %2309 = vrot.lane.b32.xlu0 %v733, 24
  %v2310 = vpop.permute.xlu0 %2309
  %2311 = vrot.lane.b32.xlu0 %v734, 24
  %v2312 = vpop.permute.xlu0 %2311
  %2313 = vrot.lane.b32.xlu0 %v735, 24
  %v2314 = vpop.permute.xlu0 %2313
  %2315 = vrot.lane.b32.xlu0 %v736, 24
  %v2316 = vpop.permute.xlu0 %2315
  %2317 = vrot.lane.b32.xlu0 %v737, 24
  %v2318 = vpop.permute.xlu0 %2317
  %2319 = vrot.lane.b32.xlu0 %v738, 24
  %v2320 = vpop.permute.xlu0 %2319
  %2321 = vrot.lane.b32.xlu0 %v739, 24
  %v2322 = vpop.permute.xlu0 %2321
  %2323 = vrot.lane.b32.xlu0 %v740, 24
  %v2324 = vpop.permute.xlu0 %2323
  %2325 = vrot.lane.b32.xlu0 %v741, 24
  %v2326 = vpop.permute.xlu0 %2325
  %2327 = vrot.lane.b32.xlu0 %v742, 24
  %v2328 = vpop.permute.xlu0 %2327
  %2329 = vrot.lane.b32.xlu0 %v743, 24
  %v2330 = vpop.permute.xlu0 %2329
  %2331 = vrot.lane.b32.xlu0 %v744, 24
  %v2332 = vpop.permute.xlu0 %2331
  %2333 = vrot.lane.b32.xlu0 %v745, 24
  %v2334 = vpop.permute.xlu0 %2333
  %2335 = vrot.lane.b32.xlu0 %v746, 24
  %v2336 = vpop.permute.xlu0 %2335
  %2337 = vrot.lane.b32.xlu0 %v747, 24
  %v2338 = vpop.permute.xlu0 %2337
  %2339 = vrot.lane.b32.xlu0 %v748, 24
  %v2340 = vpop.permute.xlu0 %2339
  %2341 = vrot.lane.b32.xlu0 %v749, 24
  %v2342 = vpop.permute.xlu0 %2341
  %2343 = vrot.lane.b32.xlu0 %v750, 24
  %v2344 = vpop.permute.xlu0 %2343
  %2345 = vrot.lane.b32.xlu0 %v751, 24
  %v2346 = vpop.permute.xlu0 %2345
  %2347 = vrot.lane.b32.xlu0 %v752, 24
  %v2348 = vpop.permute.xlu0 %2347
  %2349 = vrot.lane.b32.xlu0 %v753, 24
  %v2350 = vpop.permute.xlu0 %2349
  %2351 = vrot.lane.b32.xlu0 %v754, 24
  %v2352 = vpop.permute.xlu0 %2351
  %2353 = vrot.lane.b32.xlu0 %v755, 24
  %v2354 = vpop.permute.xlu0 %2353
  %2355 = vrot.lane.b32.xlu0 %v756, 24
  %v2356 = vpop.permute.xlu0 %2355
  %2485 = vrot.lane.b32.xlu0 %v757, 28
  %v2486 = vpop.permute.xlu0 %2485
  %2487 = vrot.lane.b32.xlu0 %v758, 28
  %v2488 = vpop.permute.xlu0 %2487
  %2489 = vrot.lane.b32.xlu0 %v759, 28
  %v2490 = vpop.permute.xlu0 %2489
  %2491 = vrot.lane.b32.xlu0 %v760, 28
  %v2492 = vpop.permute.xlu0 %2491
  %2493 = vrot.lane.b32.xlu0 %v761, 28
  %v2494 = vpop.permute.xlu0 %2493
  %2495 = vrot.lane.b32.xlu0 %v762, 28
  %v2496 = vpop.permute.xlu0 %2495
  %2497 = vrot.lane.b32.xlu0 %v763, 28
  %v2498 = vpop.permute.xlu0 %2497
  %2499 = vrot.lane.b32.xlu0 %v764, 28
  %v2500 = vpop.permute.xlu0 %2499
  %2501 = vrot.lane.b32.xlu0 %v765, 28
  %v2502 = vpop.permute.xlu0 %2501
  %2503 = vrot.lane.b32.xlu0 %v766, 28
  %v2504 = vpop.permute.xlu0 %2503
  %2505 = vrot.lane.b32.xlu0 %v767, 28
  %v2506 = vpop.permute.xlu0 %2505
  %2507 = vrot.lane.b32.xlu0 %v768, 28
  %v2508 = vpop.permute.xlu0 %2507
  %2509 = vrot.lane.b32.xlu0 %v769, 28
  %v2510 = vpop.permute.xlu0 %2509
  %2511 = vrot.lane.b32.xlu0 %v770, 28
  %v2512 = vpop.permute.xlu0 %2511
  %2513 = vrot.lane.b32.xlu0 %v771, 28
  %v2514 = vpop.permute.xlu0 %2513
  %2515 = vrot.lane.b32.xlu0 %v772, 28
  %v2516 = vpop.permute.xlu0 %2515
  %2517 = vrot.lane.b32.xlu0 %v773, 28
  %v2518 = vpop.permute.xlu0 %2517
  %2519 = vrot.lane.b32.xlu0 %v774, 28
  %v2520 = vpop.permute.xlu0 %2519
  %2521 = vrot.lane.b32.xlu0 %v775, 28
  %v2522 = vpop.permute.xlu0 %2521
  %2523 = vrot.lane.b32.xlu0 %v776, 28
  %v2524 = vpop.permute.xlu0 %2523
  %2525 = vrot.lane.b32.xlu0 %v777, 28
  %v2526 = vpop.permute.xlu0 %2525
  %2527 = vrot.lane.b32.xlu0 %v778, 28
  %v2528 = vpop.permute.xlu0 %2527
  %2529 = vrot.lane.b32.xlu0 %v779, 28
  %v2530 = vpop.permute.xlu0 %2529
  %2531 = vrot.lane.b32.xlu0 %v780, 28
  %v2532 = vpop.permute.xlu0 %2531
  %2533 = vrot.lane.b32.xlu0 %v781, 28
  %v2534 = vpop.permute.xlu0 %2533
  %2535 = vrot.lane.b32.xlu0 %v782, 28
  %v2536 = vpop.permute.xlu0 %2535
  %2537 = vrot.lane.b32.xlu0 %v783, 28
  %v2538 = vpop.permute.xlu0 %2537
  %2539 = vrot.lane.b32.xlu0 %v784, 28
  %v2540 = vpop.permute.xlu0 %2539
  %2541 = vrot.lane.b32.xlu0 %v785, 28
  %v2542 = vpop.permute.xlu0 %2541
  %2543 = vrot.lane.b32.xlu0 %v786, 28
  %v2544 = vpop.permute.xlu0 %2543
  %2545 = vrot.lane.b32.xlu0 %v787, 28
  %v2546 = vpop.permute.xlu0 %2545
  %2547 = vrot.lane.b32.xlu0 %v788, 28
  %v2548 = vpop.permute.xlu0 %2547
  %2549 = vrot.lane.b32.xlu0 %v789, 28
  %v2550 = vpop.permute.xlu0 %2549
  %2551 = vrot.lane.b32.xlu0 %v790, 28
  %v2552 = vpop.permute.xlu0 %2551
  %2553 = vrot.lane.b32.xlu0 %v791, 28
  %v2554 = vpop.permute.xlu0 %2553
  %2555 = vrot.lane.b32.xlu0 %v792, 28
  %v2556 = vpop.permute.xlu0 %2555
  %2557 = vrot.lane.b32.xlu0 %v793, 28
  %v2558 = vpop.permute.xlu0 %2557
  %2559 = vrot.lane.b32.xlu0 %v794, 28
  %v2560 = vpop.permute.xlu0 %2559
  %2561 = vrot.lane.b32.xlu0 %v795, 28
  %v2562 = vpop.permute.xlu0 %2561
  %2563 = vrot.lane.b32.xlu0 %v796, 28
  %v2564 = vpop.permute.xlu0 %2563
  %2565 = vrot.lane.b32.xlu0 %v797, 28
  %v2566 = vpop.permute.xlu0 %2565
  %2567 = vrot.lane.b32.xlu0 %v798, 28
  %v2568 = vpop.permute.xlu0 %2567
  %2569 = vrot.lane.b32.xlu0 %v799, 28
  %v2570 = vpop.permute.xlu0 %2569
  %2571 = vrot.lane.b32.xlu0 %v800, 28
  %v2572 = vpop.permute.xlu0 %2571
  %2573 = vrot.lane.b32.xlu0 %v801, 28
  %v2574 = vpop.permute.xlu0 %2573
  %2575 = vrot.lane.b32.xlu0 %v802, 28
  %v2576 = vpop.permute.xlu0 %2575
  %2577 = vrot.lane.b32.xlu0 %v803, 28
  %v2578 = vpop.permute.xlu0 %2577
  %2579 = vrot.lane.b32.xlu0 %v804, 28
  %v2580 = vpop.permute.xlu0 %2579
  %2581 = vrot.lane.b32.xlu0 %v805, 28
  %v2582 = vpop.permute.xlu0 %2581
  %2583 = vrot.lane.b32.xlu0 %v806, 28
  %v2584 = vpop.permute.xlu0 %2583
  %2585 = vrot.lane.b32.xlu0 %v807, 28
  %v2586 = vpop.permute.xlu0 %2585
  %2587 = vrot.lane.b32.xlu0 %v808, 28
  %v2588 = vpop.permute.xlu0 %2587
  %2589 = vrot.lane.b32.xlu0 %v809, 28
  %v2590 = vpop.permute.xlu0 %2589
  %2591 = vrot.lane.b32.xlu0 %v810, 28
  %v2592 = vpop.permute.xlu0 %2591
  %2593 = vrot.lane.b32.xlu0 %v811, 28
  %v2594 = vpop.permute.xlu0 %2593
  %2595 = vrot.lane.b32.xlu0 %v812, 28
  %v2596 = vpop.permute.xlu0 %2595
  %2597 = vrot.lane.b32.xlu0 %v813, 28
  %v2598 = vpop.permute.xlu0 %2597
  %2599 = vrot.lane.b32.xlu0 %v814, 28
  %v2600 = vpop.permute.xlu0 %2599
  %2601 = vrot.lane.b32.xlu0 %v815, 28
  %v2602 = vpop.permute.xlu0 %2601
  %2603 = vrot.lane.b32.xlu0 %v816, 28
  %v2604 = vpop.permute.xlu0 %2603
  %2605 = vrot.lane.b32.xlu0 %v817, 28
  %v2606 = vpop.permute.xlu0 %2605
  %2607 = vrot.lane.b32.xlu0 %v818, 28
  %v2608 = vpop.permute.xlu0 %2607
  %2609 = vrot.lane.b32.xlu0 %v819, 28
  %v2610 = vpop.permute.xlu0 %2609
  %2611 = vrot.lane.b32.xlu0 %v820, 28
  %v2612 = vpop.permute.xlu0 %2611
  %2741 = vrot.lane.b32.xlu0 %v821, 32
  %v2742 = vpop.permute.xlu0 %2741
  %2743 = vrot.lane.b32.xlu0 %v822, 32
  %v2744 = vpop.permute.xlu0 %2743
  %2745 = vrot.lane.b32.xlu0 %v823, 32
  %v2746 = vpop.permute.xlu0 %2745
  %2747 = vrot.lane.b32.xlu0 %v824, 32
  %v2748 = vpop.permute.xlu0 %2747
  %2749 = vrot.lane.b32.xlu0 %v825, 32
  %v2750 = vpop.permute.xlu0 %2749
  %2751 = vrot.lane.b32.xlu0 %v826, 32
  %v2752 = vpop.permute.xlu0 %2751
  %2753 = vrot.lane.b32.xlu0 %v827, 32
  %v2754 = vpop.permute.xlu0 %2753
  %2755 = vrot.lane.b32.xlu0 %v828, 32
  %v2756 = vpop.permute.xlu0 %2755
  %2757 = vrot.lane.b32.xlu0 %v829, 32
  %v2758 = vpop.permute.xlu0 %2757
  %2759 = vrot.lane.b32.xlu0 %v830, 32
  %v2760 = vpop.permute.xlu0 %2759
  %2761 = vrot.lane.b32.xlu0 %v831, 32
  %v2762 = vpop.permute.xlu0 %2761
  %2763 = vrot.lane.b32.xlu0 %v832, 32
  %v2764 = vpop.permute.xlu0 %2763
  %2765 = vrot.lane.b32.xlu0 %v833, 32
  %v2766 = vpop.permute.xlu0 %2765
  %2767 = vrot.lane.b32.xlu0 %v834, 32
  %v2768 = vpop.permute.xlu0 %2767
  %2769 = vrot.lane.b32.xlu0 %v835, 32
  %v2770 = vpop.permute.xlu0 %2769
  %2771 = vrot.lane.b32.xlu0 %v836, 32
  %v2772 = vpop.permute.xlu0 %2771
  %2773 = vrot.lane.b32.xlu0 %v837, 32
  %v2774 = vpop.permute.xlu0 %2773
  %2775 = vrot.lane.b32.xlu0 %v838, 32
  %v2776 = vpop.permute.xlu0 %2775
  %2777 = vrot.lane.b32.xlu0 %v839, 32
  %v2778 = vpop.permute.xlu0 %2777
  %2779 = vrot.lane.b32.xlu0 %v840, 32
  %v2780 = vpop.permute.xlu0 %2779
  %2781 = vrot.lane.b32.xlu0 %v841, 32
  %v2782 = vpop.permute.xlu0 %2781
  %2783 = vrot.lane.b32.xlu0 %v842, 32
  %v2784 = vpop.permute.xlu0 %2783
  %2785 = vrot.lane.b32.xlu0 %v843, 32
  %v2786 = vpop.permute.xlu0 %2785
  %2787 = vrot.lane.b32.xlu0 %v844, 32
  %v2788 = vpop.permute.xlu0 %2787
  %2789 = vrot.lane.b32.xlu0 %v845, 32
  %v2790 = vpop.permute.xlu0 %2789
  %2791 = vrot.lane.b32.xlu0 %v846, 32
  %v2792 = vpop.permute.xlu0 %2791
  %2793 = vrot.lane.b32.xlu0 %v847, 32
  %v2794 = vpop.permute.xlu0 %2793
  %2795 = vrot.lane.b32.xlu0 %v848, 32
  %v2796 = vpop.permute.xlu0 %2795
  %2797 = vrot.lane.b32.xlu0 %v849, 32
  %v2798 = vpop.permute.xlu0 %2797
  %2799 = vrot.lane.b32.xlu0 %v850, 32
  %v2800 = vpop.permute.xlu0 %2799
  %2801 = vrot.lane.b32.xlu0 %v851, 32
  %v2802 = vpop.permute.xlu0 %2801
  %2803 = vrot.lane.b32.xlu0 %v852, 32
  %v2804 = vpop.permute.xlu0 %2803
  %2805 = vrot.lane.b32.xlu0 %v853, 32
  %v2806 = vpop.permute.xlu0 %2805
  %2807 = vrot.lane.b32.xlu0 %v854, 32
  %v2808 = vpop.permute.xlu0 %2807
  %2809 = vrot.lane.b32.xlu0 %v855, 32
  %v2810 = vpop.permute.xlu0 %2809
  %2811 = vrot.lane.b32.xlu0 %v856, 32
  %v2812 = vpop.permute.xlu0 %2811
  %2813 = vrot.lane.b32.xlu0 %v857, 32
  %v2814 = vpop.permute.xlu0 %2813
  %2815 = vrot.lane.b32.xlu0 %v858, 32
  %v2816 = vpop.permute.xlu0 %2815
  %2817 = vrot.lane.b32.xlu0 %v859, 32
  %v2818 = vpop.permute.xlu0 %2817
  %2819 = vrot.lane.b32.xlu0 %v860, 32
  %v2820 = vpop.permute.xlu0 %2819
  %2821 = vrot.lane.b32.xlu0 %v861, 32
  %v2822 = vpop.permute.xlu0 %2821
  %2823 = vrot.lane.b32.xlu0 %v862, 32
  %v2824 = vpop.permute.xlu0 %2823
  %2825 = vrot.lane.b32.xlu0 %v863, 32
  %v2826 = vpop.permute.xlu0 %2825
  %2827 = vrot.lane.b32.xlu0 %v864, 32
  %v2828 = vpop.permute.xlu0 %2827
  %2829 = vrot.lane.b32.xlu0 %v865, 32
  %v2830 = vpop.permute.xlu0 %2829
  %2831 = vrot.lane.b32.xlu0 %v866, 32
  %v2832 = vpop.permute.xlu0 %2831
  %2833 = vrot.lane.b32.xlu0 %v867, 32
  %v2834 = vpop.permute.xlu0 %2833
  %2835 = vrot.lane.b32.xlu0 %v868, 32
  %v2836 = vpop.permute.xlu0 %2835
  %2837 = vrot.lane.b32.xlu0 %v869, 32
  %v2838 = vpop.permute.xlu0 %2837
  %2839 = vrot.lane.b32.xlu0 %v870, 32
  %v2840 = vpop.permute.xlu0 %2839
  %2841 = vrot.lane.b32.xlu0 %v871, 32
  %v2842 = vpop.permute.xlu0 %2841
  %2843 = vrot.lane.b32.xlu0 %v872, 32
  %v2844 = vpop.permute.xlu0 %2843
  %2845 = vrot.lane.b32.xlu0 %v873, 32
  %v2846 = vpop.permute.xlu0 %2845
  %2847 = vrot.lane.b32.xlu0 %v874, 32
  %v2848 = vpop.permute.xlu0 %2847
  %2849 = vrot.lane.b32.xlu0 %v875, 32
  %v2850 = vpop.permute.xlu0 %2849
  %2851 = vrot.lane.b32.xlu0 %v876, 32
  %v2852 = vpop.permute.xlu0 %2851
  %2853 = vrot.lane.b32.xlu0 %v877, 32
  %v2854 = vpop.permute.xlu0 %2853
  %2855 = vrot.lane.b32.xlu0 %v878, 32
  %v2856 = vpop.permute.xlu0 %2855
  %2857 = vrot.lane.b32.xlu0 %v879, 32
  %v2858 = vpop.permute.xlu0 %2857
  %2859 = vrot.lane.b32.xlu0 %v880, 32
  %v2860 = vpop.permute.xlu0 %2859
  %2861 = vrot.lane.b32.xlu0 %v881, 32
  %v2862 = vpop.permute.xlu0 %2861
  %2863 = vrot.lane.b32.xlu0 %v882, 32
  %v2864 = vpop.permute.xlu0 %2863
  %2865 = vrot.lane.b32.xlu0 %v883, 32
  %v2866 = vpop.permute.xlu0 %2865
  %2867 = vrot.lane.b32.xlu0 %v884, 32
  %v2868 = vpop.permute.xlu0 %2867
  %v2933 = vsel %vm155, %v308, %v950
  %v2934 = vsel %vm155, %v309, %v952
  %v2935 = vsel %vm155, %v310, %v954
  %v2936 = vsel %vm155, %v311, %v956
  %v2937 = vsel %vm155, %v312, %v958
  %v2938 = vsel %vm155, %v313, %v960
  %v2939 = vsel %vm155, %v314, %v962
  %v2940 = vsel %vm155, %v315, %v964
  %v2941 = vsel %vm155, %v316, %v966
  %v2942 = vsel %vm155, %v317, %v968
  %v2943 = vsel %vm155, %v318, %v970
  %v2944 = vsel %vm155, %v319, %v972
  %v2945 = vsel %vm155, %v320, %v974
  %v2946 = vsel %vm155, %v321, %v976
  %v2947 = vsel %vm155, %v322, %v978
  %v2948 = vsel %vm155, %v323, %v980
  %v2949 = vsel %vm155, %v324, %v982
  %v2950 = vsel %vm155, %v325, %v984
  %v2951 = vsel %vm155, %v326, %v986
  %v2952 = vsel %vm155, %v327, %v988
  %v2953 = vsel %vm155, %v328, %v990
  %v2954 = vsel %vm155, %v329, %v992
  %v2955 = vsel %vm155, %v330, %v994
  %v2956 = vsel %vm155, %v331, %v996
  %v2957 = vsel %vm155, %v332, %v998
  %v2958 = vsel %vm155, %v333, %v1000
  %v2959 = vsel %vm155, %v334, %v1002
  %v2960 = vsel %vm155, %v335, %v1004
  %v2961 = vsel %vm155, %v336, %v1006
  %v2962 = vsel %vm155, %v337, %v1008
  %v2963 = vsel %vm155, %v338, %v1010
  %v2964 = vsel %vm155, %v339, %v1012
  %v2965 = vsel %vm155, %v340, %v1014
  %v2966 = vsel %vm155, %v341, %v1016
  %v2967 = vsel %vm155, %v342, %v1018
  %v2968 = vsel %vm155, %v343, %v1020
  %v2969 = vsel %vm155, %v344, %v1022
  %v2970 = vsel %vm155, %v345, %v1024
  %v2971 = vsel %vm155, %v346, %v1026
  %v2972 = vsel %vm155, %v347, %v1028
  %v2973 = vsel %vm155, %v348, %v1030
  %v2974 = vsel %vm155, %v349, %v1032
  %v2975 = vsel %vm155, %v350, %v1034
  %v2976 = vsel %vm155, %v351, %v1036
  %v2977 = vsel %vm155, %v352, %v1038
  %v2978 = vsel %vm155, %v353, %v1040
  %v2979 = vsel %vm155, %v354, %v1042
  %v2980 = vsel %vm155, %v355, %v1044
  %v2981 = vsel %vm155, %v356, %v1046
  %v2982 = vsel %vm155, %v357, %v1048
  %v2983 = vsel %vm155, %v358, %v1050
  %v2984 = vsel %vm155, %v359, %v1052
  %v2985 = vsel %vm155, %v360, %v1054
  %v2986 = vsel %vm155, %v361, %v1056
  %v2987 = vsel %vm155, %v362, %v1058
  %v2988 = vsel %vm155, %v363, %v1060
  %v2989 = vsel %vm155, %v364, %v1062
  %v2990 = vsel %vm155, %v365, %v1064
  %v2991 = vsel %vm155, %v366, %v1066
  %v2992 = vsel %vm155, %v367, %v1068
  %v2993 = vsel %vm155, %v368, %v1070
  %v2994 = vsel %vm155, %v369, %v1072
  %v2995 = vsel %vm155, %v370, %v1074
  %v2996 = vsel %vm155, %v371, %v1076
  %vm2997 = vcmask 64512
  %v2998 = vsel %vm2997, %v2933, %v1206
  %v2999 = vsel %vm2997, %v2934, %v1208
  %v3000 = vsel %vm2997, %v2935, %v1210
  %v3001 = vsel %vm2997, %v2936, %v1212
  %v3002 = vsel %vm2997, %v2937, %v1214
  %v3003 = vsel %vm2997, %v2938, %v1216
  %v3004 = vsel %vm2997, %v2939, %v1218
  %v3005 = vsel %vm2997, %v2940, %v1220
  %v3006 = vsel %vm2997, %v2941, %v1222
  %v3007 = vsel %vm2997, %v2942, %v1224
  %v3008 = vsel %vm2997, %v2943, %v1226
  %v3009 = vsel %vm2997, %v2944, %v1228
  %v3010 = vsel %vm2997, %v2945, %v1230
  %v3011 = vsel %vm2997, %v2946, %v1232
  %v3012 = vsel %vm2997, %v2947, %v1234
  %v3013 = vsel %vm2997, %v2948, %v1236
  %v3014 = vsel %vm2997, %v2949, %v1238
  %v3015 = vsel %vm2997, %v2950, %v1240
  %v3016 = vsel %vm2997, %v2951, %v1242
  %v3017 = vsel %vm2997, %v2952, %v1244
  %v3018 = vsel %vm2997, %v2953, %v1246
  %v3019 = vsel %vm2997, %v2954, %v1248
  %v3020 = vsel %vm2997, %v2955, %v1250
  %v3021 = vsel %vm2997, %v2956, %v1252
  %v3022 = vsel %vm2997, %v2957, %v1254
  %v3023 = vsel %vm2997, %v2958, %v1256
  %v3024 = vsel %vm2997, %v2959, %v1258
  %v3025 = vsel %vm2997, %v2960, %v1260
  %v3026 = vsel %vm2997, %v2961, %v1262
  %v3027 = vsel %vm2997, %v2962, %v1264
  %v3028 = vsel %vm2997, %v2963, %v1266
  %v3029 = vsel %vm2997, %v2964, %v1268
  %v3030 = vsel %vm2997, %v2965, %v1270
  %v3031 = vsel %vm2997, %v2966, %v1272
  %v3032 = vsel %vm2997, %v2967, %v1274
  %v3033 = vsel %vm2997, %v2968, %v1276
  %v3034 = vsel %vm2997, %v2969, %v1278
  %v3035 = vsel %vm2997, %v2970, %v1280
  %v3036 = vsel %vm2997, %v2971, %v1282
  %v3037 = vsel %vm2997, %v2972, %v1284
  %v3038 = vsel %vm2997, %v2973, %v1286
  %v3039 = vsel %vm2997, %v2974, %v1288
  %v3040 = vsel %vm2997, %v2975, %v1290
  %v3041 = vsel %vm2997, %v2976, %v1292
  %v3042 = vsel %vm2997, %v2977, %v1294
  %v3043 = vsel %vm2997, %v2978, %v1296
  %v3044 = vsel %vm2997, %v2979, %v1298
  %v3045 = vsel %vm2997, %v2980, %v1300
  %v3046 = vsel %vm2997, %v2981, %v1302
  %v3047 = vsel %vm2997, %v2982, %v1304
  %v3048 = vsel %vm2997, %v2983, %v1306
  %v3049 = vsel %vm2997, %v2984, %v1308
  %v3050 = vsel %vm2997, %v2985, %v1310
  %v3051 = vsel %vm2997, %v2986, %v1312
  %v3052 = vsel %vm2997, %v2987, %v1314
  %v3053 = vsel %vm2997, %v2988, %v1316
  %v3054 = vsel %vm2997, %v2989, %v1318
  %v3055 = vsel %vm2997, %v2990, %v1320
  %v3056 = vsel %vm2997, %v2991, %v1322
  %v3057 = vsel %vm2997, %v2992, %v1324
  %v3058 = vsel %vm2997, %v2993, %v1326
  %v3059 = vsel %vm2997, %v2994, %v1328
  %v3060 = vsel %vm2997, %v2995, %v1330
  %v3061 = vsel %vm2997, %v2996, %v1332
  %vm3062 = vcmask 97280
  %v3063 = vsel %vm3062, %v2998, %v1462
  %v3064 = vsel %vm3062, %v2999, %v1464
  %v3065 = vsel %vm3062, %v3000, %v1466
  %v3066 = vsel %vm3062, %v3001, %v1468
  %v3067 = vsel %vm3062, %v3002, %v1470
  %v3068 = vsel %vm3062, %v3003, %v1472
  %v3069 = vsel %vm3062, %v3004, %v1474
  %v3070 = vsel %vm3062, %v3005, %v1476
  %v3071 = vsel %vm3062, %v3006, %v1478
  %v3072 = vsel %vm3062, %v3007, %v1480
  %v3073 = vsel %vm3062, %v3008, %v1482
  %v3074 = vsel %vm3062, %v3009, %v1484
  %v3075 = vsel %vm3062, %v3010, %v1486
  %v3076 = vsel %vm3062, %v3011, %v1488
  %v3077 = vsel %vm3062, %v3012, %v1490
  %v3078 = vsel %vm3062, %v3013, %v1492
  %v3079 = vsel %vm3062, %v3014, %v1494
  %v3080 = vsel %vm3062, %v3015, %v1496
  %v3081 = vsel %vm3062, %v3016, %v1498
  %v3082 = vsel %vm3062, %v3017, %v1500
  %v3083 = vsel %vm3062, %v3018, %v1502
  %v3084 = vsel %vm3062, %v3019, %v1504
  %v3085 = vsel %vm3062, %v3020, %v1506
  %v3086 = vsel %vm3062, %v3021, %v1508
  %v3087 = vsel %vm3062, %v3022, %v1510
  %v3088 = vsel %vm3062, %v3023, %v1512
  %v3089 = vsel %vm3062, %v3024, %v1514
  %v3090 = vsel %vm3062, %v3025, %v1516
  %v3091 = vsel %vm3062, %v3026, %v1518
  %v3092 = vsel %vm3062, %v3027, %v1520
  %v3093 = vsel %vm3062, %v3028, %v1522
  %v3094 = vsel %vm3062, %v3029, %v1524
  %v3095 = vsel %vm3062, %v3030, %v1526
  %v3096 = vsel %vm3062, %v3031, %v1528
  %v3097 = vsel %vm3062, %v3032, %v1530
  %v3098 = vsel %vm3062, %v3033, %v1532
  %v3099 = vsel %vm3062, %v3034, %v1534
  %v3100 = vsel %vm3062, %v3035, %v1536
  %v3101 = vsel %vm3062, %v3036, %v1538
  %v3102 = vsel %vm3062, %v3037, %v1540
  %v3103 = vsel %vm3062, %v3038, %v1542
  %v3104 = vsel %vm3062, %v3039, %v1544
  %v3105 = vsel %vm3062, %v3040, %v1546
  %v3106 = vsel %vm3062, %v3041, %v1548
  %v3107 = vsel %vm3062, %v3042, %v1550
  %v3108 = vsel %vm3062, %v3043, %v1552
  %v3109 = vsel %vm3062, %v3044, %v1554
  %v3110 = vsel %vm3062, %v3045, %v1556
  %v3111 = vsel %vm3062, %v3046, %v1558
  %v3112 = vsel %vm3062, %v3047, %v1560
  %v3113 = vsel %vm3062, %v3048, %v1562
  %v3114 = vsel %vm3062, %v3049, %v1564
  %v3115 = vsel %vm3062, %v3050, %v1566
  %v3116 = vsel %vm3062, %v3051, %v1568
  %v3117 = vsel %vm3062, %v3052, %v1570
  %v3118 = vsel %vm3062, %v3053, %v1572
  %v3119 = vsel %vm3062, %v3054, %v1574
  %v3120 = vsel %vm3062, %v3055, %v1576
  %v3121 = vsel %vm3062, %v3056, %v1578
  %v3122 = vsel %vm3062, %v3057, %v1580
  %v3123 = vsel %vm3062, %v3058, %v1582
  %v3124 = vsel %vm3062, %v3059, %v1584
  %v3125 = vsel %vm3062, %v3060, %v1586
  %v3126 = vsel %vm3062, %v3061, %v1588
  %vm3127 = vcmask 130048
  %v3128 = vsel %vm3127, %v3063, %v1718
  %v3129 = vsel %vm3127, %v3064, %v1720
  %v3130 = vsel %vm3127, %v3065, %v1722
  %v3131 = vsel %vm3127, %v3066, %v1724
  %v3132 = vsel %vm3127, %v3067, %v1726
  %v3133 = vsel %vm3127, %v3068, %v1728
  %v3134 = vsel %vm3127, %v3069, %v1730
  %v3135 = vsel %vm3127, %v3070, %v1732
  %v3136 = vsel %vm3127, %v3071, %v1734
  %v3137 = vsel %vm3127, %v3072, %v1736
  %v3138 = vsel %vm3127, %v3073, %v1738
  %v3139 = vsel %vm3127, %v3074, %v1740
  %v3140 = vsel %vm3127, %v3075, %v1742
  %v3141 = vsel %vm3127, %v3076, %v1744
  %v3142 = vsel %vm3127, %v3077, %v1746
  %v3143 = vsel %vm3127, %v3078, %v1748
  %v3144 = vsel %vm3127, %v3079, %v1750
  %v3145 = vsel %vm3127, %v3080, %v1752
  %v3146 = vsel %vm3127, %v3081, %v1754
  %v3147 = vsel %vm3127, %v3082, %v1756
  %v3148 = vsel %vm3127, %v3083, %v1758
  %v3149 = vsel %vm3127, %v3084, %v1760
  %v3150 = vsel %vm3127, %v3085, %v1762
  %v3151 = vsel %vm3127, %v3086, %v1764
  %v3152 = vsel %vm3127, %v3087, %v1766
  %v3153 = vsel %vm3127, %v3088, %v1768
  %v3154 = vsel %vm3127, %v3089, %v1770
  %v3155 = vsel %vm3127, %v3090, %v1772
  %v3156 = vsel %vm3127, %v3091, %v1774
  %v3157 = vsel %vm3127, %v3092, %v1776
  %v3158 = vsel %vm3127, %v3093, %v1778
  %v3159 = vsel %vm3127, %v3094, %v1780
  %v3160 = vsel %vm3127, %v3095, %v1782
  %v3161 = vsel %vm3127, %v3096, %v1784
  %v3162 = vsel %vm3127, %v3097, %v1786
  %v3163 = vsel %vm3127, %v3098, %v1788
  %v3164 = vsel %vm3127, %v3099, %v1790
  %v3165 = vsel %vm3127, %v3100, %v1792
  %v3166 = vsel %vm3127, %v3101, %v1794
  %v3167 = vsel %vm3127, %v3102, %v1796
  %v3168 = vsel %vm3127, %v3103, %v1798
  %v3169 = vsel %vm3127, %v3104, %v1800
  %v3170 = vsel %vm3127, %v3105, %v1802
  %v3171 = vsel %vm3127, %v3106, %v1804
  %v3172 = vsel %vm3127, %v3107, %v1806
  %v3173 = vsel %vm3127, %v3108, %v1808
  %v3174 = vsel %vm3127, %v3109, %v1810
  %v3175 = vsel %vm3127, %v3110, %v1812
  %v3176 = vsel %vm3127, %v3111, %v1814
  %v3177 = vsel %vm3127, %v3112, %v1816
  %v3178 = vsel %vm3127, %v3113, %v1818
  %v3179 = vsel %vm3127, %v3114, %v1820
  %v3180 = vsel %vm3127, %v3115, %v1822
  %v3181 = vsel %vm3127, %v3116, %v1824
  %v3182 = vsel %vm3127, %v3117, %v1826
  %v3183 = vsel %vm3127, %v3118, %v1828
  %v3184 = vsel %vm3127, %v3119, %v1830
  %v3185 = vsel %vm3127, %v3120, %v1832
  %v3186 = vsel %vm3127, %v3121, %v1834
  %v3187 = vsel %vm3127, %v3122, %v1836
  %v3188 = vsel %vm3127, %v3123, %v1838
  %v3189 = vsel %vm3127, %v3124, %v1840
  %v3190 = vsel %vm3127, %v3125, %v1842
  %v3191 = vsel %vm3127, %v3126, %v1844
  %vm3192 = vcmask 162816
  %v3193 = vsel %vm3192, %v3128, %v1974
  %v3194 = vsel %vm3192, %v3129, %v1976
  %v3195 = vsel %vm3192, %v3130, %v1978
  %v3196 = vsel %vm3192, %v3131, %v1980
  %v3197 = vsel %vm3192, %v3132, %v1982
  %v3198 = vsel %vm3192, %v3133, %v1984
  %v3199 = vsel %vm3192, %v3134, %v1986
  %v3200 = vsel %vm3192, %v3135, %v1988
  %v3201 = vsel %vm3192, %v3136, %v1990
  %v3202 = vsel %vm3192, %v3137, %v1992
  %v3203 = vsel %vm3192, %v3138, %v1994
  %v3204 = vsel %vm3192, %v3139, %v1996
  %v3205 = vsel %vm3192, %v3140, %v1998
  %v3206 = vsel %vm3192, %v3141, %v2000
  %v3207 = vsel %vm3192, %v3142, %v2002
  %v3208 = vsel %vm3192, %v3143, %v2004
  %v3209 = vsel %vm3192, %v3144, %v2006
  %v3210 = vsel %vm3192, %v3145, %v2008
  %v3211 = vsel %vm3192, %v3146, %v2010
  %v3212 = vsel %vm3192, %v3147, %v2012
  %v3213 = vsel %vm3192, %v3148, %v2014
  %v3214 = vsel %vm3192, %v3149, %v2016
  %v3215 = vsel %vm3192, %v3150, %v2018
  %v3216 = vsel %vm3192, %v3151, %v2020
  %v3217 = vsel %vm3192, %v3152, %v2022
  %v3218 = vsel %vm3192, %v3153, %v2024
  %v3219 = vsel %vm3192, %v3154, %v2026
  %v3220 = vsel %vm3192, %v3155, %v2028
  %v3221 = vsel %vm3192, %v3156, %v2030
  %v3222 = vsel %vm3192, %v3157, %v2032
  %v3223 = vsel %vm3192, %v3158, %v2034
  %v3224 = vsel %vm3192, %v3159, %v2036
  %v3225 = vsel %vm3192, %v3160, %v2038
  %v3226 = vsel %vm3192, %v3161, %v2040
  %v3227 = vsel %vm3192, %v3162, %v2042
  %v3228 = vsel %vm3192, %v3163, %v2044
  %v3229 = vsel %vm3192, %v3164, %v2046
  %v3230 = vsel %vm3192, %v3165, %v2048
  %v3231 = vsel %vm3192, %v3166, %v2050
  %v3232 = vsel %vm3192, %v3167, %v2052
  %v3233 = vsel %vm3192, %v3168, %v2054
  %v3234 = vsel %vm3192, %v3169, %v2056
  %v3235 = vsel %vm3192, %v3170, %v2058
  %v3236 = vsel %vm3192, %v3171, %v2060
  %v3237 = vsel %vm3192, %v3172, %v2062
  %v3238 = vsel %vm3192, %v3173, %v2064
  %v3239 = vsel %vm3192, %v3174, %v2066
  %v3240 = vsel %vm3192, %v3175, %v2068
  %v3241 = vsel %vm3192, %v3176, %v2070
  %v3242 = vsel %vm3192, %v3177, %v2072
  %v3243 = vsel %vm3192, %v3178, %v2074
  %v3244 = vsel %vm3192, %v3179, %v2076
  %v3245 = vsel %vm3192, %v3180, %v2078
  %v3246 = vsel %vm3192, %v3181, %v2080
  %v3247 = vsel %vm3192, %v3182, %v2082
  %v3248 = vsel %vm3192, %v3183, %v2084
  %v3249 = vsel %vm3192, %v3184, %v2086
  %v3250 = vsel %vm3192, %v3185, %v2088
  %v3251 = vsel %vm3192, %v3186, %v2090
  %v3252 = vsel %vm3192, %v3187, %v2092
  %v3253 = vsel %vm3192, %v3188, %v2094
  %v3254 = vsel %vm3192, %v3189, %v2096
  %v3255 = vsel %vm3192, %v3190, %v2098
  %v3256 = vsel %vm3192, %v3191, %v2100
  %vm3257 = vcmask 195584
  %v3258 = vsel %vm3257, %v3193, %v2230
  %v3259 = vsel %vm3257, %v3194, %v2232
  %v3260 = vsel %vm3257, %v3195, %v2234
  %v3261 = vsel %vm3257, %v3196, %v2236
  %v3262 = vsel %vm3257, %v3197, %v2238
  %v3263 = vsel %vm3257, %v3198, %v2240
  %v3264 = vsel %vm3257, %v3199, %v2242
  %v3265 = vsel %vm3257, %v3200, %v2244
  %v3266 = vsel %vm3257, %v3201, %v2246
  %v3267 = vsel %vm3257, %v3202, %v2248
  %v3268 = vsel %vm3257, %v3203, %v2250
  %v3269 = vsel %vm3257, %v3204, %v2252
  %v3270 = vsel %vm3257, %v3205, %v2254
  %v3271 = vsel %vm3257, %v3206, %v2256
  %v3272 = vsel %vm3257, %v3207, %v2258
  %v3273 = vsel %vm3257, %v3208, %v2260
  %v3274 = vsel %vm3257, %v3209, %v2262
  %v3275 = vsel %vm3257, %v3210, %v2264
  %v3276 = vsel %vm3257, %v3211, %v2266
  %v3277 = vsel %vm3257, %v3212, %v2268
  %v3278 = vsel %vm3257, %v3213, %v2270
  %v3279 = vsel %vm3257, %v3214, %v2272
  %v3280 = vsel %vm3257, %v3215, %v2274
  %v3281 = vsel %vm3257, %v3216, %v2276
  %v3282 = vsel %vm3257, %v3217, %v2278
  %v3283 = vsel %vm3257, %v3218, %v2280
  %v3284 = vsel %vm3257, %v3219, %v2282
  %v3285 = vsel %vm3257, %v3220, %v2284
  %v3286 = vsel %vm3257, %v3221, %v2286
  %v3287 = vsel %vm3257, %v3222, %v2288
  %v3288 = vsel %vm3257, %v3223, %v2290
  %v3289 = vsel %vm3257, %v3224, %v2292
  %v3290 = vsel %vm3257, %v3225, %v2294
  %v3291 = vsel %vm3257, %v3226, %v2296
  %v3292 = vsel %vm3257, %v3227, %v2298
  %v3293 = vsel %vm3257, %v3228, %v2300
  %v3294 = vsel %vm3257, %v3229, %v2302
  %v3295 = vsel %vm3257, %v3230, %v2304
  %v3296 = vsel %vm3257, %v3231, %v2306
  %v3297 = vsel %vm3257, %v3232, %v2308
  %v3298 = vsel %vm3257, %v3233, %v2310
  %v3299 = vsel %vm3257, %v3234, %v2312
  %v3300 = vsel %vm3257, %v3235, %v2314
  %v3301 = vsel %vm3257, %v3236, %v2316
  %v3302 = vsel %vm3257, %v3237, %v2318
  %v3303 = vsel %vm3257, %v3238, %v2320
  %v3304 = vsel %vm3257, %v3239, %v2322
  %v3305 = vsel %vm3257, %v3240, %v2324
  %v3306 = vsel %vm3257, %v3241, %v2326
  %v3307 = vsel %vm3257, %v3242, %v2328
  %v3308 = vsel %vm3257, %v3243, %v2330
  %v3309 = vsel %vm3257, %v3244, %v2332
  %v3310 = vsel %vm3257, %v3245, %v2334
  %v3311 = vsel %vm3257, %v3246, %v2336
  %v3312 = vsel %vm3257, %v3247, %v2338
  %v3313 = vsel %vm3257, %v3248, %v2340
  %v3314 = vsel %vm3257, %v3249, %v2342
  %v3315 = vsel %vm3257, %v3250, %v2344
  %v3316 = vsel %vm3257, %v3251, %v2346
  %v3317 = vsel %vm3257, %v3252, %v2348
  %v3318 = vsel %vm3257, %v3253, %v2350
  %v3319 = vsel %vm3257, %v3254, %v2352
  %v3320 = vsel %vm3257, %v3255, %v2354
  %v3321 = vsel %vm3257, %v3256, %v2356
  %vm3322 = vcmask 228352
  %v3323 = vsel %vm3322, %v3258, %v2486
  %v3324 = vsel %vm3322, %v3259, %v2488
  %v3325 = vsel %vm3322, %v3260, %v2490
  %v3326 = vsel %vm3322, %v3261, %v2492
  %v3327 = vsel %vm3322, %v3262, %v2494
  %v3328 = vsel %vm3322, %v3263, %v2496
  %v3329 = vsel %vm3322, %v3264, %v2498
  %v3330 = vsel %vm3322, %v3265, %v2500
  %v3331 = vsel %vm3322, %v3266, %v2502
  %v3332 = vsel %vm3322, %v3267, %v2504
  %v3333 = vsel %vm3322, %v3268, %v2506
  %v3334 = vsel %vm3322, %v3269, %v2508
  %v3335 = vsel %vm3322, %v3270, %v2510
  %v3336 = vsel %vm3322, %v3271, %v2512
  %v3337 = vsel %vm3322, %v3272, %v2514
  %v3338 = vsel %vm3322, %v3273, %v2516
  %v3339 = vsel %vm3322, %v3274, %v2518
  %v3340 = vsel %vm3322, %v3275, %v2520
  %v3341 = vsel %vm3322, %v3276, %v2522
  %v3342 = vsel %vm3322, %v3277, %v2524
  %v3343 = vsel %vm3322, %v3278, %v2526
  %v3344 = vsel %vm3322, %v3279, %v2528
  %v3345 = vsel %vm3322, %v3280, %v2530
  %v3346 = vsel %vm3322, %v3281, %v2532
  %v3347 = vsel %vm3322, %v3282, %v2534
  %v3348 = vsel %vm3322, %v3283, %v2536
  %v3349 = vsel %vm3322, %v3284, %v2538
  %v3350 = vsel %vm3322, %v3285, %v2540
  %v3351 = vsel %vm3322, %v3286, %v2542
  %v3352 = vsel %vm3322, %v3287, %v2544
  %v3353 = vsel %vm3322, %v3288, %v2546
  %v3354 = vsel %vm3322, %v3289, %v2548
  %v3355 = vsel %vm3322, %v3290, %v2550
  %v3356 = vsel %vm3322, %v3291, %v2552
  %v3357 = vsel %vm3322, %v3292, %v2554
  %v3358 = vsel %vm3322, %v3293, %v2556
  %v3359 = vsel %vm3322, %v3294, %v2558
  %v3360 = vsel %vm3322, %v3295, %v2560
  %v3361 = vsel %vm3322, %v3296, %v2562
  %v3362 = vsel %vm3322, %v3297, %v2564
  %v3363 = vsel %vm3322, %v3298, %v2566
  %v3364 = vsel %vm3322, %v3299, %v2568
  %v3365 = vsel %vm3322, %v3300, %v2570
  %v3366 = vsel %vm3322, %v3301, %v2572
  %v3367 = vsel %vm3322, %v3302, %v2574
  %v3368 = vsel %vm3322, %v3303, %v2576
  %v3369 = vsel %vm3322, %v3304, %v2578
  %v3370 = vsel %vm3322, %v3305, %v2580
  %v3371 = vsel %vm3322, %v3306, %v2582
  %v3372 = vsel %vm3322, %v3307, %v2584
  %v3373 = vsel %vm3322, %v3308, %v2586
  %v3374 = vsel %vm3322, %v3309, %v2588
  %v3375 = vsel %vm3322, %v3310, %v2590
  %v3376 = vsel %vm3322, %v3311, %v2592
  %v3377 = vsel %vm3322, %v3312, %v2594
  %v3378 = vsel %vm3322, %v3313, %v2596
  %v3379 = vsel %vm3322, %v3314, %v2598
  %v3380 = vsel %vm3322, %v3315, %v2600
  %v3381 = vsel %vm3322, %v3316, %v2602
  %v3382 = vsel %vm3322, %v3317, %v2604
  %v3383 = vsel %vm3322, %v3318, %v2606
  %v3384 = vsel %vm3322, %v3319, %v2608
  %v3385 = vsel %vm3322, %v3320, %v2610
  %v3386 = vsel %vm3322, %v3321, %v2612
  %vm3387 = vcmask 261120
  %v3388 = vsel %vm3387, %v3323, %v2742
  %v3389 = vsel %vm3387, %v3324, %v2744
  %v3390 = vsel %vm3387, %v3325, %v2746
  %v3391 = vsel %vm3387, %v3326, %v2748
  %v3392 = vsel %vm3387, %v3327, %v2750
  %v3393 = vsel %vm3387, %v3328, %v2752
  %v3394 = vsel %vm3387, %v3329, %v2754
  %v3395 = vsel %vm3387, %v3330, %v2756
  %v3396 = vsel %vm3387, %v3331, %v2758
  %v3397 = vsel %vm3387, %v3332, %v2760
  %v3398 = vsel %vm3387, %v3333, %v2762
  %v3399 = vsel %vm3387, %v3334, %v2764
  %v3400 = vsel %vm3387, %v3335, %v2766
  %v3401 = vsel %vm3387, %v3336, %v2768
  %v3402 = vsel %vm3387, %v3337, %v2770
  %v3403 = vsel %vm3387, %v3338, %v2772
  %v3404 = vsel %vm3387, %v3339, %v2774
  %v3405 = vsel %vm3387, %v3340, %v2776
  %v3406 = vsel %vm3387, %v3341, %v2778
  %v3407 = vsel %vm3387, %v3342, %v2780
  %v3408 = vsel %vm3387, %v3343, %v2782
  %v3409 = vsel %vm3387, %v3344, %v2784
  %v3410 = vsel %vm3387, %v3345, %v2786
  %v3411 = vsel %vm3387, %v3346, %v2788
  %v3412 = vsel %vm3387, %v3347, %v2790
  %v3413 = vsel %vm3387, %v3348, %v2792
  %v3414 = vsel %vm3387, %v3349, %v2794
  %v3415 = vsel %vm3387, %v3350, %v2796
  %v3416 = vsel %vm3387, %v3351, %v2798
  %v3417 = vsel %vm3387, %v3352, %v2800
  %v3418 = vsel %vm3387, %v3353, %v2802
  %v3419 = vsel %vm3387, %v3354, %v2804
  %v3420 = vsel %vm3387, %v3355, %v2806
  %v3421 = vsel %vm3387, %v3356, %v2808
  %v3422 = vsel %vm3387, %v3357, %v2810
  %v3423 = vsel %vm3387, %v3358, %v2812
  %v3424 = vsel %vm3387, %v3359, %v2814
  %v3425 = vsel %vm3387, %v3360, %v2816
  %v3426 = vsel %vm3387, %v3361, %v2818
  %v3427 = vsel %vm3387, %v3362, %v2820
  %v3428 = vsel %vm3387, %v3363, %v2822
  %v3429 = vsel %vm3387, %v3364, %v2824
  %v3430 = vsel %vm3387, %v3365, %v2826
  %v3431 = vsel %vm3387, %v3366, %v2828
  %v3432 = vsel %vm3387, %v3367, %v2830
  %v3433 = vsel %vm3387, %v3368, %v2832
  %v3434 = vsel %vm3387, %v3369, %v2834
  %v3435 = vsel %vm3387, %v3370, %v2836
  %v3436 = vsel %vm3387, %v3371, %v2838
  %v3437 = vsel %vm3387, %v3372, %v2840
  %v3438 = vsel %vm3387, %v3373, %v2842
  %v3439 = vsel %vm3387, %v3374, %v2844
  %v3440 = vsel %vm3387, %v3375, %v2846
  %v3441 = vsel %vm3387, %v3376, %v2848
  %v3442 = vsel %vm3387, %v3377, %v2850
  %v3443 = vsel %vm3387, %v3378, %v2852
  %v3444 = vsel %vm3387, %v3379, %v2854
  %v3445 = vsel %vm3387, %v3380, %v2856
  %v3446 = vsel %vm3387, %v3381, %v2858
  %v3447 = vsel %vm3387, %v3382, %v2860
  %v3448 = vsel %vm3387, %v3383, %v2862
  %v3449 = vsel %vm3387, %v3384, %v2864
  %v3450 = vsel %vm3387, %v3385, %v2866
  %v3451 = vsel %vm3387, %v3386, %v2868
  %v3452 = vpack.c.bf16 %v3389, %v3388
  %v3453 = vpack.c.bf16 %v3391, %v3390
  %v3454 = vpack.c.bf16 %v3393, %v3392
  %v3455 = vpack.c.bf16 %v3395, %v3394
  %v3456 = vpack.c.bf16 %v3397, %v3396
  %v3457 = vpack.c.bf16 %v3399, %v3398
  %v3458 = vpack.c.bf16 %v3401, %v3400
  %v3459 = vpack.c.bf16 %v3403, %v3402
  %v3460 = vpack.c.bf16 %v3405, %v3404
  %v3461 = vpack.c.bf16 %v3407, %v3406
  %v3462 = vpack.c.bf16 %v3409, %v3408
  %v3463 = vpack.c.bf16 %v3411, %v3410
  %v3464 = vpack.c.bf16 %v3413, %v3412
  %v3465 = vpack.c.bf16 %v3415, %v3414
  %v3466 = vpack.c.bf16 %v3417, %v3416
  %v3467 = vpack.c.bf16 %v3419, %v3418
  %v3468 = vpack.c.bf16 %v3421, %v3420
  %v3469 = vpack.c.bf16 %v3423, %v3422
  %v3470 = vpack.c.bf16 %v3425, %v3424
  %v3471 = vpack.c.bf16 %v3427, %v3426
  %v3472 = vpack.c.bf16 %v3429, %v3428
  %v3473 = vpack.c.bf16 %v3431, %v3430
  %v3474 = vpack.c.bf16 %v3433, %v3432
  %v3475 = vpack.c.bf16 %v3435, %v3434
  %v3476 = vpack.c.bf16 %v3437, %v3436
  %v3477 = vpack.c.bf16 %v3439, %v3438
  %v3478 = vpack.c.bf16 %v3441, %v3440
  %v3479 = vpack.c.bf16 %v3443, %v3442
  %v3480 = vpack.c.bf16 %v3445, %v3444
  %v3481 = vpack.c.bf16 %v3447, %v3446
  %v3482 = vpack.c.bf16 %v3449, %v3448
  %v3483 = vpack.c.bf16 %v3451, %v3450
  %v3484 = vld [vmem:[%s1] sm:$0xf]
  %v3485 = vld [vmem:[%s1 + $0x4] sm:$0xf]
  %v3486 = vld [vmem:[%s1 + $0x8] sm:$0xf]
  %v3487 = vld [vmem:[%s1 + $0xc] sm:$0xf]
  %v3488 = vld [vmem:[%s1 + $0x10] sm:$0x3]
  %v3494 = vunpack.c.l.b16 %v3484
  %v3495 = vunpack.c.l.b16 %v3485
  %v3496 = vunpack.c.l.b16 %v3486
  %v3497 = vunpack.c.l.b16 %v3487
  %v3498 = vunpack.c.l.b16 %v3488
  %v3499 = vpack.c.b16 %v3495, %v3494
  %v3500 = vpack.c.b16 %v3497, %v3496
  %v3501 = vpack.c.b16 %v3498, %v3498
  %vm3504 = vcmask 293888
  %v3506 = vsel %vm3504, %v3452, 0
  %v3509 = vsel %vm3504, %v3453, 0
  %v3512 = vsel %vm3504, %v3454, 0
  %v3515 = vsel %vm3504, %v3455, 0
  %v3518 = vsel %vm3504, %v3456, 0
  %v3521 = vsel %vm3504, %v3457, 0
  %v3524 = vsel %vm3504, %v3458, 0
  %v3527 = vsel %vm3504, %v3459, 0
  %v3530 = vsel %vm3504, %v3460, 0
  %v3533 = vsel %vm3504, %v3461, 0
  %v3536 = vsel %vm3504, %v3462, 0
  %v3539 = vsel %vm3504, %v3463, 0
  %v3542 = vsel %vm3504, %v3464, 0
  %v3545 = vsel %vm3504, %v3465, 0
  %v3548 = vsel %vm3504, %v3466, 0
  %v3551 = vsel %vm3504, %v3467, 0
  %v3554 = vsel %vm3504, %v3468, 0
  %v3557 = vsel %vm3504, %v3469, 0
  %v3560 = vsel %vm3504, %v3470, 0
  %v3563 = vsel %vm3504, %v3471, 0
  %v3566 = vsel %vm3504, %v3472, 0
  %v3569 = vsel %vm3504, %v3473, 0
  %v3572 = vsel %vm3504, %v3474, 0
  %v3575 = vsel %vm3504, %v3475, 0
  %v3578 = vsel %vm3504, %v3476, 0
  %v3581 = vsel %vm3504, %v3477, 0
  %v3584 = vsel %vm3504, %v3478, 0
  %v3587 = vsel %vm3504, %v3479, 0
  %v3590 = vsel %vm3504, %v3480, 0
  %v3593 = vsel %vm3504, %v3481, 0
  %v3596 = vsel %vm3504, %v3482, 0
  %v3599 = vsel %vm3504, %v3483, 0
  %vm3601 = vcmask 1041408
  %v3603 = vsel %vm3601, %v3501, 0
  %3605 = vmatprep.subr.bf16.mxu0 0
  %3606 = vmatpush1.bf16.msra.mxu0 %v3499
  %3607 = vmatprep.subr.bf16.mxu0 0
  %3608 = vmatpush1.bf16.msra.mxu0 %v3500
  %3609 = vmatprep.subr.bf16.mxu0 0
  %3610 = vmatpush1.bf16.msra.mxu0 %v3603
  %3611 = vmatprep.subr.bf16.mxu0 0
  %3612 = vmatpush1.bf16.msra.mxu0 0
  %3613 = vmatprep.subr.bf16.mxu0 0
  %3614 = vmatpush1.bf16.msra.mxu0 0
  %3615 = vmatprep.subr.bf16.mxu0 0
  %3616 = vmatpush1.bf16.msra.mxu0 0
  %3617 = vmatprep.subr.bf16.mxu0 0
  %3618 = vmatpush1.bf16.msra.mxu0 0
  %3619 = vmatprep.subr.bf16.mxu0 0
  %3620 = vmatpush1.bf16.msra.mxu0 0
  %3621 = vmatprep.subr.bf16.mxu0 0
  %3622 = vmatpush1.bf16.msra.mxu0 0
  %3623 = vmatprep.subr.bf16.mxu0 0
  %3624 = vmatpush1.bf16.msra.mxu0 0
  %3625 = vmatprep.subr.bf16.mxu0 0
  %3626 = vmatpush1.bf16.msra.mxu0 0
  %3627 = vmatprep.subr.bf16.mxu0 0
  %3628 = vmatpush1.bf16.msra.mxu0 0
  %3629 = vmatprep.subr.bf16.mxu0 0
  %3630 = vmatpush1.bf16.msra.mxu0 0
  %3631 = vmatprep.subr.bf16.mxu0 0
  %3632 = vmatpush1.bf16.msra.mxu0 0
  %3633 = vmatprep.subr.bf16.mxu0 0
  %3634 = vmatpush1.bf16.msra.mxu0 0
  %3635 = vmatprep.subr.bf16.mxu0 0
  %3636 = vmatpush1.bf16.msra.mxu0 0
  %3637 = vmatprep.mubr.bf16.mxu0 0
  %3638 = vmatmul.mubr.bf16.gmra.mrb[0].mxu0 %v3506
  %v3639 = vpop.f32.mrb[0].mxu0
  %v3640 = vadd.f32 0.0, %v3639
  %v3641 = vpop.f32.mrb[0].mxu0
  %v3642 = vpop.f32.mrb[0].mxu0
  %v3643 = vadd.f32 0.0, %v3642
  %v3644 = vpop.f32.mrb[0].mxu0
  %3645 = vmatprep.mubr.bf16.mxu0 0
  %3646 = vmatmul.mubr.bf16.gmra.mrb[0].mxu0 %v3509
  %v3647 = vpop.f32.mrb[0].mxu0
  %v3648 = vadd.f32 0.0, %v3647
  %v3649 = vpop.f32.mrb[0].mxu0
  %v3650 = vpop.f32.mrb[0].mxu0
  %v3651 = vadd.f32 0.0, %v3650
  %v3652 = vpop.f32.mrb[0].mxu0
  %3653 = vmatprep.mubr.bf16.mxu0 0
  %3654 = vmatmul.mubr.bf16.gmra.mrb[0].mxu0 %v3512
  %v3655 = vpop.f32.mrb[0].mxu0
  %v3656 = vadd.f32 0.0, %v3655
  %v3657 = vpop.f32.mrb[0].mxu0
  %v3658 = vpop.f32.mrb[0].mxu0
  %v3659 = vadd.f32 0.0, %v3658
  %v3660 = vpop.f32.mrb[0].mxu0
  %3661 = vmatprep.mubr.bf16.mxu0 0
  %3662 = vmatmul.mubr.bf16.gmra.mrb[0].mxu0 %v3515
  %v3663 = vpop.f32.mrb[0].mxu0
  %v3664 = vadd.f32 0.0, %v3663
  %v3665 = vpop.f32.mrb[0].mxu0
  %v3666 = vpop.f32.mrb[0].mxu0
  %v3667 = vadd.f32 0.0, %v3666
  %v3668 = vpop.f32.mrb[0].mxu0
  %3669 = vmatprep.mubr.bf16.mxu0 0
  %3670 = vmatmul.mubr.bf16.gmra.mrb[0].mxu0 %v3518
  %v3671 = vpop.f32.mrb[0].mxu0
  %v3672 = vadd.f32 0.0, %v3671
  %v3673 = vpop.f32.mrb[0].mxu0
  %v3674 = vpop.f32.mrb[0].mxu0
  %v3675 = vadd.f32 0.0, %v3674
  %v3676 = vpop.f32.mrb[0].mxu0
  %3677 = vmatprep.mubr.bf16.mxu0 0
  %3678 = vmatmul.mubr.bf16.gmra.mrb[0].mxu0 %v3521
  %v3679 = vpop.f32.mrb[0].mxu0
  %v3680 = vadd.f32 0.0, %v3679
  %v3681 = vpop.f32.mrb[0].mxu0
  %v3682 = vpop.f32.mrb[0].mxu0
  %v3683 = vadd.f32 0.0, %v3682
  %v3684 = vpop.f32.mrb[0].mxu0
  %3685 = vmatprep.mubr.bf16.mxu0 0
  %3686 = vmatmul.mubr.bf16.gmra.mrb[0].mxu0 %v3524
  %v3687 = vpop.f32.mrb[0].mxu0
  %v3688 = vadd.f32 0.0, %v3687
  %v3689 = vpop.f32.mrb[0].mxu0
  %v3690 = vpop.f32.mrb[0].mxu0
  %v3691 = vadd.f32 0.0, %v3690
  %v3692 = vpop.f32.mrb[0].mxu0
  %3693 = vmatprep.mubr.bf16.mxu0 0
  %3694 = vmatmul.mubr.bf16.gmra.mrb[0].mxu0 %v3527
  %v3695 = vpop.f32.mrb[0].mxu0
  %v3696 = vadd.f32 0.0, %v3695
  %v3697 = vpop.f32.mrb[0].mxu0
  %v3698 = vpop.f32.mrb[0].mxu0
  %v3699 = vadd.f32 0.0, %v3698
  %v3700 = vpop.f32.mrb[0].mxu0
  %3701 = vmatprep.mubr.bf16.mxu0 0
  %3702 = vmatmul.mubr.bf16.gmra.mrb[0].mxu0 %v3530
  %v3703 = vpop.f32.mrb[0].mxu0
  %v3704 = vadd.f32 0.0, %v3703
  %v3705 = vpop.f32.mrb[0].mxu0
  %v3706 = vpop.f32.mrb[0].mxu0
  %v3707 = vadd.f32 0.0, %v3706
  %v3708 = vpop.f32.mrb[0].mxu0
  %3709 = vmatprep.mubr.bf16.mxu0 0
  %3710 = vmatmul.mubr.bf16.gmra.mrb[0].mxu0 %v3533
  %v3711 = vpop.f32.mrb[0].mxu0
  %v3712 = vadd.f32 0.0, %v3711
  %v3713 = vpop.f32.mrb[0].mxu0
  %v3714 = vpop.f32.mrb[0].mxu0
  %v3715 = vadd.f32 0.0, %v3714
  %v3716 = vpop.f32.mrb[0].mxu0
  %3717 = vmatprep.mubr.bf16.mxu0 0
  %3718 = vmatmul.mubr.bf16.gmra.mrb[0].mxu0 %v3536
  %v3719 = vpop.f32.mrb[0].mxu0
  %v3720 = vadd.f32 0.0, %v3719
  %v3721 = vpop.f32.mrb[0].mxu0
  %v3722 = vpop.f32.mrb[0].mxu0
  %v3723 = vadd.f32 0.0, %v3722
  %v3724 = vpop.f32.mrb[0].mxu0
  %3725 = vmatprep.mubr.bf16.mxu0 0
  %3726 = vmatmul.mubr.bf16.gmra.mrb[0].mxu0 %v3539
  %v3727 = vpop.f32.mrb[0].mxu0
  %v3728 = vadd.f32 0.0, %v3727
  %v3729 = vpop.f32.mrb[0].mxu0
  %v3730 = vpop.f32.mrb[0].mxu0
  %v3731 = vadd.f32 0.0, %v3730
  %v3732 = vpop.f32.mrb[0].mxu0
  %3733 = vmatprep.mubr.bf16.mxu0 0
  %3734 = vmatmul.mubr.bf16.gmra.mrb[0].mxu0 %v3542
  %v3735 = vpop.f32.mrb[0].mxu0
  %v3736 = vadd.f32 0.0, %v3735
  %v3737 = vpop.f32.mrb[0].mxu0
  %v3738 = vpop.f32.mrb[0].mxu0
  %v3739 = vadd.f32 0.0, %v3738
  %v3740 = vpop.f32.mrb[0].mxu0
  %3741 = vmatprep.mubr.bf16.mxu0 0
  %3742 = vmatmul.mubr.bf16.gmra.mrb[0].mxu0 %v3545
  %v3743 = vpop.f32.mrb[0].mxu0
  %v3744 = vadd.f32 0.0, %v3743
  %v3745 = vpop.f32.mrb[0].mxu0
  %v3746 = vpop.f32.mrb[0].mxu0
  %v3747 = vadd.f32 0.0, %v3746
  %v3748 = vpop.f32.mrb[0].mxu0
  %3749 = vmatprep.mubr.bf16.mxu0 0
  %3750 = vmatmul.mubr.bf16.gmra.mrb[0].mxu0 %v3548
  %v3751 = vpop.f32.mrb[0].mxu0
  %v3752 = vadd.f32 0.0, %v3751
  %v3753 = vpop.f32.mrb[0].mxu0
  %v3754 = vpop.f32.mrb[0].mxu0
  %v3755 = vadd.f32 0.0, %v3754
  %v3756 = vpop.f32.mrb[0].mxu0
  %3757 = vmatprep.mubr.bf16.mxu0 0
  %3758 = vmatmul.mubr.bf16.gmra.mrb[0].mxu0 %v3551
  %v3759 = vpop.f32.mrb[0].mxu0
  %v3760 = vadd.f32 0.0, %v3759
  %v3761 = vpop.f32.mrb[0].mxu0
  %v3762 = vpop.f32.mrb[0].mxu0
  %v3763 = vadd.f32 0.0, %v3762
  %v3764 = vpop.f32.mrb[0].mxu0
  %3765 = vmatprep.mubr.bf16.mxu0 0
  %3766 = vmatmul.mubr.bf16.gmra.mrb[0].mxu0 %v3554
  %v3767 = vpop.f32.mrb[0].mxu0
  %v3768 = vadd.f32 0.0, %v3767
  %v3769 = vpop.f32.mrb[0].mxu0
  %v3770 = vpop.f32.mrb[0].mxu0
  %v3771 = vadd.f32 0.0, %v3770
  %v3772 = vpop.f32.mrb[0].mxu0
  %3773 = vmatprep.mubr.bf16.mxu0 0
  %3774 = vmatmul.mubr.bf16.gmra.mrb[0].mxu0 %v3557
  %v3775 = vpop.f32.mrb[0].mxu0
  %v3776 = vadd.f32 0.0, %v3775
  %v3777 = vpop.f32.mrb[0].mxu0
  %v3778 = vpop.f32.mrb[0].mxu0
  %v3779 = vadd.f32 0.0, %v3778
  %v3780 = vpop.f32.mrb[0].mxu0
  %3781 = vmatprep.mubr.bf16.mxu0 0
  %3782 = vmatmul.mubr.bf16.gmra.mrb[0].mxu0 %v3560
  %v3783 = vpop.f32.mrb[0].mxu0
  %v3784 = vadd.f32 0.0, %v3783
  %v3785 = vpop.f32.mrb[0].mxu0
  %v3786 = vpop.f32.mrb[0].mxu0
  %v3787 = vadd.f32 0.0, %v3786
  %v3788 = vpop.f32.mrb[0].mxu0
  %3789 = vmatprep.mubr.bf16.mxu0 0
  %3790 = vmatmul.mubr.bf16.gmra.mrb[0].mxu0 %v3563
  %v3791 = vpop.f32.mrb[0].mxu0
  %v3792 = vadd.f32 0.0, %v3791
  %v3793 = vpop.f32.mrb[0].mxu0
  %v3794 = vpop.f32.mrb[0].mxu0
  %v3795 = vadd.f32 0.0, %v3794
  %v3796 = vpop.f32.mrb[0].mxu0
  %3797 = vmatprep.mubr.bf16.mxu0 0
  %3798 = vmatmul.mubr.bf16.gmra.mrb[0].mxu0 %v3566
  %v3799 = vpop.f32.mrb[0].mxu0
  %v3800 = vadd.f32 0.0, %v3799
  %v3801 = vpop.f32.mrb[0].mxu0
  %v3802 = vpop.f32.mrb[0].mxu0
  %v3803 = vadd.f32 0.0, %v3802
  %v3804 = vpop.f32.mrb[0].mxu0
  %3805 = vmatprep.mubr.bf16.mxu0 0
  %3806 = vmatmul.mubr.bf16.gmra.mrb[0].mxu0 %v3569
  %v3807 = vpop.f32.mrb[0].mxu0
  %v3808 = vadd.f32 0.0, %v3807
  %v3809 = vpop.f32.mrb[0].mxu0
  %v3810 = vpop.f32.mrb[0].mxu0
  %v3811 = vadd.f32 0.0, %v3810
  %v3812 = vpop.f32.mrb[0].mxu0
  %3813 = vmatprep.mubr.bf16.mxu0 0
  %3814 = vmatmul.mubr.bf16.gmra.mrb[0].mxu0 %v3572
  %v3815 = vpop.f32.mrb[0].mxu0
  %v3816 = vadd.f32 0.0, %v3815
  %v3817 = vpop.f32.mrb[0].mxu0
  %v3818 = vpop.f32.mrb[0].mxu0
  %v3819 = vadd.f32 0.0, %v3818
  %v3820 = vpop.f32.mrb[0].mxu0
  %3821 = vmatprep.mubr.bf16.mxu0 0
  %3822 = vmatmul.mubr.bf16.gmra.mrb[0].mxu0 %v3575
  %v3823 = vpop.f32.mrb[0].mxu0
  %v3824 = vadd.f32 0.0, %v3823
  %v3825 = vpop.f32.mrb[0].mxu0
  %v3826 = vpop.f32.mrb[0].mxu0
  %v3827 = vadd.f32 0.0, %v3826
  %v3828 = vpop.f32.mrb[0].mxu0
  %3829 = vmatprep.mubr.bf16.mxu0 0
  %3830 = vmatmul.mubr.bf16.gmra.mrb[0].mxu0 %v3578
  %v3831 = vpop.f32.mrb[0].mxu0
  %v3832 = vadd.f32 0.0, %v3831
  %v3833 = vpop.f32.mrb[0].mxu0
  %v3834 = vpop.f32.mrb[0].mxu0
  %v3835 = vadd.f32 0.0, %v3834
  %v3836 = vpop.f32.mrb[0].mxu0
  %3837 = vmatprep.mubr.bf16.mxu0 0
  %3838 = vmatmul.mubr.bf16.gmra.mrb[0].mxu0 %v3581
  %v3839 = vpop.f32.mrb[0].mxu0
  %v3840 = vadd.f32 0.0, %v3839
  %v3841 = vpop.f32.mrb[0].mxu0
  %v3842 = vpop.f32.mrb[0].mxu0
  %v3843 = vadd.f32 0.0, %v3842
  %v3844 = vpop.f32.mrb[0].mxu0
  %3845 = vmatprep.mubr.bf16.mxu0 0
  %3846 = vmatmul.mubr.bf16.gmra.mrb[0].mxu0 %v3584
  %v3847 = vpop.f32.mrb[0].mxu0
  %v3848 = vadd.f32 0.0, %v3847
  %v3849 = vpop.f32.mrb[0].mxu0
  %v3850 = vpop.f32.mrb[0].mxu0
  %v3851 = vadd.f32 0.0, %v3850
  %v3852 = vpop.f32.mrb[0].mxu0
  %3853 = vmatprep.mubr.bf16.mxu0 0
  %3854 = vmatmul.mubr.bf16.gmra.mrb[0].mxu0 %v3587
  %v3855 = vpop.f32.mrb[0].mxu0
  %v3856 = vadd.f32 0.0, %v3855
  %v3857 = vpop.f32.mrb[0].mxu0
  %v3858 = vpop.f32.mrb[0].mxu0
  %v3859 = vadd.f32 0.0, %v3858
  %v3860 = vpop.f32.mrb[0].mxu0
  %3861 = vmatprep.mubr.bf16.mxu0 0
  %3862 = vmatmul.mubr.bf16.gmra.mrb[0].mxu0 %v3590
  %v3863 = vpop.f32.mrb[0].mxu0
  %v3864 = vadd.f32 0.0, %v3863
  %v3865 = vpop.f32.mrb[0].mxu0
  %v3866 = vpop.f32.mrb[0].mxu0
  %v3867 = vadd.f32 0.0, %v3866
  %v3868 = vpop.f32.mrb[0].mxu0
  %3869 = vmatprep.mubr.bf16.mxu0 0
  %3870 = vmatmul.mubr.bf16.gmra.mrb[0].mxu0 %v3593
  %v3871 = vpop.f32.mrb[0].mxu0
  %v3872 = vadd.f32 0.0, %v3871
  %v3873 = vpop.f32.mrb[0].mxu0
  %v3874 = vpop.f32.mrb[0].mxu0
  %v3875 = vadd.f32 0.0, %v3874
  %v3876 = vpop.f32.mrb[0].mxu0
  %3877 = vmatprep.mubr.bf16.mxu0 0
  %3878 = vmatmul.mubr.bf16.gmra.mrb[0].mxu0 %v3596
  %v3879 = vpop.f32.mrb[0].mxu0
  %v3880 = vadd.f32 0.0, %v3879
  %v3881 = vpop.f32.mrb[0].mxu0
  %v3882 = vpop.f32.mrb[0].mxu0
  %v3883 = vadd.f32 0.0, %v3882
  %v3884 = vpop.f32.mrb[0].mxu0
  %3885 = vmatprep.mubr.bf16.mxu0 0
  %3886 = vmatmul.mubr.bf16.gmra.mrb[0].mxu0 %v3599
  %v3887 = vpop.f32.mrb[0].mxu0
  %v3888 = vadd.f32 0.0, %v3887
  %v3889 = vpop.f32.mrb[0].mxu0
  %v3890 = vpop.f32.mrb[0].mxu0
  %v3891 = vadd.f32 0.0, %v3890
  %v3892 = vpop.f32.mrb[0].mxu0
  %3893 = vdwg.mxu0
  %v3894 = vsel %vm2997, %v3640, 0.0
  %v3895 = vsel %vm2997, %v3643, 0.0
  %v3896 = vadd.f32 %v3894, %v3895
  %v3897 = vsel %vm2997, %v3648, 0.0
  %v3898 = vadd.f32 %v3896, %v3897
  %v3899 = vsel %vm2997, %v3651, 0.0
  %v3900 = vadd.f32 %v3898, %v3899
  %v3901 = vsel %vm2997, %v3656, 0.0
  %v3902 = vadd.f32 %v3900, %v3901
  %v3903 = vsel %vm2997, %v3659, 0.0
  %v3904 = vadd.f32 %v3902, %v3903
  %v3905 = vsel %vm2997, %v3664, 0.0
  %v3906 = vadd.f32 %v3904, %v3905
  %v3907 = vsel %vm2997, %v3667, 0.0
  %v3908 = vadd.f32 %v3906, %v3907
  %v3909 = vsel %vm2997, %v3672, 0.0
  %v3910 = vadd.f32 %v3908, %v3909
  %v3911 = vsel %vm2997, %v3675, 0.0
  %v3912 = vadd.f32 %v3910, %v3911
  %v3913 = vsel %vm2997, %v3680, 0.0
  %v3914 = vadd.f32 %v3912, %v3913
  %v3915 = vsel %vm2997, %v3683, 0.0
  %v3916 = vadd.f32 %v3914, %v3915
  %v3917 = vsel %vm2997, %v3688, 0.0
  %v3918 = vadd.f32 %v3916, %v3917
  %v3919 = vsel %vm2997, %v3691, 0.0
  %v3920 = vadd.f32 %v3918, %v3919
  %v3921 = vsel %vm2997, %v3696, 0.0
  %v3922 = vadd.f32 %v3920, %v3921
  %v3923 = vsel %vm2997, %v3699, 0.0
  %v3924 = vadd.f32 %v3922, %v3923
  %v3925 = vsel %vm2997, %v3704, 0.0
  %v3926 = vadd.f32 %v3924, %v3925
  %v3927 = vsel %vm2997, %v3707, 0.0
  %v3928 = vadd.f32 %v3926, %v3927
  %v3929 = vsel %vm2997, %v3712, 0.0
  %v3930 = vadd.f32 %v3928, %v3929
  %v3931 = vsel %vm2997, %v3715, 0.0
  %v3932 = vadd.f32 %v3930, %v3931
  %v3933 = vsel %vm2997, %v3720, 0.0
  %v3934 = vadd.f32 %v3932, %v3933
  %v3935 = vsel %vm2997, %v3723, 0.0
  %v3936 = vadd.f32 %v3934, %v3935
  %v3937 = vsel %vm2997, %v3728, 0.0
  %v3938 = vadd.f32 %v3936, %v3937
  %v3939 = vsel %vm2997, %v3731, 0.0
  %v3940 = vadd.f32 %v3938, %v3939
  %v3941 = vsel %vm2997, %v3736, 0.0
  %v3942 = vadd.f32 %v3940, %v3941
  %v3943 = vsel %vm2997, %v3739, 0.0
  %v3944 = vadd.f32 %v3942, %v3943
  %v3945 = vsel %vm2997, %v3744, 0.0
  %v3946 = vadd.f32 %v3944, %v3945
  %v3947 = vsel %vm2997, %v3747, 0.0
  %v3948 = vadd.f32 %v3946, %v3947
  %v3949 = vsel %vm2997, %v3752, 0.0
  %v3950 = vadd.f32 %v3948, %v3949
  %v3951 = vsel %vm2997, %v3755, 0.0
  %v3952 = vadd.f32 %v3950, %v3951
  %v3953 = vsel %vm2997, %v3760, 0.0
  %v3954 = vadd.f32 %v3952, %v3953
  %v3955 = vsel %vm2997, %v3763, 0.0
  %v3956 = vadd.f32 %v3954, %v3955
  %v3957 = vsel %vm2997, %v3768, 0.0
  %v3958 = vadd.f32 %v3956, %v3957
  %v3959 = vsel %vm2997, %v3771, 0.0
  %v3960 = vadd.f32 %v3958, %v3959
  %v3961 = vsel %vm2997, %v3776, 0.0
  %v3962 = vadd.f32 %v3960, %v3961
  %v3963 = vsel %vm2997, %v3779, 0.0
  %v3964 = vadd.f32 %v3962, %v3963
  %v3965 = vsel %vm2997, %v3784, 0.0
  %v3966 = vadd.f32 %v3964, %v3965
  %v3967 = vsel %vm2997, %v3787, 0.0
  %v3968 = vadd.f32 %v3966, %v3967
  %v3969 = vsel %vm2997, %v3792, 0.0
  %v3970 = vadd.f32 %v3968, %v3969
  %v3971 = vsel %vm2997, %v3795, 0.0
  %v3972 = vadd.f32 %v3970, %v3971
  %v3973 = vsel %vm2997, %v3800, 0.0
  %v3974 = vadd.f32 %v3972, %v3973
  %v3975 = vsel %vm2997, %v3803, 0.0
  %v3976 = vadd.f32 %v3974, %v3975
  %v3977 = vsel %vm2997, %v3808, 0.0
  %v3978 = vadd.f32 %v3976, %v3977
  %v3979 = vsel %vm2997, %v3811, 0.0
  %v3980 = vadd.f32 %v3978, %v3979
  %v3981 = vsel %vm2997, %v3816, 0.0
  %v3982 = vadd.f32 %v3980, %v3981
  %v3983 = vsel %vm2997, %v3819, 0.0
  %v3984 = vadd.f32 %v3982, %v3983
  %v3985 = vsel %vm2997, %v3824, 0.0
  %v3986 = vadd.f32 %v3984, %v3985
  %v3987 = vsel %vm2997, %v3827, 0.0
  %v3988 = vadd.f32 %v3986, %v3987
  %v3989 = vsel %vm2997, %v3832, 0.0
  %v3990 = vadd.f32 %v3988, %v3989
  %v3991 = vsel %vm2997, %v3835, 0.0
  %v3992 = vadd.f32 %v3990, %v3991
  %v3993 = vsel %vm2997, %v3840, 0.0
  %v3994 = vadd.f32 %v3992, %v3993
  %v3995 = vsel %vm2997, %v3843, 0.0
  %v3996 = vadd.f32 %v3994, %v3995
  %v3997 = vsel %vm2997, %v3848, 0.0
  %v3998 = vadd.f32 %v3996, %v3997
  %v3999 = vsel %vm2997, %v3851, 0.0
  %v4000 = vadd.f32 %v3998, %v3999
  %v4001 = vsel %vm2997, %v3856, 0.0
  %v4002 = vadd.f32 %v4000, %v4001
  %v4003 = vsel %vm2997, %v3859, 0.0
  %v4004 = vadd.f32 %v4002, %v4003
  %v4005 = vsel %vm2997, %v3864, 0.0
  %v4006 = vadd.f32 %v4004, %v4005
  %v4007 = vsel %vm2997, %v3867, 0.0
  %v4008 = vadd.f32 %v4006, %v4007
  %v4009 = vsel %vm2997, %v3872, 0.0
  %v4010 = vadd.f32 %v4008, %v4009
  %v4011 = vsel %vm2997, %v3875, 0.0
  %v4012 = vadd.f32 %v4010, %v4011
  %v4013 = vsel %vm2997, %v3880, 0.0
  %v4014 = vadd.f32 %v4012, %v4013
  %v4015 = vsel %vm2997, %v3883, 0.0
  %v4016 = vadd.f32 %v4014, %v4015
  %v4017 = vsel %vm2997, %v3888, 0.0
  %v4018 = vadd.f32 %v4016, %v4017
  %v4019 = vsel %vm2997, %v3891, 0.0
  %v4020 = vadd.f32 %v4018, %v4019
  %v4021 = vrot.slane %v4020, 4
  %v4022 = vadd.f32 %v4020, %v4021
  %v4023 = vrot.slane %v4022, 2
  %v4024 = vadd.f32 %v4022, %v4023
  %v4025 = vrot.slane %v4024, 1
  %v4026 = vadd.f32 %v4024, %v4025
  %v4027 = vmul.f32 %v3640, %v3640
  %v4028 = vmul.f32 %v3643, %v3643
  %v4029 = vmul.f32 %v3648, %v3648
  %v4030 = vmul.f32 %v3651, %v3651
  %v4031 = vmul.f32 %v3656, %v3656
  %v4032 = vmul.f32 %v3659, %v3659
  %v4033 = vmul.f32 %v3664, %v3664
  %v4034 = vmul.f32 %v3667, %v3667
  %v4035 = vmul.f32 %v3672, %v3672
  %v4036 = vmul.f32 %v3675, %v3675
  %v4037 = vmul.f32 %v3680, %v3680
  %v4038 = vmul.f32 %v3683, %v3683
  %v4039 = vmul.f32 %v3688, %v3688
  %v4040 = vmul.f32 %v3691, %v3691
  %v4041 = vmul.f32 %v3696, %v3696
  %v4042 = vmul.f32 %v3699, %v3699
  %v4043 = vmul.f32 %v3704, %v3704
  %v4044 = vmul.f32 %v3707, %v3707
  %v4045 = vmul.f32 %v3712, %v3712
  %v4046 = vmul.f32 %v3715, %v3715
  %v4047 = vmul.f32 %v3720, %v3720
  %v4048 = vmul.f32 %v3723, %v3723
  %v4049 = vmul.f32 %v3728, %v3728
  %v4050 = vmul.f32 %v3731, %v3731
  %v4051 = vmul.f32 %v3736, %v3736
  %v4052 = vmul.f32 %v3739, %v3739
  %v4053 = vmul.f32 %v3744, %v3744
  %v4054 = vmul.f32 %v3747, %v3747
  %v4055 = vmul.f32 %v3752, %v3752
  %v4056 = vmul.f32 %v3755, %v3755
  %v4057 = vmul.f32 %v3760, %v3760
  %v4058 = vmul.f32 %v3763, %v3763
  %v4059 = vmul.f32 %v3768, %v3768
  %v4060 = vmul.f32 %v3771, %v3771
  %v4061 = vmul.f32 %v3776, %v3776
  %v4062 = vmul.f32 %v3779, %v3779
  %v4063 = vmul.f32 %v3784, %v3784
  %v4064 = vmul.f32 %v3787, %v3787
  %v4065 = vmul.f32 %v3792, %v3792
  %v4066 = vmul.f32 %v3795, %v3795
  %v4067 = vmul.f32 %v3800, %v3800
  %v4068 = vmul.f32 %v3803, %v3803
  %v4069 = vmul.f32 %v3808, %v3808
  %v4070 = vmul.f32 %v3811, %v3811
  %v4071 = vmul.f32 %v3816, %v3816
  %v4072 = vmul.f32 %v3819, %v3819
  %v4073 = vmul.f32 %v3824, %v3824
  %v4074 = vmul.f32 %v3827, %v3827
  %v4075 = vmul.f32 %v3832, %v3832
  %v4076 = vmul.f32 %v3835, %v3835
  %v4077 = vmul.f32 %v3840, %v3840
  %v4078 = vmul.f32 %v3843, %v3843
  %v4079 = vmul.f32 %v3848, %v3848
  %v4080 = vmul.f32 %v3851, %v3851
  %v4081 = vmul.f32 %v3856, %v3856
  %v4082 = vmul.f32 %v3859, %v3859
  %v4083 = vmul.f32 %v3864, %v3864
  %v4084 = vmul.f32 %v3867, %v3867
  %v4085 = vmul.f32 %v3872, %v3872
  %v4086 = vmul.f32 %v3875, %v3875
  %v4087 = vmul.f32 %v3880, %v3880
  %v4088 = vmul.f32 %v3883, %v3883
  %v4089 = vmul.f32 %v3888, %v3888
  %v4090 = vmul.f32 %v3891, %v3891
  %v4091 = vsel %vm2997, %v4027, 0.0
  %v4092 = vsel %vm2997, %v4028, 0.0
  %v4093 = vadd.f32 %v4091, %v4092
  %v4094 = vsel %vm2997, %v4029, 0.0
  %v4095 = vadd.f32 %v4093, %v4094
  %v4096 = vsel %vm2997, %v4030, 0.0
  %v4097 = vadd.f32 %v4095, %v4096
  %v4098 = vsel %vm2997, %v4031, 0.0
  %v4099 = vadd.f32 %v4097, %v4098
  %v4100 = vsel %vm2997, %v4032, 0.0
  %v4101 = vadd.f32 %v4099, %v4100
  %v4102 = vsel %vm2997, %v4033, 0.0
  %v4103 = vadd.f32 %v4101, %v4102
  %v4104 = vsel %vm2997, %v4034, 0.0
  %v4105 = vadd.f32 %v4103, %v4104
  %v4106 = vsel %vm2997, %v4035, 0.0
  %v4107 = vadd.f32 %v4105, %v4106
  %v4108 = vsel %vm2997, %v4036, 0.0
  %v4109 = vadd.f32 %v4107, %v4108
  %v4110 = vsel %vm2997, %v4037, 0.0
  %v4111 = vadd.f32 %v4109, %v4110
  %v4112 = vsel %vm2997, %v4038, 0.0
  %v4113 = vadd.f32 %v4111, %v4112
  %v4114 = vsel %vm2997, %v4039, 0.0
  %v4115 = vadd.f32 %v4113, %v4114
  %v4116 = vsel %vm2997, %v4040, 0.0
  %v4117 = vadd.f32 %v4115, %v4116
  %v4118 = vsel %vm2997, %v4041, 0.0
  %v4119 = vadd.f32 %v4117, %v4118
  %v4120 = vsel %vm2997, %v4042, 0.0
  %v4121 = vadd.f32 %v4119, %v4120
  %v4122 = vsel %vm2997, %v4043, 0.0
  %v4123 = vadd.f32 %v4121, %v4122
  %v4124 = vsel %vm2997, %v4044, 0.0
  %v4125 = vadd.f32 %v4123, %v4124
  %v4126 = vsel %vm2997, %v4045, 0.0
  %v4127 = vadd.f32 %v4125, %v4126
  %v4128 = vsel %vm2997, %v4046, 0.0
  %v4129 = vadd.f32 %v4127, %v4128
  %v4130 = vsel %vm2997, %v4047, 0.0
  %v4131 = vadd.f32 %v4129, %v4130
  %v4132 = vsel %vm2997, %v4048, 0.0
  %v4133 = vadd.f32 %v4131, %v4132
  %v4134 = vsel %vm2997, %v4049, 0.0
  %v4135 = vadd.f32 %v4133, %v4134
  %v4136 = vsel %vm2997, %v4050, 0.0
  %v4137 = vadd.f32 %v4135, %v4136
  %v4138 = vsel %vm2997, %v4051, 0.0
  %v4139 = vadd.f32 %v4137, %v4138
  %v4140 = vsel %vm2997, %v4052, 0.0
  %v4141 = vadd.f32 %v4139, %v4140
  %v4142 = vsel %vm2997, %v4053, 0.0
  %v4143 = vadd.f32 %v4141, %v4142
  %v4144 = vsel %vm2997, %v4054, 0.0
  %v4145 = vadd.f32 %v4143, %v4144
  %v4146 = vsel %vm2997, %v4055, 0.0
  %v4147 = vadd.f32 %v4145, %v4146
  %v4148 = vsel %vm2997, %v4056, 0.0
  %v4149 = vadd.f32 %v4147, %v4148
  %v4150 = vsel %vm2997, %v4057, 0.0
  %v4151 = vadd.f32 %v4149, %v4150
  %v4152 = vsel %vm2997, %v4058, 0.0
  %v4153 = vadd.f32 %v4151, %v4152
  %v4154 = vsel %vm2997, %v4059, 0.0
  %v4155 = vadd.f32 %v4153, %v4154
  %v4156 = vsel %vm2997, %v4060, 0.0
  %v4157 = vadd.f32 %v4155, %v4156
  %v4158 = vsel %vm2997, %v4061, 0.0
  %v4159 = vadd.f32 %v4157, %v4158
  %v4160 = vsel %vm2997, %v4062, 0.0
  %v4161 = vadd.f32 %v4159, %v4160
  %v4162 = vsel %vm2997, %v4063, 0.0
  %v4163 = vadd.f32 %v4161, %v4162
  %v4164 = vsel %vm2997, %v4064, 0.0
  %v4165 = vadd.f32 %v4163, %v4164
  %v4166 = vsel %vm2997, %v4065, 0.0
  %v4167 = vadd.f32 %v4165, %v4166
  %v4168 = vsel %vm2997, %v4066, 0.0
  %v4169 = vadd.f32 %v4167, %v4168
  %v4170 = vsel %vm2997, %v4067, 0.0
  %v4171 = vadd.f32 %v4169, %v4170
  %v4172 = vsel %vm2997, %v4068, 0.0
  %v4173 = vadd.f32 %v4171, %v4172
  %v4174 = vsel %vm2997, %v4069, 0.0
  %v4175 = vadd.f32 %v4173, %v4174
  %v4176 = vsel %vm2997, %v4070, 0.0
  %v4177 = vadd.f32 %v4175, %v4176
  %v4178 = vsel %vm2997, %v4071, 0.0
  %v4179 = vadd.f32 %v4177, %v4178
  %v4180 = vsel %vm2997, %v4072, 0.0
  %v4181 = vadd.f32 %v4179, %v4180
  %v4182 = vsel %vm2997, %v4073, 0.0
  %v4183 = vadd.f32 %v4181, %v4182
  %v4184 = vsel %vm2997, %v4074, 0.0
  %v4185 = vadd.f32 %v4183, %v4184
  %v4186 = vsel %vm2997, %v4075, 0.0
  %v4187 = vadd.f32 %v4185, %v4186
  %v4188 = vsel %vm2997, %v4076, 0.0
  %v4189 = vadd.f32 %v4187, %v4188
  %v4190 = vsel %vm2997, %v4077, 0.0
  %v4191 = vadd.f32 %v4189, %v4190
  %v4192 = vsel %vm2997, %v4078, 0.0
  %v4193 = vadd.f32 %v4191, %v4192
  %v4194 = vsel %vm2997, %v4079, 0.0
  %v4195 = vadd.f32 %v4193, %v4194
  %v4196 = vsel %vm2997, %v4080, 0.0
  %v4197 = vadd.f32 %v4195, %v4196
  %v4198 = vsel %vm2997, %v4081, 0.0
  %v4199 = vadd.f32 %v4197, %v4198
  %v4200 = vsel %vm2997, %v4082, 0.0
  %v4201 = vadd.f32 %v4199, %v4200
  %v4202 = vsel %vm2997, %v4083, 0.0
  %v4203 = vadd.f32 %v4201, %v4202
  %v4204 = vsel %vm2997, %v4084, 0.0
  %v4205 = vadd.f32 %v4203, %v4204
  %v4206 = vsel %vm2997, %v4085, 0.0
  %v4207 = vadd.f32 %v4205, %v4206
  %v4208 = vsel %vm2997, %v4086, 0.0
  %v4209 = vadd.f32 %v4207, %v4208
  %v4210 = vsel %vm2997, %v4087, 0.0
  %v4211 = vadd.f32 %v4209, %v4210
  %v4212 = vsel %vm2997, %v4088, 0.0
  %v4213 = vadd.f32 %v4211, %v4212
  %v4214 = vsel %vm2997, %v4089, 0.0
  %v4215 = vadd.f32 %v4213, %v4214
  %v4216 = vsel %vm2997, %v4090, 0.0
  %v4217 = vadd.f32 %v4215, %v4216
  %v4218 = vrot.slane %v4217, 4
  %v4219 = vadd.f32 %v4217, %v4218
  %v4220 = vrot.slane %v4219, 2
  %v4221 = vadd.f32 %v4219, %v4220
  %v4222 = vrot.slane %v4221, 1
  %v4223 = vadd.f32 %v4221, %v4222
  %v4224 = vmul.f32 %v4026, 0.001953125
  %v4225 = vmul.f32 %v4223, 0.001953125
  %v4226 = vmul.f32 %v4224, %v4224
  %v4227 = vsub.f32 %v4225, %v4226
  %v4228 = vmax.f32 %v4227, 0.0
  %v4229 = vld [vmem:[%s2] sm:$0x1]
  %v4230 = vadd.f32 %v4228, 1e-05
  %v4231 = vrsqrt.pop %v4230
  %v4232 = vmul.f32 %v4229, %v4231
  %v4233 = vld [vmem:[%s3] sm:$0x1]
  %v4234 = vmul.f32 %v4224, %v4232
  %v4235 = vsub.f32 %v4233, %v4234
  %v4237 = vlaneseq
  %v4238 = vshrl.u32 %v4237, 7
  %v4239 = vsub.s32 0, %v4238
  %v4240 = vrot.slane %v4232, %v4239
  %v4242 = vmul.f32 %v3640, %v4240
  %v4243 = vmul.f32 %v3643, %v4240
  %v4244 = vmul.f32 %v3648, %v4240
  %v4245 = vmul.f32 %v3651, %v4240
  %v4246 = vmul.f32 %v3656, %v4240
  %v4247 = vmul.f32 %v3659, %v4240
  %v4248 = vmul.f32 %v3664, %v4240
  %v4249 = vmul.f32 %v3667, %v4240
  %v4250 = vmul.f32 %v3672, %v4240
  %v4251 = vmul.f32 %v3675, %v4240
  %v4252 = vmul.f32 %v3680, %v4240
  %v4253 = vmul.f32 %v3683, %v4240
  %v4254 = vmul.f32 %v3688, %v4240
  %v4255 = vmul.f32 %v3691, %v4240
  %v4256 = vmul.f32 %v3696, %v4240
  %v4257 = vmul.f32 %v3699, %v4240
  %v4258 = vmul.f32 %v3704, %v4240
  %v4259 = vmul.f32 %v3707, %v4240
  %v4260 = vmul.f32 %v3712, %v4240
  %v4261 = vmul.f32 %v3715, %v4240
  %v4262 = vmul.f32 %v3720, %v4240
  %v4263 = vmul.f32 %v3723, %v4240
  %v4264 = vmul.f32 %v3728, %v4240
  %v4265 = vmul.f32 %v3731, %v4240
  %v4266 = vmul.f32 %v3736, %v4240
  %v4267 = vmul.f32 %v3739, %v4240
  %v4268 = vmul.f32 %v3744, %v4240
  %v4269 = vmul.f32 %v3747, %v4240
  %v4270 = vmul.f32 %v3752, %v4240
  %v4271 = vmul.f32 %v3755, %v4240
  %v4272 = vmul.f32 %v3760, %v4240
  %v4273 = vmul.f32 %v3763, %v4240
  %v4274 = vmul.f32 %v3768, %v4240
  %v4275 = vmul.f32 %v3771, %v4240
  %v4276 = vmul.f32 %v3776, %v4240
  %v4277 = vmul.f32 %v3779, %v4240
  %v4278 = vmul.f32 %v3784, %v4240
  %v4279 = vmul.f32 %v3787, %v4240
  %v4280 = vmul.f32 %v3792, %v4240
  %v4281 = vmul.f32 %v3795, %v4240
  %v4282 = vmul.f32 %v3800, %v4240
  %v4283 = vmul.f32 %v3803, %v4240
  %v4284 = vmul.f32 %v3808, %v4240
  %v4285 = vmul.f32 %v3811, %v4240
  %v4286 = vmul.f32 %v3816, %v4240
  %v4287 = vmul.f32 %v3819, %v4240
  %v4288 = vmul.f32 %v3824, %v4240
  %v4289 = vmul.f32 %v3827, %v4240
  %v4290 = vmul.f32 %v3832, %v4240
  %v4291 = vmul.f32 %v3835, %v4240
  %v4292 = vmul.f32 %v3840, %v4240
  %v4293 = vmul.f32 %v3843, %v4240
  %v4294 = vmul.f32 %v3848, %v4240
  %v4295 = vmul.f32 %v3851, %v4240
  %v4296 = vmul.f32 %v3856, %v4240
  %v4297 = vmul.f32 %v3859, %v4240
  %v4298 = vmul.f32 %v3864, %v4240
  %v4299 = vmul.f32 %v3867, %v4240
  %v4300 = vmul.f32 %v3872, %v4240
  %v4301 = vmul.f32 %v3875, %v4240
  %v4302 = vmul.f32 %v3880, %v4240
  %v4303 = vmul.f32 %v3883, %v4240
  %v4304 = vmul.f32 %v3888, %v4240
  %v4305 = vmul.f32 %v3891, %v4240
  %v4307 = vlaneseq
  %v4308 = vshrl.u32 %v4307, 7
  %v4309 = vsub.s32 0, %v4308
  %v4310 = vrot.slane %v4235, %v4309
  %v4312 = vadd.f32 %v4242, %v4310
  %v4313 = vadd.f32 %v4243, %v4310
  %v4314 = vadd.f32 %v4244, %v4310
  %v4315 = vadd.f32 %v4245, %v4310
  %v4316 = vadd.f32 %v4246, %v4310
  %v4317 = vadd.f32 %v4247, %v4310
  %v4318 = vadd.f32 %v4248, %v4310
  %v4319 = vadd.f32 %v4249, %v4310
  %v4320 = vadd.f32 %v4250, %v4310
  %v4321 = vadd.f32 %v4251, %v4310
  %v4322 = vadd.f32 %v4252, %v4310
  %v4323 = vadd.f32 %v4253, %v4310
  %v4324 = vadd.f32 %v4254, %v4310
  %v4325 = vadd.f32 %v4255, %v4310
  %v4326 = vadd.f32 %v4256, %v4310
  %v4327 = vadd.f32 %v4257, %v4310
  %v4328 = vadd.f32 %v4258, %v4310
  %v4329 = vadd.f32 %v4259, %v4310
  %v4330 = vadd.f32 %v4260, %v4310
  %v4331 = vadd.f32 %v4261, %v4310
  %v4332 = vadd.f32 %v4262, %v4310
  %v4333 = vadd.f32 %v4263, %v4310
  %v4334 = vadd.f32 %v4264, %v4310
  %v4335 = vadd.f32 %v4265, %v4310
  %v4336 = vadd.f32 %v4266, %v4310
  %v4337 = vadd.f32 %v4267, %v4310
  %v4338 = vadd.f32 %v4268, %v4310
  %v4339 = vadd.f32 %v4269, %v4310
  %v4340 = vadd.f32 %v4270, %v4310
  %v4341 = vadd.f32 %v4271, %v4310
  %v4342 = vadd.f32 %v4272, %v4310
  %v4343 = vadd.f32 %v4273, %v4310
  %v4344 = vadd.f32 %v4274, %v4310
  %v4345 = vadd.f32 %v4275, %v4310
  %v4346 = vadd.f32 %v4276, %v4310
  %v4347 = vadd.f32 %v4277, %v4310
  %v4348 = vadd.f32 %v4278, %v4310
  %v4349 = vadd.f32 %v4279, %v4310
  %v4350 = vadd.f32 %v4280, %v4310
  %v4351 = vadd.f32 %v4281, %v4310
  %v4352 = vadd.f32 %v4282, %v4310
  %v4353 = vadd.f32 %v4283, %v4310
  %v4354 = vadd.f32 %v4284, %v4310
  %v4355 = vadd.f32 %v4285, %v4310
  %v4356 = vadd.f32 %v4286, %v4310
  %v4357 = vadd.f32 %v4287, %v4310
  %v4358 = vadd.f32 %v4288, %v4310
  %v4359 = vadd.f32 %v4289, %v4310
  %v4360 = vadd.f32 %v4290, %v4310
  %v4361 = vadd.f32 %v4291, %v4310
  %v4362 = vadd.f32 %v4292, %v4310
  %v4363 = vadd.f32 %v4293, %v4310
  %v4364 = vadd.f32 %v4294, %v4310
  %v4365 = vadd.f32 %v4295, %v4310
  %v4366 = vadd.f32 %v4296, %v4310
  %v4367 = vadd.f32 %v4297, %v4310
  %v4368 = vadd.f32 %v4298, %v4310
  %v4369 = vadd.f32 %v4299, %v4310
  %v4370 = vadd.f32 %v4300, %v4310
  %v4371 = vadd.f32 %v4301, %v4310
  %v4372 = vadd.f32 %v4302, %v4310
  %v4373 = vadd.f32 %v4303, %v4310
  %v4374 = vadd.f32 %v4304, %v4310
  %v4375 = vadd.f32 %v4305, %v4310
  %v4376 = vmax.f32 %v4312, 0.0
  %v4377 = vmax.f32 %v4313, 0.0
  %v4378 = vmax.f32 %v4314, 0.0
  %v4379 = vmax.f32 %v4315, 0.0
  %v4380 = vmax.f32 %v4316, 0.0
  %v4381 = vmax.f32 %v4317, 0.0
  %v4382 = vmax.f32 %v4318, 0.0
  %v4383 = vmax.f32 %v4319, 0.0
  %v4384 = vmax.f32 %v4320, 0.0
  %v4385 = vmax.f32 %v4321, 0.0
  %v4386 = vmax.f32 %v4322, 0.0
  %v4387 = vmax.f32 %v4323, 0.0
  %v4388 = vmax.f32 %v4324, 0.0
  %v4389 = vmax.f32 %v4325, 0.0
  %v4390 = vmax.f32 %v4326, 0.0
  %v4391 = vmax.f32 %v4327, 0.0
  %v4392 = vmax.f32 %v4328, 0.0
  %v4393 = vmax.f32 %v4329, 0.0
  %v4394 = vmax.f32 %v4330, 0.0
  %v4395 = vmax.f32 %v4331, 0.0
  %v4396 = vmax.f32 %v4332, 0.0
  %v4397 = vmax.f32 %v4333, 0.0
  %v4398 = vmax.f32 %v4334, 0.0
  %v4399 = vmax.f32 %v4335, 0.0
  %v4400 = vmax.f32 %v4336, 0.0
  %v4401 = vmax.f32 %v4337, 0.0
  %v4402 = vmax.f32 %v4338, 0.0
  %v4403 = vmax.f32 %v4339, 0.0
  %v4404 = vmax.f32 %v4340, 0.0
  %v4405 = vmax.f32 %v4341, 0.0
  %v4406 = vmax.f32 %v4342, 0.0
  %v4407 = vmax.f32 %v4343, 0.0
  %v4408 = vmax.f32 %v4344, 0.0
  %v4409 = vmax.f32 %v4345, 0.0
  %v4410 = vmax.f32 %v4346, 0.0
  %v4411 = vmax.f32 %v4347, 0.0
  %v4412 = vmax.f32 %v4348, 0.0
  %v4413 = vmax.f32 %v4349, 0.0
  %v4414 = vmax.f32 %v4350, 0.0
  %v4415 = vmax.f32 %v4351, 0.0
  %v4416 = vmax.f32 %v4352, 0.0
  %v4417 = vmax.f32 %v4353, 0.0
  %v4418 = vmax.f32 %v4354, 0.0
  %v4419 = vmax.f32 %v4355, 0.0
  %v4420 = vmax.f32 %v4356, 0.0
  %v4421 = vmax.f32 %v4357, 0.0
  %v4422 = vmax.f32 %v4358, 0.0
  %v4423 = vmax.f32 %v4359, 0.0
  %v4424 = vmax.f32 %v4360, 0.0
  %v4425 = vmax.f32 %v4361, 0.0
  %v4426 = vmax.f32 %v4362, 0.0
  %v4427 = vmax.f32 %v4363, 0.0
  %v4428 = vmax.f32 %v4364, 0.0
  %v4429 = vmax.f32 %v4365, 0.0
  %v4430 = vmax.f32 %v4366, 0.0
  %v4431 = vmax.f32 %v4367, 0.0
  %v4432 = vmax.f32 %v4368, 0.0
  %v4433 = vmax.f32 %v4369, 0.0
  %v4434 = vmax.f32 %v4370, 0.0
  %v4435 = vmax.f32 %v4371, 0.0
  %v4436 = vmax.f32 %v4372, 0.0
  %v4437 = vmax.f32 %v4373, 0.0
  %v4438 = vmax.f32 %v4374, 0.0
  %v4439 = vmax.f32 %v4375, 0.0
  %4440 = vst.msk [vmem:[#allocation3] sm:$0xff] %vm2997, 0.0
  %4441 = vst.msk [vmem:[#allocation3 + $0x8] sm:$0xff] %vm2997, 0.0
  %vm4442 = vcmask 58368
  %4443 = vst.msk [vmem:[#allocation3 + $0x10] sm:$0x3] %vm4442, 0.0
  %4444 = vst.msk [vmem:[#allocation3 + $0x1b0] sm:$0xff] %vm2997, 0.0
  %4445 = vst.msk [vmem:[#allocation3 + $0x1b8] sm:$0xff] %vm2997, 0.0
  %4446 = vst.msk [vmem:[#allocation3 + $0x1c0] sm:$0x3] %vm4442, 0.0
  %s4447 = scalar_lea.vmem [#allocation3], 408
  %4448 = vst.msk [vmem:[%s4447] sm:$0xff] %vm2997, 0.0
  %4449 = vst.msk [vmem:[%s4447 + $0x8] sm:$0xff] %vm2997, 0.0
  %4450 = vst.msk [vmem:[%s4447 + $0x10] sm:$0x3] %vm4442, 0.0
  %4451 = vst.msk [vmem:[%s4447 + $0x1b0] sm:$0xff] %vm2997, 0.0
  %4452 = vst.msk [vmem:[%s4447 + $0x1b8] sm:$0xff] %vm2997, 0.0
  %4453 = vst.msk [vmem:[%s4447 + $0x1c0] sm:$0x3] %vm4442, 0.0
  %vm4454 = vcmask 57344
  %4455 = vst.msk [vmem:[#allocation3] sm:$0x1] %vm4454, 0.0
  %4456 = vst.msk [vmem:[#allocation3 + $0x18] sm:$0x1] %vm4454, 0.0
  %4457 = vst.msk [vmem:[#allocation3 + $0x30] sm:$0x1] %vm4454, 0.0
  %4458 = vst.msk [vmem:[#allocation3 + $0x48] sm:$0x1] %vm4454, 0.0
  %4459 = vst.msk [vmem:[#allocation3 + $0x60] sm:$0x1] %vm4454, 0.0
  %4460 = vst.msk [vmem:[#allocation3 + $0x78] sm:$0x1] %vm4454, 0.0
  %4461 = vst.msk [vmem:[#allocation3 + $0x90] sm:$0x1] %vm4454, 0.0
  %4462 = vst.msk [vmem:[#allocation3 + $0xa8] sm:$0x1] %vm4454, 0.0
  %4463 = vst.msk [vmem:[#allocation3 + $0xc0] sm:$0x1] %vm4454, 0.0
  %4464 = vst.msk [vmem:[#allocation3 + $0xd8] sm:$0x1] %vm4454, 0.0
  %4465 = vst.msk [vmem:[#allocation3 + $0xf0] sm:$0x1] %vm4454, 0.0
  %4466 = vst.msk [vmem:[#allocation3 + $0x108] sm:$0x1] %vm4454, 0.0
  %4467 = vst.msk [vmem:[#allocation3 + $0x120] sm:$0x1] %vm4454, 0.0
  %4468 = vst.msk [vmem:[#allocation3 + $0x138] sm:$0x1] %vm4454, 0.0
  %4469 = vst.msk [vmem:[#allocation3 + $0x150] sm:$0x1] %vm4454, 0.0
  %4470 = vst.msk [vmem:[#allocation3 + $0x168] sm:$0x1] %vm4454, 0.0
  %4471 = vst.msk [vmem:[#allocation3 + $0x180] sm:$0x1] %vm4454, 0.0
  %4472 = vst.msk [vmem:[#allocation3 + $0x198] sm:$0x1] %vm4454, 0.0
  %4473 = vst.msk [vmem:[#allocation3 + $0x1b0] sm:$0x1] %vm4454, 0.0
  %4474 = vst.msk [vmem:[#allocation3 + $0x1c8] sm:$0x1] %vm4454, 0.0
  %4475 = vst.msk [vmem:[#allocation3 + $0x1e0] sm:$0x1] %vm4454, 0.0
  %4476 = vst.msk [vmem:[#allocation3 + $0x1f8] sm:$0x1] %vm4454, 0.0
  %4477 = vst.msk [vmem:[#allocation3 + $0x210] sm:$0x1] %vm4454, 0.0
  %4478 = vst.msk [vmem:[#allocation3 + $0x228] sm:$0x1] %vm4454, 0.0
  %4479 = vst.msk [vmem:[#allocation3 + $0x240] sm:$0x1] %vm4454, 0.0
  %4480 = vst.msk [vmem:[#allocation3 + $0x258] sm:$0x1] %vm4454, 0.0
  %4481 = vst.msk [vmem:[#allocation3 + $0x270] sm:$0x1] %vm4454, 0.0
  %4482 = vst.msk [vmem:[#allocation3 + $0x288] sm:$0x1] %vm4454, 0.0
  %4483 = vst.msk [vmem:[#allocation3 + $0x2a0] sm:$0x1] %vm4454, 0.0
  %4484 = vst.msk [vmem:[#allocation3 + $0x2b8] sm:$0x1] %vm4454, 0.0
  %4485 = vst.msk [vmem:[#allocation3 + $0x2d0] sm:$0x1] %vm4454, 0.0
  %4486 = vst.msk [vmem:[#allocation3 + $0x2e8] sm:$0x1] %vm4454, 0.0
  %4487 = vst.msk [vmem:[#allocation3 + $0x300] sm:$0x1] %vm4454, 0.0
  %4488 = vst.msk [vmem:[#allocation3 + $0x318] sm:$0x1] %vm4454, 0.0
  %4489 = vst.msk [vmem:[#allocation3 + $0x330] sm:$0x1] %vm4454, 0.0
  %4490 = vst.msk [vmem:[#allocation3 + $0x348] sm:$0x1] %vm4454, 0.0
  %4491 = vst.msk [vmem:[#allocation3 + $0x11] sm:$0x1] %vm4454, 0.0
  %4492 = vst.msk [vmem:[#allocation3 + $0x29] sm:$0x1] %vm4454, 0.0
  %4493 = vst.msk [vmem:[#allocation3 + $0x41] sm:$0x1] %vm4454, 0.0
  %4494 = vst.msk [vmem:[#allocation3 + $0x59] sm:$0x1] %vm4454, 0.0
  %4495 = vst.msk [vmem:[#allocation3 + $0x71] sm:$0x1] %vm4454, 0.0
  %4496 = vst.msk [vmem:[#allocation3 + $0x89] sm:$0x1] %vm4454, 0.0
  %4497 = vst.msk [vmem:[#allocation3 + $0xa1] sm:$0x1] %vm4454, 0.0
  %4498 = vst.msk [vmem:[#allocation3 + $0xb9] sm:$0x1] %vm4454, 0.0
  %4499 = vst.msk [vmem:[#allocation3 + $0xd1] sm:$0x1] %vm4454, 0.0
  %4500 = vst.msk [vmem:[#allocation3 + $0xe9] sm:$0x1] %vm4454, 0.0
  %4501 = vst.msk [vmem:[#allocation3 + $0x101] sm:$0x1] %vm4454, 0.0
  %4502 = vst.msk [vmem:[#allocation3 + $0x119] sm:$0x1] %vm4454, 0.0
  %4503 = vst.msk [vmem:[#allocation3 + $0x131] sm:$0x1] %vm4454, 0.0
  %4504 = vst.msk [vmem:[#allocation3 + $0x149] sm:$0x1] %vm4454, 0.0
  %4505 = vst.msk [vmem:[#allocation3 + $0x161] sm:$0x1] %vm4454, 0.0
  %4506 = vst.msk [vmem:[#allocation3 + $0x179] sm:$0x1] %vm4454, 0.0
  %4507 = vst.msk [vmem:[#allocation3 + $0x191] sm:$0x1] %vm4454, 0.0
  %4508 = vst.msk [vmem:[#allocation3 + $0x1a9] sm:$0x1] %vm4454, 0.0
  %4509 = vst.msk [vmem:[#allocation3 + $0x1c1] sm:$0x1] %vm4454, 0.0
  %4510 = vst.msk [vmem:[#allocation3 + $0x1d9] sm:$0x1] %vm4454, 0.0
  %4511 = vst.msk [vmem:[#allocation3 + $0x1f1] sm:$0x1] %vm4454, 0.0
  %4512 = vst.msk [vmem:[#allocation3 + $0x209] sm:$0x1] %vm4454, 0.0
  %4513 = vst.msk [vmem:[#allocation3 + $0x221] sm:$0x1] %vm4454, 0.0
  %4514 = vst.msk [vmem:[#allocation3 + $0x239] sm:$0x1] %vm4454, 0.0
  %4515 = vst.msk [vmem:[#allocation3 + $0x251] sm:$0x1] %vm4454, 0.0
  %4516 = vst.msk [vmem:[#allocation3 + $0x269] sm:$0x1] %vm4454, 0.0
  %4517 = vst.msk [vmem:[#allocation3 + $0x281] sm:$0x1] %vm4454, 0.0
  %4518 = vst.msk [vmem:[#allocation3 + $0x299] sm:$0x1] %vm4454, 0.0
  %4519 = vst.msk [vmem:[#allocation3 + $0x2b1] sm:$0x1] %vm4454, 0.0
  %4520 = vst.msk [vmem:[#allocation3 + $0x2c9] sm:$0x1] %vm4454, 0.0
  %4521 = vst.msk [vmem:[#allocation3 + $0x2e1] sm:$0x1] %vm4454, 0.0
  %4522 = vst.msk [vmem:[#allocation3 + $0x2f9] sm:$0x1] %vm4454, 0.0
  %4523 = vst.msk [vmem:[#allocation3 + $0x311] sm:$0x1] %vm4454, 0.0
  %4524 = vst.msk [vmem:[#allocation3 + $0x329] sm:$0x1] %vm4454, 0.0
  %4525 = vst.msk [vmem:[#allocation3 + $0x341] sm:$0x1] %vm4454, 0.0
  %4526 = vst.msk [vmem:[#allocation3 + $0x359] sm:$0x1] %vm4454, 0.0
  %s4527 = scalar_lea.vmem [#allocation3], 24
  %4528 = vst.msk [vmem:[%s4527 + $0x1] sm:$0xff] %vm2997, %v4376
  %4529 = vst.msk [vmem:[%s4527 + $0x9] sm:$0xff] %vm2997, %v4377
  %4530 = vst.msk [vmem:[%s4527 + $0x19] sm:$0xff] %vm2997, %v4378
  %4531 = vst.msk [vmem:[%s4527 + $0x21] sm:$0xff] %vm2997, %v4379
  %4532 = vst.msk [vmem:[%s4527 + $0x31] sm:$0xff] %vm2997, %v4380
  %4533 = vst.msk [vmem:[%s4527 + $0x39] sm:$0xff] %vm2997, %v4381
  %4534 = vst.msk [vmem:[%s4527 + $0x49] sm:$0xff] %vm2997, %v4382
  %4535 = vst.msk [vmem:[%s4527 + $0x51] sm:$0xff] %vm2997, %v4383
  %4536 = vst.msk [vmem:[%s4527 + $0x61] sm:$0xff] %vm2997, %v4384
  %4537 = vst.msk [vmem:[%s4527 + $0x69] sm:$0xff] %vm2997, %v4385
  %4538 = vst.msk [vmem:[%s4527 + $0x79] sm:$0xff] %vm2997, %v4386
  %4539 = vst.msk [vmem:[%s4527 + $0x81] sm:$0xff] %vm2997, %v4387
  %4540 = vst.msk [vmem:[%s4527 + $0x91] sm:$0xff] %vm2997, %v4388
  %4541 = vst.msk [vmem:[%s4527 + $0x99] sm:$0xff] %vm2997, %v4389
  %4542 = vst.msk [vmem:[%s4527 + $0xa9] sm:$0xff] %vm2997, %v4390
  %4543 = vst.msk [vmem:[%s4527 + $0xb1] sm:$0xff] %vm2997, %v4391
  %4544 = vst.msk [vmem:[%s4527 + $0xc1] sm:$0xff] %vm2997, %v4392
  %4545 = vst.msk [vmem:[%s4527 + $0xc9] sm:$0xff] %vm2997, %v4393
  %4546 = vst.msk [vmem:[%s4527 + $0xd9] sm:$0xff] %vm2997, %v4394
  %4547 = vst.msk [vmem:[%s4527 + $0xe1] sm:$0xff] %vm2997, %v4395
  %4548 = vst.msk [vmem:[%s4527 + $0xf1] sm:$0xff] %vm2997, %v4396
  %4549 = vst.msk [vmem:[%s4527 + $0xf9] sm:$0xff] %vm2997, %v4397
  %4550 = vst.msk [vmem:[%s4527 + $0x109] sm:$0xff] %vm2997, %v4398
  %4551 = vst.msk [vmem:[%s4527 + $0x111] sm:$0xff] %vm2997, %v4399
  %4552 = vst.msk [vmem:[%s4527 + $0x121] sm:$0xff] %vm2997, %v4400
  %4553 = vst.msk [vmem:[%s4527 + $0x129] sm:$0xff] %vm2997, %v4401
  %4554 = vst.msk [vmem:[%s4527 + $0x139] sm:$0xff] %vm2997, %v4402
  %4555 = vst.msk [vmem:[%s4527 + $0x141] sm:$0xff] %vm2997, %v4403
  %4556 = vst.msk [vmem:[%s4527 + $0x151] sm:$0xff] %vm2997, %v4404
  %4557 = vst.msk [vmem:[%s4527 + $0x159] sm:$0xff] %vm2997, %v4405
  %4558 = vst.msk [vmem:[%s4527 + $0x169] sm:$0xff] %vm2997, %v4406
  %4559 = vst.msk [vmem:[%s4527 + $0x171] sm:$0xff] %vm2997, %v4407
  %4560 = vst.msk [vmem:[%s4527 + $0x1b1] sm:$0xff] %vm2997, %v4408
  %4561 = vst.msk [vmem:[%s4527 + $0x1b9] sm:$0xff] %vm2997, %v4409
  %4562 = vst.msk [vmem:[%s4527 + $0x1c9] sm:$0xff] %vm2997, %v4410
  %4563 = vst.msk [vmem:[%s4527 + $0x1d1] sm:$0xff] %vm2997, %v4411
  %4564 = vst.msk [vmem:[%s4527 + $0x1e1] sm:$0xff] %vm2997, %v4412
  %4565 = vst.msk [vmem:[%s4527 + $0x1e9] sm:$0xff] %vm2997, %v4413
  %4566 = vst.msk [vmem:[%s4527 + $0x1f9] sm:$0xff] %vm2997, %v4414
  %4567 = vst.msk [vmem:[%s4527 + $0x201] sm:$0xff] %vm2997, %v4415
  %4568 = vst.msk [vmem:[%s4527 + $0x211] sm:$0xff] %vm2997, %v4416
  %4569 = vst.msk [vmem:[%s4527 + $0x219] sm:$0xff] %vm2997, %v4417
  %4570 = vst.msk [vmem:[%s4527 + $0x229] sm:$0xff] %vm2997, %v4418
  %4571 = vst.msk [vmem:[%s4527 + $0x231] sm:$0xff] %vm2997, %v4419
  %4572 = vst.msk [vmem:[%s4527 + $0x241] sm:$0xff] %vm2997, %v4420
  %4573 = vst.msk [vmem:[%s4527 + $0x249] sm:$0xff] %vm2997, %v4421
  %4574 = vst.msk [vmem:[%s4527 + $0x259] sm:$0xff] %vm2997, %v4422
  %4575 = vst.msk [vmem:[%s4527 + $0x261] sm:$0xff] %vm2997, %v4423
  %4576 = vst.msk [vmem:[%s4527 + $0x271] sm:$0xff] %vm2997, %v4424
  %4577 = vst.msk [vmem:[%s4527 + $0x279] sm:$0xff] %vm2997, %v4425
  %4578 = vst.msk [vmem:[%s4527 + $0x289] sm:$0xff] %vm2997, %v4426
  %4579 = vst.msk [vmem:[%s4527 + $0x291] sm:$0xff] %vm2997, %v4427
  %4580 = vst.msk [vmem:[%s4527 + $0x2a1] sm:$0xff] %vm2997, %v4428
  %4581 = vst.msk [vmem:[%s4527 + $0x2a9] sm:$0xff] %vm2997, %v4429
  %4582 = vst.msk [vmem:[%s4527 + $0x2b9] sm:$0xff] %vm2997, %v4430
  %4583 = vst.msk [vmem:[%s4527 + $0x2c1] sm:$0xff] %vm2997, %v4431
  %4584 = vst.msk [vmem:[%s4527 + $0x2d1] sm:$0xff] %vm2997, %v4432
  %4585 = vst.msk [vmem:[%s4527 + $0x2d9] sm:$0xff] %vm2997, %v4433
  %4586 = vst.msk [vmem:[%s4527 + $0x2e9] sm:$0xff] %vm2997, %v4434
  %4587 = vst.msk [vmem:[%s4527 + $0x2f1] sm:$0xff] %vm2997, %v4435
  %4588 = vst.msk [vmem:[%s4527 + $0x301] sm:$0xff] %vm2997, %v4436
  %4589 = vst.msk [vmem:[%s4527 + $0x309] sm:$0xff] %vm2997, %v4437
  %4590 = vst.msk [vmem:[%s4527 + $0x319] sm:$0xff] %vm2997, %v4438
  %4591 = vst.msk [vmem:[%s4527 + $0x321] sm:$0xff] %vm2997, %v4439
  %v4592 = vld [vmem:[#allocation3] sm:$0xff]
  %v4593 = vld [vmem:[#allocation3 + $0x8] sm:$0xff]
  %v4594 = vld [vmem:[#allocation3 + $0x18] sm:$0xff]
  %v4595 = vld [vmem:[#allocation3 + $0x20] sm:$0xff]
  %v4596 = vld [vmem:[#allocation3 + $0x30] sm:$0xff]
  %v4597 = vld [vmem:[#allocation3 + $0x38] sm:$0xff]
  %v4598 = vld [vmem:[#allocation3 + $0x48] sm:$0xff]
  %v4599 = vld [vmem:[#allocation3 + $0x50] sm:$0xff]
  %v4600 = vld [vmem:[#allocation3 + $0x60] sm:$0xff]
  %v4601 = vld [vmem:[#allocation3 + $0x68] sm:$0xff]
  %v4602 = vld [vmem:[#allocation3 + $0x78] sm:$0xff]
  %v4603 = vld [vmem:[#allocation3 + $0x80] sm:$0xff]
  %v4604 = vld [vmem:[#allocation3 + $0x90] sm:$0xff]
  %v4605 = vld [vmem:[#allocation3 + $0x98] sm:$0xff]
  %v4606 = vld [vmem:[#allocation3 + $0xa8] sm:$0xff]
  %v4607 = vld [vmem:[#allocation3 + $0xb0] sm:$0xff]
  %v4608 = vld [vmem:[#allocation3 + $0xc0] sm:$0xff]
  %v4609 = vld [vmem:[#allocation3 + $0xc8] sm:$0xff]
  %v4610 = vld [vmem:[#allocation3 + $0xd8] sm:$0xff]
  %v4611 = vld [vmem:[#allocation3 + $0xe0] sm:$0xff]
  %v4612 = vld [vmem:[#allocation3 + $0xf0] sm:$0xff]
  %v4613 = vld [vmem:[#allocation3 + $0xf8] sm:$0xff]
  %v4614 = vld [vmem:[#allocation3 + $0x108] sm:$0xff]
  %v4615 = vld [vmem:[#allocation3 + $0x110] sm:$0xff]
  %v4616 = vld [vmem:[#allocation3 + $0x120] sm:$0xff]
  %v4617 = vld [vmem:[#allocation3 + $0x128] sm:$0xff]
  %v4618 = vld [vmem:[#allocation3 + $0x138] sm:$0xff]
  %v4619 = vld [vmem:[#allocation3 + $0x140] sm:$0xff]
  %v4620 = vld [vmem:[#allocation3 + $0x150] sm:$0xff]
  %v4621 = vld [vmem:[#allocation3 + $0x158] sm:$0xff]
  %v4622 = vld [vmem:[#allocation3 + $0x168] sm:$0xff]
  %v4623 = vld [vmem:[#allocation3 + $0x170] sm:$0xff]
  %v4624 = vld [vmem:[#allocation3 + $0x1b0] sm:$0xff]
  %v4625 = vld [vmem:[#allocation3 + $0x1b8] sm:$0xff]
  %v4626 = vld [vmem:[#allocation3 + $0x1c8] sm:$0xff]
  %v4627 = vld [vmem:[#allocation3 + $0x1d0] sm:$0xff]
  %v4628 = vld [vmem:[#allocation3 + $0x1e0] sm:$0xff]
  %v4629 = vld [vmem:[#allocation3 + $0x1e8] sm:$0xff]
  %v4630 = vld [vmem:[#allocation3 + $0x1f8] sm:$0xff]
  %v4631 = vld [vmem:[#allocation3 + $0x200] sm:$0xff]
  %v4632 = vld [vmem:[#allocation3 + $0x210] sm:$0xff]
  %v4633 = vld [vmem:[#allocation3 + $0x218] sm:$0xff]
  %v4634 = vld [vmem:[#allocation3 + $0x228] sm:$0xff]
  %v4635 = vld [vmem:[#allocation3 + $0x230] sm:$0xff]
  %v4636 = vld [vmem:[#allocation3 + $0x240] sm:$0xff]
  %v4637 = vld [vmem:[#allocation3 + $0x248] sm:$0xff]
  %v4638 = vld [vmem:[#allocation3 + $0x258] sm:$0xff]
  %v4639 = vld [vmem:[#allocation3 + $0x260] sm:$0xff]
  %v4640 = vld [vmem:[#allocation3 + $0x270] sm:$0xff]
  %v4641 = vld [vmem:[#allocation3 + $0x278] sm:$0xff]
  %v4642 = vld [vmem:[#allocation3 + $0x288] sm:$0xff]
  %v4643 = vld [vmem:[#allocation3 + $0x290] sm:$0xff]
  %v4644 = vld [vmem:[#allocation3 + $0x2a0] sm:$0xff]
  %v4645 = vld [vmem:[#allocation3 + $0x2a8] sm:$0xff]
  %v4646 = vld [vmem:[#allocation3 + $0x2b8] sm:$0xff]
  %v4647 = vld [vmem:[#allocation3 + $0x2c0] sm:$0xff]
  %v4648 = vld [vmem:[#allocation3 + $0x2d0] sm:$0xff]
  %v4649 = vld [vmem:[#allocation3 + $0x2d8] sm:$0xff]
  %v4650 = vld [vmem:[#allocation3 + $0x2e8] sm:$0xff]
  %v4651 = vld [vmem:[#allocation3 + $0x2f0] sm:$0xff]
  %v4652 = vld [vmem:[#allocation3 + $0x300] sm:$0xff]
  %v4653 = vld [vmem:[#allocation3 + $0x308] sm:$0xff]
  %v4654 = vld [vmem:[#allocation3 + $0x318] sm:$0xff]
  %v4655 = vld [vmem:[#allocation3 + $0x320] sm:$0xff]
  %v4656 = vld [vmem:[#allocation3 + $0x1] sm:$0xff]
  %v4657 = vld [vmem:[#allocation3 + $0x9] sm:$0xff]
  %v4658 = vld [vmem:[#allocation3 + $0x19] sm:$0xff]
  %v4659 = vld [vmem:[#allocation3 + $0x21] sm:$0xff]
  %v4660 = vld [vmem:[#allocation3 + $0x31] sm:$0xff]
  %v4661 = vld [vmem:[#allocation3 + $0x39] sm:$0xff]
  %v4662 = vld [vmem:[#allocation3 + $0x49] sm:$0xff]
  %v4663 = vld [vmem:[#allocation3 + $0x51] sm:$0xff]
  %v4664 = vld [vmem:[#allocation3 + $0x61] sm:$0xff]
  %v4665 = vld [vmem:[#allocation3 + $0x69] sm:$0xff]
  %v4666 = vld [vmem:[#allocation3 + $0x79] sm:$0xff]
  %v4667 = vld [vmem:[#allocation3 + $0x81] sm:$0xff]
  %v4668 = vld [vmem:[#allocation3 + $0x91] sm:$0xff]
  %v4669 = vld [vmem:[#allocation3 + $0x99] sm:$0xff]
  %v4670 = vld [vmem:[#allocation3 + $0xa9] sm:$0xff]
  %v4671 = vld [vmem:[#allocation3 + $0xb1] sm:$0xff]
  %v4672 = vld [vmem:[#allocation3 + $0xc1] sm:$0xff]
  %v4673 = vld [vmem:[#allocation3 + $0xc9] sm:$0xff]
  %v4674 = vld [vmem:[#allocation3 + $0xd9] sm:$0xff]
  %v4675 = vld [vmem:[#allocation3 + $0xe1] sm:$0xff]
  %v4676 = vld [vmem:[#allocation3 + $0xf1] sm:$0xff]
  %v4677 = vld [vmem:[#allocation3 + $0xf9] sm:$0xff]
  %v4678 = vld [vmem:[#allocation3 + $0x109] sm:$0xff]
  %v4679 = vld [vmem:[#allocation3 + $0x111] sm:$0xff]
  %v4680 = vld [vmem:[#allocation3 + $0x121] sm:$0xff]
  %v4681 = vld [vmem:[#allocation3 + $0x129] sm:$0xff]
  %v4682 = vld [vmem:[#allocation3 + $0x139] sm:$0xff]
  %v4683 = vld [vmem:[#allocation3 + $0x141] sm:$0xff]
  %v4684 = vld [vmem:[#allocation3 + $0x151] sm:$0xff]
  %v4685 = vld [vmem:[#allocation3 + $0x159] sm:$0xff]
  %v4686 = vld [vmem:[#allocation3 + $0x169] sm:$0xff]
  %v4687 = vld [vmem:[#allocation3 + $0x171] sm:$0xff]
  %v4688 = vld [vmem:[#allocation3 + $0x1b1] sm:$0xff]
  %v4689 = vld [vmem:[#allocation3 + $0x1b9] sm:$0xff]
  %v4690 = vld [vmem:[#allocation3 + $0x1c9] sm:$0xff]
  %v4691 = vld [vmem:[#allocation3 + $0x1d1] sm:$0xff]
  %v4692 = vld [vmem:[#allocation3 + $0x1e1] sm:$0xff]
  %v4693 = vld [vmem:[#allocation3 + $0x1e9] sm:$0xff]
  %v4694 = vld [vmem:[#allocation3 + $0x1f9] sm:$0xff]
  %v4695 = vld [vmem:[#allocation3 + $0x201] sm:$0xff]
  %v4696 = vld [vmem:[#allocation3 + $0x211] sm:$0xff]
  %v4697 = vld [vmem:[#allocation3 + $0x219] sm:$0xff]
  %v4698 = vld [vmem:[#allocation3 + $0x229] sm:$0xff]
  %v4699 = vld [vmem:[#allocation3 + $0x231] sm:$0xff]
  %v4700 = vld [vmem:[#allocation3 + $0x241] sm:$0xff]
  %v4701 = vld [vmem:[#allocation3 + $0x249] sm:$0xff]
  %v4702 = vld [vmem:[#allocation3 + $0x259] sm:$0xff]
  %v4703 = vld [vmem:[#allocation3 + $0x261] sm:$0xff]
  %v4704 = vld [vmem:[#allocation3 + $0x271] sm:$0xff]
  %v4705 = vld [vmem:[#allocation3 + $0x279] sm:$0xff]
  %v4706 = vld [vmem:[#allocation3 + $0x289] sm:$0xff]
  %v4707 = vld [vmem:[#allocation3 + $0x291] sm:$0xff]
  %v4708 = vld [vmem:[#allocation3 + $0x2a1] sm:$0xff]
  %v4709 = vld [vmem:[#allocation3 + $0x2a9] sm:$0xff]
  %v4710 = vld [vmem:[#allocation3 + $0x2b9] sm:$0xff]
  %v4711 = vld [vmem:[#allocation3 + $0x2c1] sm:$0xff]
  %v4712 = vld [vmem:[#allocation3 + $0x2d1] sm:$0xff]
  %v4713 = vld [vmem:[#allocation3 + $0x2d9] sm:$0xff]
  %v4714 = vld [vmem:[#allocation3 + $0x2e9] sm:$0xff]
  %v4715 = vld [vmem:[#allocation3 + $0x2f1] sm:$0xff]
  %v4716 = vld [vmem:[#allocation3 + $0x301] sm:$0xff]
  %v4717 = vld [vmem:[#allocation3 + $0x309] sm:$0xff]
  %v4718 = vld [vmem:[#allocation3 + $0x319] sm:$0xff]
  %v4719 = vld [vmem:[#allocation3 + $0x321] sm:$0xff]
  %v4720 = vld [vmem:[#allocation3 + $0x2] sm:$0xff]
  %v4721 = vld [vmem:[#allocation3 + $0xa] sm:$0xff]
  %v4722 = vld [vmem:[#allocation3 + $0x1a] sm:$0xff]
  %v4723 = vld [vmem:[#allocation3 + $0x22] sm:$0xff]
  %v4724 = vld [vmem:[#allocation3 + $0x32] sm:$0xff]
  %v4725 = vld [vmem:[#allocation3 + $0x3a] sm:$0xff]
  %v4726 = vld [vmem:[#allocation3 + $0x4a] sm:$0xff]
  %v4727 = vld [vmem:[#allocation3 + $0x52] sm:$0xff]
  %v4728 = vld [vmem:[#allocation3 + $0x62] sm:$0xff]
  %v4729 = vld [vmem:[#allocation3 + $0x6a] sm:$0xff]
  %v4730 = vld [vmem:[#allocation3 + $0x7a] sm:$0xff]
  %v4731 = vld [vmem:[#allocation3 + $0x82] sm:$0xff]
  %v4732 = vld [vmem:[#allocation3 + $0x92] sm:$0xff]
  %v4733 = vld [vmem:[#allocation3 + $0x9a] sm:$0xff]
  %v4734 = vld [vmem:[#allocation3 + $0xaa] sm:$0xff]
  %v4735 = vld [vmem:[#allocation3 + $0xb2] sm:$0xff]
  %v4736 = vld [vmem:[#allocation3 + $0xc2] sm:$0xff]
  %v4737 = vld [vmem:[#allocation3 + $0xca] sm:$0xff]
  %v4738 = vld [vmem:[#allocation3 + $0xda] sm:$0xff]
  %v4739 = vld [vmem:[#allocation3 + $0xe2] sm:$0xff]
  %v4740 = vld [vmem:[#allocation3 + $0xf2] sm:$0xff]
  %v4741 = vld [vmem:[#allocation3 + $0xfa] sm:$0xff]
  %v4742 = vld [vmem:[#allocation3 + $0x10a] sm:$0xff]
  %v4743 = vld [vmem:[#allocation3 + $0x112] sm:$0xff]
  %v4744 = vld [vmem:[#allocation3 + $0x122] sm:$0xff]
  %v4745 = vld [vmem:[#allocation3 + $0x12a] sm:$0xff]
  %v4746 = vld [vmem:[#allocation3 + $0x13a] sm:$0xff]
  %v4747 = vld [vmem:[#allocation3 + $0x142] sm:$0xff]
  %v4748 = vld [vmem:[#allocation3 + $0x152] sm:$0xff]
  %v4749 = vld [vmem:[#allocation3 + $0x15a] sm:$0xff]
  %v4750 = vld [vmem:[#allocation3 + $0x16a] sm:$0xff]
  %v4751 = vld [vmem:[#allocation3 + $0x172] sm:$0xff]
  %v4752 = vld [vmem:[#allocation3 + $0x1b2] sm:$0xff]
  %v4753 = vld [vmem:[#allocation3 + $0x1ba] sm:$0xff]
  %v4754 = vld [vmem:[#allocation3 + $0x1ca] sm:$0xff]
  %v4755 = vld [vmem:[#allocation3 + $0x1d2] sm:$0xff]
  %v4756 = vld [vmem:[#allocation3 + $0x1e2] sm:$0xff]
  %v4757 = vld [vmem:[#allocation3 + $0x1ea] sm:$0xff]
  %v4758 = vld [vmem:[#allocation3 + $0x1fa] sm:$0xff]
  %v4759 = vld [vmem:[#allocation3 + $0x202] sm:$0xff]
  %v4760 = vld [vmem:[#allocation3 + $0x212] sm:$0xff]
  %v4761 = vld [vmem:[#allocation3 + $0x21a] sm:$0xff]
  %v4762 = vld [vmem:[#allocation3 + $0x22a] sm:$0xff]
  %v4763 = vld [vmem:[#allocation3 + $0x232] sm:$0xff]
  %v4764 = vld [vmem:[#allocation3 + $0x242] sm:$0xff]
  %v4765 = vld [vmem:[#allocation3 + $0x24a] sm:$0xff]
  %v4766 = vld [vmem:[#allocation3 + $0x25a] sm:$0xff]
  %v4767 = vld [vmem:[#allocation3 + $0x262] sm:$0xff]
  %v4768 = vld [vmem:[#allocation3 + $0x272] sm:$0xff]
  %v4769 = vld [vmem:[#allocation3 + $0x27a] sm:$0xff]
  %v4770 = vld [vmem:[#allocation3 + $0x28a] sm:$0xff]
  %v4771 = vld [vmem:[#allocation3 + $0x292] sm:$0xff]
  %v4772 = vld [vmem:[#allocation3 + $0x2a2] sm:$0xff]
  %v4773 = vld [vmem:[#allocation3 + $0x2aa] sm:$0xff]
  %v4774 = vld [vmem:[#allocation3 + $0x2ba] sm:$0xff]
  %v4775 = vld [vmem:[#allocation3 + $0x2c2] sm:$0xff]
  %v4776 = vld [vmem:[#allocation3 + $0x2d2] sm:$0xff]
  %v4777 = vld [vmem:[#allocation3 + $0x2da] sm:$0xff]
  %v4778 = vld [vmem:[#allocation3 + $0x2ea] sm:$0xff]
  %v4779 = vld [vmem:[#allocation3 + $0x2f2] sm:$0xff]
  %v4780 = vld [vmem:[#allocation3 + $0x302] sm:$0xff]
  %v4781 = vld [vmem:[#allocation3 + $0x30a] sm:$0xff]
  %v4782 = vld [vmem:[#allocation3 + $0x31a] sm:$0xff]
  %v4783 = vld [vmem:[#allocation3 + $0x322] sm:$0xff]
  %v4784 = vld [vmem:[%s4527] sm:$0xff]
  %v4785 = vld [vmem:[%s4527 + $0x8] sm:$0xff]
  %v4786 = vld [vmem:[%s4527 + $0x18] sm:$0xff]
  %v4787 = vld [vmem:[%s4527 + $0x20] sm:$0xff]
  %v4788 = vld [vmem:[%s4527 + $0x30] sm:$0xff]
  %v4789 = vld [vmem:[%s4527 + $0x38] sm:$0xff]
  %v4790 = vld [vmem:[%s4527 + $0x48] sm:$0xff]
  %v4791 = vld [vmem:[%s4527 + $0x50] sm:$0xff]
  %v4792 = vld [vmem:[%s4527 + $0x60] sm:$0xff]
  %v4793 = vld [vmem:[%s4527 + $0x68] sm:$0xff]
  %v4794 = vld [vmem:[%s4527 + $0x78] sm:$0xff]
  %v4795 = vld [vmem:[%s4527 + $0x80] sm:$0xff]
  %v4796 = vld [vmem:[%s4527 + $0x90] sm:$0xff]
  %v4797 = vld [vmem:[%s4527 + $0x98] sm:$0xff]
  %v4798 = vld [vmem:[%s4527 + $0xa8] sm:$0xff]
  %v4799 = vld [vmem:[%s4527 + $0xb0] sm:$0xff]
  %v4800 = vld [vmem:[%s4527 + $0xc0] sm:$0xff]
  %v4801 = vld [vmem:[%s4527 + $0xc8] sm:$0xff]
  %v4802 = vld [vmem:[%s4527 + $0xd8] sm:$0xff]
  %v4803 = vld [vmem:[%s4527 + $0xe0] sm:$0xff]
  %v4804 = vld [vmem:[%s4527 + $0xf0] sm:$0xff]
  %v4805 = vld [vmem:[%s4527 + $0xf8] sm:$0xff]
  %v4806 = vld [vmem:[%s4527 + $0x108] sm:$0xff]
  %v4807 = vld [vmem:[%s4527 + $0x110] sm:$0xff]
  %v4808 = vld [vmem:[%s4527 + $0x120] sm:$0xff]
  %v4809 = vld [vmem:[%s4527 + $0x128] sm:$0xff]
  %v4810 = vld [vmem:[%s4527 + $0x138] sm:$0xff]
  %v4811 = vld [vmem:[%s4527 + $0x140] sm:$0xff]
  %v4812 = vld [vmem:[%s4527 + $0x150] sm:$0xff]
  %v4813 = vld [vmem:[%s4527 + $0x158] sm:$0xff]
  %v4814 = vld [vmem:[%s4527 + $0x168] sm:$0xff]
  %v4815 = vld [vmem:[%s4527 + $0x170] sm:$0xff]
  %v4816 = vld [vmem:[%s4527 + $0x1b0] sm:$0xff]
  %v4817 = vld [vmem:[%s4527 + $0x1b8] sm:$0xff]
  %v4818 = vld [vmem:[%s4527 + $0x1c8] sm:$0xff]
  %v4819 = vld [vmem:[%s4527 + $0x1d0] sm:$0xff]
  %v4820 = vld [vmem:[%s4527 + $0x1e0] sm:$0xff]
  %v4821 = vld [vmem:[%s4527 + $0x1e8] sm:$0xff]
  %v4822 = vld [vmem:[%s4527 + $0x1f8] sm:$0xff]
  %v4823 = vld [vmem:[%s4527 + $0x200] sm:$0xff]
  %v4824 = vld [vmem:[%s4527 + $0x210] sm:$0xff]
  %v4825 = vld [vmem:[%s4527 + $0x218] sm:$0xff]
  %v4826 = vld [vmem:[%s4527 + $0x228] sm:$0xff]
  %v4827 = vld [vmem:[%s4527 + $0x230] sm:$0xff]
  %v4828 = vld [vmem:[%s4527 + $0x240] sm:$0xff]
  %v4829 = vld [vmem:[%s4527 + $0x248] sm:$0xff]
  %v4830 = vld [vmem:[%s4527 + $0x258] sm:$0xff]
  %v4831 = vld [vmem:[%s4527 + $0x260] sm:$0xff]
  %v4832 = vld [vmem:[%s4527 + $0x270] sm:$0xff]
  %v4833 = vld [vmem:[%s4527 + $0x278] sm:$0xff]
  %v4834 = vld [vmem:[%s4527 + $0x288] sm:$0xff]
  %v4835 = vld [vmem:[%s4527 + $0x290] sm:$0xff]
  %v4836 = vld [vmem:[%s4527 + $0x2a0] sm:$0xff]
  %v4837 = vld [vmem:[%s4527 + $0x2a8] sm:$0xff]
  %v4838 = vld [vmem:[%s4527 + $0x2b8] sm:$0xff]
  %v4839 = vld [vmem:[%s4527 + $0x2c0] sm:$0xff]
  %v4840 = vld [vmem:[%s4527 + $0x2d0] sm:$0xff]
  %v4841 = vld [vmem:[%s4527 + $0x2d8] sm:$0xff]
  %v4842 = vld [vmem:[%s4527 + $0x2e8] sm:$0xff]
  %v4843 = vld [vmem:[%s4527 + $0x2f0] sm:$0xff]
  %v4844 = vld [vmem:[%s4527 + $0x300] sm:$0xff]
  %v4845 = vld [vmem:[%s4527 + $0x308] sm:$0xff]
  %v4846 = vld [vmem:[%s4527 + $0x318] sm:$0xff]
  %v4847 = vld [vmem:[%s4527 + $0x320] sm:$0xff]
  %v4848 = vld [vmem:[%s4527 + $0x1] sm:$0xff]
  %v4849 = vld [vmem:[%s4527 + $0x9] sm:$0xff]
  %v4850 = vld [vmem:[%s4527 + $0x19] sm:$0xff]
  %v4851 = vld [vmem:[%s4527 + $0x21] sm:$0xff]
  %v4852 = vld [vmem:[%s4527 + $0x31] sm:$0xff]
  %v4853 = vld [vmem:[%s4527 + $0x39] sm:$0xff]
  %v4854 = vld [vmem:[%s4527 + $0x49] sm:$0xff]
  %v4855 = vld [vmem:[%s4527 + $0x51] sm:$0xff]
  %v4856 = vld [vmem:[%s4527 + $0x61] sm:$0xff]
  %v4857 = vld [vmem:[%s4527 + $0x69] sm:$0xff]
  %v4858 = vld [vmem:[%s4527 + $0x79] sm:$0xff]
  %v4859 = vld [vmem:[%s4527 + $0x81] sm:$0xff]
  %v4860 = vld [vmem:[%s4527 + $0x91] sm:$0xff]
  %v4861 = vld [vmem:[%s4527 + $0x99] sm:$0xff]
  %v4862 = vld [vmem:[%s4527 + $0xa9] sm:$0xff]
  %v4863 = vld [vmem:[%s4527 + $0xb1] sm:$0xff]
  %v4864 = vld [vmem:[%s4527 + $0xc1] sm:$0xff]
  %v4865 = vld [vmem:[%s4527 + $0xc9] sm:$0xff]
  %v4866 = vld [vmem:[%s4527 + $0xd9] sm:$0xff]
  %v4867 = vld [vmem:[%s4527 + $0xe1] sm:$0xff]
  %v4868 = vld [vmem:[%s4527 + $0xf1] sm:$0xff]
  %v4869 = vld [vmem:[%s4527 + $0xf9] sm:$0xff]
  %v4870 = vld [vmem:[%s4527 + $0x109] sm:$0xff]
  %v4871 = vld [vmem:[%s4527 + $0x111] sm:$0xff]
  %v4872 = vld [vmem:[%s4527 + $0x121] sm:$0xff]
  %v4873 = vld [vmem:[%s4527 + $0x129] sm:$0xff]
  %v4874 = vld [vmem:[%s4527 + $0x139] sm:$0xff]
  %v4875 = vld [vmem:[%s4527 + $0x141] sm:$0xff]
  %v4876 = vld [vmem:[%s4527 + $0x151] sm:$0xff]
  %v4877 = vld [vmem:[%s4527 + $0x159] sm:$0xff]
  %v4878 = vld [vmem:[%s4527 + $0x169] sm:$0xff]
  %v4879 = vld [vmem:[%s4527 + $0x171] sm:$0xff]
  %v4880 = vld [vmem:[%s4527 + $0x1b1] sm:$0xff]
  %v4881 = vld [vmem:[%s4527 + $0x1b9] sm:$0xff]
  %v4882 = vld [vmem:[%s4527 + $0x1c9] sm:$0xff]
  %v4883 = vld [vmem:[%s4527 + $0x1d1] sm:$0xff]
  %v4884 = vld [vmem:[%s4527 + $0x1e1] sm:$0xff]
  %v4885 = vld [vmem:[%s4527 + $0x1e9] sm:$0xff]
  %v4886 = vld [vmem:[%s4527 + $0x1f9] sm:$0xff]
  %v4887 = vld [vmem:[%s4527 + $0x201] sm:$0xff]
  %v4888 = vld [vmem:[%s4527 + $0x211] sm:$0xff]
  %v4889 = vld [vmem:[%s4527 + $0x219] sm:$0xff]
  %v4890 = vld [vmem:[%s4527 + $0x229] sm:$0xff]
  %v4891 = vld [vmem:[%s4527 + $0x231] sm:$0xff]
  %v4892 = vld [vmem:[%s4527 + $0x241] sm:$0xff]
  %v4893 = vld [vmem:[%s4527 + $0x249] sm:$0xff]
  %v4894 = vld [vmem:[%s4527 + $0x259] sm:$0xff]
  %v4895 = vld [vmem:[%s4527 + $0x261] sm:$0xff]
  %v4896 = vld [vmem:[%s4527 + $0x271] sm:$0xff]
  %v4897 = vld [vmem:[%s4527 + $0x279] sm:$0xff]
  %v4898 = vld [vmem:[%s4527 + $0x289] sm:$0xff]
  %v4899 = vld [vmem:[%s4527 + $0x291] sm:$0xff]
  %v4900 = vld [vmem:[%s4527 + $0x2a1] sm:$0xff]
  %v4901 = vld [vmem:[%s4527 + $0x2a9] sm:$0xff]
  %v4902 = vld [vmem:[%s4527 + $0x2b9] sm:$0xff]
  %v4903 = vld [vmem:[%s4527 + $0x2c1] sm:$0xff]
  %v4904 = vld [vmem:[%s4527 + $0x2d1] sm:$0xff]
  %v4905 = vld [vmem:[%s4527 + $0x2d9] sm:$0xff]
  %v4906 = vld [vmem:[%s4527 + $0x2e9] sm:$0xff]
  %v4907 = vld [vmem:[%s4527 + $0x2f1] sm:$0xff]
  %v4908 = vld [vmem:[%s4527 + $0x301] sm:$0xff]
  %v4909 = vld [vmem:[%s4527 + $0x309] sm:$0xff]
  %v4910 = vld [vmem:[%s4527 + $0x319] sm:$0xff]
  %v4911 = vld [vmem:[%s4527 + $0x321] sm:$0xff]
  %v4912 = vld [vmem:[%s4527 + $0x2] sm:$0xff]
  %v4913 = vld [vmem:[%s4527 + $0xa] sm:$0xff]
  %v4914 = vld [vmem:[%s4527 + $0x1a] sm:$0xff]
  %v4915 = vld [vmem:[%s4527 + $0x22] sm:$0xff]
  %v4916 = vld [vmem:[%s4527 + $0x32] sm:$0xff]
  %v4917 = vld [vmem:[%s4527 + $0x3a] sm:$0xff]
  %v4918 = vld [vmem:[%s4527 + $0x4a] sm:$0xff]
  %v4919 = vld [vmem:[%s4527 + $0x52] sm:$0xff]
  %v4920 = vld [vmem:[%s4527 + $0x62] sm:$0xff]
  %v4921 = vld [vmem:[%s4527 + $0x6a] sm:$0xff]
  %v4922 = vld [vmem:[%s4527 + $0x7a] sm:$0xff]
  %v4923 = vld [vmem:[%s4527 + $0x82] sm:$0xff]
  %v4924 = vld [vmem:[%s4527 + $0x92] sm:$0xff]
  %v4925 = vld [vmem:[%s4527 + $0x9a] sm:$0xff]
  %v4926 = vld [vmem:[%s4527 + $0xaa] sm:$0xff]
  %v4927 = vld [vmem:[%s4527 + $0xb2] sm:$0xff]
  %v4928 = vld [vmem:[%s4527 + $0xc2] sm:$0xff]
  %v4929 = vld [vmem:[%s4527 + $0xca] sm:$0xff]
  %v4930 = vld [vmem:[%s4527 + $0xda] sm:$0xff]
  %v4931 = vld [vmem:[%s4527 + $0xe2] sm:$0xff]
  %v4932 = vld [vmem:[%s4527 + $0xf2] sm:$0xff]
  %v4933 = vld [vmem:[%s4527 + $0xfa] sm:$0xff]
  %v4934 = vld [vmem:[%s4527 + $0x10a] sm:$0xff]
  %v4935 = vld [vmem:[%s4527 + $0x112] sm:$0xff]
  %v4936 = vld [vmem:[%s4527 + $0x122] sm:$0xff]
  %v4937 = vld [vmem:[%s4527 + $0x12a] sm:$0xff]
  %v4938 = vld [vmem:[%s4527 + $0x13a] sm:$0xff]
  %v4939 = vld [vmem:[%s4527 + $0x142] sm:$0xff]
  %v4940 = vld [vmem:[%s4527 + $0x152] sm:$0xff]
  %v4941 = vld [vmem:[%s4527 + $0x15a] sm:$0xff]
  %v4942 = vld [vmem:[%s4527 + $0x16a] sm:$0xff]
  %v4943 = vld [vmem:[%s4527 + $0x172] sm:$0xff]
  %v4944 = vld [vmem:[%s4527 + $0x1b2] sm:$0xff]
  %v4945 = vld [vmem:[%s4527 + $0x1ba] sm:$0xff]
  %v4946 = vld [vmem:[%s4527 + $0x1ca] sm:$0xff]
  %v4947 = vld [vmem:[%s4527 + $0x1d2] sm:$0xff]
  %v4948 = vld [vmem:[%s4527 + $0x1e2] sm:$0xff]
  %v4949 = vld [vmem:[%s4527 + $0x1ea] sm:$0xff]
  %v4950 = vld [vmem:[%s4527 + $0x1fa] sm:$0xff]
  %v4951 = vld [vmem:[%s4527 + $0x202] sm:$0xff]
  %v4952 = vld [vmem:[%s4527 + $0x212] sm:$0xff]
  %v4953 = vld [vmem:[%s4527 + $0x21a] sm:$0xff]
  %v4954 = vld [vmem:[%s4527 + $0x22a] sm:$0xff]
  %v4955 = vld [vmem:[%s4527 + $0x232] sm:$0xff]
  %v4956 = vld [vmem:[%s4527 + $0x242] sm:$0xff]
  %v4957 = vld [vmem:[%s4527 + $0x24a] sm:$0xff]
  %v4958 = vld [vmem:[%s4527 + $0x25a] sm:$0xff]
  %v4959 = vld [vmem:[%s4527 + $0x262] sm:$0xff]
  %v4960 = vld [vmem:[%s4527 + $0x272] sm:$0xff]
  %v4961 = vld [vmem:[%s4527 + $0x27a] sm:$0xff]
  %v4962 = vld [vmem:[%s4527 + $0x28a] sm:$0xff]
  %v4963 = vld [vmem:[%s4527 + $0x292] sm:$0xff]
  %v4964 = vld [vmem:[%s4527 + $0x2a2] sm:$0xff]
  %v4965 = vld [vmem:[%s4527 + $0x2aa] sm:$0xff]
  %v4966 = vld [vmem:[%s4527 + $0x2ba] sm:$0xff]
  %v4967 = vld [vmem:[%s4527 + $0x2c2] sm:$0xff]
  %v4968 = vld [vmem:[%s4527 + $0x2d2] sm:$0xff]
  %v4969 = vld [vmem:[%s4527 + $0x2da] sm:$0xff]
  %v4970 = vld [vmem:[%s4527 + $0x2ea] sm:$0xff]
  %v4971 = vld [vmem:[%s4527 + $0x2f2] sm:$0xff]
  %v4972 = vld [vmem:[%s4527 + $0x302] sm:$0xff]
  %v4973 = vld [vmem:[%s4527 + $0x30a] sm:$0xff]
  %v4974 = vld [vmem:[%s4527 + $0x31a] sm:$0xff]
  %v4975 = vld [vmem:[%s4527 + $0x322] sm:$0xff]
  %s4976 = scalar_lea.vmem [#allocation3], 48
  %v4977 = vld [vmem:[%s4976] sm:$0xff]
  %v4978 = vld [vmem:[%s4976 + $0x8] sm:$0xff]
  %v4979 = vld [vmem:[%s4976 + $0x18] sm:$0xff]
  %v4980 = vld [vmem:[%s4976 + $0x20] sm:$0xff]
  %v4981 = vld [vmem:[%s4976 + $0x30] sm:$0xff]
  %v4982 = vld [vmem:[%s4976 + $0x38] sm:$0xff]
  %v4983 = vld [vmem:[%s4976 + $0x48] sm:$0xff]
  %v4984 = vld [vmem:[%s4976 + $0x50] sm:$0xff]
  %v4985 = vld [vmem:[%s4976 + $0x60] sm:$0xff]
  %v4986 = vld [vmem:[%s4976 + $0x68] sm:$0xff]
  %v4987 = vld [vmem:[%s4976 + $0x78] sm:$0xff]
  %v4988 = vld [vmem:[%s4976 + $0x80] sm:$0xff]
  %v4989 = vld [vmem:[%s4976 + $0x90] sm:$0xff]
  %v4990 = vld [vmem:[%s4976 + $0x98] sm:$0xff]
  %v4991 = vld [vmem:[%s4976 + $0xa8] sm:$0xff]
  %v4992 = vld [vmem:[%s4976 + $0xb0] sm:$0xff]
  %v4993 = vld [vmem:[%s4976 + $0xc0] sm:$0xff]
  %v4994 = vld [vmem:[%s4976 + $0xc8] sm:$0xff]
  %v4995 = vld [vmem:[%s4976 + $0xd8] sm:$0xff]
  %v4996 = vld [vmem:[%s4976 + $0xe0] sm:$0xff]
  %v4997 = vld [vmem:[%s4976 + $0xf0] sm:$0xff]
  %v4998 = vld [vmem:[%s4976 + $0xf8] sm:$0xff]
  %v4999 = vld [vmem:[%s4976 + $0x108] sm:$0xff]
  %v5000 = vld [vmem:[%s4976 + $0x110] sm:$0xff]
  %v5001 = vld [vmem:[%s4976 + $0x120] sm:$0xff]
  %v5002 = vld [vmem:[%s4976 + $0x128] sm:$0xff]
  %v5003 = vld [vmem:[%s4976 + $0x138] sm:$0xff]
  %v5004 = vld [vmem:[%s4976 + $0x140] sm:$0xff]
  %v5005 = vld [vmem:[%s4976 + $0x150] sm:$0xff]
  %v5006 = vld [vmem:[%s4976 + $0x158] sm:$0xff]
  %v5007 = vld [vmem:[%s4976 + $0x168] sm:$0xff]
  %v5008 = vld [vmem:[%s4976 + $0x170] sm:$0xff]
  %v5009 = vld [vmem:[%s4976 + $0x1b0] sm:$0xff]
  %v5010 = vld [vmem:[%s4976 + $0x1b8] sm:$0xff]
  %v5011 = vld [vmem:[%s4976 + $0x1c8] sm:$0xff]
  %v5012 = vld [vmem:[%s4976 + $0x1d0] sm:$0xff]
  %v5013 = vld [vmem:[%s4976 + $0x1e0] sm:$0xff]
  %v5014 = vld [vmem:[%s4976 + $0x1e8] sm:$0xff]
  %v5015 = vld [vmem:[%s4976 + $0x1f8] sm:$0xff]
  %v5016 = vld [vmem:[%s4976 + $0x200] sm:$0xff]
  %v5017 = vld [vmem:[%s4976 + $0x210] sm:$0xff]
  %v5018 = vld [vmem:[%s4976 + $0x218] sm:$0xff]
  %v5019 = vld [vmem:[%s4976 + $0x228] sm:$0xff]
  %v5020 = vld [vmem:[%s4976 + $0x230] sm:$0xff]
  %v5021 = vld [vmem:[%s4976 + $0x240] sm:$0xff]
  %v5022 = vld [vmem:[%s4976 + $0x248] sm:$0xff]
  %v5023 = vld [vmem:[%s4976 + $0x258] sm:$0xff]
  %v5024 = vld [vmem:[%s4976 + $0x260] sm:$0xff]
  %v5025 = vld [vmem:[%s4976 + $0x270] sm:$0xff]
  %v5026 = vld [vmem:[%s4976 + $0x278] sm:$0xff]
  %v5027 = vld [vmem:[%s4976 + $0x288] sm:$0xff]
  %v5028 = vld [vmem:[%s4976 + $0x290] sm:$0xff]
  %v5029 = vld [vmem:[%s4976 + $0x2a0] sm:$0xff]
  %v5030 = vld [vmem:[%s4976 + $0x2a8] sm:$0xff]
  %v5031 = vld [vmem:[%s4976 + $0x2b8] sm:$0xff]
  %v5032 = vld [vmem:[%s4976 + $0x2c0] sm:$0xff]
  %v5033 = vld [vmem:[%s4976 + $0x2d0] sm:$0xff]
  %v5034 = vld [vmem:[%s4976 + $0x2d8] sm:$0xff]
  %v5035 = vld [vmem:[%s4976 + $0x2e8] sm:$0xff]
  %v5036 = vld [vmem:[%s4976 + $0x2f0] sm:$0xff]
  %v5037 = vld [vmem:[%s4976 + $0x300] sm:$0xff]
  %v5038 = vld [vmem:[%s4976 + $0x308] sm:$0xff]
  %v5039 = vld [vmem:[%s4976 + $0x318] sm:$0xff]
  %v5040 = vld [vmem:[%s4976 + $0x320] sm:$0xff]
  %v5041 = vld [vmem:[%s4976 + $0x1] sm:$0xff]
  %v5042 = vld [vmem:[%s4976 + $0x9] sm:$0xff]
  %v5043 = vld [vmem:[%s4976 + $0x19] sm:$0xff]
  %v5044 = vld [vmem:[%s4976 + $0x21] sm:$0xff]
  %v5045 = vld [vmem:[%s4976 + $0x31] sm:$0xff]
  %v5046 = vld [vmem:[%s4976 + $0x39] sm:$0xff]
  %v5047 = vld [vmem:[%s4976 + $0x49] sm:$0xff]
  %v5048 = vld [vmem:[%s4976 + $0x51] sm:$0xff]
  %v5049 = vld [vmem:[%s4976 + $0x61] sm:$0xff]
  %v5050 = vld [vmem:[%s4976 + $0x69] sm:$0xff]
  %v5051 = vld [vmem:[%s4976 + $0x79] sm:$0xff]
  %v5052 = vld [vmem:[%s4976 + $0x81] sm:$0xff]
  %v5053 = vld [vmem:[%s4976 + $0x91] sm:$0xff]
  %v5054 = vld [vmem:[%s4976 + $0x99] sm:$0xff]
  %v5055 = vld [vmem:[%s4976 + $0xa9] sm:$0xff]
  %v5056 = vld [vmem:[%s4976 + $0xb1] sm:$0xff]
  %v5057 = vld [vmem:[%s4976 + $0xc1] sm:$0xff]
  %v5058 = vld [vmem:[%s4976 + $0xc9] sm:$0xff]
  %v5059 = vld [vmem:[%s4976 + $0xd9] sm:$0xff]
  %v5060 = vld [vmem:[%s4976 + $0xe1] sm:$0xff]
  %v5061 = vld [vmem:[%s4976 + $0xf1] sm:$0xff]
  %v5062 = vld [vmem:[%s4976 + $0xf9] sm:$0xff]
  %v5063 = vld [vmem:[%s4976 + $0x109] sm:$0xff]
  %v5064 = vld [vmem:[%s4976 + $0x111] sm:$0xff]
  %v5065 = vld [vmem:[%s4976 + $0x121] sm:$0xff]
  %v5066 = vld [vmem:[%s4976 + $0x129] sm:$0xff]
  %v5067 = vld [vmem:[%s4976 + $0x139] sm:$0xff]
  %v5068 = vld [vmem:[%s4976 + $0x141] sm:$0xff]
  %v5069 = vld [vmem:[%s4976 + $0x151] sm:$0xff]
  %v5070 = vld [vmem:[%s4976 + $0x159] sm:$0xff]
  %v5071 = vld [vmem:[%s4976 + $0x169] sm:$0xff]
  %v5072 = vld [vmem:[%s4976 + $0x171] sm:$0xff]
  %v5073 = vld [vmem:[%s4976 + $0x1b1] sm:$0xff]
  %v5074 = vld [vmem:[%s4976 + $0x1b9] sm:$0xff]
  %v5075 = vld [vmem:[%s4976 + $0x1c9] sm:$0xff]
  %v5076 = vld [vmem:[%s4976 + $0x1d1] sm:$0xff]
  %v5077 = vld [vmem:[%s4976 + $0x1e1] sm:$0xff]
  %v5078 = vld [vmem:[%s4976 + $0x1e9] sm:$0xff]
  %v5079 = vld [vmem:[%s4976 + $0x1f9] sm:$0xff]
  %v5080 = vld [vmem:[%s4976 + $0x201] sm:$0xff]
  %v5081 = vld [vmem:[%s4976 + $0x211] sm:$0xff]
  %v5082 = vld [vmem:[%s4976 + $0x219] sm:$0xff]
  %v5083 = vld [vmem:[%s4976 + $0x229] sm:$0xff]
  %v5084 = vld [vmem:[%s4976 + $0x231] sm:$0xff]
  %v5085 = vld [vmem:[%s4976 + $0x241] sm:$0xff]
  %v5086 = vld [vmem:[%s4976 + $0x249] sm:$0xff]
  %v5087 = vld [vmem:[%s4976 + $0x259] sm:$0xff]
  %v5088 = vld [vmem:[%s4976 + $0x261] sm:$0xff]
  %v5089 = vld [vmem:[%s4976 + $0x271] sm:$0xff]
  %v5090 = vld [vmem:[%s4976 + $0x279] sm:$0xff]
  %v5091 = vld [vmem:[%s4976 + $0x289] sm:$0xff]
  %v5092 = vld [vmem:[%s4976 + $0x291] sm:$0xff]
  %v5093 = vld [vmem:[%s4976 + $0x2a1] sm:$0xff]
  %v5094 = vld [vmem:[%s4976 + $0x2a9] sm:$0xff]
  %v5095 = vld [vmem:[%s4976 + $0x2b9] sm:$0xff]
  %v5096 = vld [vmem:[%s4976 + $0x2c1] sm:$0xff]
  %v5097 = vld [vmem:[%s4976 + $0x2d1] sm:$0xff]
  %v5098 = vld [vmem:[%s4976 + $0x2d9] sm:$0xff]
  %v5099 = vld [vmem:[%s4976 + $0x2e9] sm:$0xff]
  %v5100 = vld [vmem:[%s4976 + $0x2f1] sm:$0xff]
  %v5101 = vld [vmem:[%s4976 + $0x301] sm:$0xff]
  %v5102 = vld [vmem:[%s4976 + $0x309] sm:$0xff]
  %v5103 = vld [vmem:[%s4976 + $0x319] sm:$0xff]
  %v5104 = vld [vmem:[%s4976 + $0x321] sm:$0xff]
  %v5105 = vld [vmem:[%s4976 + $0x2] sm:$0xff]
  %v5106 = vld [vmem:[%s4976 + $0xa] sm:$0xff]
  %v5107 = vld [vmem:[%s4976 + $0x1a] sm:$0xff]
  %v5108 = vld [vmem:[%s4976 + $0x22] sm:$0xff]
  %v5109 = vld [vmem:[%s4976 + $0x32] sm:$0xff]
  %v5110 = vld [vmem:[%s4976 + $0x3a] sm:$0xff]
  %v5111 = vld [vmem:[%s4976 + $0x4a] sm:$0xff]
  %v5112 = vld [vmem:[%s4976 + $0x52] sm:$0xff]
  %v5113 = vld [vmem:[%s4976 + $0x62] sm:$0xff]
  %v5114 = vld [vmem:[%s4976 + $0x6a] sm:$0xff]
  %v5115 = vld [vmem:[%s4976 + $0x7a] sm:$0xff]
  %v5116 = vld [vmem:[%s4976 + $0x82] sm:$0xff]
  %v5117 = vld [vmem:[%s4976 + $0x92] sm:$0xff]
  %v5118 = vld [vmem:[%s4976 + $0x9a] sm:$0xff]
  %v5119 = vld [vmem:[%s4976 + $0xaa] sm:$0xff]
  %v5120 = vld [vmem:[%s4976 + $0xb2] sm:$0xff]
  %v5121 = vld [vmem:[%s4976 + $0xc2] sm:$0xff]
  %v5122 = vld [vmem:[%s4976 + $0xca] sm:$0xff]
  %v5123 = vld [vmem:[%s4976 + $0xda] sm:$0xff]
  %v5124 = vld [vmem:[%s4976 + $0xe2] sm:$0xff]
  %v5125 = vld [vmem:[%s4976 + $0xf2] sm:$0xff]
  %v5126 = vld [vmem:[%s4976 + $0xfa] sm:$0xff]
  %v5127 = vld [vmem:[%s4976 + $0x10a] sm:$0xff]
  %v5128 = vld [vmem:[%s4976 + $0x112] sm:$0xff]
  %v5129 = vld [vmem:[%s4976 + $0x122] sm:$0xff]
  %v5130 = vld [vmem:[%s4976 + $0x12a] sm:$0xff]
  %v5131 = vld [vmem:[%s4976 + $0x13a] sm:$0xff]
  %v5132 = vld [vmem:[%s4976 + $0x142] sm:$0xff]
  %v5133 = vld [vmem:[%s4976 + $0x152] sm:$0xff]
  %v5134 = vld [vmem:[%s4976 + $0x15a] sm:$0xff]
  %v5135 = vld [vmem:[%s4976 + $0x16a] sm:$0xff]
  %v5136 = vld [vmem:[%s4976 + $0x172] sm:$0xff]
  %v5137 = vld [vmem:[%s4976 + $0x1b2] sm:$0xff]
  %v5138 = vld [vmem:[%s4976 + $0x1ba] sm:$0xff]
  %v5139 = vld [vmem:[%s4976 + $0x1ca] sm:$0xff]
  %v5140 = vld [vmem:[%s4976 + $0x1d2] sm:$0xff]
  %v5141 = vld [vmem:[%s4976 + $0x1e2] sm:$0xff]
  %v5142 = vld [vmem:[%s4976 + $0x1ea] sm:$0xff]
  %v5143 = vld [vmem:[%s4976 + $0x1fa] sm:$0xff]
  %v5144 = vld [vmem:[%s4976 + $0x202] sm:$0xff]
  %v5145 = vld [vmem:[%s4976 + $0x212] sm:$0xff]
  %v5146 = vld [vmem:[%s4976 + $0x21a] sm:$0xff]
  %v5147 = vld [vmem:[%s4976 + $0x22a] sm:$0xff]
  %v5148 = vld [vmem:[%s4976 + $0x232] sm:$0xff]
  %v5149 = vld [vmem:[%s4976 + $0x242] sm:$0xff]
  %v5150 = vld [vmem:[%s4976 + $0x24a] sm:$0xff]
  %v5151 = vld [vmem:[%s4976 + $0x25a] sm:$0xff]
  %v5152 = vld [vmem:[%s4976 + $0x262] sm:$0xff]
  %v5153 = vld [vmem:[%s4976 + $0x272] sm:$0xff]
  %v5154 = vld [vmem:[%s4976 + $0x27a] sm:$0xff]
  %v5155 = vld [vmem:[%s4976 + $0x28a] sm:$0xff]
  %v5156 = vld [vmem:[%s4976 + $0x292] sm:$0xff]
  %v5157 = vld [vmem:[%s4976 + $0x2a2] sm:$0xff]
  %v5158 = vld [vmem:[%s4976 + $0x2aa] sm:$0xff]
  %v5159 = vld [vmem:[%s4976 + $0x2ba] sm:$0xff]
  %v5160 = vld [vmem:[%s4976 + $0x2c2] sm:$0xff]
  %v5161 = vld [vmem:[%s4976 + $0x2d2] sm:$0xff]
  %v5162 = vld [vmem:[%s4976 + $0x2da] sm:$0xff]
  %v5163 = vld [vmem:[%s4976 + $0x2ea] sm:$0xff]
  %v5164 = vld [vmem:[%s4976 + $0x2f2] sm:$0xff]
  %v5165 = vld [vmem:[%s4976 + $0x302] sm:$0xff]
  %v5166 = vld [vmem:[%s4976 + $0x30a] sm:$0xff]
  %v5167 = vld [vmem:[%s4976 + $0x31a] sm:$0xff]
  %v5168 = vld [vmem:[%s4976 + $0x322] sm:$0xff]
  %5233 = vrot.lane.b32.xlu0 %v4656, 8
  %v5234 = vpop.permute.xlu0 %5233
  %5235 = vrot.lane.b32.xlu0 %v4657, 8
  %v5236 = vpop.permute.xlu0 %5235
  %5237 = vrot.lane.b32.xlu0 %v4658, 8
  %v5238 = vpop.permute.xlu0 %5237
  %5239 = vrot.lane.b32.xlu0 %v4659, 8
  %v5240 = vpop.permute.xlu0 %5239
  %5241 = vrot.lane.b32.xlu0 %v4660, 8
  %v5242 = vpop.permute.xlu0 %5241
  %5243 = vrot.lane.b32.xlu0 %v4661, 8
  %v5244 = vpop.permute.xlu0 %5243
  %5245 = vrot.lane.b32.xlu0 %v4662, 8
  %v5246 = vpop.permute.xlu0 %5245
  %5247 = vrot.lane.b32.xlu0 %v4663, 8
  %v5248 = vpop.permute.xlu0 %5247
  %5249 = vrot.lane.b32.xlu0 %v4664, 8
  %v5250 = vpop.permute.xlu0 %5249
  %5251 = vrot.lane.b32.xlu0 %v4665, 8
  %v5252 = vpop.permute.xlu0 %5251
  %5253 = vrot.lane.b32.xlu0 %v4666, 8
  %v5254 = vpop.permute.xlu0 %5253
  %5255 = vrot.lane.b32.xlu0 %v4667, 8
  %v5256 = vpop.permute.xlu0 %5255
  %5257 = vrot.lane.b32.xlu0 %v4668, 8
  %v5258 = vpop.permute.xlu0 %5257
  %5259 = vrot.lane.b32.xlu0 %v4669, 8
  %v5260 = vpop.permute.xlu0 %5259
  %5261 = vrot.lane.b32.xlu0 %v4670, 8
  %v5262 = vpop.permute.xlu0 %5261
  %5263 = vrot.lane.b32.xlu0 %v4671, 8
  %v5264 = vpop.permute.xlu0 %5263
  %5265 = vrot.lane.b32.xlu0 %v4672, 8
  %v5266 = vpop.permute.xlu0 %5265
  %5267 = vrot.lane.b32.xlu0 %v4673, 8
  %v5268 = vpop.permute.xlu0 %5267
  %5269 = vrot.lane.b32.xlu0 %v4674, 8
  %v5270 = vpop.permute.xlu0 %5269
  %5271 = vrot.lane.b32.xlu0 %v4675, 8
  %v5272 = vpop.permute.xlu0 %5271
  %5273 = vrot.lane.b32.xlu0 %v4676, 8
  %v5274 = vpop.permute.xlu0 %5273
  %5275 = vrot.lane.b32.xlu0 %v4677, 8
  %v5276 = vpop.permute.xlu0 %5275
  %5277 = vrot.lane.b32.xlu0 %v4678, 8
  %v5278 = vpop.permute.xlu0 %5277
  %5279 = vrot.lane.b32.xlu0 %v4679, 8
  %v5280 = vpop.permute.xlu0 %5279
  %5281 = vrot.lane.b32.xlu0 %v4680, 8
  %v5282 = vpop.permute.xlu0 %5281
  %5283 = vrot.lane.b32.xlu0 %v4681, 8
  %v5284 = vpop.permute.xlu0 %5283
  %5285 = vrot.lane.b32.xlu0 %v4682, 8
  %v5286 = vpop.permute.xlu0 %5285
  %5287 = vrot.lane.b32.xlu0 %v4683, 8
  %v5288 = vpop.permute.xlu0 %5287
  %5289 = vrot.lane.b32.xlu0 %v4684, 8
  %v5290 = vpop.permute.xlu0 %5289
  %5291 = vrot.lane.b32.xlu0 %v4685, 8
  %v5292 = vpop.permute.xlu0 %5291
  %5293 = vrot.lane.b32.xlu0 %v4686, 8
  %v5294 = vpop.permute.xlu0 %5293
  %5295 = vrot.lane.b32.xlu0 %v4687, 8
  %v5296 = vpop.permute.xlu0 %5295
  %5297 = vrot.lane.b32.xlu0 %v4688, 8
  %v5298 = vpop.permute.xlu0 %5297
  %5299 = vrot.lane.b32.xlu0 %v4689, 8
  %v5300 = vpop.permute.xlu0 %5299
  %5301 = vrot.lane.b32.xlu0 %v4690, 8
  %v5302 = vpop.permute.xlu0 %5301
  %5303 = vrot.lane.b32.xlu0 %v4691, 8
  %v5304 = vpop.permute.xlu0 %5303
  %5305 = vrot.lane.b32.xlu0 %v4692, 8
  %v5306 = vpop.permute.xlu0 %5305
  %5307 = vrot.lane.b32.xlu0 %v4693, 8
  %v5308 = vpop.permute.xlu0 %5307
  %5309 = vrot.lane.b32.xlu0 %v4694, 8
  %v5310 = vpop.permute.xlu0 %5309
  %5311 = vrot.lane.b32.xlu0 %v4695, 8
  %v5312 = vpop.permute.xlu0 %5311
  %5313 = vrot.lane.b32.xlu0 %v4696, 8
  %v5314 = vpop.permute.xlu0 %5313
  %5315 = vrot.lane.b32.xlu0 %v4697, 8
  %v5316 = vpop.permute.xlu0 %5315
  %5317 = vrot.lane.b32.xlu0 %v4698, 8
  %v5318 = vpop.permute.xlu0 %5317
  %5319 = vrot.lane.b32.xlu0 %v4699, 8
  %v5320 = vpop.permute.xlu0 %5319
  %5321 = vrot.lane.b32.xlu0 %v4700, 8
  %v5322 = vpop.permute.xlu0 %5321
  %5323 = vrot.lane.b32.xlu0 %v4701, 8
  %v5324 = vpop.permute.xlu0 %5323
  %5325 = vrot.lane.b32.xlu0 %v4702, 8
  %v5326 = vpop.permute.xlu0 %5325
  %5327 = vrot.lane.b32.xlu0 %v4703, 8
  %v5328 = vpop.permute.xlu0 %5327
  %5329 = vrot.lane.b32.xlu0 %v4704, 8
  %v5330 = vpop.permute.xlu0 %5329
  %5331 = vrot.lane.b32.xlu0 %v4705, 8
  %v5332 = vpop.permute.xlu0 %5331
  %5333 = vrot.lane.b32.xlu0 %v4706, 8
  %v5334 = vpop.permute.xlu0 %5333
  %5335 = vrot.lane.b32.xlu0 %v4707, 8
  %v5336 = vpop.permute.xlu0 %5335
  %5337 = vrot.lane.b32.xlu0 %v4708, 8
  %v5338 = vpop.permute.xlu0 %5337
  %5339 = vrot.lane.b32.xlu0 %v4709, 8
  %v5340 = vpop.permute.xlu0 %5339
  %5341 = vrot.lane.b32.xlu0 %v4710, 8
  %v5342 = vpop.permute.xlu0 %5341
  %5343 = vrot.lane.b32.xlu0 %v4711, 8
  %v5344 = vpop.permute.xlu0 %5343
  %5345 = vrot.lane.b32.xlu0 %v4712, 8
  %v5346 = vpop.permute.xlu0 %5345
  %5347 = vrot.lane.b32.xlu0 %v4713, 8
  %v5348 = vpop.permute.xlu0 %5347
  %5349 = vrot.lane.b32.xlu0 %v4714, 8
  %v5350 = vpop.permute.xlu0 %5349
  %5351 = vrot.lane.b32.xlu0 %v4715, 8
  %v5352 = vpop.permute.xlu0 %5351
  %5353 = vrot.lane.b32.xlu0 %v4716, 8
  %v5354 = vpop.permute.xlu0 %5353
  %5355 = vrot.lane.b32.xlu0 %v4717, 8
  %v5356 = vpop.permute.xlu0 %5355
  %5357 = vrot.lane.b32.xlu0 %v4718, 8
  %v5358 = vpop.permute.xlu0 %5357
  %5359 = vrot.lane.b32.xlu0 %v4719, 8
  %v5360 = vpop.permute.xlu0 %5359
  %5489 = vrot.lane.b32.xlu0 %v4720, 16
  %v5490 = vpop.permute.xlu0 %5489
  %5491 = vrot.lane.b32.xlu0 %v4721, 16
  %v5492 = vpop.permute.xlu0 %5491
  %5493 = vrot.lane.b32.xlu0 %v4722, 16
  %v5494 = vpop.permute.xlu0 %5493
  %5495 = vrot.lane.b32.xlu0 %v4723, 16
  %v5496 = vpop.permute.xlu0 %5495
  %5497 = vrot.lane.b32.xlu0 %v4724, 16
  %v5498 = vpop.permute.xlu0 %5497
  %5499 = vrot.lane.b32.xlu0 %v4725, 16
  %v5500 = vpop.permute.xlu0 %5499
  %5501 = vrot.lane.b32.xlu0 %v4726, 16
  %v5502 = vpop.permute.xlu0 %5501
  %5503 = vrot.lane.b32.xlu0 %v4727, 16
  %v5504 = vpop.permute.xlu0 %5503
  %5505 = vrot.lane.b32.xlu0 %v4728, 16
  %v5506 = vpop.permute.xlu0 %5505
  %5507 = vrot.lane.b32.xlu0 %v4729, 16
  %v5508 = vpop.permute.xlu0 %5507
  %5509 = vrot.lane.b32.xlu0 %v4730, 16
  %v5510 = vpop.permute.xlu0 %5509
  %5511 = vrot.lane.b32.xlu0 %v4731, 16
  %v5512 = vpop.permute.xlu0 %5511
  %5513 = vrot.lane.b32.xlu0 %v4732, 16
  %v5514 = vpop.permute.xlu0 %5513
  %5515 = vrot.lane.b32.xlu0 %v4733, 16
  %v5516 = vpop.permute.xlu0 %5515
  %5517 = vrot.lane.b32.xlu0 %v4734, 16
  %v5518 = vpop.permute.xlu0 %5517
  %5519 = vrot.lane.b32.xlu0 %v4735, 16
  %v5520 = vpop.permute.xlu0 %5519
  %5521 = vrot.lane.b32.xlu0 %v4736, 16
  %v5522 = vpop.permute.xlu0 %5521
  %5523 = vrot.lane.b32.xlu0 %v4737, 16
  %v5524 = vpop.permute.xlu0 %5523
  %5525 = vrot.lane.b32.xlu0 %v4738, 16
  %v5526 = vpop.permute.xlu0 %5525
  %5527 = vrot.lane.b32.xlu0 %v4739, 16
  %v5528 = vpop.permute.xlu0 %5527
  %5529 = vrot.lane.b32.xlu0 %v4740, 16
  %v5530 = vpop.permute.xlu0 %5529
  %5531 = vrot.lane.b32.xlu0 %v4741, 16
  %v5532 = vpop.permute.xlu0 %5531
  %5533 = vrot.lane.b32.xlu0 %v4742, 16
  %v5534 = vpop.permute.xlu0 %5533
  %5535 = vrot.lane.b32.xlu0 %v4743, 16
  %v5536 = vpop.permute.xlu0 %5535
  %5537 = vrot.lane.b32.xlu0 %v4744, 16
  %v5538 = vpop.permute.xlu0 %5537
  %5539 = vrot.lane.b32.xlu0 %v4745, 16
  %v5540 = vpop.permute.xlu0 %5539
  %5541 = vrot.lane.b32.xlu0 %v4746, 16
  %v5542 = vpop.permute.xlu0 %5541
  %5543 = vrot.lane.b32.xlu0 %v4747, 16
  %v5544 = vpop.permute.xlu0 %5543
  %5545 = vrot.lane.b32.xlu0 %v4748, 16
  %v5546 = vpop.permute.xlu0 %5545
  %5547 = vrot.lane.b32.xlu0 %v4749, 16
  %v5548 = vpop.permute.xlu0 %5547
  %5549 = vrot.lane.b32.xlu0 %v4750, 16
  %v5550 = vpop.permute.xlu0 %5549
  %5551 = vrot.lane.b32.xlu0 %v4751, 16
  %v5552 = vpop.permute.xlu0 %5551
  %5553 = vrot.lane.b32.xlu0 %v4752, 16
  %v5554 = vpop.permute.xlu0 %5553
  %5555 = vrot.lane.b32.xlu0 %v4753, 16
  %v5556 = vpop.permute.xlu0 %5555
  %5557 = vrot.lane.b32.xlu0 %v4754, 16
  %v5558 = vpop.permute.xlu0 %5557
  %5559 = vrot.lane.b32.xlu0 %v4755, 16
  %v5560 = vpop.permute.xlu0 %5559
  %5561 = vrot.lane.b32.xlu0 %v4756, 16
  %v5562 = vpop.permute.xlu0 %5561
  %5563 = vrot.lane.b32.xlu0 %v4757, 16
  %v5564 = vpop.permute.xlu0 %5563
  %5565 = vrot.lane.b32.xlu0 %v4758, 16
  %v5566 = vpop.permute.xlu0 %5565
  %5567 = vrot.lane.b32.xlu0 %v4759, 16
  %v5568 = vpop.permute.xlu0 %5567
  %5569 = vrot.lane.b32.xlu0 %v4760, 16
  %v5570 = vpop.permute.xlu0 %5569
  %5571 = vrot.lane.b32.xlu0 %v4761, 16
  %v5572 = vpop.permute.xlu0 %5571
  %5573 = vrot.lane.b32.xlu0 %v4762, 16
  %v5574 = vpop.permute.xlu0 %5573
  %5575 = vrot.lane.b32.xlu0 %v4763, 16
  %v5576 = vpop.permute.xlu0 %5575
  %5577 = vrot.lane.b32.xlu0 %v4764, 16
  %v5578 = vpop.permute.xlu0 %5577
  %5579 = vrot.lane.b32.xlu0 %v4765, 16
  %v5580 = vpop.permute.xlu0 %5579
  %5581 = vrot.lane.b32.xlu0 %v4766, 16
  %v5582 = vpop.permute.xlu0 %5581
  %5583 = vrot.lane.b32.xlu0 %v4767, 16
  %v5584 = vpop.permute.xlu0 %5583
  %5585 = vrot.lane.b32.xlu0 %v4768, 16
  %v5586 = vpop.permute.xlu0 %5585
  %5587 = vrot.lane.b32.xlu0 %v4769, 16
  %v5588 = vpop.permute.xlu0 %5587
  %5589 = vrot.lane.b32.xlu0 %v4770, 16
  %v5590 = vpop.permute.xlu0 %5589
  %5591 = vrot.lane.b32.xlu0 %v4771, 16
  %v5592 = vpop.permute.xlu0 %5591
  %5593 = vrot.lane.b32.xlu0 %v4772, 16
  %v5594 = vpop.permute.xlu0 %5593
  %5595 = vrot.lane.b32.xlu0 %v4773, 16
  %v5596 = vpop.permute.xlu0 %5595
  %5597 = vrot.lane.b32.xlu0 %v4774, 16
  %v5598 = vpop.permute.xlu0 %5597
  %5599 = vrot.lane.b32.xlu0 %v4775, 16
  %v5600 = vpop.permute.xlu0 %5599
  %5601 = vrot.lane.b32.xlu0 %v4776, 16
  %v5602 = vpop.permute.xlu0 %5601
  %5603 = vrot.lane.b32.xlu0 %v4777, 16
  %v5604 = vpop.permute.xlu0 %5603
  %5605 = vrot.lane.b32.xlu0 %v4778, 16
  %v5606 = vpop.permute.xlu0 %5605
  %5607 = vrot.lane.b32.xlu0 %v4779, 16
  %v5608 = vpop.permute.xlu0 %5607
  %5609 = vrot.lane.b32.xlu0 %v4780, 16
  %v5610 = vpop.permute.xlu0 %5609
  %5611 = vrot.lane.b32.xlu0 %v4781, 16
  %v5612 = vpop.permute.xlu0 %5611
  %5613 = vrot.lane.b32.xlu0 %v4782, 16
  %v5614 = vpop.permute.xlu0 %5613
  %5615 = vrot.lane.b32.xlu0 %v4783, 16
  %v5616 = vpop.permute.xlu0 %5615
  %5745 = vrot.lane.b32.xlu0 %v4784, 24
  %v5746 = vpop.permute.xlu0 %5745
  %5747 = vrot.lane.b32.xlu0 %v4785, 24
  %v5748 = vpop.permute.xlu0 %5747
  %5749 = vrot.lane.b32.xlu0 %v4786, 24
  %v5750 = vpop.permute.xlu0 %5749
  %5751 = vrot.lane.b32.xlu0 %v4787, 24
  %v5752 = vpop.permute.xlu0 %5751
  %5753 = vrot.lane.b32.xlu0 %v4788, 24
  %v5754 = vpop.permute.xlu0 %5753
  %5755 = vrot.lane.b32.xlu0 %v4789, 24
  %v5756 = vpop.permute.xlu0 %5755
  %5757 = vrot.lane.b32.xlu0 %v4790, 24
  %v5758 = vpop.permute.xlu0 %5757
  %5759 = vrot.lane.b32.xlu0 %v4791, 24
  %v5760 = vpop.permute.xlu0 %5759
  %5761 = vrot.lane.b32.xlu0 %v4792, 24
  %v5762 = vpop.permute.xlu0 %5761
  %5763 = vrot.lane.b32.xlu0 %v4793, 24
  %v5764 = vpop.permute.xlu0 %5763
  %5765 = vrot.lane.b32.xlu0 %v4794, 24
  %v5766 = vpop.permute.xlu0 %5765
  %5767 = vrot.lane.b32.xlu0 %v4795, 24
  %v5768 = vpop.permute.xlu0 %5767
  %5769 = vrot.lane.b32.xlu0 %v4796, 24
  %v5770 = vpop.permute.xlu0 %5769
  %5771 = vrot.lane.b32.xlu0 %v4797, 24
  %v5772 = vpop.permute.xlu0 %5771
  %5773 = vrot.lane.b32.xlu0 %v4798, 24
  %v5774 = vpop.permute.xlu0 %5773
  %5775 = vrot.lane.b32.xlu0 %v4799, 24
  %v5776 = vpop.permute.xlu0 %5775
  %5777 = vrot.lane.b32.xlu0 %v4800, 24
  %v5778 = vpop.permute.xlu0 %5777
  %5779 = vrot.lane.b32.xlu0 %v4801, 24
  %v5780 = vpop.permute.xlu0 %5779
  %5781 = vrot.lane.b32.xlu0 %v4802, 24
  %v5782 = vpop.permute.xlu0 %5781
  %5783 = vrot.lane.b32.xlu0 %v4803, 24
  %v5784 = vpop.permute.xlu0 %5783
  %5785 = vrot.lane.b32.xlu0 %v4804, 24
  %v5786 = vpop.permute.xlu0 %5785
  %5787 = vrot.lane.b32.xlu0 %v4805, 24
  %v5788 = vpop.permute.xlu0 %5787
  %5789 = vrot.lane.b32.xlu0 %v4806, 24
  %v5790 = vpop.permute.xlu0 %5789
  %5791 = vrot.lane.b32.xlu0 %v4807, 24
  %v5792 = vpop.permute.xlu0 %5791
  %5793 = vrot.lane.b32.xlu0 %v4808, 24
  %v5794 = vpop.permute.xlu0 %5793
  %5795 = vrot.lane.b32.xlu0 %v4809, 24
  %v5796 = vpop.permute.xlu0 %5795
  %5797 = vrot.lane.b32.xlu0 %v4810, 24
  %v5798 = vpop.permute.xlu0 %5797
  %5799 = vrot.lane.b32.xlu0 %v4811, 24
  %v5800 = vpop.permute.xlu0 %5799
  %5801 = vrot.lane.b32.xlu0 %v4812, 24
  %v5802 = vpop.permute.xlu0 %5801
  %5803 = vrot.lane.b32.xlu0 %v4813, 24
  %v5804 = vpop.permute.xlu0 %5803
  %5805 = vrot.lane.b32.xlu0 %v4814, 24
  %v5806 = vpop.permute.xlu0 %5805
  %5807 = vrot.lane.b32.xlu0 %v4815, 24
  %v5808 = vpop.permute.xlu0 %5807
  %5809 = vrot.lane.b32.xlu0 %v4816, 24
  %v5810 = vpop.permute.xlu0 %5809
  %5811 = vrot.lane.b32.xlu0 %v4817, 24
  %v5812 = vpop.permute.xlu0 %5811
  %5813 = vrot.lane.b32.xlu0 %v4818, 24
  %v5814 = vpop.permute.xlu0 %5813
  %5815 = vrot.lane.b32.xlu0 %v4819, 24
  %v5816 = vpop.permute.xlu0 %5815
  %5817 = vrot.lane.b32.xlu0 %v4820, 24
  %v5818 = vpop.permute.xlu0 %5817
  %5819 = vrot.lane.b32.xlu0 %v4821, 24
  %v5820 = vpop.permute.xlu0 %5819
  %5821 = vrot.lane.b32.xlu0 %v4822, 24
  %v5822 = vpop.permute.xlu0 %5821
  %5823 = vrot.lane.b32.xlu0 %v4823, 24
  %v5824 = vpop.permute.xlu0 %5823
  %5825 = vrot.lane.b32.xlu0 %v4824, 24
  %v5826 = vpop.permute.xlu0 %5825
  %5827 = vrot.lane.b32.xlu0 %v4825, 24
  %v5828 = vpop.permute.xlu0 %5827
  %5829 = vrot.lane.b32.xlu0 %v4826, 24
  %v5830 = vpop.permute.xlu0 %5829
  %5831 = vrot.lane.b32.xlu0 %v4827, 24
  %v5832 = vpop.permute.xlu0 %5831
  %5833 = vrot.lane.b32.xlu0 %v4828, 24
  %v5834 = vpop.permute.xlu0 %5833
  %5835 = vrot.lane.b32.xlu0 %v4829, 24
  %v5836 = vpop.permute.xlu0 %5835
  %5837 = vrot.lane.b32.xlu0 %v4830, 24
  %v5838 = vpop.permute.xlu0 %5837
  %5839 = vrot.lane.b32.xlu0 %v4831, 24
  %v5840 = vpop.permute.xlu0 %5839
  %5841 = vrot.lane.b32.xlu0 %v4832, 24
  %v5842 = vpop.permute.xlu0 %5841
  %5843 = vrot.lane.b32.xlu0 %v4833, 24
  %v5844 = vpop.permute.xlu0 %5843
  %5845 = vrot.lane.b32.xlu0 %v4834, 24
  %v5846 = vpop.permute.xlu0 %5845
  %5847 = vrot.lane.b32.xlu0 %v4835, 24
  %v5848 = vpop.permute.xlu0 %5847
  %5849 = vrot.lane.b32.xlu0 %v4836, 24
  %v5850 = vpop.permute.xlu0 %5849
  %5851 = vrot.lane.b32.xlu0 %v4837, 24
  %v5852 = vpop.permute.xlu0 %5851
  %5853 = vrot.lane.b32.xlu0 %v4838, 24
  %v5854 = vpop.permute.xlu0 %5853
  %5855 = vrot.lane.b32.xlu0 %v4839, 24
  %v5856 = vpop.permute.xlu0 %5855
  %5857 = vrot.lane.b32.xlu0 %v4840, 24
  %v5858 = vpop.permute.xlu0 %5857
  %5859 = vrot.lane.b32.xlu0 %v4841, 24
  %v5860 = vpop.permute.xlu0 %5859
  %5861 = vrot.lane.b32.xlu0 %v4842, 24
  %v5862 = vpop.permute.xlu0 %5861
  %5863 = vrot.lane.b32.xlu0 %v4843, 24
  %v5864 = vpop.permute.xlu0 %5863
  %5865 = vrot.lane.b32.xlu0 %v4844, 24
  %v5866 = vpop.permute.xlu0 %5865
  %5867 = vrot.lane.b32.xlu0 %v4845, 24
  %v5868 = vpop.permute.xlu0 %5867
  %5869 = vrot.lane.b32.xlu0 %v4846, 24
  %v5870 = vpop.permute.xlu0 %5869
  %5871 = vrot.lane.b32.xlu0 %v4847, 24
  %v5872 = vpop.permute.xlu0 %5871
  %6001 = vrot.lane.b32.xlu0 %v4848, 32
  %v6002 = vpop.permute.xlu0 %6001
  %6003 = vrot.lane.b32.xlu0 %v4849, 32
  %v6004 = vpop.permute.xlu0 %6003
  %6005 = vrot.lane.b32.xlu0 %v4850, 32
  %v6006 = vpop.permute.xlu0 %6005
  %6007 = vrot.lane.b32.xlu0 %v4851, 32
  %v6008 = vpop.permute.xlu0 %6007
  %6009 = vrot.lane.b32.xlu0 %v4852, 32
  %v6010 = vpop.permute.xlu0 %6009
  %6011 = vrot.lane.b32.xlu0 %v4853, 32
  %v6012 = vpop.permute.xlu0 %6011
  %6013 = vrot.lane.b32.xlu0 %v4854, 32
  %v6014 = vpop.permute.xlu0 %6013
  %6015 = vrot.lane.b32.xlu0 %v4855, 32
  %v6016 = vpop.permute.xlu0 %6015
  %6017 = vrot.lane.b32.xlu0 %v4856, 32
  %v6018 = vpop.permute.xlu0 %6017
  %6019 = vrot.lane.b32.xlu0 %v4857, 32
  %v6020 = vpop.permute.xlu0 %6019
  %6021 = vrot.lane.b32.xlu0 %v4858, 32
  %v6022 = vpop.permute.xlu0 %6021
  %6023 = vrot.lane.b32.xlu0 %v4859, 32
  %v6024 = vpop.permute.xlu0 %6023
  %6025 = vrot.lane.b32.xlu0 %v4860, 32
  %v6026 = vpop.permute.xlu0 %6025
  %6027 = vrot.lane.b32.xlu0 %v4861, 32
  %v6028 = vpop.permute.xlu0 %6027
  %6029 = vrot.lane.b32.xlu0 %v4862, 32
  %v6030 = vpop.permute.xlu0 %6029
  %6031 = vrot.lane.b32.xlu0 %v4863, 32
  %v6032 = vpop.permute.xlu0 %6031
  %6033 = vrot.lane.b32.xlu0 %v4864, 32
  %v6034 = vpop.permute.xlu0 %6033
  %6035 = vrot.lane.b32.xlu0 %v4865, 32
  %v6036 = vpop.permute.xlu0 %6035
  %6037 = vrot.lane.b32.xlu0 %v4866, 32
  %v6038 = vpop.permute.xlu0 %6037
  %6039 = vrot.lane.b32.xlu0 %v4867, 32
  %v6040 = vpop.permute.xlu0 %6039
  %6041 = vrot.lane.b32.xlu0 %v4868, 32
  %v6042 = vpop.permute.xlu0 %6041
  %6043 = vrot.lane.b32.xlu0 %v4869, 32
  %v6044 = vpop.permute.xlu0 %6043
  %6045 = vrot.lane.b32.xlu0 %v4870, 32
  %v6046 = vpop.permute.xlu0 %6045
  %6047 = vrot.lane.b32.xlu0 %v4871, 32
  %v6048 = vpop.permute.xlu0 %6047
  %6049 = vrot.lane.b32.xlu0 %v4872, 32
  %v6050 = vpop.permute.xlu0 %6049
  %6051 = vrot.lane.b32.xlu0 %v4873, 32
  %v6052 = vpop.permute.xlu0 %6051
  %6053 = vrot.lane.b32.xlu0 %v4874, 32
  %v6054 = vpop.permute.xlu0 %6053
  %6055 = vrot.lane.b32.xlu0 %v4875, 32
  %v6056 = vpop.permute.xlu0 %6055
  %6057 = vrot.lane.b32.xlu0 %v4876, 32
  %v6058 = vpop.permute.xlu0 %6057
  %6059 = vrot.lane.b32.xlu0 %v4877, 32
  %v6060 = vpop.permute.xlu0 %6059
  %6061 = vrot.lane.b32.xlu0 %v4878, 32
  %v6062 = vpop.permute.xlu0 %6061
  %6063 = vrot.lane.b32.xlu0 %v4879, 32
  %v6064 = vpop.permute.xlu0 %6063
  %6065 = vrot.lane.b32.xlu0 %v4880, 32
  %v6066 = vpop.permute.xlu0 %6065
  %6067 = vrot.lane.b32.xlu0 %v4881, 32
  %v6068 = vpop.permute.xlu0 %6067
  %6069 = vrot.lane.b32.xlu0 %v4882, 32
  %v6070 = vpop.permute.xlu0 %6069
  %6071 = vrot.lane.b32.xlu0 %v4883, 32
  %v6072 = vpop.permute.xlu0 %6071
  %6073 = vrot.lane.b32.xlu0 %v4884, 32
  %v6074 = vpop.permute.xlu0 %6073
  %6075 = vrot.lane.b32.xlu0 %v4885, 32
  %v6076 = vpop.permute.xlu0 %6075
  %6077 = vrot.lane.b32.xlu0 %v4886, 32
  %v6078 = vpop.permute.xlu0 %6077
  %6079 = vrot.lane.b32.xlu0 %v4887, 32
  %v6080 = vpop.permute.xlu0 %6079
  %6081 = vrot.lane.b32.xlu0 %v4888, 32
  %v6082 = vpop.permute.xlu0 %6081
  %6083 = vrot.lane.b32.xlu0 %v4889, 32
  %v6084 = vpop.permute.xlu0 %6083
  %6085 = vrot.lane.b32.xlu0 %v4890, 32
  %v6086 = vpop.permute.xlu0 %6085
  %6087 = vrot.lane.b32.xlu0 %v4891, 32
  %v6088 = vpop.permute.xlu0 %6087
  %6089 = vrot.lane.b32.xlu0 %v4892, 32
  %v6090 = vpop.permute.xlu0 %6089
  %6091 = vrot.lane.b32.xlu0 %v4893, 32
  %v6092 = vpop.permute.xlu0 %6091
  %6093 = vrot.lane.b32.xlu0 %v4894, 32
  %v6094 = vpop.permute.xlu0 %6093
  %6095 = vrot.lane.b32.xlu0 %v4895, 32
  %v6096 = vpop.permute.xlu0 %6095
  %6097 = vrot.lane.b32.xlu0 %v4896, 32
  %v6098 = vpop.permute.xlu0 %6097
  %6099 = vrot.lane.b32.xlu0 %v4897, 32
  %v6100 = vpop.permute.xlu0 %6099
  %6101 = vrot.lane.b32.xlu0 %v4898, 32
  %v6102 = vpop.permute.xlu0 %6101
  %6103 = vrot.lane.b32.xlu0 %v4899, 32
  %v6104 = vpop.permute.xlu0 %6103
  %6105 = vrot.lane.b32.xlu0 %v4900, 32
  %v6106 = vpop.permute.xlu0 %6105
  %6107 = vrot.lane.b32.xlu0 %v4901, 32
  %v6108 = vpop.permute.xlu0 %6107
  %6109 = vrot.lane.b32.xlu0 %v4902, 32
  %v6110 = vpop.permute.xlu0 %6109
  %6111 = vrot.lane.b32.xlu0 %v4903, 32
  %v6112 = vpop.permute.xlu0 %6111
  %6113 = vrot.lane.b32.xlu0 %v4904, 32
  %v6114 = vpop.permute.xlu0 %6113
  %6115 = vrot.lane.b32.xlu0 %v4905, 32
  %v6116 = vpop.permute.xlu0 %6115
  %6117 = vrot.lane.b32.xlu0 %v4906, 32
  %v6118 = vpop.permute.xlu0 %6117
  %6119 = vrot.lane.b32.xlu0 %v4907, 32
  %v6120 = vpop.permute.xlu0 %6119
  %6121 = vrot.lane.b32.xlu0 %v4908, 32
  %v6122 = vpop.permute.xlu0 %6121
  %6123 = vrot.lane.b32.xlu0 %v4909, 32
  %v6124 = vpop.permute.xlu0 %6123
  %6125 = vrot.lane.b32.xlu0 %v4910, 32
  %v6126 = vpop.permute.xlu0 %6125
  %6127 = vrot.lane.b32.xlu0 %v4911, 32
  %v6128 = vpop.permute.xlu0 %6127
  %6257 = vrot.lane.b32.xlu0 %v4912, 40
  %v6258 = vpop.permute.xlu0 %6257
  %6259 = vrot.lane.b32.xlu0 %v4913, 40
  %v6260 = vpop.permute.xlu0 %6259
  %6261 = vrot.lane.b32.xlu0 %v4914, 40
  %v6262 = vpop.permute.xlu0 %6261
  %6263 = vrot.lane.b32.xlu0 %v4915, 40
  %v6264 = vpop.permute.xlu0 %6263
  %6265 = vrot.lane.b32.xlu0 %v4916, 40
  %v6266 = vpop.permute.xlu0 %6265
  %6267 = vrot.lane.b32.xlu0 %v4917, 40
  %v6268 = vpop.permute.xlu0 %6267
  %6269 = vrot.lane.b32.xlu0 %v4918, 40
  %v6270 = vpop.permute.xlu0 %6269
  %6271 = vrot.lane.b32.xlu0 %v4919, 40
  %v6272 = vpop.permute.xlu0 %6271
  %6273 = vrot.lane.b32.xlu0 %v4920, 40
  %v6274 = vpop.permute.xlu0 %6273
  %6275 = vrot.lane.b32.xlu0 %v4921, 40
  %v6276 = vpop.permute.xlu0 %6275
  %6277 = vrot.lane.b32.xlu0 %v4922, 40
  %v6278 = vpop.permute.xlu0 %6277
  %6279 = vrot.lane.b32.xlu0 %v4923, 40
  %v6280 = vpop.permute.xlu0 %6279
  %6281 = vrot.lane.b32.xlu0 %v4924, 40
  %v6282 = vpop.permute.xlu0 %6281
  %6283 = vrot.lane.b32.xlu0 %v4925, 40
  %v6284 = vpop.permute.xlu0 %6283
  %6285 = vrot.lane.b32.xlu0 %v4926, 40
  %v6286 = vpop.permute.xlu0 %6285
  %6287 = vrot.lane.b32.xlu0 %v4927, 40
  %v6288 = vpop.permute.xlu0 %6287
  %6289 = vrot.lane.b32.xlu0 %v4928, 40
  %v6290 = vpop.permute.xlu0 %6289
  %6291 = vrot.lane.b32.xlu0 %v4929, 40
  %v6292 = vpop.permute.xlu0 %6291
  %6293 = vrot.lane.b32.xlu0 %v4930, 40
  %v6294 = vpop.permute.xlu0 %6293
  %6295 = vrot.lane.b32.xlu0 %v4931, 40
  %v6296 = vpop.permute.xlu0 %6295
  %6297 = vrot.lane.b32.xlu0 %v4932, 40
  %v6298 = vpop.permute.xlu0 %6297
  %6299 = vrot.lane.b32.xlu0 %v4933, 40
  %v6300 = vpop.permute.xlu0 %6299
  %6301 = vrot.lane.b32.xlu0 %v4934, 40
  %v6302 = vpop.permute.xlu0 %6301
  %6303 = vrot.lane.b32.xlu0 %v4935, 40
  %v6304 = vpop.permute.xlu0 %6303
  %6305 = vrot.lane.b32.xlu0 %v4936, 40
  %v6306 = vpop.permute.xlu0 %6305
  %6307 = vrot.lane.b32.xlu0 %v4937, 40
  %v6308 = vpop.permute.xlu0 %6307
  %6309 = vrot.lane.b32.xlu0 %v4938, 40
  %v6310 = vpop.permute.xlu0 %6309
  %6311 = vrot.lane.b32.xlu0 %v4939, 40
  %v6312 = vpop.permute.xlu0 %6311
  %6313 = vrot.lane.b32.xlu0 %v4940, 40
  %v6314 = vpop.permute.xlu0 %6313
  %6315 = vrot.lane.b32.xlu0 %v4941, 40
  %v6316 = vpop.permute.xlu0 %6315
  %6317 = vrot.lane.b32.xlu0 %v4942, 40
  %v6318 = vpop.permute.xlu0 %6317
  %6319 = vrot.lane.b32.xlu0 %v4943, 40
  %v6320 = vpop.permute.xlu0 %6319
  %6321 = vrot.lane.b32.xlu0 %v4944, 40
  %v6322 = vpop.permute.xlu0 %6321
  %6323 = vrot.lane.b32.xlu0 %v4945, 40
  %v6324 = vpop.permute.xlu0 %6323
  %6325 = vrot.lane.b32.xlu0 %v4946, 40
  %v6326 = vpop.permute.xlu0 %6325
  %6327 = vrot.lane.b32.xlu0 %v4947, 40
  %v6328 = vpop.permute.xlu0 %6327
  %6329 = vrot.lane.b32.xlu0 %v4948, 40
  %v6330 = vpop.permute.xlu0 %6329
  %6331 = vrot.lane.b32.xlu0 %v4949, 40
  %v6332 = vpop.permute.xlu0 %6331
  %6333 = vrot.lane.b32.xlu0 %v4950, 40
  %v6334 = vpop.permute.xlu0 %6333
  %6335 = vrot.lane.b32.xlu0 %v4951, 40
  %v6336 = vpop.permute.xlu0 %6335
  %6337 = vrot.lane.b32.xlu0 %v4952, 40
  %v6338 = vpop.permute.xlu0 %6337
  %6339 = vrot.lane.b32.xlu0 %v4953, 40
  %v6340 = vpop.permute.xlu0 %6339
  %6341 = vrot.lane.b32.xlu0 %v4954, 40
  %v6342 = vpop.permute.xlu0 %6341
  %6343 = vrot.lane.b32.xlu0 %v4955, 40
  %v6344 = vpop.permute.xlu0 %6343
  %6345 = vrot.lane.b32.xlu0 %v4956, 40
  %v6346 = vpop.permute.xlu0 %6345
  %6347 = vrot.lane.b32.xlu0 %v4957, 40
  %v6348 = vpop.permute.xlu0 %6347
  %6349 = vrot.lane.b32.xlu0 %v4958, 40
  %v6350 = vpop.permute.xlu0 %6349
  %6351 = vrot.lane.b32.xlu0 %v4959, 40
  %v6352 = vpop.permute.xlu0 %6351
  %6353 = vrot.lane.b32.xlu0 %v4960, 40
  %v6354 = vpop.permute.xlu0 %6353
  %6355 = vrot.lane.b32.xlu0 %v4961, 40
  %v6356 = vpop.permute.xlu0 %6355
  %6357 = vrot.lane.b32.xlu0 %v4962, 40
  %v6358 = vpop.permute.xlu0 %6357
  %6359 = vrot.lane.b32.xlu0 %v4963, 40
  %v6360 = vpop.permute.xlu0 %6359
  %6361 = vrot.lane.b32.xlu0 %v4964, 40
  %v6362 = vpop.permute.xlu0 %6361
  %6363 = vrot.lane.b32.xlu0 %v4965, 40
  %v6364 = vpop.permute.xlu0 %6363
  %6365 = vrot.lane.b32.xlu0 %v4966, 40
  %v6366 = vpop.permute.xlu0 %6365
  %6367 = vrot.lane.b32.xlu0 %v4967, 40
  %v6368 = vpop.permute.xlu0 %6367
  %6369 = vrot.lane.b32.xlu0 %v4968, 40
  %v6370 = vpop.permute.xlu0 %6369
  %6371 = vrot.lane.b32.xlu0 %v4969, 40
  %v6372 = vpop.permute.xlu0 %6371
  %6373 = vrot.lane.b32.xlu0 %v4970, 40
  %v6374 = vpop.permute.xlu0 %6373
  %6375 = vrot.lane.b32.xlu0 %v4971, 40
  %v6376 = vpop.permute.xlu0 %6375
  %6377 = vrot.lane.b32.xlu0 %v4972, 40
  %v6378 = vpop.permute.xlu0 %6377
  %6379 = vrot.lane.b32.xlu0 %v4973, 40
  %v6380 = vpop.permute.xlu0 %6379
  %6381 = vrot.lane.b32.xlu0 %v4974, 40
  %v6382 = vpop.permute.xlu0 %6381
  %6383 = vrot.lane.b32.xlu0 %v4975, 40
  %v6384 = vpop.permute.xlu0 %6383
  %6513 = vrot.lane.b32.xlu0 %v4977, 48
  %v6514 = vpop.permute.xlu0 %6513
  %6515 = vrot.lane.b32.xlu0 %v4978, 48
  %v6516 = vpop.permute.xlu0 %6515
  %6517 = vrot.lane.b32.xlu0 %v4979, 48
  %v6518 = vpop.permute.xlu0 %6517
  %6519 = vrot.lane.b32.xlu0 %v4980, 48
  %v6520 = vpop.permute.xlu0 %6519
  %6521 = vrot.lane.b32.xlu0 %v4981, 48
  %v6522 = vpop.permute.xlu0 %6521
  %6523 = vrot.lane.b32.xlu0 %v4982, 48
  %v6524 = vpop.permute.xlu0 %6523
  %6525 = vrot.lane.b32.xlu0 %v4983, 48
  %v6526 = vpop.permute.xlu0 %6525
  %6527 = vrot.lane.b32.xlu0 %v4984, 48
  %v6528 = vpop.permute.xlu0 %6527
  %6529 = vrot.lane.b32.xlu0 %v4985, 48
  %v6530 = vpop.permute.xlu0 %6529
  %6531 = vrot.lane.b32.xlu0 %v4986, 48
  %v6532 = vpop.permute.xlu0 %6531
  %6533 = vrot.lane.b32.xlu0 %v4987, 48
  %v6534 = vpop.permute.xlu0 %6533
  %6535 = vrot.lane.b32.xlu0 %v4988, 48
  %v6536 = vpop.permute.xlu0 %6535
  %6537 = vrot.lane.b32.xlu0 %v4989, 48
  %v6538 = vpop.permute.xlu0 %6537
  %6539 = vrot.lane.b32.xlu0 %v4990, 48
  %v6540 = vpop.permute.xlu0 %6539
  %6541 = vrot.lane.b32.xlu0 %v4991, 48
  %v6542 = vpop.permute.xlu0 %6541
  %6543 = vrot.lane.b32.xlu0 %v4992, 48
  %v6544 = vpop.permute.xlu0 %6543
  %6545 = vrot.lane.b32.xlu0 %v4993, 48
  %v6546 = vpop.permute.xlu0 %6545
  %6547 = vrot.lane.b32.xlu0 %v4994, 48
  %v6548 = vpop.permute.xlu0 %6547
  %6549 = vrot.lane.b32.xlu0 %v4995, 48
  %v6550 = vpop.permute.xlu0 %6549
  %6551 = vrot.lane.b32.xlu0 %v4996, 48
  %v6552 = vpop.permute.xlu0 %6551
  %6553 = vrot.lane.b32.xlu0 %v4997, 48
  %v6554 = vpop.permute.xlu0 %6553
  %6555 = vrot.lane.b32.xlu0 %v4998, 48
  %v6556 = vpop.permute.xlu0 %6555
  %6557 = vrot.lane.b32.xlu0 %v4999, 48
  %v6558 = vpop.permute.xlu0 %6557
  %6559 = vrot.lane.b32.xlu0 %v5000, 48
  %v6560 = vpop.permute.xlu0 %6559
  %6561 = vrot.lane.b32.xlu0 %v5001, 48
  %v6562 = vpop.permute.xlu0 %6561
  %6563 = vrot.lane.b32.xlu0 %v5002, 48
  %v6564 = vpop.permute.xlu0 %6563
  %6565 = vrot.lane.b32.xlu0 %v5003, 48
  %v6566 = vpop.permute.xlu0 %6565
  %6567 = vrot.lane.b32.xlu0 %v5004, 48
  %v6568 = vpop.permute.xlu0 %6567
  %6569 = vrot.lane.b32.xlu0 %v5005, 48
  %v6570 = vpop.permute.xlu0 %6569
  %6571 = vrot.lane.b32.xlu0 %v5006, 48
  %v6572 = vpop.permute.xlu0 %6571
  %6573 = vrot.lane.b32.xlu0 %v5007, 48
  %v6574 = vpop.permute.xlu0 %6573
  %6575 = vrot.lane.b32.xlu0 %v5008, 48
  %v6576 = vpop.permute.xlu0 %6575
  %6577 = vrot.lane.b32.xlu0 %v5009, 48
  %v6578 = vpop.permute.xlu0 %6577
  %6579 = vrot.lane.b32.xlu0 %v5010, 48
  %v6580 = vpop.permute.xlu0 %6579
  %6581 = vrot.lane.b32.xlu0 %v5011, 48
  %v6582 = vpop.permute.xlu0 %6581
  %6583 = vrot.lane.b32.xlu0 %v5012, 48
  %v6584 = vpop.permute.xlu0 %6583
  %6585 = vrot.lane.b32.xlu0 %v5013, 48
  %v6586 = vpop.permute.xlu0 %6585
  %6587 = vrot.lane.b32.xlu0 %v5014, 48
  %v6588 = vpop.permute.xlu0 %6587
  %6589 = vrot.lane.b32.xlu0 %v5015, 48
  %v6590 = vpop.permute.xlu0 %6589
  %6591 = vrot.lane.b32.xlu0 %v5016, 48
  %v6592 = vpop.permute.xlu0 %6591
  %6593 = vrot.lane.b32.xlu0 %v5017, 48
  %v6594 = vpop.permute.xlu0 %6593
  %6595 = vrot.lane.b32.xlu0 %v5018, 48
  %v6596 = vpop.permute.xlu0 %6595
  %6597 = vrot.lane.b32.xlu0 %v5019, 48
  %v6598 = vpop.permute.xlu0 %6597
  %6599 = vrot.lane.b32.xlu0 %v5020, 48
  %v6600 = vpop.permute.xlu0 %6599
  %6601 = vrot.lane.b32.xlu0 %v5021, 48
  %v6602 = vpop.permute.xlu0 %6601
  %6603 = vrot.lane.b32.xlu0 %v5022, 48
  %v6604 = vpop.permute.xlu0 %6603
  %6605 = vrot.lane.b32.xlu0 %v5023, 48
  %v6606 = vpop.permute.xlu0 %6605
  %6607 = vrot.lane.b32.xlu0 %v5024, 48
  %v6608 = vpop.permute.xlu0 %6607
  %6609 = vrot.lane.b32.xlu0 %v5025, 48
  %v6610 = vpop.permute.xlu0 %6609
  %6611 = vrot.lane.b32.xlu0 %v5026, 48
  %v6612 = vpop.permute.xlu0 %6611
  %6613 = vrot.lane.b32.xlu0 %v5027, 48
  %v6614 = vpop.permute.xlu0 %6613
  %6615 = vrot.lane.b32.xlu0 %v5028, 48
  %v6616 = vpop.permute.xlu0 %6615
  %6617 = vrot.lane.b32.xlu0 %v5029, 48
  %v6618 = vpop.permute.xlu0 %6617
  %6619 = vrot.lane.b32.xlu0 %v5030, 48
  %v6620 = vpop.permute.xlu0 %6619
  %6621 = vrot.lane.b32.xlu0 %v5031, 48
  %v6622 = vpop.permute.xlu0 %6621
  %6623 = vrot.lane.b32.xlu0 %v5032, 48
  %v6624 = vpop.permute.xlu0 %6623
  %6625 = vrot.lane.b32.xlu0 %v5033, 48
  %v6626 = vpop.permute.xlu0 %6625
  %6627 = vrot.lane.b32.xlu0 %v5034, 48
  %v6628 = vpop.permute.xlu0 %6627
  %6629 = vrot.lane.b32.xlu0 %v5035, 48
  %v6630 = vpop.permute.xlu0 %6629
  %6631 = vrot.lane.b32.xlu0 %v5036, 48
  %v6632 = vpop.permute.xlu0 %6631
  %6633 = vrot.lane.b32.xlu0 %v5037, 48
  %v6634 = vpop.permute.xlu0 %6633
  %6635 = vrot.lane.b32.xlu0 %v5038, 48
  %v6636 = vpop.permute.xlu0 %6635
  %6637 = vrot.lane.b32.xlu0 %v5039, 48
  %v6638 = vpop.permute.xlu0 %6637
  %6639 = vrot.lane.b32.xlu0 %v5040, 48
  %v6640 = vpop.permute.xlu0 %6639
  %6769 = vrot.lane.b32.xlu0 %v5041, 56
  %v6770 = vpop.permute.xlu0 %6769
  %6771 = vrot.lane.b32.xlu0 %v5042, 56
  %v6772 = vpop.permute.xlu0 %6771
  %6773 = vrot.lane.b32.xlu0 %v5043, 56
  %v6774 = vpop.permute.xlu0 %6773
  %6775 = vrot.lane.b32.xlu0 %v5044, 56
  %v6776 = vpop.permute.xlu0 %6775
  %6777 = vrot.lane.b32.xlu0 %v5045, 56
  %v6778 = vpop.permute.xlu0 %6777
  %6779 = vrot.lane.b32.xlu0 %v5046, 56
  %v6780 = vpop.permute.xlu0 %6779
  %6781 = vrot.lane.b32.xlu0 %v5047, 56
  %v6782 = vpop.permute.xlu0 %6781
  %6783 = vrot.lane.b32.xlu0 %v5048, 56
  %v6784 = vpop.permute.xlu0 %6783
  %6785 = vrot.lane.b32.xlu0 %v5049, 56
  %v6786 = vpop.permute.xlu0 %6785
  %6787 = vrot.lane.b32.xlu0 %v5050, 56
  %v6788 = vpop.permute.xlu0 %6787
  %6789 = vrot.lane.b32.xlu0 %v5051, 56
  %v6790 = vpop.permute.xlu0 %6789
  %6791 = vrot.lane.b32.xlu0 %v5052, 56
  %v6792 = vpop.permute.xlu0 %6791
  %6793 = vrot.lane.b32.xlu0 %v5053, 56
  %v6794 = vpop.permute.xlu0 %6793
  %6795 = vrot.lane.b32.xlu0 %v5054, 56
  %v6796 = vpop.permute.xlu0 %6795
  %6797 = vrot.lane.b32.xlu0 %v5055, 56
  %v6798 = vpop.permute.xlu0 %6797
  %6799 = vrot.lane.b32.xlu0 %v5056, 56
  %v6800 = vpop.permute.xlu0 %6799
  %6801 = vrot.lane.b32.xlu0 %v5057, 56
  %v6802 = vpop.permute.xlu0 %6801
  %6803 = vrot.lane.b32.xlu0 %v5058, 56
  %v6804 = vpop.permute.xlu0 %6803
  %6805 = vrot.lane.b32.xlu0 %v5059, 56
  %v6806 = vpop.permute.xlu0 %6805
  %6807 = vrot.lane.b32.xlu0 %v5060, 56
  %v6808 = vpop.permute.xlu0 %6807
  %6809 = vrot.lane.b32.xlu0 %v5061, 56
  %v6810 = vpop.permute.xlu0 %6809
  %6811 = vrot.lane.b32.xlu0 %v5062, 56
  %v6812 = vpop.permute.xlu0 %6811
  %6813 = vrot.lane.b32.xlu0 %v5063, 56
  %v6814 = vpop.permute.xlu0 %6813
  %6815 = vrot.lane.b32.xlu0 %v5064, 56
  %v6816 = vpop.permute.xlu0 %6815
  %6817 = vrot.lane.b32.xlu0 %v5065, 56
  %v6818 = vpop.permute.xlu0 %6817
  %6819 = vrot.lane.b32.xlu0 %v5066, 56
  %v6820 = vpop.permute.xlu0 %6819
  %6821 = vrot.lane.b32.xlu0 %v5067, 56
  %v6822 = vpop.permute.xlu0 %6821
  %6823 = vrot.lane.b32.xlu0 %v5068, 56
  %v6824 = vpop.permute.xlu0 %6823
  %6825 = vrot.lane.b32.xlu0 %v5069, 56
  %v6826 = vpop.permute.xlu0 %6825
  %6827 = vrot.lane.b32.xlu0 %v5070, 56
  %v6828 = vpop.permute.xlu0 %6827
  %6829 = vrot.lane.b32.xlu0 %v5071, 56
  %v6830 = vpop.permute.xlu0 %6829
  %6831 = vrot.lane.b32.xlu0 %v5072, 56
  %v6832 = vpop.permute.xlu0 %6831
  %6833 = vrot.lane.b32.xlu0 %v5073, 56
  %v6834 = vpop.permute.xlu0 %6833
  %6835 = vrot.lane.b32.xlu0 %v5074, 56
  %v6836 = vpop.permute.xlu0 %6835
  %6837 = vrot.lane.b32.xlu0 %v5075, 56
  %v6838 = vpop.permute.xlu0 %6837
  %6839 = vrot.lane.b32.xlu0 %v5076, 56
  %v6840 = vpop.permute.xlu0 %6839
  %6841 = vrot.lane.b32.xlu0 %v5077, 56
  %v6842 = vpop.permute.xlu0 %6841
  %6843 = vrot.lane.b32.xlu0 %v5078, 56
  %v6844 = vpop.permute.xlu0 %6843
  %6845 = vrot.lane.b32.xlu0 %v5079, 56
  %v6846 = vpop.permute.xlu0 %6845
  %6847 = vrot.lane.b32.xlu0 %v5080, 56
  %v6848 = vpop.permute.xlu0 %6847
  %6849 = vrot.lane.b32.xlu0 %v5081, 56
  %v6850 = vpop.permute.xlu0 %6849
  %6851 = vrot.lane.b32.xlu0 %v5082, 56
  %v6852 = vpop.permute.xlu0 %6851
  %6853 = vrot.lane.b32.xlu0 %v5083, 56
  %v6854 = vpop.permute.xlu0 %6853
  %6855 = vrot.lane.b32.xlu0 %v5084, 56
  %v6856 = vpop.permute.xlu0 %6855
  %6857 = vrot.lane.b32.xlu0 %v5085, 56
  %v6858 = vpop.permute.xlu0 %6857
  %6859 = vrot.lane.b32.xlu0 %v5086, 56
  %v6860 = vpop.permute.xlu0 %6859
  %6861 = vrot.lane.b32.xlu0 %v5087, 56
  %v6862 = vpop.permute.xlu0 %6861
  %6863 = vrot.lane.b32.xlu0 %v5088, 56
  %v6864 = vpop.permute.xlu0 %6863
  %6865 = vrot.lane.b32.xlu0 %v5089, 56
  %v6866 = vpop.permute.xlu0 %6865
  %6867 = vrot.lane.b32.xlu0 %v5090, 56
  %v6868 = vpop.permute.xlu0 %6867
  %6869 = vrot.lane.b32.xlu0 %v5091, 56
  %v6870 = vpop.permute.xlu0 %6869
  %6871 = vrot.lane.b32.xlu0 %v5092, 56
  %v6872 = vpop.permute.xlu0 %6871
  %6873 = vrot.lane.b32.xlu0 %v5093, 56
  %v6874 = vpop.permute.xlu0 %6873
  %6875 = vrot.lane.b32.xlu0 %v5094, 56
  %v6876 = vpop.permute.xlu0 %6875
  %6877 = vrot.lane.b32.xlu0 %v5095, 56
  %v6878 = vpop.permute.xlu0 %6877
  %6879 = vrot.lane.b32.xlu0 %v5096, 56
  %v6880 = vpop.permute.xlu0 %6879
  %6881 = vrot.lane.b32.xlu0 %v5097, 56
  %v6882 = vpop.permute.xlu0 %6881
  %6883 = vrot.lane.b32.xlu0 %v5098, 56
  %v6884 = vpop.permute.xlu0 %6883
  %6885 = vrot.lane.b32.xlu0 %v5099, 56
  %v6886 = vpop.permute.xlu0 %6885
  %6887 = vrot.lane.b32.xlu0 %v5100, 56
  %v6888 = vpop.permute.xlu0 %6887
  %6889 = vrot.lane.b32.xlu0 %v5101, 56
  %v6890 = vpop.permute.xlu0 %6889
  %6891 = vrot.lane.b32.xlu0 %v5102, 56
  %v6892 = vpop.permute.xlu0 %6891
  %6893 = vrot.lane.b32.xlu0 %v5103, 56
  %v6894 = vpop.permute.xlu0 %6893
  %6895 = vrot.lane.b32.xlu0 %v5104, 56
  %v6896 = vpop.permute.xlu0 %6895
  %7025 = vrot.lane.b32.xlu0 %v5105, 64
  %v7026 = vpop.permute.xlu0 %7025
  %7027 = vrot.lane.b32.xlu0 %v5106, 64
  %v7028 = vpop.permute.xlu0 %7027
  %7029 = vrot.lane.b32.xlu0 %v5107, 64
  %v7030 = vpop.permute.xlu0 %7029
  %7031 = vrot.lane.b32.xlu0 %v5108, 64
  %v7032 = vpop.permute.xlu0 %7031
  %7033 = vrot.lane.b32.xlu0 %v5109, 64
  %v7034 = vpop.permute.xlu0 %7033
  %7035 = vrot.lane.b32.xlu0 %v5110, 64
  %v7036 = vpop.permute.xlu0 %7035
  %7037 = vrot.lane.b32.xlu0 %v5111, 64
  %v7038 = vpop.permute.xlu0 %7037
  %7039 = vrot.lane.b32.xlu0 %v5112, 64
  %v7040 = vpop.permute.xlu0 %7039
  %7041 = vrot.lane.b32.xlu0 %v5113, 64
  %v7042 = vpop.permute.xlu0 %7041
  %7043 = vrot.lane.b32.xlu0 %v5114, 64
  %v7044 = vpop.permute.xlu0 %7043
  %7045 = vrot.lane.b32.xlu0 %v5115, 64
  %v7046 = vpop.permute.xlu0 %7045
  %7047 = vrot.lane.b32.xlu0 %v5116, 64
  %v7048 = vpop.permute.xlu0 %7047
  %7049 = vrot.lane.b32.xlu0 %v5117, 64
  %v7050 = vpop.permute.xlu0 %7049
  %7051 = vrot.lane.b32.xlu0 %v5118, 64
  %v7052 = vpop.permute.xlu0 %7051
  %7053 = vrot.lane.b32.xlu0 %v5119, 64
  %v7054 = vpop.permute.xlu0 %7053
  %7055 = vrot.lane.b32.xlu0 %v5120, 64
  %v7056 = vpop.permute.xlu0 %7055
  %7057 = vrot.lane.b32.xlu0 %v5121, 64
  %v7058 = vpop.permute.xlu0 %7057
  %7059 = vrot.lane.b32.xlu0 %v5122, 64
  %v7060 = vpop.permute.xlu0 %7059
  %7061 = vrot.lane.b32.xlu0 %v5123, 64
  %v7062 = vpop.permute.xlu0 %7061
  %7063 = vrot.lane.b32.xlu0 %v5124, 64
  %v7064 = vpop.permute.xlu0 %7063
  %7065 = vrot.lane.b32.xlu0 %v5125, 64
  %v7066 = vpop.permute.xlu0 %7065
  %7067 = vrot.lane.b32.xlu0 %v5126, 64
  %v7068 = vpop.permute.xlu0 %7067
  %7069 = vrot.lane.b32.xlu0 %v5127, 64
  %v7070 = vpop.permute.xlu0 %7069
  %7071 = vrot.lane.b32.xlu0 %v5128, 64
  %v7072 = vpop.permute.xlu0 %7071
  %7073 = vrot.lane.b32.xlu0 %v5129, 64
  %v7074 = vpop.permute.xlu0 %7073
  %7075 = vrot.lane.b32.xlu0 %v5130, 64
  %v7076 = vpop.permute.xlu0 %7075
  %7077 = vrot.lane.b32.xlu0 %v5131, 64
  %v7078 = vpop.permute.xlu0 %7077
  %7079 = vrot.lane.b32.xlu0 %v5132, 64
  %v7080 = vpop.permute.xlu0 %7079
  %7081 = vrot.lane.b32.xlu0 %v5133, 64
  %v7082 = vpop.permute.xlu0 %7081
  %7083 = vrot.lane.b32.xlu0 %v5134, 64
  %v7084 = vpop.permute.xlu0 %7083
  %7085 = vrot.lane.b32.xlu0 %v5135, 64
  %v7086 = vpop.permute.xlu0 %7085
  %7087 = vrot.lane.b32.xlu0 %v5136, 64
  %v7088 = vpop.permute.xlu0 %7087
  %7089 = vrot.lane.b32.xlu0 %v5137, 64
  %v7090 = vpop.permute.xlu0 %7089
  %7091 = vrot.lane.b32.xlu0 %v5138, 64
  %v7092 = vpop.permute.xlu0 %7091
  %7093 = vrot.lane.b32.xlu0 %v5139, 64
  %v7094 = vpop.permute.xlu0 %7093
  %7095 = vrot.lane.b32.xlu0 %v5140, 64
  %v7096 = vpop.permute.xlu0 %7095
  %7097 = vrot.lane.b32.xlu0 %v5141, 64
  %v7098 = vpop.permute.xlu0 %7097
  %7099 = vrot.lane.b32.xlu0 %v5142, 64
  %v7100 = vpop.permute.xlu0 %7099
  %7101 = vrot.lane.b32.xlu0 %v5143, 64
  %v7102 = vpop.permute.xlu0 %7101
  %7103 = vrot.lane.b32.xlu0 %v5144, 64
  %v7104 = vpop.permute.xlu0 %7103
  %7105 = vrot.lane.b32.xlu0 %v5145, 64
  %v7106 = vpop.permute.xlu0 %7105
  %7107 = vrot.lane.b32.xlu0 %v5146, 64
  %v7108 = vpop.permute.xlu0 %7107
  %7109 = vrot.lane.b32.xlu0 %v5147, 64
  %v7110 = vpop.permute.xlu0 %7109
  %7111 = vrot.lane.b32.xlu0 %v5148, 64
  %v7112 = vpop.permute.xlu0 %7111
  %7113 = vrot.lane.b32.xlu0 %v5149, 64
  %v7114 = vpop.permute.xlu0 %7113
  %7115 = vrot.lane.b32.xlu0 %v5150, 64
  %v7116 = vpop.permute.xlu0 %7115
  %7117 = vrot.lane.b32.xlu0 %v5151, 64
  %v7118 = vpop.permute.xlu0 %7117
  %7119 = vrot.lane.b32.xlu0 %v5152, 64
  %v7120 = vpop.permute.xlu0 %7119
  %7121 = vrot.lane.b32.xlu0 %v5153, 64
  %v7122 = vpop.permute.xlu0 %7121
  %7123 = vrot.lane.b32.xlu0 %v5154, 64
  %v7124 = vpop.permute.xlu0 %7123
  %7125 = vrot.lane.b32.xlu0 %v5155, 64
  %v7126 = vpop.permute.xlu0 %7125
  %7127 = vrot.lane.b32.xlu0 %v5156, 64
  %v7128 = vpop.permute.xlu0 %7127
  %7129 = vrot.lane.b32.xlu0 %v5157, 64
  %v7130 = vpop.permute.xlu0 %7129
  %7131 = vrot.lane.b32.xlu0 %v5158, 64
  %v7132 = vpop.permute.xlu0 %7131
  %7133 = vrot.lane.b32.xlu0 %v5159, 64
  %v7134 = vpop.permute.xlu0 %7133
  %7135 = vrot.lane.b32.xlu0 %v5160, 64
  %v7136 = vpop.permute.xlu0 %7135
  %7137 = vrot.lane.b32.xlu0 %v5161, 64
  %v7138 = vpop.permute.xlu0 %7137
  %7139 = vrot.lane.b32.xlu0 %v5162, 64
  %v7140 = vpop.permute.xlu0 %7139
  %7141 = vrot.lane.b32.xlu0 %v5163, 64
  %v7142 = vpop.permute.xlu0 %7141
  %7143 = vrot.lane.b32.xlu0 %v5164, 64
  %v7144 = vpop.permute.xlu0 %7143
  %7145 = vrot.lane.b32.xlu0 %v5165, 64
  %v7146 = vpop.permute.xlu0 %7145
  %7147 = vrot.lane.b32.xlu0 %v5166, 64
  %v7148 = vpop.permute.xlu0 %7147
  %7149 = vrot.lane.b32.xlu0 %v5167, 64
  %v7150 = vpop.permute.xlu0 %7149
  %7151 = vrot.lane.b32.xlu0 %v5168, 64
  %v7152 = vpop.permute.xlu0 %7151
  %v7217 = vsel %vm2997, %v4592, %v5234
  %v7218 = vsel %vm2997, %v4593, %v5236
  %v7219 = vsel %vm2997, %v4594, %v5238
  %v7220 = vsel %vm2997, %v4595, %v5240
  %v7221 = vsel %vm2997, %v4596, %v5242
  %v7222 = vsel %vm2997, %v4597, %v5244
  %v7223 = vsel %vm2997, %v4598, %v5246
  %v7224 = vsel %vm2997, %v4599, %v5248
  %v7225 = vsel %vm2997, %v4600, %v5250
  %v7226 = vsel %vm2997, %v4601, %v5252
  %v7227 = vsel %vm2997, %v4602, %v5254
  %v7228 = vsel %vm2997, %v4603, %v5256
  %v7229 = vsel %vm2997, %v4604, %v5258
  %v7230 = vsel %vm2997, %v4605, %v5260
  %v7231 = vsel %vm2997, %v4606, %v5262
  %v7232 = vsel %vm2997, %v4607, %v5264
  %v7233 = vsel %vm2997, %v4608, %v5266
  %v7234 = vsel %vm2997, %v4609, %v5268
  %v7235 = vsel %vm2997, %v4610, %v5270
  %v7236 = vsel %vm2997, %v4611, %v5272
  %v7237 = vsel %vm2997, %v4612, %v5274
  %v7238 = vsel %vm2997, %v4613, %v5276
  %v7239 = vsel %vm2997, %v4614, %v5278
  %v7240 = vsel %vm2997, %v4615, %v5280
  %v7241 = vsel %vm2997, %v4616, %v5282
  %v7242 = vsel %vm2997, %v4617, %v5284
  %v7243 = vsel %vm2997, %v4618, %v5286
  %v7244 = vsel %vm2997, %v4619, %v5288
  %v7245 = vsel %vm2997, %v4620, %v5290
  %v7246 = vsel %vm2997, %v4621, %v5292
  %v7247 = vsel %vm2997, %v4622, %v5294
  %v7248 = vsel %vm2997, %v4623, %v5296
  %v7249 = vsel %vm2997, %v4624, %v5298
  %v7250 = vsel %vm2997, %v4625, %v5300
  %v7251 = vsel %vm2997, %v4626, %v5302
  %v7252 = vsel %vm2997, %v4627, %v5304
  %v7253 = vsel %vm2997, %v4628, %v5306
  %v7254 = vsel %vm2997, %v4629, %v5308
  %v7255 = vsel %vm2997, %v4630, %v5310
  %v7256 = vsel %vm2997, %v4631, %v5312
  %v7257 = vsel %vm2997, %v4632, %v5314
  %v7258 = vsel %vm2997, %v4633, %v5316
  %v7259 = vsel %vm2997, %v4634, %v5318
  %v7260 = vsel %vm2997, %v4635, %v5320
  %v7261 = vsel %vm2997, %v4636, %v5322
  %v7262 = vsel %vm2997, %v4637, %v5324
  %v7263 = vsel %vm2997, %v4638, %v5326
  %v7264 = vsel %vm2997, %v4639, %v5328
  %v7265 = vsel %vm2997, %v4640, %v5330
  %v7266 = vsel %vm2997, %v4641, %v5332
  %v7267 = vsel %vm2997, %v4642, %v5334
  %v7268 = vsel %vm2997, %v4643, %v5336
  %v7269 = vsel %vm2997, %v4644, %v5338
  %v7270 = vsel %vm2997, %v4645, %v5340
  %v7271 = vsel %vm2997, %v4646, %v5342
  %v7272 = vsel %vm2997, %v4647, %v5344
  %v7273 = vsel %vm2997, %v4648, %v5346
  %v7274 = vsel %vm2997, %v4649, %v5348
  %v7275 = vsel %vm2997, %v4650, %v5350
  %v7276 = vsel %vm2997, %v4651, %v5352
  %v7277 = vsel %vm2997, %v4652, %v5354
  %v7278 = vsel %vm2997, %v4653, %v5356
  %v7279 = vsel %vm2997, %v4654, %v5358
  %v7280 = vsel %vm2997, %v4655, %v5360
  %v7281 = vsel %vm3127, %v7217, %v5490
  %v7282 = vsel %vm3127, %v7218, %v5492
  %v7283 = vsel %vm3127, %v7219, %v5494
  %v7284 = vsel %vm3127, %v7220, %v5496
  %v7285 = vsel %vm3127, %v7221, %v5498
  %v7286 = vsel %vm3127, %v7222, %v5500
  %v7287 = vsel %vm3127, %v7223, %v5502
  %v7288 = vsel %vm3127, %v7224, %v5504
  %v7289 = vsel %vm3127, %v7225, %v5506
  %v7290 = vsel %vm3127, %v7226, %v5508
  %v7291 = vsel %vm3127, %v7227, %v5510
  %v7292 = vsel %vm3127, %v7228, %v5512
  %v7293 = vsel %vm3127, %v7229, %v5514
  %v7294 = vsel %vm3127, %v7230, %v5516
  %v7295 = vsel %vm3127, %v7231, %v5518
  %v7296 = vsel %vm3127, %v7232, %v5520
  %v7297 = vsel %vm3127, %v7233, %v5522
  %v7298 = vsel %vm3127, %v7234, %v5524
  %v7299 = vsel %vm3127, %v7235, %v5526
  %v7300 = vsel %vm3127, %v7236, %v5528
  %v7301 = vsel %vm3127, %v7237, %v5530
  %v7302 = vsel %vm3127, %v7238, %v5532
  %v7303 = vsel %vm3127, %v7239, %v5534
  %v7304 = vsel %vm3127, %v7240, %v5536
  %v7305 = vsel %vm3127, %v7241, %v5538
  %v7306 = vsel %vm3127, %v7242, %v5540
  %v7307 = vsel %vm3127, %v7243, %v5542
  %v7308 = vsel %vm3127, %v7244, %v5544
  %v7309 = vsel %vm3127, %v7245, %v5546
  %v7310 = vsel %vm3127, %v7246, %v5548
  %v7311 = vsel %vm3127, %v7247, %v5550
  %v7312 = vsel %vm3127, %v7248, %v5552
  %v7313 = vsel %vm3127, %v7249, %v5554
  %v7314 = vsel %vm3127, %v7250, %v5556
  %v7315 = vsel %vm3127, %v7251, %v5558
  %v7316 = vsel %vm3127, %v7252, %v5560
  %v7317 = vsel %vm3127, %v7253, %v5562
  %v7318 = vsel %vm3127, %v7254, %v5564
  %v7319 = vsel %vm3127, %v7255, %v5566
  %v7320 = vsel %vm3127, %v7256, %v5568
  %v7321 = vsel %vm3127, %v7257, %v5570
  %v7322 = vsel %vm3127, %v7258, %v5572
  %v7323 = vsel %vm3127, %v7259, %v5574
  %v7324 = vsel %vm3127, %v7260, %v5576
  %v7325 = vsel %vm3127, %v7261, %v5578
  %v7326 = vsel %vm3127, %v7262, %v5580
  %v7327 = vsel %vm3127, %v7263, %v5582
  %v7328 = vsel %vm3127, %v7264, %v5584
  %v7329 = vsel %vm3127, %v7265, %v5586
  %v7330 = vsel %vm3127, %v7266, %v5588
  %v7331 = vsel %vm3127, %v7267, %v5590
  %v7332 = vsel %vm3127, %v7268, %v5592
  %v7333 = vsel %vm3127, %v7269, %v5594
  %v7334 = vsel %vm3127, %v7270, %v5596
  %v7335 = vsel %vm3127, %v7271, %v5598
  %v7336 = vsel %vm3127, %v7272, %v5600
  %v7337 = vsel %vm3127, %v7273, %v5602
  %v7338 = vsel %vm3127, %v7274, %v5604
  %v7339 = vsel %vm3127, %v7275, %v5606
  %v7340 = vsel %vm3127, %v7276, %v5608
  %v7341 = vsel %vm3127, %v7277, %v5610
  %v7342 = vsel %vm3127, %v7278, %v5612
  %v7343 = vsel %vm3127, %v7279, %v5614
  %v7344 = vsel %vm3127, %v7280, %v5616
  %v7345 = vsel %vm3257, %v7281, %v5746
  %v7346 = vsel %vm3257, %v7282, %v5748
  %v7347 = vsel %vm3257, %v7283, %v5750
  %v7348 = vsel %vm3257, %v7284, %v5752
  %v7349 = vsel %vm3257, %v7285, %v5754
  %v7350 = vsel %vm3257, %v7286, %v5756
  %v7351 = vsel %vm3257, %v7287, %v5758
  %v7352 = vsel %vm3257, %v7288, %v5760
  %v7353 = vsel %vm3257, %v7289, %v5762
  %v7354 = vsel %vm3257, %v7290, %v5764
  %v7355 = vsel %vm3257, %v7291, %v5766
  %v7356 = vsel %vm3257, %v7292, %v5768
  %v7357 = vsel %vm3257, %v7293, %v5770
  %v7358 = vsel %vm3257, %v7294, %v5772
  %v7359 = vsel %vm3257, %v7295, %v5774
  %v7360 = vsel %vm3257, %v7296, %v5776
  %v7361 = vsel %vm3257, %v7297, %v5778
  %v7362 = vsel %vm3257, %v7298, %v5780
  %v7363 = vsel %vm3257, %v7299, %v5782
  %v7364 = vsel %vm3257, %v7300, %v5784
  %v7365 = vsel %vm3257, %v7301, %v5786
  %v7366 = vsel %vm3257, %v7302, %v5788
  %v7367 = vsel %vm3257, %v7303, %v5790
  %v7368 = vsel %vm3257, %v7304, %v5792
  %v7369 = vsel %vm3257, %v7305, %v5794
  %v7370 = vsel %vm3257, %v7306, %v5796
  %v7371 = vsel %vm3257, %v7307, %v5798
  %v7372 = vsel %vm3257, %v7308, %v5800
  %v7373 = vsel %vm3257, %v7309, %v5802
  %v7374 = vsel %vm3257, %v7310, %v5804
  %v7375 = vsel %vm3257, %v7311, %v5806
  %v7376 = vsel %vm3257, %v7312, %v5808
  %v7377 = vsel %vm3257, %v7313, %v5810
  %v7378 = vsel %vm3257, %v7314, %v5812
  %v7379 = vsel %vm3257, %v7315, %v5814
  %v7380 = vsel %vm3257, %v7316, %v5816
  %v7381 = vsel %vm3257, %v7317, %v5818
  %v7382 = vsel %vm3257, %v7318, %v5820
  %v7383 = vsel %vm3257, %v7319, %v5822
  %v7384 = vsel %vm3257, %v7320, %v5824
  %v7385 = vsel %vm3257, %v7321, %v5826
  %v7386 = vsel %vm3257, %v7322, %v5828
  %v7387 = vsel %vm3257, %v7323, %v5830
  %v7388 = vsel %vm3257, %v7324, %v5832
  %v7389 = vsel %vm3257, %v7325, %v5834
  %v7390 = vsel %vm3257, %v7326, %v5836
  %v7391 = vsel %vm3257, %v7327, %v5838
  %v7392 = vsel %vm3257, %v7328, %v5840
  %v7393 = vsel %vm3257, %v7329, %v5842
  %v7394 = vsel %vm3257, %v7330, %v5844
  %v7395 = vsel %vm3257, %v7331, %v5846
  %v7396 = vsel %vm3257, %v7332, %v5848
  %v7397 = vsel %vm3257, %v7333, %v5850
  %v7398 = vsel %vm3257, %v7334, %v5852
  %v7399 = vsel %vm3257, %v7335, %v5854
  %v7400 = vsel %vm3257, %v7336, %v5856
  %v7401 = vsel %vm3257, %v7337, %v5858
  %v7402 = vsel %vm3257, %v7338, %v5860
  %v7403 = vsel %vm3257, %v7339, %v5862
  %v7404 = vsel %vm3257, %v7340, %v5864
  %v7405 = vsel %vm3257, %v7341, %v5866
  %v7406 = vsel %vm3257, %v7342, %v5868
  %v7407 = vsel %vm3257, %v7343, %v5870
  %v7408 = vsel %vm3257, %v7344, %v5872
  %v7409 = vsel %vm3387, %v7345, %v6002
  %v7410 = vsel %vm3387, %v7346, %v6004
  %v7411 = vsel %vm3387, %v7347, %v6006
  %v7412 = vsel %vm3387, %v7348, %v6008
  %v7413 = vsel %vm3387, %v7349, %v6010
  %v7414 = vsel %vm3387, %v7350, %v6012
  %v7415 = vsel %vm3387, %v7351, %v6014
  %v7416 = vsel %vm3387, %v7352, %v6016
  %v7417 = vsel %vm3387, %v7353, %v6018
  %v7418 = vsel %vm3387, %v7354, %v6020
  %v7419 = vsel %vm3387, %v7355, %v6022
  %v7420 = vsel %vm3387, %v7356, %v6024
  %v7421 = vsel %vm3387, %v7357, %v6026
  %v7422 = vsel %vm3387, %v7358, %v6028
  %v7423 = vsel %vm3387, %v7359, %v6030
  %v7424 = vsel %vm3387, %v7360, %v6032
  %v7425 = vsel %vm3387, %v7361, %v6034
  %v7426 = vsel %vm3387, %v7362, %v6036
  %v7427 = vsel %vm3387, %v7363, %v6038
  %v7428 = vsel %vm3387, %v7364, %v6040
  %v7429 = vsel %vm3387, %v7365, %v6042
  %v7430 = vsel %vm3387, %v7366, %v6044
  %v7431 = vsel %vm3387, %v7367, %v6046
  %v7432 = vsel %vm3387, %v7368, %v6048
  %v7433 = vsel %vm3387, %v7369, %v6050
  %v7434 = vsel %vm3387, %v7370, %v6052
  %v7435 = vsel %vm3387, %v7371, %v6054
  %v7436 = vsel %vm3387, %v7372, %v6056
  %v7437 = vsel %vm3387, %v7373, %v6058
  %v7438 = vsel %vm3387, %v7374, %v6060
  %v7439 = vsel %vm3387, %v7375, %v6062
  %v7440 = vsel %vm3387, %v7376, %v6064
  %v7441 = vsel %vm3387, %v7377, %v6066
  %v7442 = vsel %vm3387, %v7378, %v6068
  %v7443 = vsel %vm3387, %v7379, %v6070
  %v7444 = vsel %vm3387, %v7380, %v6072
  %v7445 = vsel %vm3387, %v7381, %v6074
  %v7446 = vsel %vm3387, %v7382, %v6076
  %v7447 = vsel %vm3387, %v7383, %v6078
  %v7448 = vsel %vm3387, %v7384, %v6080
  %v7449 = vsel %vm3387, %v7385, %v6082
  %v7450 = vsel %vm3387, %v7386, %v6084
  %v7451 = vsel %vm3387, %v7387, %v6086
  %v7452 = vsel %vm3387, %v7388, %v6088
  %v7453 = vsel %vm3387, %v7389, %v6090
  %v7454 = vsel %vm3387, %v7390, %v6092
  %v7455 = vsel %vm3387, %v7391, %v6094
  %v7456 = vsel %vm3387, %v7392, %v6096
  %v7457 = vsel %vm3387, %v7393, %v6098
  %v7458 = vsel %vm3387, %v7394, %v6100
  %v7459 = vsel %vm3387, %v7395, %v6102
  %v7460 = vsel %vm3387, %v7396, %v6104
  %v7461 = vsel %vm3387, %v7397, %v6106
  %v7462 = vsel %vm3387, %v7398, %v6108
  %v7463 = vsel %vm3387, %v7399, %v6110
  %v7464 = vsel %vm3387, %v7400, %v6112
  %v7465 = vsel %vm3387, %v7401, %v6114
  %v7466 = vsel %vm3387, %v7402, %v6116
  %v7467 = vsel %vm3387, %v7403, %v6118
  %v7468 = vsel %vm3387, %v7404, %v6120
  %v7469 = vsel %vm3387, %v7405, %v6122
  %v7470 = vsel %vm3387, %v7406, %v6124
  %v7471 = vsel %vm3387, %v7407, %v6126
  %v7472 = vsel %vm3387, %v7408, %v6128
  %vm7473 = vcmask 326656
  %v7474 = vsel %vm7473, %v7409, %v6258
  %v7475 = vsel %vm7473, %v7410, %v6260
  %v7476 = vsel %vm7473, %v7411, %v6262
  %v7477 = vsel %vm7473, %v7412, %v6264
  %v7478 = vsel %vm7473, %v7413, %v6266
  %v7479 = vsel %vm7473, %v7414, %v6268
  %v7480 = vsel %vm7473, %v7415, %v6270
  %v7481 = vsel %vm7473, %v7416, %v6272
  %v7482 = vsel %vm7473, %v7417, %v6274
  %v7483 = vsel %vm7473, %v7418, %v6276
  %v7484 = vsel %vm7473, %v7419, %v6278
  %v7485 = vsel %vm7473, %v7420, %v6280
  %v7486 = vsel %vm7473, %v7421, %v6282
  %v7487 = vsel %vm7473, %v7422, %v6284
  %v7488 = vsel %vm7473, %v7423, %v6286
  %v7489 = vsel %vm7473, %v7424, %v6288
  %v7490 = vsel %vm7473, %v7425, %v6290
  %v7491 = vsel %vm7473, %v7426, %v6292
  %v7492 = vsel %vm7473, %v7427, %v6294
  %v7493 = vsel %vm7473, %v7428, %v6296
  %v7494 = vsel %vm7473, %v7429, %v6298
  %v7495 = vsel %vm7473, %v7430, %v6300
  %v7496 = vsel %vm7473, %v7431, %v6302
  %v7497 = vsel %vm7473, %v7432, %v6304
  %v7498 = vsel %vm7473, %v7433, %v6306
  %v7499 = vsel %vm7473, %v7434, %v6308
  %v7500 = vsel %vm7473, %v7435, %v6310
  %v7501 = vsel %vm7473, %v7436, %v6312
  %v7502 = vsel %vm7473, %v7437, %v6314
  %v7503 = vsel %vm7473, %v7438, %v6316
  %v7504 = vsel %vm7473, %v7439, %v6318
  %v7505 = vsel %vm7473, %v7440, %v6320
  %v7506 = vsel %vm7473, %v7441, %v6322
  %v7507 = vsel %vm7473, %v7442, %v6324
  %v7508 = vsel %vm7473, %v7443, %v6326
  %v7509 = vsel %vm7473, %v7444, %v6328
  %v7510 = vsel %vm7473, %v7445, %v6330
  %v7511 = vsel %vm7473, %v7446, %v6332
  %v7512 = vsel %vm7473, %v7447, %v6334
  %v7513 = vsel %vm7473, %v7448, %v6336
  %v7514 = vsel %vm7473, %v7449, %v6338
  %v7515 = vsel %vm7473, %v7450, %v6340
  %v7516 = vsel %vm7473, %v7451, %v6342
  %v7517 = vsel %vm7473, %v7452, %v6344
  %v7518 = vsel %vm7473, %v7453, %v6346
  %v7519 = vsel %vm7473, %v7454, %v6348
  %v7520 = vsel %vm7473, %v7455, %v6350
  %v7521 = vsel %vm7473, %v7456, %v6352
  %v7522 = vsel %vm7473, %v7457, %v6354
  %v7523 = vsel %vm7473, %v7458, %v6356
  %v7524 = vsel %vm7473, %v7459, %v6358
  %v7525 = vsel %vm7473, %v7460, %v6360
  %v7526 = vsel %vm7473, %v7461, %v6362
  %v7527 = vsel %vm7473, %v7462, %v6364
  %v7528 = vsel %vm7473, %v7463, %v6366
  %v7529 = vsel %vm7473, %v7464, %v6368
  %v7530 = vsel %vm7473, %v7465, %v6370
  %v7531 = vsel %vm7473, %v7466, %v6372
  %v7532 = vsel %vm7473, %v7467, %v6374
  %v7533 = vsel %vm7473, %v7468, %v6376
  %v7534 = vsel %vm7473, %v7469, %v6378
  %v7535 = vsel %vm7473, %v7470, %v6380
  %v7536 = vsel %vm7473, %v7471, %v6382
  %v7537 = vsel %vm7473, %v7472, %v6384
  %vm7538 = vcmask 392192
  %v7539 = vsel %vm7538, %v7474, %v6514
  %v7540 = vsel %vm7538, %v7475, %v6516
  %v7541 = vsel %vm7538, %v7476, %v6518
  %v7542 = vsel %vm7538, %v7477, %v6520
  %v7543 = vsel %vm7538, %v7478, %v6522
  %v7544 = vsel %vm7538, %v7479, %v6524
  %v7545 = vsel %vm7538, %v7480, %v6526
  %v7546 = vsel %vm7538, %v7481, %v6528
  %v7547 = vsel %vm7538, %v7482, %v6530
  %v7548 = vsel %vm7538, %v7483, %v6532
  %v7549 = vsel %vm7538, %v7484, %v6534
  %v7550 = vsel %vm7538, %v7485, %v6536
  %v7551 = vsel %vm7538, %v7486, %v6538
  %v7552 = vsel %vm7538, %v7487, %v6540
  %v7553 = vsel %vm7538, %v7488, %v6542
  %v7554 = vsel %vm7538, %v7489, %v6544
  %v7555 = vsel %vm7538, %v7490, %v6546
  %v7556 = vsel %vm7538, %v7491, %v6548
  %v7557 = vsel %vm7538, %v7492, %v6550
  %v7558 = vsel %vm7538, %v7493, %v6552
  %v7559 = vsel %vm7538, %v7494, %v6554
  %v7560 = vsel %vm7538, %v7495, %v6556
  %v7561 = vsel %vm7538, %v7496, %v6558
  %v7562 = vsel %vm7538, %v7497, %v6560
  %v7563 = vsel %vm7538, %v7498, %v6562
  %v7564 = vsel %vm7538, %v7499, %v6564
  %v7565 = vsel %vm7538, %v7500, %v6566
  %v7566 = vsel %vm7538, %v7501, %v6568
  %v7567 = vsel %vm7538, %v7502, %v6570
  %v7568 = vsel %vm7538, %v7503, %v6572
  %v7569 = vsel %vm7538, %v7504, %v6574
  %v7570 = vsel %vm7538, %v7505, %v6576
  %v7571 = vsel %vm7538, %v7506, %v6578
  %v7572 = vsel %vm7538, %v7507, %v6580
  %v7573 = vsel %vm7538, %v7508, %v6582
  %v7574 = vsel %vm7538, %v7509, %v6584
  %v7575 = vsel %vm7538, %v7510, %v6586
  %v7576 = vsel %vm7538, %v7511, %v6588
  %v7577 = vsel %vm7538, %v7512, %v6590
  %v7578 = vsel %vm7538, %v7513, %v6592
  %v7579 = vsel %vm7538, %v7514, %v6594
  %v7580 = vsel %vm7538, %v7515, %v6596
  %v7581 = vsel %vm7538, %v7516, %v6598
  %v7582 = vsel %vm7538, %v7517, %v6600
  %v7583 = vsel %vm7538, %v7518, %v6602
  %v7584 = vsel %vm7538, %v7519, %v6604
  %v7585 = vsel %vm7538, %v7520, %v6606
  %v7586 = vsel %vm7538, %v7521, %v6608
  %v7587 = vsel %vm7538, %v7522, %v6610
  %v7588 = vsel %vm7538, %v7523, %v6612
  %v7589 = vsel %vm7538, %v7524, %v6614
  %v7590 = vsel %vm7538, %v7525, %v6616
  %v7591 = vsel %vm7538, %v7526, %v6618
  %v7592 = vsel %vm7538, %v7527, %v6620
  %v7593 = vsel %vm7538, %v7528, %v6622
  %v7594 = vsel %vm7538, %v7529, %v6624
  %v7595 = vsel %vm7538, %v7530, %v6626
  %v7596 = vsel %vm7538, %v7531, %v6628
  %v7597 = vsel %vm7538, %v7532, %v6630
  %v7598 = vsel %vm7538, %v7533, %v6632
  %v7599 = vsel %vm7538, %v7534, %v6634
  %v7600 = vsel %vm7538, %v7535, %v6636
  %v7601 = vsel %vm7538, %v7536, %v6638
  %v7602 = vsel %vm7538, %v7537, %v6640
  %vm7603 = vcmask 457728
  %v7604 = vsel %vm7603, %v7539, %v6770
  %v7605 = vsel %vm7603, %v7540, %v6772
  %v7606 = vsel %vm7603, %v7541, %v6774
  %v7607 = vsel %vm7603, %v7542, %v6776
  %v7608 = vsel %vm7603, %v7543, %v6778
  %v7609 = vsel %vm7603, %v7544, %v6780
  %v7610 = vsel %vm7603, %v7545, %v6782
  %v7611 = vsel %vm7603, %v7546, %v6784
  %v7612 = vsel %vm7603, %v7547, %v6786
  %v7613 = vsel %vm7603, %v7548, %v6788
  %v7614 = vsel %vm7603, %v7549, %v6790
  %v7615 = vsel %vm7603, %v7550, %v6792
  %v7616 = vsel %vm7603, %v7551, %v6794
  %v7617 = vsel %vm7603, %v7552, %v6796
  %v7618 = vsel %vm7603, %v7553, %v6798
  %v7619 = vsel %vm7603, %v7554, %v6800
  %v7620 = vsel %vm7603, %v7555, %v6802
  %v7621 = vsel %vm7603, %v7556, %v6804
  %v7622 = vsel %vm7603, %v7557, %v6806
  %v7623 = vsel %vm7603, %v7558, %v6808
  %v7624 = vsel %vm7603, %v7559, %v6810
  %v7625 = vsel %vm7603, %v7560, %v6812
  %v7626 = vsel %vm7603, %v7561, %v6814
  %v7627 = vsel %vm7603, %v7562, %v6816
  %v7628 = vsel %vm7603, %v7563, %v6818
  %v7629 = vsel %vm7603, %v7564, %v6820
  %v7630 = vsel %vm7603, %v7565, %v6822
  %v7631 = vsel %vm7603, %v7566, %v6824
  %v7632 = vsel %vm7603, %v7567, %v6826
  %v7633 = vsel %vm7603, %v7568, %v6828
  %v7634 = vsel %vm7603, %v7569, %v6830
  %v7635 = vsel %vm7603, %v7570, %v6832
  %v7636 = vsel %vm7603, %v7571, %v6834
  %v7637 = vsel %vm7603, %v7572, %v6836
  %v7638 = vsel %vm7603, %v7573, %v6838
  %v7639 = vsel %vm7603, %v7574, %v6840
  %v7640 = vsel %vm7603, %v7575, %v6842
  %v7641 = vsel %vm7603, %v7576, %v6844
  %v7642 = vsel %vm7603, %v7577, %v6846
  %v7643 = vsel %vm7603, %v7578, %v6848
  %v7644 = vsel %vm7603, %v7579, %v6850
  %v7645 = vsel %vm7603, %v7580, %v6852
  %v7646 = vsel %vm7603, %v7581, %v6854
  %v7647 = vsel %vm7603, %v7582, %v6856
  %v7648 = vsel %vm7603, %v7583, %v6858
  %v7649 = vsel %vm7603, %v7584, %v6860
  %v7650 = vsel %vm7603, %v7585, %v6862
  %v7651 = vsel %vm7603, %v7586, %v6864
  %v7652 = vsel %vm7603, %v7587, %v6866
  %v7653 = vsel %vm7603, %v7588, %v6868
  %v7654 = vsel %vm7603, %v7589, %v6870
  %v7655 = vsel %vm7603, %v7590, %v6872
  %v7656 = vsel %vm7603, %v7591, %v6874
  %v7657 = vsel %vm7603, %v7592, %v6876
  %v7658 = vsel %vm7603, %v7593, %v6878
  %v7659 = vsel %vm7603, %v7594, %v6880
  %v7660 = vsel %vm7603, %v7595, %v6882
  %v7661 = vsel %vm7603, %v7596, %v6884
  %v7662 = vsel %vm7603, %v7597, %v6886
  %v7663 = vsel %vm7603, %v7598, %v6888
  %v7664 = vsel %vm7603, %v7599, %v6890
  %v7665 = vsel %vm7603, %v7600, %v6892
  %v7666 = vsel %vm7603, %v7601, %v6894
  %v7667 = vsel %vm7603, %v7602, %v6896
  %vm7668 = vcmask 523264
  %v7669 = vsel %vm7668, %v7604, %v7026
  %v7670 = vsel %vm7668, %v7605, %v7028
  %v7671 = vsel %vm7668, %v7606, %v7030
  %v7672 = vsel %vm7668, %v7607, %v7032
  %v7673 = vsel %vm7668, %v7608, %v7034
  %v7674 = vsel %vm7668, %v7609, %v7036
  %v7675 = vsel %vm7668, %v7610, %v7038
  %v7676 = vsel %vm7668, %v7611, %v7040
  %v7677 = vsel %vm7668, %v7612, %v7042
  %v7678 = vsel %vm7668, %v7613, %v7044
  %v7679 = vsel %vm7668, %v7614, %v7046
  %v7680 = vsel %vm7668, %v7615, %v7048
  %v7681 = vsel %vm7668, %v7616, %v7050
  %v7682 = vsel %vm7668, %v7617, %v7052
  %v7683 = vsel %vm7668, %v7618, %v7054
  %v7684 = vsel %vm7668, %v7619, %v7056
  %v7685 = vsel %vm7668, %v7620, %v7058
  %v7686 = vsel %vm7668, %v7621, %v7060
  %v7687 = vsel %vm7668, %v7622, %v7062
  %v7688 = vsel %vm7668, %v7623, %v7064
  %v7689 = vsel %vm7668, %v7624, %v7066
  %v7690 = vsel %vm7668, %v7625, %v7068
  %v7691 = vsel %vm7668, %v7626, %v7070
  %v7692 = vsel %vm7668, %v7627, %v7072
  %v7693 = vsel %vm7668, %v7628, %v7074
  %v7694 = vsel %vm7668, %v7629, %v7076
  %v7695 = vsel %vm7668, %v7630, %v7078
  %v7696 = vsel %vm7668, %v7631, %v7080
  %v7697 = vsel %vm7668, %v7632, %v7082
  %v7698 = vsel %vm7668, %v7633, %v7084
  %v7699 = vsel %vm7668, %v7634, %v7086
  %v7700 = vsel %vm7668, %v7635, %v7088
  %v7701 = vsel %vm7668, %v7636, %v7090
  %v7702 = vsel %vm7668, %v7637, %v7092
  %v7703 = vsel %vm7668, %v7638, %v7094
  %v7704 = vsel %vm7668, %v7639, %v7096
  %v7705 = vsel %vm7668, %v7640, %v7098
  %v7706 = vsel %vm7668, %v7641, %v7100
  %v7707 = vsel %vm7668, %v7642, %v7102
  %v7708 = vsel %vm7668, %v7643, %v7104
  %v7709 = vsel %vm7668, %v7644, %v7106
  %v7710 = vsel %vm7668, %v7645, %v7108
  %v7711 = vsel %vm7668, %v7646, %v7110
  %v7712 = vsel %vm7668, %v7647, %v7112
  %v7713 = vsel %vm7668, %v7648, %v7114
  %v7714 = vsel %vm7668, %v7649, %v7116
  %v7715 = vsel %vm7668, %v7650, %v7118
  %v7716 = vsel %vm7668, %v7651, %v7120
  %v7717 = vsel %vm7668, %v7652, %v7122
  %v7718 = vsel %vm7668, %v7653, %v7124
  %v7719 = vsel %vm7668, %v7654, %v7126
  %v7720 = vsel %vm7668, %v7655, %v7128
  %v7721 = vsel %vm7668, %v7656, %v7130
  %v7722 = vsel %vm7668, %v7657, %v7132
  %v7723 = vsel %vm7668, %v7658, %v7134
  %v7724 = vsel %vm7668, %v7659, %v7136
  %v7725 = vsel %vm7668, %v7660, %v7138
  %v7726 = vsel %vm7668, %v7661, %v7140
  %v7727 = vsel %vm7668, %v7662, %v7142
  %v7728 = vsel %vm7668, %v7663, %v7144
  %v7729 = vsel %vm7668, %v7664, %v7146
  %v7730 = vsel %vm7668, %v7665, %v7148
  %v7731 = vsel %vm7668, %v7666, %v7150
  %v7732 = vsel %vm7668, %v7667, %v7152
  %v7733 = vpack.c.bf16 %v7670, %v7669
  %v7734 = vpack.c.bf16 %v7672, %v7671
  %v7735 = vpack.c.bf16 %v7674, %v7673
  %v7736 = vpack.c.bf16 %v7676, %v7675
  %v7737 = vpack.c.bf16 %v7678, %v7677
  %v7738 = vpack.c.bf16 %v7680, %v7679
  %v7739 = vpack.c.bf16 %v7682, %v7681
  %v7740 = vpack.c.bf16 %v7684, %v7683
  %v7741 = vpack.c.bf16 %v7686, %v7685
  %v7742 = vpack.c.bf16 %v7688, %v7687
  %v7743 = vpack.c.bf16 %v7690, %v7689
  %v7744 = vpack.c.bf16 %v7692, %v7691
  %v7745 = vpack.c.bf16 %v7694, %v7693
  %v7746 = vpack.c.bf16 %v7696, %v7695
  %v7747 = vpack.c.bf16 %v7698, %v7697
  %v7748 = vpack.c.bf16 %v7700, %v7699
  %v7749 = vpack.c.bf16 %v7702, %v7701
  %v7750 = vpack.c.bf16 %v7704, %v7703
  %v7751 = vpack.c.bf16 %v7706, %v7705
  %v7752 = vpack.c.bf16 %v7708, %v7707
  %v7753 = vpack.c.bf16 %v7710, %v7709
  %v7754 = vpack.c.bf16 %v7712, %v7711
  %v7755 = vpack.c.bf16 %v7714, %v7713
  %v7756 = vpack.c.bf16 %v7716, %v7715
  %v7757 = vpack.c.bf16 %v7718, %v7717
  %v7758 = vpack.c.bf16 %v7720, %v7719
  %v7759 = vpack.c.bf16 %v7722, %v7721
  %v7760 = vpack.c.bf16 %v7724, %v7723
  %v7761 = vpack.c.bf16 %v7726, %v7725
  %v7762 = vpack.c.bf16 %v7728, %v7727
  %v7763 = vpack.c.bf16 %v7730, %v7729
  %v7764 = vpack.c.bf16 %v7732, %v7731
  %v7765 = vld [vmem:[%s4] sm:$0xf]
  %v7766 = vld [vmem:[%s4 + $0x4] sm:$0xf]
  %v7767 = vld [vmem:[%s4 + $0x8] sm:$0xf]
  %v7768 = vld [vmem:[%s4 + $0xc] sm:$0xf]
  %v7769 = vld [vmem:[%s4 + $0x10] sm:$0xf]
  %v7770 = vld [vmem:[%s4 + $0x14] sm:$0xf]
  %v7771 = vld [vmem:[%s4 + $0x18] sm:$0xf]
  %v7772 = vld [vmem:[%s4 + $0x1c] sm:$0xf]
  %v7773 = vld [vmem:[%s4 + $0x20] sm:$0xf]
  %v7783 = vunpack.c.l.b16 %v7765
  %v7784 = vunpack.c.l.b16 %v7766
  %v7785 = vunpack.c.l.b16 %v7767
  %v7786 = vunpack.c.l.b16 %v7768
  %v7787 = vunpack.c.l.b16 %v7769
  %v7788 = vunpack.c.l.b16 %v7770
  %v7789 = vunpack.c.l.b16 %v7771
  %v7790 = vunpack.c.l.b16 %v7772
  %v7791 = vunpack.c.l.b16 %v7773
  %v7792 = vpack.c.b16 %v7784, %v7783
  %v7793 = vpack.c.b16 %v7786, %v7785
  %v7794 = vpack.c.b16 %v7788, %v7787
  %v7795 = vpack.c.b16 %v7790, %v7789
  %v7796 = vpack.c.b16 %v7791, %v7791
  %vm7801 = vcmask 588800
  %v7803 = vsel %vm7801, %v7733, 0
  %v7806 = vsel %vm7801, %v7734, 0
  %v7809 = vsel %vm7801, %v7735, 0
  %v7812 = vsel %vm7801, %v7736, 0
  %v7815 = vsel %vm7801, %v7737, 0
  %v7818 = vsel %vm7801, %v7738, 0
  %v7821 = vsel %vm7801, %v7739, 0
  %v7824 = vsel %vm7801, %v7740, 0
  %v7827 = vsel %vm7801, %v7741, 0
  %v7830 = vsel %vm7801, %v7742, 0
  %v7833 = vsel %vm7801, %v7743, 0
  %v7836 = vsel %vm7801, %v7744, 0
  %v7839 = vsel %vm7801, %v7745, 0
  %v7842 = vsel %vm7801, %v7746, 0
  %v7845 = vsel %vm7801, %v7747, 0
  %v7848 = vsel %vm7801, %v7748, 0
  %v7851 = vsel %vm7801, %v7749, 0
  %v7854 = vsel %vm7801, %v7750, 0
  %v7857 = vsel %vm7801, %v7751, 0
  %v7860 = vsel %vm7801, %v7752, 0
  %v7863 = vsel %vm7801, %v7753, 0
  %v7866 = vsel %vm7801, %v7754, 0
  %v7869 = vsel %vm7801, %v7755, 0
  %v7872 = vsel %vm7801, %v7756, 0
  %v7875 = vsel %vm7801, %v7757, 0
  %v7878 = vsel %vm7801, %v7758, 0
  %v7881 = vsel %vm7801, %v7759, 0
  %v7884 = vsel %vm7801, %v7760, 0
  %v7887 = vsel %vm7801, %v7761, 0
  %v7890 = vsel %vm7801, %v7762, 0
  %v7893 = vsel %vm7801, %v7763, 0
  %v7896 = vsel %vm7801, %v7764, 0
  %vm7898 = vcmask 1043456
  %v7900 = vsel %vm7898, %v7796, 0
  %7902 = vmatprep.subr.bf16.mxu0 0
  %7903 = vmatpush1.bf16.msra.mxu0 %v7792
  %7904 = vmatprep.subr.bf16.mxu0 0
  %7905 = vmatpush1.bf16.msra.mxu0 %v7793
  %7906 = vmatprep.subr.bf16.mxu0 0
  %7907 = vmatpush1.bf16.msra.mxu0 %v7794
  %7908 = vmatprep.subr.bf16.mxu0 0
  %7909 = vmatpush1.bf16.msra.mxu0 %v7795
  %7910 = vmatprep.subr.bf16.mxu0 0
  %7911 = vmatpush1.bf16.msra.mxu0 %v7900
  %7912 = vmatprep.subr.bf16.mxu0 0
  %7913 = vmatpush1.bf16.msra.mxu0 0
  %7914 = vmatprep.subr.bf16.mxu0 0
  %7915 = vmatpush1.bf16.msra.mxu0 0
  %7916 = vmatprep.subr.bf16.mxu0 0
  %7917 = vmatpush1.bf16.msra.mxu0 0
  %7918 = vmatprep.subr.bf16.mxu0 0
  %7919 = vmatpush1.bf16.msra.mxu0 0
  %7920 = vmatprep.subr.bf16.mxu0 0
  %7921 = vmatpush1.bf16.msra.mxu0 0
  %7922 = vmatprep.subr.bf16.mxu0 0
  %7923 = vmatpush1.bf16.msra.mxu0 0
  %7924 = vmatprep.subr.bf16.mxu0 0
  %7925 = vmatpush1.bf16.msra.mxu0 0
  %7926 = vmatprep.subr.bf16.mxu0 0
  %7927 = vmatpush1.bf16.msra.mxu0 0
  %7928 = vmatprep.subr.bf16.mxu0 0
  %7929 = vmatpush1.bf16.msra.mxu0 0
  %7930 = vmatprep.subr.bf16.mxu0 0
  %7931 = vmatpush1.bf16.msra.mxu0 0
  %7932 = vmatprep.subr.bf16.mxu0 0
  %7933 = vmatpush1.bf16.msra.mxu0 0
  %7934 = vmatprep.mubr.bf16.mxu0 0
  %7935 = vmatmul.mubr.bf16.gmra.mrb[0].mxu0 %v7803
  %v7936 = vpop.f32.mrb[0].mxu0
  %v7937 = vadd.f32 0.0, %v7936
  %v7938 = vpop.f32.mrb[0].mxu0
  %v7939 = vpop.f32.mrb[0].mxu0
  %v7940 = vadd.f32 0.0, %v7939
  %v7941 = vpop.f32.mrb[0].mxu0
  %7942 = vmatprep.mubr.bf16.mxu0 0
  %7943 = vmatmul.mubr.bf16.gmra.mrb[0].mxu0 %v7806
  %v7944 = vpop.f32.mrb[0].mxu0
  %v7945 = vadd.f32 0.0, %v7944
  %v7946 = vpop.f32.mrb[0].mxu0
  %v7947 = vpop.f32.mrb[0].mxu0
  %v7948 = vadd.f32 0.0, %v7947
  %v7949 = vpop.f32.mrb[0].mxu0
  %7950 = vmatprep.mubr.bf16.mxu0 0
  %7951 = vmatmul.mubr.bf16.gmra.mrb[0].mxu0 %v7809
  %v7952 = vpop.f32.mrb[0].mxu0
  %v7953 = vadd.f32 0.0, %v7952
  %v7954 = vpop.f32.mrb[0].mxu0
  %v7955 = vpop.f32.mrb[0].mxu0
  %v7956 = vadd.f32 0.0, %v7955
  %v7957 = vpop.f32.mrb[0].mxu0
  %7958 = vmatprep.mubr.bf16.mxu0 0
  %7959 = vmatmul.mubr.bf16.gmra.mrb[0].mxu0 %v7812
  %v7960 = vpop.f32.mrb[0].mxu0
  %v7961 = vadd.f32 0.0, %v7960
  %v7962 = vpop.f32.mrb[0].mxu0
  %v7963 = vpop.f32.mrb[0].mxu0
  %v7964 = vadd.f32 0.0, %v7963
  %v7965 = vpop.f32.mrb[0].mxu0
  %7966 = vmatprep.mubr.bf16.mxu0 0
  %7967 = vmatmul.mubr.bf16.gmra.mrb[0].mxu0 %v7815
  %v7968 = vpop.f32.mrb[0].mxu0
  %v7969 = vadd.f32 0.0, %v7968
  %v7970 = vpop.f32.mrb[0].mxu0
  %v7971 = vpop.f32.mrb[0].mxu0
  %v7972 = vadd.f32 0.0, %v7971
  %v7973 = vpop.f32.mrb[0].mxu0
  %7974 = vmatprep.mubr.bf16.mxu0 0
  %7975 = vmatmul.mubr.bf16.gmra.mrb[0].mxu0 %v7818
  %v7976 = vpop.f32.mrb[0].mxu0
  %v7977 = vadd.f32 0.0, %v7976
  %v7978 = vpop.f32.mrb[0].mxu0
  %v7979 = vpop.f32.mrb[0].mxu0
  %v7980 = vadd.f32 0.0, %v7979
  %v7981 = vpop.f32.mrb[0].mxu0
  %7982 = vmatprep.mubr.bf16.mxu0 0
  %7983 = vmatmul.mubr.bf16.gmra.mrb[0].mxu0 %v7821
  %v7984 = vpop.f32.mrb[0].mxu0
  %v7985 = vadd.f32 0.0, %v7984
  %v7986 = vpop.f32.mrb[0].mxu0
  %v7987 = vpop.f32.mrb[0].mxu0
  %v7988 = vadd.f32 0.0, %v7987
  %v7989 = vpop.f32.mrb[0].mxu0
  %7990 = vmatprep.mubr.bf16.mxu0 0
  %7991 = vmatmul.mubr.bf16.gmra.mrb[0].mxu0 %v7824
  %v7992 = vpop.f32.mrb[0].mxu0
  %v7993 = vadd.f32 0.0, %v7992
  %v7994 = vpop.f32.mrb[0].mxu0
  %v7995 = vpop.f32.mrb[0].mxu0
  %v7996 = vadd.f32 0.0, %v7995
  %v7997 = vpop.f32.mrb[0].mxu0
  %7998 = vmatprep.mubr.bf16.mxu0 0
  %7999 = vmatmul.mubr.bf16.gmra.mrb[0].mxu0 %v7827
  %v8000 = vpop.f32.mrb[0].mxu0
  %v8001 = vadd.f32 0.0, %v8000
  %v8002 = vpop.f32.mrb[0].mxu0
  %v8003 = vpop.f32.mrb[0].mxu0
  %v8004 = vadd.f32 0.0, %v8003
  %v8005 = vpop.f32.mrb[0].mxu0
  %8006 = vmatprep.mubr.bf16.mxu0 0
  %8007 = vmatmul.mubr.bf16.gmra.mrb[0].mxu0 %v7830
  %v8008 = vpop.f32.mrb[0].mxu0
  %v8009 = vadd.f32 0.0, %v8008
  %v8010 = vpop.f32.mrb[0].mxu0
  %v8011 = vpop.f32.mrb[0].mxu0
  %v8012 = vadd.f32 0.0, %v8011
  %v8013 = vpop.f32.mrb[0].mxu0
  %8014 = vmatprep.mubr.bf16.mxu0 0
  %8015 = vmatmul.mubr.bf16.gmra.mrb[0].mxu0 %v7833
  %v8016 = vpop.f32.mrb[0].mxu0
  %v8017 = vadd.f32 0.0, %v8016
  %v8018 = vpop.f32.mrb[0].mxu0
  %v8019 = vpop.f32.mrb[0].mxu0
  %v8020 = vadd.f32 0.0, %v8019
  %v8021 = vpop.f32.mrb[0].mxu0
  %8022 = vmatprep.mubr.bf16.mxu0 0
  %8023 = vmatmul.mubr.bf16.gmra.mrb[0].mxu0 %v7836
  %v8024 = vpop.f32.mrb[0].mxu0
  %v8025 = vadd.f32 0.0, %v8024
  %v8026 = vpop.f32.mrb[0].mxu0
  %v8027 = vpop.f32.mrb[0].mxu0
  %v8028 = vadd.f32 0.0, %v8027
  %v8029 = vpop.f32.mrb[0].mxu0
  %8030 = vmatprep.mubr.bf16.mxu0 0
  %8031 = vmatmul.mubr.bf16.gmra.mrb[0].mxu0 %v7839
  %v8032 = vpop.f32.mrb[0].mxu0
  %v8033 = vadd.f32 0.0, %v8032
  %v8034 = vpop.f32.mrb[0].mxu0
  %v8035 = vpop.f32.mrb[0].mxu0
  %v8036 = vadd.f32 0.0, %v8035
  %v8037 = vpop.f32.mrb[0].mxu0
  %8038 = vmatprep.mubr.bf16.mxu0 0
  %8039 = vmatmul.mubr.bf16.gmra.mrb[0].mxu0 %v7842
  %v8040 = vpop.f32.mrb[0].mxu0
  %v8041 = vadd.f32 0.0, %v8040
  %v8042 = vpop.f32.mrb[0].mxu0
  %v8043 = vpop.f32.mrb[0].mxu0
  %v8044 = vadd.f32 0.0, %v8043
  %v8045 = vpop.f32.mrb[0].mxu0
  %8046 = vmatprep.mubr.bf16.mxu0 0
  %8047 = vmatmul.mubr.bf16.gmra.mrb[0].mxu0 %v7845
  %v8048 = vpop.f32.mrb[0].mxu0
  %v8049 = vadd.f32 0.0, %v8048
  %v8050 = vpop.f32.mrb[0].mxu0
  %v8051 = vpop.f32.mrb[0].mxu0
  %v8052 = vadd.f32 0.0, %v8051
  %v8053 = vpop.f32.mrb[0].mxu0
  %8054 = vmatprep.mubr.bf16.mxu0 0
  %8055 = vmatmul.mubr.bf16.gmra.mrb[0].mxu0 %v7848
  %v8056 = vpop.f32.mrb[0].mxu0
  %v8057 = vadd.f32 0.0, %v8056
  %v8058 = vpop.f32.mrb[0].mxu0
  %v8059 = vpop.f32.mrb[0].mxu0
  %v8060 = vadd.f32 0.0, %v8059
  %v8061 = vpop.f32.mrb[0].mxu0
  %8062 = vmatprep.mubr.bf16.mxu0 0
  %8063 = vmatmul.mubr.bf16.gmra.mrb[0].mxu0 %v7851
  %v8064 = vpop.f32.mrb[0].mxu0
  %v8065 = vadd.f32 0.0, %v8064
  %v8066 = vpop.f32.mrb[0].mxu0
  %v8067 = vpop.f32.mrb[0].mxu0
  %v8068 = vadd.f32 0.0, %v8067
  %v8069 = vpop.f32.mrb[0].mxu0
  %8070 = vmatprep.mubr.bf16.mxu0 0
  %8071 = vmatmul.mubr.bf16.gmra.mrb[0].mxu0 %v7854
  %v8072 = vpop.f32.mrb[0].mxu0
  %v8073 = vadd.f32 0.0, %v8072
  %v8074 = vpop.f32.mrb[0].mxu0
  %v8075 = vpop.f32.mrb[0].mxu0
  %v8076 = vadd.f32 0.0, %v8075
  %v8077 = vpop.f32.mrb[0].mxu0
  %8078 = vmatprep.mubr.bf16.mxu0 0
  %8079 = vmatmul.mubr.bf16.gmra.mrb[0].mxu0 %v7857
  %v8080 = vpop.f32.mrb[0].mxu0
  %v8081 = vadd.f32 0.0, %v8080
  %v8082 = vpop.f32.mrb[0].mxu0
  %v8083 = vpop.f32.mrb[0].mxu0
  %v8084 = vadd.f32 0.0, %v8083
  %v8085 = vpop.f32.mrb[0].mxu0
  %8086 = vmatprep.mubr.bf16.mxu0 0
  %8087 = vmatmul.mubr.bf16.gmra.mrb[0].mxu0 %v7860
  %v8088 = vpop.f32.mrb[0].mxu0
  %v8089 = vadd.f32 0.0, %v8088
  %v8090 = vpop.f32.mrb[0].mxu0
  %v8091 = vpop.f32.mrb[0].mxu0
  %v8092 = vadd.f32 0.0, %v8091
  %v8093 = vpop.f32.mrb[0].mxu0
  %8094 = vmatprep.mubr.bf16.mxu0 0
  %8095 = vmatmul.mubr.bf16.gmra.mrb[0].mxu0 %v7863
  %v8096 = vpop.f32.mrb[0].mxu0
  %v8097 = vadd.f32 0.0, %v8096
  %v8098 = vpop.f32.mrb[0].mxu0
  %v8099 = vpop.f32.mrb[0].mxu0
  %v8100 = vadd.f32 0.0, %v8099
  %v8101 = vpop.f32.mrb[0].mxu0
  %8102 = vmatprep.mubr.bf16.mxu0 0
  %8103 = vmatmul.mubr.bf16.gmra.mrb[0].mxu0 %v7866
  %v8104 = vpop.f32.mrb[0].mxu0
  %v8105 = vadd.f32 0.0, %v8104
  %v8106 = vpop.f32.mrb[0].mxu0
  %v8107 = vpop.f32.mrb[0].mxu0
  %v8108 = vadd.f32 0.0, %v8107
  %v8109 = vpop.f32.mrb[0].mxu0
  %8110 = vmatprep.mubr.bf16.mxu0 0
  %8111 = vmatmul.mubr.bf16.gmra.mrb[0].mxu0 %v7869
  %v8112 = vpop.f32.mrb[0].mxu0
  %v8113 = vadd.f32 0.0, %v8112
  %v8114 = vpop.f32.mrb[0].mxu0
  %v8115 = vpop.f32.mrb[0].mxu0
  %v8116 = vadd.f32 0.0, %v8115
  %v8117 = vpop.f32.mrb[0].mxu0
  %8118 = vmatprep.mubr.bf16.mxu0 0
  %8119 = vmatmul.mubr.bf16.gmra.mrb[0].mxu0 %v7872
  %v8120 = vpop.f32.mrb[0].mxu0
  %v8121 = vadd.f32 0.0, %v8120
  %v8122 = vpop.f32.mrb[0].mxu0
  %v8123 = vpop.f32.mrb[0].mxu0
  %v8124 = vadd.f32 0.0, %v8123
  %v8125 = vpop.f32.mrb[0].mxu0
  %8126 = vmatprep.mubr.bf16.mxu0 0
  %8127 = vmatmul.mubr.bf16.gmra.mrb[0].mxu0 %v7875
  %v8128 = vpop.f32.mrb[0].mxu0
  %v8129 = vadd.f32 0.0, %v8128
  %v8130 = vpop.f32.mrb[0].mxu0
  %v8131 = vpop.f32.mrb[0].mxu0
  %v8132 = vadd.f32 0.0, %v8131
  %v8133 = vpop.f32.mrb[0].mxu0
  %8134 = vmatprep.mubr.bf16.mxu0 0
  %8135 = vmatmul.mubr.bf16.gmra.mrb[0].mxu0 %v7878
  %v8136 = vpop.f32.mrb[0].mxu0
  %v8137 = vadd.f32 0.0, %v8136
  %v8138 = vpop.f32.mrb[0].mxu0
  %v8139 = vpop.f32.mrb[0].mxu0
  %v8140 = vadd.f32 0.0, %v8139
  %v8141 = vpop.f32.mrb[0].mxu0
  %8142 = vmatprep.mubr.bf16.mxu0 0
  %8143 = vmatmul.mubr.bf16.gmra.mrb[0].mxu0 %v7881
  %v8144 = vpop.f32.mrb[0].mxu0
  %v8145 = vadd.f32 0.0, %v8144
  %v8146 = vpop.f32.mrb[0].mxu0
  %v8147 = vpop.f32.mrb[0].mxu0
  %v8148 = vadd.f32 0.0, %v8147
  %v8149 = vpop.f32.mrb[0].mxu0
  %8150 = vmatprep.mubr.bf16.mxu0 0
  %8151 = vmatmul.mubr.bf16.gmra.mrb[0].mxu0 %v7884
  %v8152 = vpop.f32.mrb[0].mxu0
  %v8153 = vadd.f32 0.0, %v8152
  %v8154 = vpop.f32.mrb[0].mxu0
  %v8155 = vpop.f32.mrb[0].mxu0
  %v8156 = vadd.f32 0.0, %v8155
  %v8157 = vpop.f32.mrb[0].mxu0
  %8158 = vmatprep.mubr.bf16.mxu0 0
  %8159 = vmatmul.mubr.bf16.gmra.mrb[0].mxu0 %v7887
  %v8160 = vpop.f32.mrb[0].mxu0
  %v8161 = vadd.f32 0.0, %v8160
  %v8162 = vpop.f32.mrb[0].mxu0
  %v8163 = vpop.f32.mrb[0].mxu0
  %v8164 = vadd.f32 0.0, %v8163
  %v8165 = vpop.f32.mrb[0].mxu0
  %8166 = vmatprep.mubr.bf16.mxu0 0
  %8167 = vmatmul.mubr.bf16.gmra.mrb[0].mxu0 %v7890
  %v8168 = vpop.f32.mrb[0].mxu0
  %v8169 = vadd.f32 0.0, %v8168
  %v8170 = vpop.f32.mrb[0].mxu0
  %v8171 = vpop.f32.mrb[0].mxu0
  %v8172 = vadd.f32 0.0, %v8171
  %v8173 = vpop.f32.mrb[0].mxu0
  %8174 = vmatprep.mubr.bf16.mxu0 0
  %8175 = vmatmul.mubr.bf16.gmra.mrb[0].mxu0 %v7893
  %v8176 = vpop.f32.mrb[0].mxu0
  %v8177 = vadd.f32 0.0, %v8176
  %v8178 = vpop.f32.mrb[0].mxu0
  %v8179 = vpop.f32.mrb[0].mxu0
  %v8180 = vadd.f32 0.0, %v8179
  %v8181 = vpop.f32.mrb[0].mxu0
  %8182 = vmatprep.mubr.bf16.mxu0 0
  %8183 = vmatmul.mubr.bf16.gmra.mrb[0].mxu0 %v7896
  %v8184 = vpop.f32.mrb[0].mxu0
  %v8185 = vadd.f32 0.0, %v8184
  %v8186 = vpop.f32.mrb[0].mxu0
  %v8187 = vpop.f32.mrb[0].mxu0
  %v8188 = vadd.f32 0.0, %v8187
  %v8189 = vpop.f32.mrb[0].mxu0
  %8190 = vdwg.mxu0
  %v8191 = vsel %vm2997, %v7937, 0.0
  %v8192 = vsel %vm2997, %v7940, 0.0
  %v8193 = vadd.f32 %v8191, %v8192
  %v8194 = vsel %vm2997, %v7945, 0.0
  %v8195 = vadd.f32 %v8193, %v8194
  %v8196 = vsel %vm2997, %v7948, 0.0
  %v8197 = vadd.f32 %v8195, %v8196
  %v8198 = vsel %vm2997, %v7953, 0.0
  %v8199 = vadd.f32 %v8197, %v8198
  %v8200 = vsel %vm2997, %v7956, 0.0
  %v8201 = vadd.f32 %v8199, %v8200
  %v8202 = vsel %vm2997, %v7961, 0.0
  %v8203 = vadd.f32 %v8201, %v8202
  %v8204 = vsel %vm2997, %v7964, 0.0
  %v8205 = vadd.f32 %v8203, %v8204
  %v8206 = vsel %vm2997, %v7969, 0.0
  %v8207 = vadd.f32 %v8205, %v8206
  %v8208 = vsel %vm2997, %v7972, 0.0
  %v8209 = vadd.f32 %v8207, %v8208
  %v8210 = vsel %vm2997, %v7977, 0.0
  %v8211 = vadd.f32 %v8209, %v8210
  %v8212 = vsel %vm2997, %v7980, 0.0
  %v8213 = vadd.f32 %v8211, %v8212
  %v8214 = vsel %vm2997, %v7985, 0.0
  %v8215 = vadd.f32 %v8213, %v8214
  %v8216 = vsel %vm2997, %v7988, 0.0
  %v8217 = vadd.f32 %v8215, %v8216
  %v8218 = vsel %vm2997, %v7993, 0.0
  %v8219 = vadd.f32 %v8217, %v8218
  %v8220 = vsel %vm2997, %v7996, 0.0
  %v8221 = vadd.f32 %v8219, %v8220
  %v8222 = vsel %vm2997, %v8001, 0.0
  %v8223 = vadd.f32 %v8221, %v8222
  %v8224 = vsel %vm2997, %v8004, 0.0
  %v8225 = vadd.f32 %v8223, %v8224
  %v8226 = vsel %vm2997, %v8009, 0.0
  %v8227 = vadd.f32 %v8225, %v8226
  %v8228 = vsel %vm2997, %v8012, 0.0
  %v8229 = vadd.f32 %v8227, %v8228
  %v8230 = vsel %vm2997, %v8017, 0.0
  %v8231 = vadd.f32 %v8229, %v8230
  %v8232 = vsel %vm2997, %v8020, 0.0
  %v8233 = vadd.f32 %v8231, %v8232
  %v8234 = vsel %vm2997, %v8025, 0.0
  %v8235 = vadd.f32 %v8233, %v8234
  %v8236 = vsel %vm2997, %v8028, 0.0
  %v8237 = vadd.f32 %v8235, %v8236
  %v8238 = vsel %vm2997, %v8033, 0.0
  %v8239 = vadd.f32 %v8237, %v8238
  %v8240 = vsel %vm2997, %v8036, 0.0
  %v8241 = vadd.f32 %v8239, %v8240
  %v8242 = vsel %vm2997, %v8041, 0.0
  %v8243 = vadd.f32 %v8241, %v8242
  %v8244 = vsel %vm2997, %v8044, 0.0
  %v8245 = vadd.f32 %v8243, %v8244
  %v8246 = vsel %vm2997, %v8049, 0.0
  %v8247 = vadd.f32 %v8245, %v8246
  %v8248 = vsel %vm2997, %v8052, 0.0
  %v8249 = vadd.f32 %v8247, %v8248
  %v8250 = vsel %vm2997, %v8057, 0.0
  %v8251 = vadd.f32 %v8249, %v8250
  %v8252 = vsel %vm2997, %v8060, 0.0
  %v8253 = vadd.f32 %v8251, %v8252
  %v8254 = vsel %vm2997, %v8065, 0.0
  %v8255 = vadd.f32 %v8253, %v8254
  %v8256 = vsel %vm2997, %v8068, 0.0
  %v8257 = vadd.f32 %v8255, %v8256
  %v8258 = vsel %vm2997, %v8073, 0.0
  %v8259 = vadd.f32 %v8257, %v8258
  %v8260 = vsel %vm2997, %v8076, 0.0
  %v8261 = vadd.f32 %v8259, %v8260
  %v8262 = vsel %vm2997, %v8081, 0.0
  %v8263 = vadd.f32 %v8261, %v8262
  %v8264 = vsel %vm2997, %v8084, 0.0
  %v8265 = vadd.f32 %v8263, %v8264
  %v8266 = vsel %vm2997, %v8089, 0.0
  %v8267 = vadd.f32 %v8265, %v8266
  %v8268 = vsel %vm2997, %v8092, 0.0
  %v8269 = vadd.f32 %v8267, %v8268
  %v8270 = vsel %vm2997, %v8097, 0.0
  %v8271 = vadd.f32 %v8269, %v8270
  %v8272 = vsel %vm2997, %v8100, 0.0
  %v8273 = vadd.f32 %v8271, %v8272
  %v8274 = vsel %vm2997, %v8105, 0.0
  %v8275 = vadd.f32 %v8273, %v8274
  %v8276 = vsel %vm2997, %v8108, 0.0
  %v8277 = vadd.f32 %v8275, %v8276
  %v8278 = vsel %vm2997, %v8113, 0.0
  %v8279 = vadd.f32 %v8277, %v8278
  %v8280 = vsel %vm2997, %v8116, 0.0
  %v8281 = vadd.f32 %v8279, %v8280
  %v8282 = vsel %vm2997, %v8121, 0.0
  %v8283 = vadd.f32 %v8281, %v8282
  %v8284 = vsel %vm2997, %v8124, 0.0
  %v8285 = vadd.f32 %v8283, %v8284
  %v8286 = vsel %vm2997, %v8129, 0.0
  %v8287 = vadd.f32 %v8285, %v8286
  %v8288 = vsel %vm2997, %v8132, 0.0
  %v8289 = vadd.f32 %v8287, %v8288
  %v8290 = vsel %vm2997, %v8137, 0.0
  %v8291 = vadd.f32 %v8289, %v8290
  %v8292 = vsel %vm2997, %v8140, 0.0
  %v8293 = vadd.f32 %v8291, %v8292
  %v8294 = vsel %vm2997, %v8145, 0.0
  %v8295 = vadd.f32 %v8293, %v8294
  %v8296 = vsel %vm2997, %v8148, 0.0
  %v8297 = vadd.f32 %v8295, %v8296
  %v8298 = vsel %vm2997, %v8153, 0.0
  %v8299 = vadd.f32 %v8297, %v8298
  %v8300 = vsel %vm2997, %v8156, 0.0
  %v8301 = vadd.f32 %v8299, %v8300
  %v8302 = vsel %vm2997, %v8161, 0.0
  %v8303 = vadd.f32 %v8301, %v8302
  %v8304 = vsel %vm2997, %v8164, 0.0
  %v8305 = vadd.f32 %v8303, %v8304
  %v8306 = vsel %vm2997, %v8169, 0.0
  %v8307 = vadd.f32 %v8305, %v8306
  %v8308 = vsel %vm2997, %v8172, 0.0
  %v8309 = vadd.f32 %v8307, %v8308
  %v8310 = vsel %vm2997, %v8177, 0.0
  %v8311 = vadd.f32 %v8309, %v8310
  %v8312 = vsel %vm2997, %v8180, 0.0
  %v8313 = vadd.f32 %v8311, %v8312
  %v8314 = vsel %vm2997, %v8185, 0.0
  %v8315 = vadd.f32 %v8313, %v8314
  %v8316 = vsel %vm2997, %v8188, 0.0
  %v8317 = vadd.f32 %v8315, %v8316
  %v8318 = vrot.slane %v8317, 4
  %v8319 = vadd.f32 %v8317, %v8318
  %v8320 = vrot.slane %v8319, 2
  %v8321 = vadd.f32 %v8319, %v8320
  %v8322 = vrot.slane %v8321, 1
  %v8323 = vadd.f32 %v8321, %v8322
  %v8324 = vmul.f32 %v7937, %v7937
  %v8325 = vmul.f32 %v7940, %v7940
  %v8326 = vmul.f32 %v7945, %v7945
  %v8327 = vmul.f32 %v7948, %v7948
  %v8328 = vmul.f32 %v7953, %v7953
  %v8329 = vmul.f32 %v7956, %v7956
  %v8330 = vmul.f32 %v7961, %v7961
  %v8331 = vmul.f32 %v7964, %v7964
  %v8332 = vmul.f32 %v7969, %v7969
  %v8333 = vmul.f32 %v7972, %v7972
  %v8334 = vmul.f32 %v7977, %v7977
  %v8335 = vmul.f32 %v7980, %v7980
  %v8336 = vmul.f32 %v7985, %v7985
  %v8337 = vmul.f32 %v7988, %v7988
  %v8338 = vmul.f32 %v7993, %v7993
  %v8339 = vmul.f32 %v7996, %v7996
  %v8340 = vmul.f32 %v8001, %v8001
  %v8341 = vmul.f32 %v8004, %v8004
  %v8342 = vmul.f32 %v8009, %v8009
  %v8343 = vmul.f32 %v8012, %v8012
  %v8344 = vmul.f32 %v8017, %v8017
  %v8345 = vmul.f32 %v8020, %v8020
  %v8346 = vmul.f32 %v8025, %v8025
  %v8347 = vmul.f32 %v8028, %v8028
  %v8348 = vmul.f32 %v8033, %v8033
  %v8349 = vmul.f32 %v8036, %v8036
  %v8350 = vmul.f32 %v8041, %v8041
  %v8351 = vmul.f32 %v8044, %v8044
  %v8352 = vmul.f32 %v8049, %v8049
  %v8353 = vmul.f32 %v8052, %v8052
  %v8354 = vmul.f32 %v8057, %v8057
  %v8355 = vmul.f32 %v8060, %v8060
  %v8356 = vmul.f32 %v8065, %v8065
  %v8357 = vmul.f32 %v8068, %v8068
  %v8358 = vmul.f32 %v8073, %v8073
  %v8359 = vmul.f32 %v8076, %v8076
  %v8360 = vmul.f32 %v8081, %v8081
  %v8361 = vmul.f32 %v8084, %v8084
  %v8362 = vmul.f32 %v8089, %v8089
  %v8363 = vmul.f32 %v8092, %v8092
  %v8364 = vmul.f32 %v8097, %v8097
  %v8365 = vmul.f32 %v8100, %v8100
  %v8366 = vmul.f32 %v8105, %v8105
  %v8367 = vmul.f32 %v8108, %v8108
  %v8368 = vmul.f32 %v8113, %v8113
  %v8369 = vmul.f32 %v8116, %v8116
  %v8370 = vmul.f32 %v8121, %v8121
  %v8371 = vmul.f32 %v8124, %v8124
  %v8372 = vmul.f32 %v8129, %v8129
  %v8373 = vmul.f32 %v8132, %v8132
  %v8374 = vmul.f32 %v8137, %v8137
  %v8375 = vmul.f32 %v8140, %v8140
  %v8376 = vmul.f32 %v8145, %v8145
  %v8377 = vmul.f32 %v8148, %v8148
  %v8378 = vmul.f32 %v8153, %v8153
  %v8379 = vmul.f32 %v8156, %v8156
  %v8380 = vmul.f32 %v8161, %v8161
  %v8381 = vmul.f32 %v8164, %v8164
  %v8382 = vmul.f32 %v8169, %v8169
  %v8383 = vmul.f32 %v8172, %v8172
  %v8384 = vmul.f32 %v8177, %v8177
  %v8385 = vmul.f32 %v8180, %v8180
  %v8386 = vmul.f32 %v8185, %v8185
  %v8387 = vmul.f32 %v8188, %v8188
  %v8388 = vsel %vm2997, %v8324, 0.0
  %v8389 = vsel %vm2997, %v8325, 0.0
  %v8390 = vadd.f32 %v8388, %v8389
  %v8391 = vsel %vm2997, %v8326, 0.0
  %v8392 = vadd.f32 %v8390, %v8391
  %v8393 = vsel %vm2997, %v8327, 0.0
  %v8394 = vadd.f32 %v8392, %v8393
  %v8395 = vsel %vm2997, %v8328, 0.0
  %v8396 = vadd.f32 %v8394, %v8395
  %v8397 = vsel %vm2997, %v8329, 0.0
  %v8398 = vadd.f32 %v8396, %v8397
  %v8399 = vsel %vm2997, %v8330, 0.0
  %v8400 = vadd.f32 %v8398, %v8399
  %v8401 = vsel %vm2997, %v8331, 0.0
  %v8402 = vadd.f32 %v8400, %v8401
  %v8403 = vsel %vm2997, %v8332, 0.0
  %v8404 = vadd.f32 %v8402, %v8403
  %v8405 = vsel %vm2997, %v8333, 0.0
  %v8406 = vadd.f32 %v8404, %v8405
  %v8407 = vsel %vm2997, %v8334, 0.0
  %v8408 = vadd.f32 %v8406, %v8407
  %v8409 = vsel %vm2997, %v8335, 0.0
  %v8410 = vadd.f32 %v8408, %v8409
  %v8411 = vsel %vm2997, %v8336, 0.0
  %v8412 = vadd.f32 %v8410, %v8411
  %v8413 = vsel %vm2997, %v8337, 0.0
  %v8414 = vadd.f32 %v8412, %v8413
  %v8415 = vsel %vm2997, %v8338, 0.0
  %v8416 = vadd.f32 %v8414, %v8415
  %v8417 = vsel %vm2997, %v8339, 0.0
  %v8418 = vadd.f32 %v8416, %v8417
  %v8419 = vsel %vm2997, %v8340, 0.0
  %v8420 = vadd.f32 %v8418, %v8419
  %v8421 = vsel %vm2997, %v8341, 0.0
  %v8422 = vadd.f32 %v8420, %v8421
  %v8423 = vsel %vm2997, %v8342, 0.0
  %v8424 = vadd.f32 %v8422, %v8423
  %v8425 = vsel %vm2997, %v8343, 0.0
  %v8426 = vadd.f32 %v8424, %v8425
  %v8427 = vsel %vm2997, %v8344, 0.0
  %v8428 = vadd.f32 %v8426, %v8427
  %v8429 = vsel %vm2997, %v8345, 0.0
  %v8430 = vadd.f32 %v8428, %v8429
  %v8431 = vsel %vm2997, %v8346, 0.0
  %v8432 = vadd.f32 %v8430, %v8431
  %v8433 = vsel %vm2997, %v8347, 0.0
  %v8434 = vadd.f32 %v8432, %v8433
  %v8435 = vsel %vm2997, %v8348, 0.0
  %v8436 = vadd.f32 %v8434, %v8435
  %v8437 = vsel %vm2997, %v8349, 0.0
  %v8438 = vadd.f32 %v8436, %v8437
  %v8439 = vsel %vm2997, %v8350, 0.0
  %v8440 = vadd.f32 %v8438, %v8439
  %v8441 = vsel %vm2997, %v8351, 0.0
  %v8442 = vadd.f32 %v8440, %v8441
  %v8443 = vsel %vm2997, %v8352, 0.0
  %v8444 = vadd.f32 %v8442, %v8443
  %v8445 = vsel %vm2997, %v8353, 0.0
  %v8446 = vadd.f32 %v8444, %v8445
  %v8447 = vsel %vm2997, %v8354, 0.0
  %v8448 = vadd.f32 %v8446, %v8447
  %v8449 = vsel %vm2997, %v8355, 0.0
  %v8450 = vadd.f32 %v8448, %v8449
  %v8451 = vsel %vm2997, %v8356, 0.0
  %v8452 = vadd.f32 %v8450, %v8451
  %v8453 = vsel %vm2997, %v8357, 0.0
  %v8454 = vadd.f32 %v8452, %v8453
  %v8455 = vsel %vm2997, %v8358, 0.0
  %v8456 = vadd.f32 %v8454, %v8455
  %v8457 = vsel %vm2997, %v8359, 0.0
  %v8458 = vadd.f32 %v8456, %v8457
  %v8459 = vsel %vm2997, %v8360, 0.0
  %v8460 = vadd.f32 %v8458, %v8459
  %v8461 = vsel %vm2997, %v8361, 0.0
  %v8462 = vadd.f32 %v8460, %v8461
  %v8463 = vsel %vm2997, %v8362, 0.0
  %v8464 = vadd.f32 %v8462, %v8463
  %v8465 = vsel %vm2997, %v8363, 0.0
  %v8466 = vadd.f32 %v8464, %v8465
  %v8467 = vsel %vm2997, %v8364, 0.0
  %v8468 = vadd.f32 %v8466, %v8467
  %v8469 = vsel %vm2997, %v8365, 0.0
  %v8470 = vadd.f32 %v8468, %v8469
  %v8471 = vsel %vm2997, %v8366, 0.0
  %v8472 = vadd.f32 %v8470, %v8471
  %v8473 = vsel %vm2997, %v8367, 0.0
  %v8474 = vadd.f32 %v8472, %v8473
  %v8475 = vsel %vm2997, %v8368, 0.0
  %v8476 = vadd.f32 %v8474, %v8475
  %v8477 = vsel %vm2997, %v8369, 0.0
  %v8478 = vadd.f32 %v8476, %v8477
  %v8479 = vsel %vm2997, %v8370, 0.0
  %v8480 = vadd.f32 %v8478, %v8479
  %v8481 = vsel %vm2997, %v8371, 0.0
  %v8482 = vadd.f32 %v8480, %v8481
  %v8483 = vsel %vm2997, %v8372, 0.0
  %v8484 = vadd.f32 %v8482, %v8483
  %v8485 = vsel %vm2997, %v8373, 0.0
  %v8486 = vadd.f32 %v8484, %v8485
  %v8487 = vsel %vm2997, %v8374, 0.0
  %v8488 = vadd.f32 %v8486, %v8487
  %v8489 = vsel %vm2997, %v8375, 0.0
  %v8490 = vadd.f32 %v8488, %v8489
  %v8491 = vsel %vm2997, %v8376, 0.0
  %v8492 = vadd.f32 %v8490, %v8491
  %v8493 = vsel %vm2997, %v8377, 0.0
  %v8494 = vadd.f32 %v8492, %v8493
  %v8495 = vsel %vm2997, %v8378, 0.0
  %v8496 = vadd.f32 %v8494, %v8495
  %v8497 = vsel %vm2997, %v8379, 0.0
  %v8498 = vadd.f32 %v8496, %v8497
  %v8499 = vsel %vm2997, %v8380, 0.0
  %v8500 = vadd.f32 %v8498, %v8499
  %v8501 = vsel %vm2997, %v8381, 0.0
  %v8502 = vadd.f32 %v8500, %v8501
  %v8503 = vsel %vm2997, %v8382, 0.0
  %v8504 = vadd.f32 %v8502, %v8503
  %v8505 = vsel %vm2997, %v8383, 0.0
  %v8506 = vadd.f32 %v8504, %v8505
  %v8507 = vsel %vm2997, %v8384, 0.0
  %v8508 = vadd.f32 %v8506, %v8507
  %v8509 = vsel %vm2997, %v8385, 0.0
  %v8510 = vadd.f32 %v8508, %v8509
  %v8511 = vsel %vm2997, %v8386, 0.0
  %v8512 = vadd.f32 %v8510, %v8511
  %v8513 = vsel %vm2997, %v8387, 0.0
  %v8514 = vadd.f32 %v8512, %v8513
  %v8515 = vrot.slane %v8514, 4
  %v8516 = vadd.f32 %v8514, %v8515
  %v8517 = vrot.slane %v8516, 2
  %v8518 = vadd.f32 %v8516, %v8517
  %v8519 = vrot.slane %v8518, 1
  %v8520 = vadd.f32 %v8518, %v8519
  %v8521 = vmul.f32 %v8323, 0.001953125
  %v8522 = vmul.f32 %v8520, 0.001953125
  %v8523 = vmul.f32 %v8521, %v8521
  %v8524 = vsub.f32 %v8522, %v8523
  %v8525 = vmax.f32 %v8524, 0.0
  %v8526 = vld [vmem:[%s5] sm:$0x1]
  %v8527 = vadd.f32 %v8525, 1e-05
  %v8528 = vrsqrt.pop %v8527
  %v8529 = vmul.f32 %v8526, %v8528
  %v8530 = vld [vmem:[%s6] sm:$0x1]
  %v8531 = vmul.f32 %v8521, %v8529
  %v8532 = vsub.f32 %v8530, %v8531
  %v8534 = vlaneseq
  %v8535 = vshrl.u32 %v8534, 7
  %v8536 = vsub.s32 0, %v8535
  %v8537 = vrot.slane %v8529, %v8536
  %v8539 = vmul.f32 %v7937, %v8537
  %v8540 = vmul.f32 %v7940, %v8537
  %v8541 = vmul.f32 %v7945, %v8537
  %v8542 = vmul.f32 %v7948, %v8537
  %v8543 = vmul.f32 %v7953, %v8537
  %v8544 = vmul.f32 %v7956, %v8537
  %v8545 = vmul.f32 %v7961, %v8537
  %v8546 = vmul.f32 %v7964, %v8537
  %v8547 = vmul.f32 %v7969, %v8537
  %v8548 = vmul.f32 %v7972, %v8537
  %v8549 = vmul.f32 %v7977, %v8537
  %v8550 = vmul.f32 %v7980, %v8537
  %v8551 = vmul.f32 %v7985, %v8537
  %v8552 = vmul.f32 %v7988, %v8537
  %v8553 = vmul.f32 %v7993, %v8537
  %v8554 = vmul.f32 %v7996, %v8537
  %v8555 = vmul.f32 %v8001, %v8537
  %v8556 = vmul.f32 %v8004, %v8537
  %v8557 = vmul.f32 %v8009, %v8537
  %v8558 = vmul.f32 %v8012, %v8537
  %v8559 = vmul.f32 %v8017, %v8537
  %v8560 = vmul.f32 %v8020, %v8537
  %v8561 = vmul.f32 %v8025, %v8537
  %v8562 = vmul.f32 %v8028, %v8537
  %v8563 = vmul.f32 %v8033, %v8537
  %v8564 = vmul.f32 %v8036, %v8537
  %v8565 = vmul.f32 %v8041, %v8537
  %v8566 = vmul.f32 %v8044, %v8537
  %v8567 = vmul.f32 %v8049, %v8537
  %v8568 = vmul.f32 %v8052, %v8537
  %v8569 = vmul.f32 %v8057, %v8537
  %v8570 = vmul.f32 %v8060, %v8537
  %v8571 = vmul.f32 %v8065, %v8537
  %v8572 = vmul.f32 %v8068, %v8537
  %v8573 = vmul.f32 %v8073, %v8537
  %v8574 = vmul.f32 %v8076, %v8537
  %v8575 = vmul.f32 %v8081, %v8537
  %v8576 = vmul.f32 %v8084, %v8537
  %v8577 = vmul.f32 %v8089, %v8537
  %v8578 = vmul.f32 %v8092, %v8537
  %v8579 = vmul.f32 %v8097, %v8537
  %v8580 = vmul.f32 %v8100, %v8537
  %v8581 = vmul.f32 %v8105, %v8537
  %v8582 = vmul.f32 %v8108, %v8537
  %v8583 = vmul.f32 %v8113, %v8537
  %v8584 = vmul.f32 %v8116, %v8537
  %v8585 = vmul.f32 %v8121, %v8537
  %v8586 = vmul.f32 %v8124, %v8537
  %v8587 = vmul.f32 %v8129, %v8537
  %v8588 = vmul.f32 %v8132, %v8537
  %v8589 = vmul.f32 %v8137, %v8537
  %v8590 = vmul.f32 %v8140, %v8537
  %v8591 = vmul.f32 %v8145, %v8537
  %v8592 = vmul.f32 %v8148, %v8537
  %v8593 = vmul.f32 %v8153, %v8537
  %v8594 = vmul.f32 %v8156, %v8537
  %v8595 = vmul.f32 %v8161, %v8537
  %v8596 = vmul.f32 %v8164, %v8537
  %v8597 = vmul.f32 %v8169, %v8537
  %v8598 = vmul.f32 %v8172, %v8537
  %v8599 = vmul.f32 %v8177, %v8537
  %v8600 = vmul.f32 %v8180, %v8537
  %v8601 = vmul.f32 %v8185, %v8537
  %v8602 = vmul.f32 %v8188, %v8537
  %v8604 = vlaneseq
  %v8605 = vshrl.u32 %v8604, 7
  %v8606 = vsub.s32 0, %v8605
  %v8607 = vrot.slane %v8532, %v8606
  %v8609 = vadd.f32 %v8539, %v8607
  %v8610 = vadd.f32 %v8540, %v8607
  %v8611 = vadd.f32 %v8541, %v8607
  %v8612 = vadd.f32 %v8542, %v8607
  %v8613 = vadd.f32 %v8543, %v8607
  %v8614 = vadd.f32 %v8544, %v8607
  %v8615 = vadd.f32 %v8545, %v8607
  %v8616 = vadd.f32 %v8546, %v8607
  %v8617 = vadd.f32 %v8547, %v8607
  %v8618 = vadd.f32 %v8548, %v8607
  %v8619 = vadd.f32 %v8549, %v8607
  %v8620 = vadd.f32 %v8550, %v8607
  %v8621 = vadd.f32 %v8551, %v8607
  %v8622 = vadd.f32 %v8552, %v8607
  %v8623 = vadd.f32 %v8553, %v8607
  %v8624 = vadd.f32 %v8554, %v8607
  %v8625 = vadd.f32 %v8555, %v8607
  %v8626 = vadd.f32 %v8556, %v8607
  %v8627 = vadd.f32 %v8557, %v8607
  %v8628 = vadd.f32 %v8558, %v8607
  %v8629 = vadd.f32 %v8559, %v8607
  %v8630 = vadd.f32 %v8560, %v8607
  %v8631 = vadd.f32 %v8561, %v8607
  %v8632 = vadd.f32 %v8562, %v8607
  %v8633 = vadd.f32 %v8563, %v8607
  %v8634 = vadd.f32 %v8564, %v8607
  %v8635 = vadd.f32 %v8565, %v8607
  %v8636 = vadd.f32 %v8566, %v8607
  %v8637 = vadd.f32 %v8567, %v8607
  %v8638 = vadd.f32 %v8568, %v8607
  %v8639 = vadd.f32 %v8569, %v8607
  %v8640 = vadd.f32 %v8570, %v8607
  %v8641 = vadd.f32 %v8571, %v8607
  %v8642 = vadd.f32 %v8572, %v8607
  %v8643 = vadd.f32 %v8573, %v8607
  %v8644 = vadd.f32 %v8574, %v8607
  %v8645 = vadd.f32 %v8575, %v8607
  %v8646 = vadd.f32 %v8576, %v8607
  %v8647 = vadd.f32 %v8577, %v8607
  %v8648 = vadd.f32 %v8578, %v8607
  %v8649 = vadd.f32 %v8579, %v8607
  %v8650 = vadd.f32 %v8580, %v8607
  %v8651 = vadd.f32 %v8581, %v8607
  %v8652 = vadd.f32 %v8582, %v8607
  %v8653 = vadd.f32 %v8583, %v8607
  %v8654 = vadd.f32 %v8584, %v8607
  %v8655 = vadd.f32 %v8585, %v8607
  %v8656 = vadd.f32 %v8586, %v8607
  %v8657 = vadd.f32 %v8587, %v8607
  %v8658 = vadd.f32 %v8588, %v8607
  %v8659 = vadd.f32 %v8589, %v8607
  %v8660 = vadd.f32 %v8590, %v8607
  %v8661 = vadd.f32 %v8591, %v8607
  %v8662 = vadd.f32 %v8592, %v8607
  %v8663 = vadd.f32 %v8593, %v8607
  %v8664 = vadd.f32 %v8594, %v8607
  %v8665 = vadd.f32 %v8595, %v8607
  %v8666 = vadd.f32 %v8596, %v8607
  %v8667 = vadd.f32 %v8597, %v8607
  %v8668 = vadd.f32 %v8598, %v8607
  %v8669 = vadd.f32 %v8599, %v8607
  %v8670 = vadd.f32 %v8600, %v8607
  %v8671 = vadd.f32 %v8601, %v8607
  %v8672 = vadd.f32 %v8602, %v8607
  %v8673 = vmax.f32 %v8609, 0.0
  %v8674 = vmax.f32 %v8610, 0.0
  %v8675 = vmax.f32 %v8611, 0.0
  %v8676 = vmax.f32 %v8612, 0.0
  %v8677 = vmax.f32 %v8613, 0.0
  %v8678 = vmax.f32 %v8614, 0.0
  %v8679 = vmax.f32 %v8615, 0.0
  %v8680 = vmax.f32 %v8616, 0.0
  %v8681 = vmax.f32 %v8617, 0.0
  %v8682 = vmax.f32 %v8618, 0.0
  %v8683 = vmax.f32 %v8619, 0.0
  %v8684 = vmax.f32 %v8620, 0.0
  %v8685 = vmax.f32 %v8621, 0.0
  %v8686 = vmax.f32 %v8622, 0.0
  %v8687 = vmax.f32 %v8623, 0.0
  %v8688 = vmax.f32 %v8624, 0.0
  %v8689 = vmax.f32 %v8625, 0.0
  %v8690 = vmax.f32 %v8626, 0.0
  %v8691 = vmax.f32 %v8627, 0.0
  %v8692 = vmax.f32 %v8628, 0.0
  %v8693 = vmax.f32 %v8629, 0.0
  %v8694 = vmax.f32 %v8630, 0.0
  %v8695 = vmax.f32 %v8631, 0.0
  %v8696 = vmax.f32 %v8632, 0.0
  %v8697 = vmax.f32 %v8633, 0.0
  %v8698 = vmax.f32 %v8634, 0.0
  %v8699 = vmax.f32 %v8635, 0.0
  %v8700 = vmax.f32 %v8636, 0.0
  %v8701 = vmax.f32 %v8637, 0.0
  %v8702 = vmax.f32 %v8638, 0.0
  %v8703 = vmax.f32 %v8639, 0.0
  %v8704 = vmax.f32 %v8640, 0.0
  %v8705 = vmax.f32 %v8641, 0.0
  %v8706 = vmax.f32 %v8642, 0.0
  %v8707 = vmax.f32 %v8643, 0.0
  %v8708 = vmax.f32 %v8644, 0.0
  %v8709 = vmax.f32 %v8645, 0.0
  %v8710 = vmax.f32 %v8646, 0.0
  %v8711 = vmax.f32 %v8647, 0.0
  %v8712 = vmax.f32 %v8648, 0.0
  %v8713 = vmax.f32 %v8649, 0.0
  %v8714 = vmax.f32 %v8650, 0.0
  %v8715 = vmax.f32 %v8651, 0.0
  %v8716 = vmax.f32 %v8652, 0.0
  %v8717 = vmax.f32 %v8653, 0.0
  %v8718 = vmax.f32 %v8654, 0.0
  %v8719 = vmax.f32 %v8655, 0.0
  %v8720 = vmax.f32 %v8656, 0.0
  %v8721 = vmax.f32 %v8657, 0.0
  %v8722 = vmax.f32 %v8658, 0.0
  %v8723 = vmax.f32 %v8659, 0.0
  %v8724 = vmax.f32 %v8660, 0.0
  %v8725 = vmax.f32 %v8661, 0.0
  %v8726 = vmax.f32 %v8662, 0.0
  %v8727 = vmax.f32 %v8663, 0.0
  %v8728 = vmax.f32 %v8664, 0.0
  %v8729 = vmax.f32 %v8665, 0.0
  %v8730 = vmax.f32 %v8666, 0.0
  %v8731 = vmax.f32 %v8667, 0.0
  %v8732 = vmax.f32 %v8668, 0.0
  %v8733 = vmax.f32 %v8669, 0.0
  %v8734 = vmax.f32 %v8670, 0.0
  %v8735 = vmax.f32 %v8671, 0.0
  %v8736 = vmax.f32 %v8672, 0.0
  %8737 = vst.msk [vmem:[%s7] sm:$0xff] %vm2997, %v8673
  %8738 = vst.msk [vmem:[%s7 + $0x8] sm:$0xff] %vm2997, %v8674
  %8739 = vst.msk [vmem:[%s7 + $0x10] sm:$0xff] %vm2997, %v8675
  %8740 = vst.msk [vmem:[%s7 + $0x18] sm:$0xff] %vm2997, %v8676
  %8741 = vst.msk [vmem:[%s7 + $0x20] sm:$0xff] %vm2997, %v8677
  %8742 = vst.msk [vmem:[%s7 + $0x28] sm:$0xff] %vm2997, %v8678
  %8743 = vst.msk [vmem:[%s7 + $0x30] sm:$0xff] %vm2997, %v8679
  %8744 = vst.msk [vmem:[%s7 + $0x38] sm:$0xff] %vm2997, %v8680
  %8745 = vst.msk [vmem:[%s7 + $0x40] sm:$0xff] %vm2997, %v8681
  %8746 = vst.msk [vmem:[%s7 + $0x48] sm:$0xff] %vm2997, %v8682
  %8747 = vst.msk [vmem:[%s7 + $0x50] sm:$0xff] %vm2997, %v8683
  %8748 = vst.msk [vmem:[%s7 + $0x58] sm:$0xff] %vm2997, %v8684
  %8749 = vst.msk [vmem:[%s7 + $0x60] sm:$0xff] %vm2997, %v8685
  %8750 = vst.msk [vmem:[%s7 + $0x68] sm:$0xff] %vm2997, %v8686
  %8751 = vst.msk [vmem:[%s7 + $0x70] sm:$0xff] %vm2997, %v8687
  %8752 = vst.msk [vmem:[%s7 + $0x78] sm:$0xff] %vm2997, %v8688
  %8753 = vst.msk [vmem:[%s7 + $0x80] sm:$0xff] %vm2997, %v8689
  %8754 = vst.msk [vmem:[%s7 + $0x88] sm:$0xff] %vm2997, %v8690
  %8755 = vst.msk [vmem:[%s7 + $0x90] sm:$0xff] %vm2997, %v8691
  %8756 = vst.msk [vmem:[%s7 + $0x98] sm:$0xff] %vm2997, %v8692
  %8757 = vst.msk [vmem:[%s7 + $0xa0] sm:$0xff] %vm2997, %v8693
  %8758 = vst.msk [vmem:[%s7 + $0xa8] sm:$0xff] %vm2997, %v8694
  %8759 = vst.msk [vmem:[%s7 + $0xb0] sm:$0xff] %vm2997, %v8695
  %8760 = vst.msk [vmem:[%s7 + $0xb8] sm:$0xff] %vm2997, %v8696
  %8761 = vst.msk [vmem:[%s7 + $0xc0] sm:$0xff] %vm2997, %v8697
  %8762 = vst.msk [vmem:[%s7 + $0xc8] sm:$0xff] %vm2997, %v8698
  %8763 = vst.msk [vmem:[%s7 + $0xd0] sm:$0xff] %vm2997, %v8699
  %8764 = vst.msk [vmem:[%s7 + $0xd8] sm:$0xff] %vm2997, %v8700
  %8765 = vst.msk [vmem:[%s7 + $0xe0] sm:$0xff] %vm2997, %v8701
  %8766 = vst.msk [vmem:[%s7 + $0xe8] sm:$0xff] %vm2997, %v8702
  %8767 = vst.msk [vmem:[%s7 + $0xf0] sm:$0xff] %vm2997, %v8703
  %8768 = vst.msk [vmem:[%s7 + $0xf8] sm:$0xff] %vm2997, %v8704
  %8769 = vst.msk [vmem:[%s7 + $0x100] sm:$0xff] %vm2997, %v8705
  %8770 = vst.msk [vmem:[%s7 + $0x108] sm:$0xff] %vm2997, %v8706
  %8771 = vst.msk [vmem:[%s7 + $0x110] sm:$0xff] %vm2997, %v8707
  %8772 = vst.msk [vmem:[%s7 + $0x118] sm:$0xff] %vm2997, %v8708
  %8773 = vst.msk [vmem:[%s7 + $0x120] sm:$0xff] %vm2997, %v8709
  %8774 = vst.msk [vmem:[%s7 + $0x128] sm:$0xff] %vm2997, %v8710
  %8775 = vst.msk [vmem:[%s7 + $0x130] sm:$0xff] %vm2997, %v8711
  %8776 = vst.msk [vmem:[%s7 + $0x138] sm:$0xff] %vm2997, %v8712
  %8777 = vst.msk [vmem:[%s7 + $0x140] sm:$0xff] %vm2997, %v8713
  %8778 = vst.msk [vmem:[%s7 + $0x148] sm:$0xff] %vm2997, %v8714
  %8779 = vst.msk [vmem:[%s7 + $0x150] sm:$0xff] %vm2997, %v8715
  %8780 = vst.msk [vmem:[%s7 + $0x158] sm:$0xff] %vm2997, %v8716
  %8781 = vst.msk [vmem:[%s7 + $0x160] sm:$0xff] %vm2997, %v8717
  %8782 = vst.msk [vmem:[%s7 + $0x168] sm:$0xff] %vm2997, %v8718
  %8783 = vst.msk [vmem:[%s7 + $0x170] sm:$0xff] %vm2997, %v8719
  %8784 = vst.msk [vmem:[%s7 + $0x178] sm:$0xff] %vm2997, %v8720
  %8785 = vst.msk [vmem:[%s7 + $0x180] sm:$0xff] %vm2997, %v8721
  %8786 = vst.msk [vmem:[%s7 + $0x188] sm:$0xff] %vm2997, %v8722
  %8787 = vst.msk [vmem:[%s7 + $0x190] sm:$0xff] %vm2997, %v8723
  %8788 = vst.msk [vmem:[%s7 + $0x198] sm:$0xff] %vm2997, %v8724
  %8789 = vst.msk [vmem:[%s7 + $0x1a0] sm:$0xff] %vm2997, %v8725
  %8790 = vst.msk [vmem:[%s7 + $0x1a8] sm:$0xff] %vm2997, %v8726
  %8791 = vst.msk [vmem:[%s7 + $0x1b0] sm:$0xff] %vm2997, %v8727
  %8792 = vst.msk [vmem:[%s7 + $0x1b8] sm:$0xff] %vm2997, %v8728
  %8793 = vst.msk [vmem:[%s7 + $0x1c0] sm:$0xff] %vm2997, %v8729
  %8794 = vst.msk [vmem:[%s7 + $0x1c8] sm:$0xff] %vm2997, %v8730
  %8795 = vst.msk [vmem:[%s7 + $0x1d0] sm:$0xff] %vm2997, %v8731
  %8796 = vst.msk [vmem:[%s7 + $0x1d8] sm:$0xff] %vm2997, %v8732
  %8797 = vst.msk [vmem:[%s7 + $0x1e0] sm:$0xff] %vm2997, %v8733
  %8798 = vst.msk [vmem:[%s7 + $0x1e8] sm:$0xff] %vm2997, %v8734
  %8799 = vst.msk [vmem:[%s7 + $0x1f0] sm:$0xff] %vm2997, %v8735
  %8800 = vst.msk [vmem:[%s7 + $0x1f8] sm:$0xff] %vm2997, %v8736
  // Predicated region
  $region30: #{tpu_custom_call.1} parent=0 // pred_check
    _
  $region31: #{tpu_custom_call.1} parent=0 // pred_check_branch
    %8802 = sbr.rel (0) target = $region33
  $region32: #{tpu_custom_call.1} parent=0 // pred_region
    _
  $region33: #{tpu_custom_call.1} parent=0 // pred_fallthru
    _
  // Predicated region
  $region34: #{tpu_custom_call.1} parent=0 // pred_check
    _
  $region35: #{tpu_custom_call.1} parent=0 // pred_check_branch
    %8804 = sbr.rel (0) target = $region37
  $region36: #{tpu_custom_call.1} parent=0 // pred_region
    _
  $region37: #{tpu_custom_call.1} parent=0 // pred_fallthru
    _

</llo_original>
